<compile_context>
chip_gen: v6e
topology: v6e:2x2x1
jax: 0.10.0
libtpu: 0.0.40
codegen_flags: <defaults>
</compile_context>

<pallas_src>
import functools

import jax
import jax.numpy as jnp
from jax import lax
from jax.experimental import pallas as pl
from jax.experimental.pallas import tpu as pltpu


# ----------------------------------------------------------------------------
# Fused kernel builder.
# Lane layout inside each 128-wide gate block: fwd hidden at lanes [0,H),
# bwd hidden at lanes [H,2H), rest zero-padded.  h_cat is a single (8,128)
# vreg carrying both directions.
# ----------------------------------------------------------------------------
def _make_encoder_kernel(T, BP, VP, E, H, GW, n_layers):
    G3 = 3 * GW
    TBP = T * BP
    f32 = jnp.float32

    def kernel(idx_ref, emb_ref, *refs):
        # ---- parse positional refs: per-layer params, outputs, scratch -----
        pos = 0
        layer_params = []
        for l in range(n_layers):
            n_p = 6 if l == 0 else 8
            layer_params.append(refs[pos:pos + n_p])
            pos += n_p
        out_pad_ref = refs[pos]
        hid_pad_ref = refs[pos + 1]
        pos += 2
        gi_f_scr = refs[pos]
        gi_b_scr = refs[pos + 1]
        pos += 2
        out_scr, outrev_scr = [], []
        for l in range(n_layers):
            out_scr.append(refs[pos])
            outrev_scr.append(refs[pos + 1])
            pos += 2

        # ---- fused embedding gather: one-hot @ table on the MXU ------------
        idx = idx_ref[...]                                        # (TBP, 1) i32
        iota = lax.broadcasted_iota(jnp.int32, (TBP, VP), 1)
        onehot = (iota == idx).astype(f32)                        # (TBP, VP)
        x = jnp.dot(onehot, emb_ref[...], preferred_element_type=f32)  # (TBP,E)

        # lane-selection matrix: moves lanes [H,2H) -> [0,H) via one MXU pass
        # (unambiguous alternative to a lane rotate; epilogue-only).
        rows = lax.broadcasted_iota(jnp.int32, (GW, GW), 0)
        cols = lax.broadcasted_iota(jnp.int32, (GW, GW), 1)
        sel_b = (rows == cols + H).astype(f32)                    # (GW, GW)

        h_finals = []
        for l in range(n_layers):
            p = layer_params[l]
            # ---- hoisted input projection for ALL timesteps (prologue) -----
            if l == 0:
                wih_f, wih_b, bih_f, bih_b, whh_ref, bhh_ref = p
                gi_f = jnp.dot(x, wih_f[...], preferred_element_type=f32) + bih_f[...]
                gi_b = jnp.dot(x, wih_b[...], preferred_element_type=f32) + bih_b[...]
            else:
                # no (T,B,2H) concat: map prev layer's lane-packed direction
                # buffers straight into this layer's gate columns.
                m_fd, m_fr, m_bd, m_br, bih_f, bih_b, whh_ref, bhh_ref = p
                o_prev = out_scr[l - 1][...]                      # (TBP, GW)
                orv_prev = outrev_scr[l - 1][...]                 # (TBP, GW)
                gi_f = (jnp.dot(o_prev, m_fd[...], preferred_element_type=f32)
                        + jnp.dot(orv_prev, m_fr[...], preferred_element_type=f32)
                        + bih_f[...])
                gi_b = (jnp.dot(o_prev, m_bd[...], preferred_element_type=f32)
                        + jnp.dot(orv_prev, m_br[...], preferred_element_type=f32)
                        + bih_b[...])
            gi_f_scr[...] = gi_f                                  # (TBP, 3GW)
            gi_b_scr[...] = gi_b

            whh = whh_ref[...]                                    # (GW, 3GW) block-diag, hoisted
            bhh = jnp.broadcast_to(bhh_ref[...], (BP, G3))        # hoisted broadcast

            # ---- serial recurrence: one fused dot per step, both dirs ------
            h = jnp.zeros((BP, GW), f32)                          # fwd|bwd lane-packed
            for s in range(T):
                sr = T - 1 - s
                # tile-aligned per-step reads; fwd/bwd occupy disjoint lanes
                gi_t = (gi_f_scr[s * BP:(s + 1) * BP, :]
                        + gi_b_scr[sr * BP:(sr + 1) * BP, :])
                gh = jnp.dot(h, whh, preferred_element_type=f32) + bhh
                # 128-lane-aligned gate slices (free vreg picks)
                r = jax.nn.sigmoid(gi_t[:, 0:GW] + gh[:, 0:GW])
                z = jax.nn.sigmoid(gi_t[:, GW:2 * GW] + gh[:, GW:2 * GW])
                ng = jnp.tanh(gi_t[:, 2 * GW:3 * GW] + r * gh[:, 2 * GW:3 * GW])
                h = (1.0 - z) * ng + z * h
                # store both forward-order and time-reversed copies (aligned vst)
                out_scr[l][s * BP:(s + 1) * BP, :] = h
                outrev_scr[l][sr * BP:(sr + 1) * BP, :] = h
            h_finals.append(h)

        # ---- epilogue: fwd+bwd sum of top layer + hidden stack -------------
        top = n_layers - 1
        out_top = out_scr[top][...]                               # row t: out_f[t] | out_b[T-1-t]
        outrev_top = outrev_scr[top][...]                         # row t: out_f[T-1-t] | out_b[t]
        outsum = out_top + jnp.dot(outrev_top, sel_b, preferred_element_type=f32)
        for t in range(T):
            out_pad_ref[t] = outsum[t * BP:(t + 1) * BP, :]
        for l in range(n_layers):
            hid_pad_ref[2 * l] = h_finals[l]                      # fwd at lanes [0,H)
            hid_pad_ref[2 * l + 1] = jnp.dot(h_finals[l], sel_b,
                                             preferred_element_type=f32)  # bwd moved to [0,H)

    return kernel


# ----------------------------------------------------------------------------
# One-time parameter preparation (outside jit): transpose, gate padding,
# block-diagonal packing, layer>=1 input-projection mapping matrices.
# ----------------------------------------------------------------------------
def prepare_params(raw, input_size, embedding_size, hidden_size, n_layers):
    H = hidden_size
    E = embedding_size
    GW = max(128, ((2 * H + 127) // 128) * 128)   # gate block width (>= 2H, mult of 128)
    VP = ((input_size + 127) // 128) * 128        # padded vocab for one-hot matmul
    f32 = jnp.float32

    emb_pad = jnp.zeros((VP, E), f32).at[:input_size, :].set(raw["embedding"].astype(f32))

    def pad_ih(w_ih, d_in, dir_off):
        out = jnp.zeros((d_in, 3 * GW), f32)
        for g in range(3):
            out = out.at[:, g * GW + dir_off: g * GW + dir_off + H].set(
                w_ih[g * H:(g + 1) * H, :].astype(f32).T)
        return out

    def pad_bias(b, dir_off):
        out = jnp.zeros((1, 3 * GW), f32)
        for g in range(3):
            out = out.at[0, g * GW + dir_off: g * GW + dir_off + H].set(
                b[g * H:(g + 1) * H].astype(f32))
        return out

    def make_whh_cat(whh_f, whh_b):
        out = jnp.zeros((GW, 3 * GW), f32)
        for d, w in enumerate((whh_f, whh_b)):
            off = d * H
            for g in range(3):
                out = out.at[off:off + H, g * GW + off: g * GW + off + H].set(
                    w[g * H:(g + 1) * H, :].astype(f32).T)
        return out

    def make_m(w_ih_dir, src_half, dst_off):
        # src_half 0: reads out_f (lanes [0,H) of OUT);  1: reads out_b (lanes
        # [H,2H) of OUT_rev).  dst_off: this direction's gate sub-columns.
        out = jnp.zeros((GW, 3 * GW), f32)
        w_half = w_ih_dir[:, src_half * H:(src_half + 1) * H].astype(f32)
        row_off = src_half * H
        for g in range(3):
            out = out.at[row_off:row_off + H,
                         g * GW + dst_off: g * GW + dst_off + H].set(
                w_half[g * H:(g + 1) * H, :].T)
        return out

    layers = []
    for l in range(n_layers):
        pf = raw["gru"][l]["fwd"]
        pb = raw["gru"][l]["bwd"]
        whh_cat = make_whh_cat(pf["w_hh"], pb["w_hh"])
        bhh_cat = pad_bias(pf["b_hh"], 0) + pad_bias(pb["b_hh"], H)
        bih_f = pad_bias(pf["b_ih"], 0)
        bih_b = pad_bias(pb["b_ih"], H)
        if l == 0:
            layers.append((pad_ih(pf["w_ih"], E, 0), pad_ih(pb["w_ih"], E, H),
                           bih_f, bih_b, whh_cat, bhh_cat))
        else:
            layers.append((make_m(pf["w_ih"], 0, 0), make_m(pf["w_ih"], 1, 0),
                           make_m(pb["w_ih"], 0, H), make_m(pb["w_ih"], 1, H),
                           bih_f, bih_b, whh_cat, bhh_cat))

    cfg = dict(H=H, E=E, GW=GW, VP=VP, n_layers=n_layers)
    prep = dict(emb=emb_pad, layers=tuple(layers))
    return cfg, prep


# ----------------------------------------------------------------------------
# Forward pass: one pallas_call, tiny wrapper (pad indices, slice padded outs).
# ----------------------------------------------------------------------------
def teacher_encoder_forward(prep, input_seqs, input_lengths=None, *, cfg):
    del input_lengths  # reference module ignores them (no packing)
    H, E, GW, VP, n_layers = cfg["H"], cfg["E"], cfg["GW"], cfg["VP"], cfg["n_layers"]
    T, B = input_seqs.shape
    BP = max(8, ((B + 7) // 8) * 8)

    idx = jnp.zeros((T, BP), jnp.int32).at[:, :B].set(input_seqs.astype(jnp.int32))
    idx = idx.reshape(T * BP, 1)

    flat = tuple(a for layer in prep["layers"] for a in layer)
    kernel = _make_encoder_kernel(T, BP, VP, E, H, GW, n_layers)

    vmem = pl.BlockSpec(memory_space=pltpu.MemorySpace.VMEM)
    scratch = [pltpu.VMEM((T * BP, 3 * GW), jnp.float32),
               pltpu.VMEM((T * BP, 3 * GW), jnp.float32)]
    for _ in range(n_layers):
        scratch += [pltpu.VMEM((T * BP, GW), jnp.float32),
                    pltpu.VMEM((T * BP, GW), jnp.float32)]

    out_pad, hid_pad = pl.pallas_call(
        kernel,
        out_shape=(jax.ShapeDtypeStruct((T, BP, GW), jnp.float32),
                   jax.ShapeDtypeStruct((2 * n_layers, BP, GW), jnp.float32)),
        in_specs=[vmem] * (2 + len(flat)),
        out_specs=(vmem, vmem),
        scratch_shapes=scratch,
    )(idx, prep["emb"], *flat)

    return out_pad[:, :B, :H], hid_pad[:, :B, :H]


# ----------------------------------------------------------------------------
# Pure-JAX reference (for correctness check).
# ----------------------------------------------------------------------------
def _gru_direction_ref(x, w_ih, w_hh, b_ih, b_hh):
    H = w_hh.shape[1]
    wih_t = w_ih.T
    whh_t = w_hh.T

    def step(h, xt):
        gi = xt @ wih_t + b_ih
        gh = h @ whh_t + b_hh
        r = jax.nn.sigmoid(gi[:, :H] + gh[:, :H])
        z = jax.nn.sigmoid(gi[:, H:2 * H] + gh[:, H:2 * H])
        n = jnp.tanh(gi[:, 2 * H:] + r * gh[:, 2 * H:])
        h_new = (1.0 - z) * n + z * h
        return h_new, h_new

    h0 = jnp.zeros((x.shape[1], H), jnp.float32)
    hN, outs = lax.scan(step, h0, x)
    return outs, hN


def teacher_encoder_forward_ref(params, input_seqs, n_layers, hidden_size):
    x = params["embedding"][input_seqs].astype(jnp.float32)
    hiddens = []
    for layer in range(n_layers):
        pf = params["gru"][layer]["fwd"]
        pb = params["gru"][layer]["bwd"]
        out_f, h_f = _gru_direction_ref(x, pf["w_ih"], pf["w_hh"],
                                        pf["b_ih"], pf["b_hh"])
        out_b_rev, h_b = _gru_direction_ref(x[::-1], pb["w_ih"], pb["w_hh"],
                                            pb["b_ih"], pb["b_hh"])
        out_b = out_b_rev[::-1]
        x = jnp.concatenate([out_f, out_b], axis=-1)
        hiddens.extend([h_f, h_b])
    hidden = jnp.stack(hiddens, axis=0)
    outputs = x[:, :, :hidden_size] + x[:, :, hidden_size:]
    return outputs, hidden


# ----------------------------------------------------------------------------
# Deterministic parameter initialization (shapes follow nn.Embedding / nn.GRU).
# ----------------------------------------------------------------------------
def init_params(key, input_size, embedding_size, hidden_size, n_layers):
    keys = jax.random.split(key, 1 + n_layers * 2 * 4)
    ki = iter(keys)

    emb = jax.random.normal(next(ki), (input_size, embedding_size), jnp.float32)
    emb = emb.at[0].set(0.0)  # padding_idx=0

    bound = 1.0 / jnp.sqrt(hidden_size)
    gru = []
    for layer in range(n_layers):
        d_in = embedding_size if layer == 0 else 2 * hidden_size
        layer_p = {}
        for dname in ("fwd", "bwd"):
            layer_p[dname] = {
                "w_ih": jax.random.uniform(next(ki), (3 * hidden_size, d_in),
                                           jnp.float32, -bound, bound),
                "w_hh": jax.random.uniform(next(ki), (3 * hidden_size, hidden_size),
                                           jnp.float32, -bound, bound),
                "b_ih": jax.random.uniform(next(ki), (3 * hidden_size,),
                                           jnp.float32, -bound, bound),
                "b_hh": jax.random.uniform(next(ki), (3 * hidden_size,),
                                           jnp.float32, -bound, bound),
            }
        gru.append(layer_p)
    return {"embedding": emb, "gru": gru}


if __name__ == "__main__":
    INPUT_SIZE = 50       # vocab
    EMBEDDING_SIZE = 32
    HIDDEN_SIZE = 32
    N_LAYERS = 2
    T, B = 8, 2           # seq_len, batch

    key = jax.random.PRNGKey(0)
    k_param, k_seq = jax.random.split(key)
    raw_params = init_params(k_param, INPUT_SIZE, EMBEDDING_SIZE, HIDDEN_SIZE, N_LAYERS)

    input_seqs = jax.random.randint(k_seq, (T, B), 1, INPUT_SIZE, dtype=jnp.int32)
    input_lengths = jnp.full((B,), T, jnp.int32)

    cfg, prep = prepare_params(raw_params, INPUT_SIZE, EMBEDDING_SIZE,
                               HIDDEN_SIZE, N_LAYERS)

    fwd = jax.jit(functools.partial(teacher_encoder_forward, cfg=cfg))
    outputs, hidden = fwd(prep, input_seqs, input_lengths)
    outputs = jax.block_until_ready(outputs)
    hidden = jax.block_until_ready(hidden)

    assert outputs.shape == (T, B, HIDDEN_SIZE)
    assert hidden.shape == (N_LAYERS * 2, B, HIDDEN_SIZE)

    # correctness check against a pure-JAX scan reference
    ref_out, ref_hid = teacher_encoder_forward_ref(raw_params, input_seqs,
                                                   N_LAYERS, HIDDEN_SIZE)
    assert jnp.allclose(outputs, ref_out, atol=1e-4, rtol=1e-4)
    assert jnp.allclose(hidden, ref_hid, atol=1e-4, rtol=1e-4)

    print("KERNEL_OK")
</pallas_src>

<mosaic_0001>
module attributes {stable_mosaic.version = 11 : i64} {
  func.func @kernel(%arg0: memref<64x1xi32, #tpu.memory_space<vmem>>, %arg1: memref<128x32xf32, #tpu.memory_space<vmem>>, %arg2: memref<32x384xf32, #tpu.memory_space<vmem>>, %arg3: memref<32x384xf32, #tpu.memory_space<vmem>>, %arg4: memref<1x384xf32, #tpu.memory_space<vmem>>, %arg5: memref<1x384xf32, #tpu.memory_space<vmem>>, %arg6: memref<128x384xf32, #tpu.memory_space<vmem>>, %arg7: memref<1x384xf32, #tpu.memory_space<vmem>>, %arg8: memref<128x384xf32, #tpu.memory_space<vmem>>, %arg9: memref<128x384xf32, #tpu.memory_space<vmem>>, %arg10: memref<128x384xf32, #tpu.memory_space<vmem>>, %arg11: memref<128x384xf32, #tpu.memory_space<vmem>>, %arg12: memref<1x384xf32, #tpu.memory_space<vmem>>, %arg13: memref<1x384xf32, #tpu.memory_space<vmem>>, %arg14: memref<128x384xf32, #tpu.memory_space<vmem>>, %arg15: memref<1x384xf32, #tpu.memory_space<vmem>>, %arg16: memref<8x8x128xf32, #tpu.memory_space<vmem>>, %arg17: memref<4x8x128xf32, #tpu.memory_space<vmem>>, %arg18: memref<64x384xf32, #tpu.memory_space<vmem>>, %arg19: memref<64x384xf32, #tpu.memory_space<vmem>>, %arg20: memref<64x128xf32, #tpu.memory_space<vmem>>, %arg21: memref<64x128xf32, #tpu.memory_space<vmem>>, %arg22: memref<64x128xf32, #tpu.memory_space<vmem>>, %arg23: memref<64x128xf32, #tpu.memory_space<vmem>>) attributes {dimension_semantics = [], scalar_prefetch = 0 : i64, scratch_operands = 6 : i64, tpu.core_type = #tpu.core_type<tc>} {
    %c0 = arith.constant 0 : index
    %c0_0 = arith.constant 0 : index
    %0 = vector.load %arg0[%c0, %c0_0] : memref<64x1xi32, #tpu.memory_space<vmem>>, vector<64x1xi32>
    %1 = tpu.iota {dimensions = array<i32: 1>} : vector<64x128xi32>
    %2 = vector.broadcast %0 : vector<64x1xi32> to vector<64x128xi32>
    %3 = arith.cmpi eq, %1, %2 : vector<64x128xi32>
    %4 = arith.extui %3 : vector<64x128xi1> to vector<64x128xi32>
    %5 = arith.sitofp %4 : vector<64x128xi32> to vector<64x128xf32>
    %c0_1 = arith.constant 0 : index
    %c0_2 = arith.constant 0 : index
    %6 = vector.load %arg1[%c0_1, %c0_2] : memref<128x32xf32, #tpu.memory_space<vmem>>, vector<128x32xf32>
    %cst = arith.constant dense<0.000000e+00> : vector<64x32xf32>
    %7 = tpu.matmul %5, %6, %cst {dimension_numbers = #tpu.dot_dimension_numbers<[1], [0], [0], [1], [0, 0, 1, 1], [], []>} : vector<64x128xf32>, vector<128x32xf32>, vector<64x32xf32> -> vector<64x32xf32>
    %8 = tpu.iota {dimensions = array<i32: 0>} : vector<128x128xi32>
    %9 = tpu.iota {dimensions = array<i32: 1>} : vector<128x128xi32>
    %c32_i32 = arith.constant 32 : i32
    %10 = vector.broadcast %c32_i32 : i32 to vector<128x128xi32>
    %11 = arith.addi %9, %10 : vector<128x128xi32>
    %12 = arith.cmpi eq, %8, %11 : vector<128x128xi32>
    %13 = arith.extui %12 : vector<128x128xi1> to vector<128x128xi32>
    %14 = arith.sitofp %13 : vector<128x128xi32> to vector<128x128xf32>
    %c0_3 = arith.constant 0 : index
    %c0_4 = arith.constant 0 : index
    %15 = vector.load %arg2[%c0_3, %c0_4] : memref<32x384xf32, #tpu.memory_space<vmem>>, vector<32x384xf32>
    %cst_5 = arith.constant dense<0.000000e+00> : vector<64x384xf32>
    %16 = tpu.matmul %7, %15, %cst_5 {dimension_numbers = #tpu.dot_dimension_numbers<[1], [0], [0], [1], [0, 0, 1, 1], [], []>} : vector<64x32xf32>, vector<32x384xf32>, vector<64x384xf32> -> vector<64x384xf32>
    %c0_6 = arith.constant 0 : index
    %c0_7 = arith.constant 0 : index
    %17 = vector.load %arg4[%c0_6, %c0_7] : memref<1x384xf32, #tpu.memory_space<vmem>>, vector<1x384xf32>
    %18 = vector.broadcast %17 : vector<1x384xf32> to vector<64x384xf32>
    %19 = arith.addf %16, %18 : vector<64x384xf32>
    %c0_8 = arith.constant 0 : index
    %c0_9 = arith.constant 0 : index
    %20 = vector.load %arg3[%c0_8, %c0_9] : memref<32x384xf32, #tpu.memory_space<vmem>>, vector<32x384xf32>
    %cst_10 = arith.constant dense<0.000000e+00> : vector<64x384xf32>
    %21 = tpu.matmul %7, %20, %cst_10 {dimension_numbers = #tpu.dot_dimension_numbers<[1], [0], [0], [1], [0, 0, 1, 1], [], []>} : vector<64x32xf32>, vector<32x384xf32>, vector<64x384xf32> -> vector<64x384xf32>
    %c0_11 = arith.constant 0 : index
    %c0_12 = arith.constant 0 : index
    %22 = vector.load %arg5[%c0_11, %c0_12] : memref<1x384xf32, #tpu.memory_space<vmem>>, vector<1x384xf32>
    %23 = vector.broadcast %22 : vector<1x384xf32> to vector<64x384xf32>
    %24 = arith.addf %21, %23 : vector<64x384xf32>
    %c0_13 = arith.constant 0 : index
    %c0_14 = arith.constant 0 : index
    %25 = vector.load %arg18[%c0_13, %c0_14] : memref<64x384xf32, #tpu.memory_space<vmem>>, vector<64x384xf32>
    tpu.vector_store %arg18[%c0_13, %c0_14], %19 {strides = array<i32>} : memref<64x384xf32, #tpu.memory_space<vmem>>, vector<64x384xf32>,
    %c0_15 = arith.constant 0 : index
    %c0_16 = arith.constant 0 : index
    %26 = vector.load %arg19[%c0_15, %c0_16] : memref<64x384xf32, #tpu.memory_space<vmem>>, vector<64x384xf32>
    tpu.vector_store %arg19[%c0_15, %c0_16], %24 {strides = array<i32>} : memref<64x384xf32, #tpu.memory_space<vmem>>, vector<64x384xf32>,
    %c0_17 = arith.constant 0 : index
    %c0_18 = arith.constant 0 : index
    %27 = vector.load %arg6[%c0_17, %c0_18] : memref<128x384xf32, #tpu.memory_space<vmem>>, vector<128x384xf32>
    %c0_19 = arith.constant 0 : index
    %c0_20 = arith.constant 0 : index
    %28 = vector.load %arg7[%c0_19, %c0_20] : memref<1x384xf32, #tpu.memory_space<vmem>>, vector<1x384xf32>
    %29 = vector.shape_cast %28 : vector<1x384xf32> to vector<1x384xf32>
    %30 = vector.broadcast %29 : vector<1x384xf32> to vector<8x384xf32>
    %cst_21 = arith.constant 0.000000e+00 : f32
    %31 = vector.broadcast %cst_21 : f32 to vector<8x128xf32>
    %c0_22 = arith.constant 0 : index
    %c0_23 = arith.constant 0 : index
    %32 = vector.load %arg18[%c0_22, %c0_23] : memref<64x384xf32, #tpu.memory_space<vmem>>, vector<8x384xf32>
    %c56 = arith.constant 56 : index
    %c0_24 = arith.constant 0 : index
    %33 = vector.load %arg19[%c56, %c0_24] : memref<64x384xf32, #tpu.memory_space<vmem>>, vector<8x384xf32>
    %34 = arith.addf %32, %33 : vector<8x384xf32>
    %cst_25 = arith.constant dense<0.000000e+00> : vector<8x384xf32>
    %35 = tpu.matmul %31, %27, %cst_25 {dimension_numbers = #tpu.dot_dimension_numbers<[1], [0], [0], [1], [0, 0, 1, 1], [], []>} : vector<8x128xf32>, vector<128x384xf32>, vector<8x384xf32> -> vector<8x384xf32>
    %36 = arith.addf %35, %30 : vector<8x384xf32>
    %37 = vector.extract_strided_slice %34 {offsets = [0, 0], sizes = [8, 128], strides = [1, 1]} : vector<8x384xf32> to vector<8x128xf32>
    %38 = vector.extract_strided_slice %36 {offsets = [0, 0], sizes = [8, 128], strides = [1, 1]} : vector<8x384xf32> to vector<8x128xf32>
    %39 = arith.addf %37, %38 : vector<8x128xf32>
    %40 = arith.negf %39 : vector<8x128xf32>
    %41 = math.exp %40 : vector<8x128xf32>
    %cst_26 = arith.constant 1.000000e+00 : f32
    %42 = vector.broadcast %cst_26 : f32 to vector<8x128xf32>
    %43 = arith.addf %42, %41 : vector<8x128xf32>
    %44 = arith.divf %42, %43 : vector<8x128xf32>
    %45 = vector.extract_strided_slice %34 {offsets = [0, 128], sizes = [8, 128], strides = [1, 1]} : vector<8x384xf32> to vector<8x128xf32>
    %46 = vector.extract_strided_slice %36 {offsets = [0, 128], sizes = [8, 128], strides = [1, 1]} : vector<8x384xf32> to vector<8x128xf32>
    %47 = arith.addf %45, %46 : vector<8x128xf32>
    %48 = arith.negf %47 : vector<8x128xf32>
    %49 = math.exp %48 : vector<8x128xf32>
    %cst_27 = arith.constant 1.000000e+00 : f32
    %50 = vector.broadcast %cst_27 : f32 to vector<8x128xf32>
    %51 = arith.addf %50, %49 : vector<8x128xf32>
    %52 = arith.divf %50, %51 : vector<8x128xf32>
    %53 = vector.extract_strided_slice %34 {offsets = [0, 256], sizes = [8, 128], strides = [1, 1]} : vector<8x384xf32> to vector<8x128xf32>
    %54 = vector.extract_strided_slice %36 {offsets = [0, 256], sizes = [8, 128], strides = [1, 1]} : vector<8x384xf32> to vector<8x128xf32>
    %55 = arith.mulf %44, %54 : vector<8x128xf32>
    %56 = arith.addf %53, %55 : vector<8x128xf32>
    %57 = math.tanh %56 : vector<8x128xf32>
    %cst_28 = arith.constant 1.000000e+00 : f32
    %58 = vector.broadcast %cst_28 : f32 to vector<8x128xf32>
    %59 = arith.subf %58, %52 : vector<8x128xf32>
    %60 = arith.mulf %59, %57 : vector<8x128xf32>
    %61 = arith.mulf %52, %31 : vector<8x128xf32>
    %62 = arith.addf %60, %61 : vector<8x128xf32>
    %c0_29 = arith.constant 0 : index
    %c0_30 = arith.constant 0 : index
    %63 = vector.load %arg20[%c0_29, %c0_30] : memref<64x128xf32, #tpu.memory_space<vmem>>, vector<8x128xf32>
    tpu.vector_store %arg20[%c0_29, %c0_30], %62 {strides = array<i32>} : memref<64x128xf32, #tpu.memory_space<vmem>>, vector<8x128xf32>,
    %c56_31 = arith.constant 56 : index
    %c0_32 = arith.constant 0 : index
    %64 = vector.load %arg21[%c56_31, %c0_32] : memref<64x128xf32, #tpu.memory_space<vmem>>, vector<8x128xf32>
    tpu.vector_store %arg21[%c56_31, %c0_32], %62 {strides = array<i32>} : memref<64x128xf32, #tpu.memory_space<vmem>>, vector<8x128xf32>,
    %c8 = arith.constant 8 : index
    %c0_33 = arith.constant 0 : index
    %65 = vector.load %arg18[%c8, %c0_33] : memref<64x384xf32, #tpu.memory_space<vmem>>, vector<8x384xf32>
    %c48 = arith.constant 48 : index
    %c0_34 = arith.constant 0 : index
    %66 = vector.load %arg19[%c48, %c0_34] : memref<64x384xf32, #tpu.memory_space<vmem>>, vector<8x384xf32>
    %67 = arith.addf %65, %66 : vector<8x384xf32>
    %cst_35 = arith.constant dense<0.000000e+00> : vector<8x384xf32>
    %68 = tpu.matmul %62, %27, %cst_35 {dimension_numbers = #tpu.dot_dimension_numbers<[1], [0], [0], [1], [0, 0, 1, 1], [], []>} : vector<8x128xf32>, vector<128x384xf32>, vector<8x384xf32> -> vector<8x384xf32>
    %69 = arith.addf %68, %30 : vector<8x384xf32>
    %70 = vector.extract_strided_slice %67 {offsets = [0, 0], sizes = [8, 128], strides = [1, 1]} : vector<8x384xf32> to vector<8x128xf32>
    %71 = vector.extract_strided_slice %69 {offsets = [0, 0], sizes = [8, 128], strides = [1, 1]} : vector<8x384xf32> to vector<8x128xf32>
    %72 = arith.addf %70, %71 : vector<8x128xf32>
    %73 = arith.negf %72 : vector<8x128xf32>
    %74 = math.exp %73 : vector<8x128xf32>
    %cst_36 = arith.constant 1.000000e+00 : f32
    %75 = vector.broadcast %cst_36 : f32 to vector<8x128xf32>
    %76 = arith.addf %75, %74 : vector<8x128xf32>
    %77 = arith.divf %75, %76 : vector<8x128xf32>
    %78 = vector.extract_strided_slice %67 {offsets = [0, 128], sizes = [8, 128], strides = [1, 1]} : vector<8x384xf32> to vector<8x128xf32>
    %79 = vector.extract_strided_slice %69 {offsets = [0, 128], sizes = [8, 128], strides = [1, 1]} : vector<8x384xf32> to vector<8x128xf32>
    %80 = arith.addf %78, %79 : vector<8x128xf32>
    %81 = arith.negf %80 : vector<8x128xf32>
    %82 = math.exp %81 : vector<8x128xf32>
    %cst_37 = arith.constant 1.000000e+00 : f32
    %83 = vector.broadcast %cst_37 : f32 to vector<8x128xf32>
    %84 = arith.addf %83, %82 : vector<8x128xf32>
    %85 = arith.divf %83, %84 : vector<8x128xf32>
    %86 = vector.extract_strided_slice %67 {offsets = [0, 256], sizes = [8, 128], strides = [1, 1]} : vector<8x384xf32> to vector<8x128xf32>
    %87 = vector.extract_strided_slice %69 {offsets = [0, 256], sizes = [8, 128], strides = [1, 1]} : vector<8x384xf32> to vector<8x128xf32>
    %88 = arith.mulf %77, %87 : vector<8x128xf32>
    %89 = arith.addf %86, %88 : vector<8x128xf32>
    %90 = math.tanh %89 : vector<8x128xf32>
    %cst_38 = arith.constant 1.000000e+00 : f32
    %91 = vector.broadcast %cst_38 : f32 to vector<8x128xf32>
    %92 = arith.subf %91, %85 : vector<8x128xf32>
    %93 = arith.mulf %92, %90 : vector<8x128xf32>
    %94 = arith.mulf %85, %62 : vector<8x128xf32>
    %95 = arith.addf %93, %94 : vector<8x128xf32>
    %c8_39 = arith.constant 8 : index
    %c0_40 = arith.constant 0 : index
    %96 = vector.load %arg20[%c8_39, %c0_40] : memref<64x128xf32, #tpu.memory_space<vmem>>, vector<8x128xf32>
    tpu.vector_store %arg20[%c8_39, %c0_40], %95 {strides = array<i32>} : memref<64x128xf32, #tpu.memory_space<vmem>>, vector<8x128xf32>,
    %c48_41 = arith.constant 48 : index
    %c0_42 = arith.constant 0 : index
    %97 = vector.load %arg21[%c48_41, %c0_42] : memref<64x128xf32, #tpu.memory_space<vmem>>, vector<8x128xf32>
    tpu.vector_store %arg21[%c48_41, %c0_42], %95 {strides = array<i32>} : memref<64x128xf32, #tpu.memory_space<vmem>>, vector<8x128xf32>,
    %c16 = arith.constant 16 : index
    %c0_43 = arith.constant 0 : index
    %98 = vector.load %arg18[%c16, %c0_43] : memref<64x384xf32, #tpu.memory_space<vmem>>, vector<8x384xf32>
    %c40 = arith.constant 40 : index
    %c0_44 = arith.constant 0 : index
    %99 = vector.load %arg19[%c40, %c0_44] : memref<64x384xf32, #tpu.memory_space<vmem>>, vector<8x384xf32>
    %100 = arith.addf %98, %99 : vector<8x384xf32>
    %cst_45 = arith.constant dense<0.000000e+00> : vector<8x384xf32>
    %101 = tpu.matmul %95, %27, %cst_45 {dimension_numbers = #tpu.dot_dimension_numbers<[1], [0], [0], [1], [0, 0, 1, 1], [], []>} : vector<8x128xf32>, vector<128x384xf32>, vector<8x384xf32> -> vector<8x384xf32>
    %102 = arith.addf %101, %30 : vector<8x384xf32>
    %103 = vector.extract_strided_slice %100 {offsets = [0, 0], sizes = [8, 128], strides = [1, 1]} : vector<8x384xf32> to vector<8x128xf32>
    %104 = vector.extract_strided_slice %102 {offsets = [0, 0], sizes = [8, 128], strides = [1, 1]} : vector<8x384xf32> to vector<8x128xf32>
    %105 = arith.addf %103, %104 : vector<8x128xf32>
    %106 = arith.negf %105 : vector<8x128xf32>
    %107 = math.exp %106 : vector<8x128xf32>
    %cst_46 = arith.constant 1.000000e+00 : f32
    %108 = vector.broadcast %cst_46 : f32 to vector<8x128xf32>
    %109 = arith.addf %108, %107 : vector<8x128xf32>
    %110 = arith.divf %108, %109 : vector<8x128xf32>
    %111 = vector.extract_strided_slice %100 {offsets = [0, 128], sizes = [8, 128], strides = [1, 1]} : vector<8x384xf32> to vector<8x128xf32>
    %112 = vector.extract_strided_slice %102 {offsets = [0, 128], sizes = [8, 128], strides = [1, 1]} : vector<8x384xf32> to vector<8x128xf32>
    %113 = arith.addf %111, %112 : vector<8x128xf32>
    %114 = arith.negf %113 : vector<8x128xf32>
    %115 = math.exp %114 : vector<8x128xf32>
    %cst_47 = arith.constant 1.000000e+00 : f32
    %116 = vector.broadcast %cst_47 : f32 to vector<8x128xf32>
    %117 = arith.addf %116, %115 : vector<8x128xf32>
    %118 = arith.divf %116, %117 : vector<8x128xf32>
    %119 = vector.extract_strided_slice %100 {offsets = [0, 256], sizes = [8, 128], strides = [1, 1]} : vector<8x384xf32> to vector<8x128xf32>
    %120 = vector.extract_strided_slice %102 {offsets = [0, 256], sizes = [8, 128], strides = [1, 1]} : vector<8x384xf32> to vector<8x128xf32>
    %121 = arith.mulf %110, %120 : vector<8x128xf32>
    %122 = arith.addf %119, %121 : vector<8x128xf32>
    %123 = math.tanh %122 : vector<8x128xf32>
    %cst_48 = arith.constant 1.000000e+00 : f32
    %124 = vector.broadcast %cst_48 : f32 to vector<8x128xf32>
    %125 = arith.subf %124, %118 : vector<8x128xf32>
    %126 = arith.mulf %125, %123 : vector<8x128xf32>
    %127 = arith.mulf %118, %95 : vector<8x128xf32>
    %128 = arith.addf %126, %127 : vector<8x128xf32>
    %c16_49 = arith.constant 16 : index
    %c0_50 = arith.constant 0 : index
    %129 = vector.load %arg20[%c16_49, %c0_50] : memref<64x128xf32, #tpu.memory_space<vmem>>, vector<8x128xf32>
    tpu.vector_store %arg20[%c16_49, %c0_50], %128 {strides = array<i32>} : memref<64x128xf32, #tpu.memory_space<vmem>>, vector<8x128xf32>,
    %c40_51 = arith.constant 40 : index
    %c0_52 = arith.constant 0 : index
    %130 = vector.load %arg21[%c40_51, %c0_52] : memref<64x128xf32, #tpu.memory_space<vmem>>, vector<8x128xf32>
    tpu.vector_store %arg21[%c40_51, %c0_52], %128 {strides = array<i32>} : memref<64x128xf32, #tpu.memory_space<vmem>>, vector<8x128xf32>,
    %c24 = arith.constant 24 : index
    %c0_53 = arith.constant 0 : index
    %131 = vector.load %arg18[%c24, %c0_53] : memref<64x384xf32, #tpu.memory_space<vmem>>, vector<8x384xf32>
    %c32 = arith.constant 32 : index
    %c0_54 = arith.constant 0 : index
    %132 = vector.load %arg19[%c32, %c0_54] : memref<64x384xf32, #tpu.memory_space<vmem>>, vector<8x384xf32>
    %133 = arith.addf %131, %132 : vector<8x384xf32>
    %cst_55 = arith.constant dense<0.000000e+00> : vector<8x384xf32>
    %134 = tpu.matmul %128, %27, %cst_55 {dimension_numbers = #tpu.dot_dimension_numbers<[1], [0], [0], [1], [0, 0, 1, 1], [], []>} : vector<8x128xf32>, vector<128x384xf32>, vector<8x384xf32> -> vector<8x384xf32>
    %135 = arith.addf %134, %30 : vector<8x384xf32>
    %136 = vector.extract_strided_slice %133 {offsets = [0, 0], sizes = [8, 128], strides = [1, 1]} : vector<8x384xf32> to vector<8x128xf32>
    %137 = vector.extract_strided_slice %135 {offsets = [0, 0], sizes = [8, 128], strides = [1, 1]} : vector<8x384xf32> to vector<8x128xf32>
    %138 = arith.addf %136, %137 : vector<8x128xf32>
    %139 = arith.negf %138 : vector<8x128xf32>
    %140 = math.exp %139 : vector<8x128xf32>
    %cst_56 = arith.constant 1.000000e+00 : f32
    %141 = vector.broadcast %cst_56 : f32 to vector<8x128xf32>
    %142 = arith.addf %141, %140 : vector<8x128xf32>
    %143 = arith.divf %141, %142 : vector<8x128xf32>
    %144 = vector.extract_strided_slice %133 {offsets = [0, 128], sizes = [8, 128], strides = [1, 1]} : vector<8x384xf32> to vector<8x128xf32>
    %145 = vector.extract_strided_slice %135 {offsets = [0, 128], sizes = [8, 128], strides = [1, 1]} : vector<8x384xf32> to vector<8x128xf32>
    %146 = arith.addf %144, %145 : vector<8x128xf32>
    %147 = arith.negf %146 : vector<8x128xf32>
    %148 = math.exp %147 : vector<8x128xf32>
    %cst_57 = arith.constant 1.000000e+00 : f32
    %149 = vector.broadcast %cst_57 : f32 to vector<8x128xf32>
    %150 = arith.addf %149, %148 : vector<8x128xf32>
    %151 = arith.divf %149, %150 : vector<8x128xf32>
    %152 = vector.extract_strided_slice %133 {offsets = [0, 256], sizes = [8, 128], strides = [1, 1]} : vector<8x384xf32> to vector<8x128xf32>
    %153 = vector.extract_strided_slice %135 {offsets = [0, 256], sizes = [8, 128], strides = [1, 1]} : vector<8x384xf32> to vector<8x128xf32>
    %154 = arith.mulf %143, %153 : vector<8x128xf32>
    %155 = arith.addf %152, %154 : vector<8x128xf32>
    %156 = math.tanh %155 : vector<8x128xf32>
    %cst_58 = arith.constant 1.000000e+00 : f32
    %157 = vector.broadcast %cst_58 : f32 to vector<8x128xf32>
    %158 = arith.subf %157, %151 : vector<8x128xf32>
    %159 = arith.mulf %158, %156 : vector<8x128xf32>
    %160 = arith.mulf %151, %128 : vector<8x128xf32>
    %161 = arith.addf %159, %160 : vector<8x128xf32>
    %c24_59 = arith.constant 24 : index
    %c0_60 = arith.constant 0 : index
    %162 = vector.load %arg20[%c24_59, %c0_60] : memref<64x128xf32, #tpu.memory_space<vmem>>, vector<8x128xf32>
    tpu.vector_store %arg20[%c24_59, %c0_60], %161 {strides = array<i32>} : memref<64x128xf32, #tpu.memory_space<vmem>>, vector<8x128xf32>,
    %c32_61 = arith.constant 32 : index
    %c0_62 = arith.constant 0 : index
    %163 = vector.load %arg21[%c32_61, %c0_62] : memref<64x128xf32, #tpu.memory_space<vmem>>, vector<8x128xf32>
    tpu.vector_store %arg21[%c32_61, %c0_62], %161 {strides = array<i32>} : memref<64x128xf32, #tpu.memory_space<vmem>>, vector<8x128xf32>,
    %c32_63 = arith.constant 32 : index
    %c0_64 = arith.constant 0 : index
    %164 = vector.load %arg18[%c32_63, %c0_64] : memref<64x384xf32, #tpu.memory_space<vmem>>, vector<8x384xf32>
    %c24_65 = arith.constant 24 : index
    %c0_66 = arith.constant 0 : index
    %165 = vector.load %arg19[%c24_65, %c0_66] : memref<64x384xf32, #tpu.memory_space<vmem>>, vector<8x384xf32>
    %166 = arith.addf %164, %165 : vector<8x384xf32>
    %cst_67 = arith.constant dense<0.000000e+00> : vector<8x384xf32>
    %167 = tpu.matmul %161, %27, %cst_67 {dimension_numbers = #tpu.dot_dimension_numbers<[1], [0], [0], [1], [0, 0, 1, 1], [], []>} : vector<8x128xf32>, vector<128x384xf32>, vector<8x384xf32> -> vector<8x384xf32>
    %168 = arith.addf %167, %30 : vector<8x384xf32>
    %169 = vector.extract_strided_slice %166 {offsets = [0, 0], sizes = [8, 128], strides = [1, 1]} : vector<8x384xf32> to vector<8x128xf32>
    %170 = vector.extract_strided_slice %168 {offsets = [0, 0], sizes = [8, 128], strides = [1, 1]} : vector<8x384xf32> to vector<8x128xf32>
    %171 = arith.addf %169, %170 : vector<8x128xf32>
    %172 = arith.negf %171 : vector<8x128xf32>
    %173 = math.exp %172 : vector<8x128xf32>
    %cst_68 = arith.constant 1.000000e+00 : f32
    %174 = vector.broadcast %cst_68 : f32 to vector<8x128xf32>
    %175 = arith.addf %174, %173 : vector<8x128xf32>
    %176 = arith.divf %174, %175 : vector<8x128xf32>
    %177 = vector.extract_strided_slice %166 {offsets = [0, 128], sizes = [8, 128], strides = [1, 1]} : vector<8x384xf32> to vector<8x128xf32>
    %178 = vector.extract_strided_slice %168 {offsets = [0, 128], sizes = [8, 128], strides = [1, 1]} : vector<8x384xf32> to vector<8x128xf32>
    %179 = arith.addf %177, %178 : vector<8x128xf32>
    %180 = arith.negf %179 : vector<8x128xf32>
    %181 = math.exp %180 : vector<8x128xf32>
    %cst_69 = arith.constant 1.000000e+00 : f32
    %182 = vector.broadcast %cst_69 : f32 to vector<8x128xf32>
    %183 = arith.addf %182, %181 : vector<8x128xf32>
    %184 = arith.divf %182, %183 : vector<8x128xf32>
    %185 = vector.extract_strided_slice %166 {offsets = [0, 256], sizes = [8, 128], strides = [1, 1]} : vector<8x384xf32> to vector<8x128xf32>
    %186 = vector.extract_strided_slice %168 {offsets = [0, 256], sizes = [8, 128], strides = [1, 1]} : vector<8x384xf32> to vector<8x128xf32>
    %187 = arith.mulf %176, %186 : vector<8x128xf32>
    %188 = arith.addf %185, %187 : vector<8x128xf32>
    %189 = math.tanh %188 : vector<8x128xf32>
    %cst_70 = arith.constant 1.000000e+00 : f32
    %190 = vector.broadcast %cst_70 : f32 to vector<8x128xf32>
    %191 = arith.subf %190, %184 : vector<8x128xf32>
    %192 = arith.mulf %191, %189 : vector<8x128xf32>
    %193 = arith.mulf %184, %161 : vector<8x128xf32>
    %194 = arith.addf %192, %193 : vector<8x128xf32>
    %c32_71 = arith.constant 32 : index
    %c0_72 = arith.constant 0 : index
    %195 = vector.load %arg20[%c32_71, %c0_72] : memref<64x128xf32, #tpu.memory_space<vmem>>, vector<8x128xf32>
    tpu.vector_store %arg20[%c32_71, %c0_72], %194 {strides = array<i32>} : memref<64x128xf32, #tpu.memory_space<vmem>>, vector<8x128xf32>,
    %c24_73 = arith.constant 24 : index
    %c0_74 = arith.constant 0 : index
    %196 = vector.load %arg21[%c24_73, %c0_74] : memref<64x128xf32, #tpu.memory_space<vmem>>, vector<8x128xf32>
    tpu.vector_store %arg21[%c24_73, %c0_74], %194 {strides = array<i32>} : memref<64x128xf32, #tpu.memory_space<vmem>>, vector<8x128xf32>,
    %c40_75 = arith.constant 40 : index
    %c0_76 = arith.constant 0 : index
    %197 = vector.load %arg18[%c40_75, %c0_76] : memref<64x384xf32, #tpu.memory_space<vmem>>, vector<8x384xf32>
    %c16_77 = arith.constant 16 : index
    %c0_78 = arith.constant 0 : index
    %198 = vector.load %arg19[%c16_77, %c0_78] : memref<64x384xf32, #tpu.memory_space<vmem>>, vector<8x384xf32>
    %199 = arith.addf %197, %198 : vector<8x384xf32>
    %cst_79 = arith.constant dense<0.000000e+00> : vector<8x384xf32>
    %200 = tpu.matmul %194, %27, %cst_79 {dimension_numbers = #tpu.dot_dimension_numbers<[1], [0], [0], [1], [0, 0, 1, 1], [], []>} : vector<8x128xf32>, vector<128x384xf32>, vector<8x384xf32> -> vector<8x384xf32>
    %201 = arith.addf %200, %30 : vector<8x384xf32>
    %202 = vector.extract_strided_slice %199 {offsets = [0, 0], sizes = [8, 128], strides = [1, 1]} : vector<8x384xf32> to vector<8x128xf32>
    %203 = vector.extract_strided_slice %201 {offsets = [0, 0], sizes = [8, 128], strides = [1, 1]} : vector<8x384xf32> to vector<8x128xf32>
    %204 = arith.addf %202, %203 : vector<8x128xf32>
    %205 = arith.negf %204 : vector<8x128xf32>
    %206 = math.exp %205 : vector<8x128xf32>
    %cst_80 = arith.constant 1.000000e+00 : f32
    %207 = vector.broadcast %cst_80 : f32 to vector<8x128xf32>
    %208 = arith.addf %207, %206 : vector<8x128xf32>
    %209 = arith.divf %207, %208 : vector<8x128xf32>
    %210 = vector.extract_strided_slice %199 {offsets = [0, 128], sizes = [8, 128], strides = [1, 1]} : vector<8x384xf32> to vector<8x128xf32>
    %211 = vector.extract_strided_slice %201 {offsets = [0, 128], sizes = [8, 128], strides = [1, 1]} : vector<8x384xf32> to vector<8x128xf32>
    %212 = arith.addf %210, %211 : vector<8x128xf32>
    %213 = arith.negf %212 : vector<8x128xf32>
    %214 = math.exp %213 : vector<8x128xf32>
    %cst_81 = arith.constant 1.000000e+00 : f32
    %215 = vector.broadcast %cst_81 : f32 to vector<8x128xf32>
    %216 = arith.addf %215, %214 : vector<8x128xf32>
    %217 = arith.divf %215, %216 : vector<8x128xf32>
    %218 = vector.extract_strided_slice %199 {offsets = [0, 256], sizes = [8, 128], strides = [1, 1]} : vector<8x384xf32> to vector<8x128xf32>
    %219 = vector.extract_strided_slice %201 {offsets = [0, 256], sizes = [8, 128], strides = [1, 1]} : vector<8x384xf32> to vector<8x128xf32>
    %220 = arith.mulf %209, %219 : vector<8x128xf32>
    %221 = arith.addf %218, %220 : vector<8x128xf32>
    %222 = math.tanh %221 : vector<8x128xf32>
    %cst_82 = arith.constant 1.000000e+00 : f32
    %223 = vector.broadcast %cst_82 : f32 to vector<8x128xf32>
    %224 = arith.subf %223, %217 : vector<8x128xf32>
    %225 = arith.mulf %224, %222 : vector<8x128xf32>
    %226 = arith.mulf %217, %194 : vector<8x128xf32>
    %227 = arith.addf %225, %226 : vector<8x128xf32>
    %c40_83 = arith.constant 40 : index
    %c0_84 = arith.constant 0 : index
    %228 = vector.load %arg20[%c40_83, %c0_84] : memref<64x128xf32, #tpu.memory_space<vmem>>, vector<8x128xf32>
    tpu.vector_store %arg20[%c40_83, %c0_84], %227 {strides = array<i32>} : memref<64x128xf32, #tpu.memory_space<vmem>>, vector<8x128xf32>,
    %c16_85 = arith.constant 16 : index
    %c0_86 = arith.constant 0 : index
    %229 = vector.load %arg21[%c16_85, %c0_86] : memref<64x128xf32, #tpu.memory_space<vmem>>, vector<8x128xf32>
    tpu.vector_store %arg21[%c16_85, %c0_86], %227 {strides = array<i32>} : memref<64x128xf32, #tpu.memory_space<vmem>>, vector<8x128xf32>,
    %c48_87 = arith.constant 48 : index
    %c0_88 = arith.constant 0 : index
    %230 = vector.load %arg18[%c48_87, %c0_88] : memref<64x384xf32, #tpu.memory_space<vmem>>, vector<8x384xf32>
    %c8_89 = arith.constant 8 : index
    %c0_90 = arith.constant 0 : index
    %231 = vector.load %arg19[%c8_89, %c0_90] : memref<64x384xf32, #tpu.memory_space<vmem>>, vector<8x384xf32>
    %232 = arith.addf %230, %231 : vector<8x384xf32>
    %cst_91 = arith.constant dense<0.000000e+00> : vector<8x384xf32>
    %233 = tpu.matmul %227, %27, %cst_91 {dimension_numbers = #tpu.dot_dimension_numbers<[1], [0], [0], [1], [0, 0, 1, 1], [], []>} : vector<8x128xf32>, vector<128x384xf32>, vector<8x384xf32> -> vector<8x384xf32>
    %234 = arith.addf %233, %30 : vector<8x384xf32>
    %235 = vector.extract_strided_slice %232 {offsets = [0, 0], sizes = [8, 128], strides = [1, 1]} : vector<8x384xf32> to vector<8x128xf32>
    %236 = vector.extract_strided_slice %234 {offsets = [0, 0], sizes = [8, 128], strides = [1, 1]} : vector<8x384xf32> to vector<8x128xf32>
    %237 = arith.addf %235, %236 : vector<8x128xf32>
    %238 = arith.negf %237 : vector<8x128xf32>
    %239 = math.exp %238 : vector<8x128xf32>
    %cst_92 = arith.constant 1.000000e+00 : f32
    %240 = vector.broadcast %cst_92 : f32 to vector<8x128xf32>
    %241 = arith.addf %240, %239 : vector<8x128xf32>
    %242 = arith.divf %240, %241 : vector<8x128xf32>
    %243 = vector.extract_strided_slice %232 {offsets = [0, 128], sizes = [8, 128], strides = [1, 1]} : vector<8x384xf32> to vector<8x128xf32>
    %244 = vector.extract_strided_slice %234 {offsets = [0, 128], sizes = [8, 128], strides = [1, 1]} : vector<8x384xf32> to vector<8x128xf32>
    %245 = arith.addf %243, %244 : vector<8x128xf32>
    %246 = arith.negf %245 : vector<8x128xf32>
    %247 = math.exp %246 : vector<8x128xf32>
    %cst_93 = arith.constant 1.000000e+00 : f32
    %248 = vector.broadcast %cst_93 : f32 to vector<8x128xf32>
    %249 = arith.addf %248, %247 : vector<8x128xf32>
    %250 = arith.divf %248, %249 : vector<8x128xf32>
    %251 = vector.extract_strided_slice %232 {offsets = [0, 256], sizes = [8, 128], strides = [1, 1]} : vector<8x384xf32> to vector<8x128xf32>
    %252 = vector.extract_strided_slice %234 {offsets = [0, 256], sizes = [8, 128], strides = [1, 1]} : vector<8x384xf32> to vector<8x128xf32>
    %253 = arith.mulf %242, %252 : vector<8x128xf32>
    %254 = arith.addf %251, %253 : vector<8x128xf32>
    %255 = math.tanh %254 : vector<8x128xf32>
    %cst_94 = arith.constant 1.000000e+00 : f32
    %256 = vector.broadcast %cst_94 : f32 to vector<8x128xf32>
    %257 = arith.subf %256, %250 : vector<8x128xf32>
    %258 = arith.mulf %257, %255 : vector<8x128xf32>
    %259 = arith.mulf %250, %227 : vector<8x128xf32>
    %260 = arith.addf %258, %259 : vector<8x128xf32>
    %c48_95 = arith.constant 48 : index
    %c0_96 = arith.constant 0 : index
    %261 = vector.load %arg20[%c48_95, %c0_96] : memref<64x128xf32, #tpu.memory_space<vmem>>, vector<8x128xf32>
    tpu.vector_store %arg20[%c48_95, %c0_96], %260 {strides = array<i32>} : memref<64x128xf32, #tpu.memory_space<vmem>>, vector<8x128xf32>,
    %c8_97 = arith.constant 8 : index
    %c0_98 = arith.constant 0 : index
    %262 = vector.load %arg21[%c8_97, %c0_98] : memref<64x128xf32, #tpu.memory_space<vmem>>, vector<8x128xf32>
    tpu.vector_store %arg21[%c8_97, %c0_98], %260 {strides = array<i32>} : memref<64x128xf32, #tpu.memory_space<vmem>>, vector<8x128xf32>,
    %c56_99 = arith.constant 56 : index
    %c0_100 = arith.constant 0 : index
    %263 = vector.load %arg18[%c56_99, %c0_100] : memref<64x384xf32, #tpu.memory_space<vmem>>, vector<8x384xf32>
    %c0_101 = arith.constant 0 : index
    %c0_102 = arith.constant 0 : index
    %264 = vector.load %arg19[%c0_101, %c0_102] : memref<64x384xf32, #tpu.memory_space<vmem>>, vector<8x384xf32>
    %265 = arith.addf %263, %264 : vector<8x384xf32>
    %cst_103 = arith.constant dense<0.000000e+00> : vector<8x384xf32>
    %266 = tpu.matmul %260, %27, %cst_103 {dimension_numbers = #tpu.dot_dimension_numbers<[1], [0], [0], [1], [0, 0, 1, 1], [], []>} : vector<8x128xf32>, vector<128x384xf32>, vector<8x384xf32> -> vector<8x384xf32>
    %267 = arith.addf %266, %30 : vector<8x384xf32>
    %268 = vector.extract_strided_slice %265 {offsets = [0, 0], sizes = [8, 128], strides = [1, 1]} : vector<8x384xf32> to vector<8x128xf32>
    %269 = vector.extract_strided_slice %267 {offsets = [0, 0], sizes = [8, 128], strides = [1, 1]} : vector<8x384xf32> to vector<8x128xf32>
    %270 = arith.addf %268, %269 : vector<8x128xf32>
    %271 = arith.negf %270 : vector<8x128xf32>
    %272 = math.exp %271 : vector<8x128xf32>
    %cst_104 = arith.constant 1.000000e+00 : f32
    %273 = vector.broadcast %cst_104 : f32 to vector<8x128xf32>
    %274 = arith.addf %273, %272 : vector<8x128xf32>
    %275 = arith.divf %273, %274 : vector<8x128xf32>
    %276 = vector.extract_strided_slice %265 {offsets = [0, 128], sizes = [8, 128], strides = [1, 1]} : vector<8x384xf32> to vector<8x128xf32>
    %277 = vector.extract_strided_slice %267 {offsets = [0, 128], sizes = [8, 128], strides = [1, 1]} : vector<8x384xf32> to vector<8x128xf32>
    %278 = arith.addf %276, %277 : vector<8x128xf32>
    %279 = arith.negf %278 : vector<8x128xf32>
    %280 = math.exp %279 : vector<8x128xf32>
    %cst_105 = arith.constant 1.000000e+00 : f32
    %281 = vector.broadcast %cst_105 : f32 to vector<8x128xf32>
    %282 = arith.addf %281, %280 : vector<8x128xf32>
    %283 = arith.divf %281, %282 : vector<8x128xf32>
    %284 = vector.extract_strided_slice %265 {offsets = [0, 256], sizes = [8, 128], strides = [1, 1]} : vector<8x384xf32> to vector<8x128xf32>
    %285 = vector.extract_strided_slice %267 {offsets = [0, 256], sizes = [8, 128], strides = [1, 1]} : vector<8x384xf32> to vector<8x128xf32>
    %286 = arith.mulf %275, %285 : vector<8x128xf32>
    %287 = arith.addf %284, %286 : vector<8x128xf32>
    %288 = math.tanh %287 : vector<8x128xf32>
    %cst_106 = arith.constant 1.000000e+00 : f32
    %289 = vector.broadcast %cst_106 : f32 to vector<8x128xf32>
    %290 = arith.subf %289, %283 : vector<8x128xf32>
    %291 = arith.mulf %290, %288 : vector<8x128xf32>
    %292 = arith.mulf %283, %260 : vector<8x128xf32>
    %293 = arith.addf %291, %292 : vector<8x128xf32>
    %c56_107 = arith.constant 56 : index
    %c0_108 = arith.constant 0 : index
    %294 = vector.load %arg20[%c56_107, %c0_108] : memref<64x128xf32, #tpu.memory_space<vmem>>, vector<8x128xf32>
    tpu.vector_store %arg20[%c56_107, %c0_108], %293 {strides = array<i32>} : memref<64x128xf32, #tpu.memory_space<vmem>>, vector<8x128xf32>,
    %c0_109 = arith.constant 0 : index
    %c0_110 = arith.constant 0 : index
    %295 = vector.load %arg21[%c0_109, %c0_110] : memref<64x128xf32, #tpu.memory_space<vmem>>, vector<8x128xf32>
    tpu.vector_store %arg21[%c0_109, %c0_110], %293 {strides = array<i32>} : memref<64x128xf32, #tpu.memory_space<vmem>>, vector<8x128xf32>,
    %c0_111 = arith.constant 0 : index
    %c0_112 = arith.constant 0 : index
    %296 = vector.load %arg20[%c0_111, %c0_112] : memref<64x128xf32, #tpu.memory_space<vmem>>, vector<64x128xf32>
    %c0_113 = arith.constant 0 : index
    %c0_114 = arith.constant 0 : index
    %297 = vector.load %arg21[%c0_113, %c0_114] : memref<64x128xf32, #tpu.memory_space<vmem>>, vector<64x128xf32>
    %c0_115 = arith.constant 0 : index
    %c0_116 = arith.constant 0 : index
    %298 = vector.load %arg8[%c0_115, %c0_116] : memref<128x384xf32, #tpu.memory_space<vmem>>, vector<128x384xf32>
    %cst_117 = arith.constant dense<0.000000e+00> : vector<64x384xf32>
    %299 = tpu.matmul %296, %298, %cst_117 {dimension_numbers = #tpu.dot_dimension_numbers<[1], [0], [0], [1], [0, 0, 1, 1], [], []>} : vector<64x128xf32>, vector<128x384xf32>, vector<64x384xf32> -> vector<64x384xf32>
    %c0_118 = arith.constant 0 : index
    %c0_119 = arith.constant 0 : index
    %300 = vector.load %arg9[%c0_118, %c0_119] : memref<128x384xf32, #tpu.memory_space<vmem>>, vector<128x384xf32>
    %cst_120 = arith.constant dense<0.000000e+00> : vector<64x384xf32>
    %301 = tpu.matmul %297, %300, %cst_120 {dimension_numbers = #tpu.dot_dimension_numbers<[1], [0], [0], [1], [0, 0, 1, 1], [], []>} : vector<64x128xf32>, vector<128x384xf32>, vector<64x384xf32> -> vector<64x384xf32>
    %302 = arith.addf %299, %301 : vector<64x384xf32>
    %c0_121 = arith.constant 0 : index
    %c0_122 = arith.constant 0 : index
    %303 = vector.load %arg12[%c0_121, %c0_122] : memref<1x384xf32, #tpu.memory_space<vmem>>, vector<1x384xf32>
    %304 = vector.broadcast %303 : vector<1x384xf32> to vector<64x384xf32>
    %305 = arith.addf %302, %304 : vector<64x384xf32>
    %c0_123 = arith.constant 0 : index
    %c0_124 = arith.constant 0 : index
    %306 = vector.load %arg10[%c0_123, %c0_124] : memref<128x384xf32, #tpu.memory_space<vmem>>, vector<128x384xf32>
    %cst_125 = arith.constant dense<0.000000e+00> : vector<64x384xf32>
    %307 = tpu.matmul %296, %306, %cst_125 {dimension_numbers = #tpu.dot_dimension_numbers<[1], [0], [0], [1], [0, 0, 1, 1], [], []>} : vector<64x128xf32>, vector<128x384xf32>, vector<64x384xf32> -> vector<64x384xf32>
    %c0_126 = arith.constant 0 : index
    %c0_127 = arith.constant 0 : index
    %308 = vector.load %arg11[%c0_126, %c0_127] : memref<128x384xf32, #tpu.memory_space<vmem>>, vector<128x384xf32>
    %cst_128 = arith.constant dense<0.000000e+00> : vector<64x384xf32>
    %309 = tpu.matmul %297, %308, %cst_128 {dimension_numbers = #tpu.dot_dimension_numbers<[1], [0], [0], [1], [0, 0, 1, 1], [], []>} : vector<64x128xf32>, vector<128x384xf32>, vector<64x384xf32> -> vector<64x384xf32>
    %310 = arith.addf %307, %309 : vector<64x384xf32>
    %c0_129 = arith.constant 0 : index
    %c0_130 = arith.constant 0 : index
    %311 = vector.load %arg13[%c0_129, %c0_130] : memref<1x384xf32, #tpu.memory_space<vmem>>, vector<1x384xf32>
    %312 = vector.broadcast %311 : vector<1x384xf32> to vector<64x384xf32>
    %313 = arith.addf %310, %312 : vector<64x384xf32>
    %c0_131 = arith.constant 0 : index
    %c0_132 = arith.constant 0 : index
    %314 = vector.load %arg18[%c0_131, %c0_132] : memref<64x384xf32, #tpu.memory_space<vmem>>, vector<64x384xf32>
    tpu.vector_store %arg18[%c0_131, %c0_132], %305 {strides = array<i32>} : memref<64x384xf32, #tpu.memory_space<vmem>>, vector<64x384xf32>,
    %c0_133 = arith.constant 0 : index
    %c0_134 = arith.constant 0 : index
    %315 = vector.load %arg19[%c0_133, %c0_134] : memref<64x384xf32, #tpu.memory_space<vmem>>, vector<64x384xf32>
    tpu.vector_store %arg19[%c0_133, %c0_134], %313 {strides = array<i32>} : memref<64x384xf32, #tpu.memory_space<vmem>>, vector<64x384xf32>,
    %c0_135 = arith.constant 0 : index
    %c0_136 = arith.constant 0 : index
    %316 = vector.load %arg14[%c0_135, %c0_136] : memref<128x384xf32, #tpu.memory_space<vmem>>, vector<128x384xf32>
    %c0_137 = arith.constant 0 : index
    %c0_138 = arith.constant 0 : index
    %317 = vector.load %arg15[%c0_137, %c0_138] : memref<1x384xf32, #tpu.memory_space<vmem>>, vector<1x384xf32>
    %318 = vector.shape_cast %317 : vector<1x384xf32> to vector<1x384xf32>
    %319 = vector.broadcast %318 : vector<1x384xf32> to vector<8x384xf32>
    %cst_139 = arith.constant 0.000000e+00 : f32
    %320 = vector.broadcast %cst_139 : f32 to vector<8x128xf32>
    %c0_140 = arith.constant 0 : index
    %c0_141 = arith.constant 0 : index
    %321 = vector.load %arg18[%c0_140, %c0_141] : memref<64x384xf32, #tpu.memory_space<vmem>>, vector<8x384xf32>
    %c56_142 = arith.constant 56 : index
    %c0_143 = arith.constant 0 : index
    %322 = vector.load %arg19[%c56_142, %c0_143] : memref<64x384xf32, #tpu.memory_space<vmem>>, vector<8x384xf32>
    %323 = arith.addf %321, %322 : vector<8x384xf32>
    %cst_144 = arith.constant dense<0.000000e+00> : vector<8x384xf32>
    %324 = tpu.matmul %320, %316, %cst_144 {dimension_numbers = #tpu.dot_dimension_numbers<[1], [0], [0], [1], [0, 0, 1, 1], [], []>} : vector<8x128xf32>, vector<128x384xf32>, vector<8x384xf32> -> vector<8x384xf32>
    %325 = arith.addf %324, %319 : vector<8x384xf32>
    %326 = vector.extract_strided_slice %323 {offsets = [0, 0], sizes = [8, 128], strides = [1, 1]} : vector<8x384xf32> to vector<8x128xf32>
    %327 = vector.extract_strided_slice %325 {offsets = [0, 0], sizes = [8, 128], strides = [1, 1]} : vector<8x384xf32> to vector<8x128xf32>
    %328 = arith.addf %326, %327 : vector<8x128xf32>
    %329 = arith.negf %328 : vector<8x128xf32>
    %330 = math.exp %329 : vector<8x128xf32>
    %cst_145 = arith.constant 1.000000e+00 : f32
    %331 = vector.broadcast %cst_145 : f32 to vector<8x128xf32>
    %332 = arith.addf %331, %330 : vector<8x128xf32>
    %333 = arith.divf %331, %332 : vector<8x128xf32>
    %334 = vector.extract_strided_slice %323 {offsets = [0, 128], sizes = [8, 128], strides = [1, 1]} : vector<8x384xf32> to vector<8x128xf32>
    %335 = vector.extract_strided_slice %325 {offsets = [0, 128], sizes = [8, 128], strides = [1, 1]} : vector<8x384xf32> to vector<8x128xf32>
    %336 = arith.addf %334, %335 : vector<8x128xf32>
    %337 = arith.negf %336 : vector<8x128xf32>
    %338 = math.exp %337 : vector<8x128xf32>
    %cst_146 = arith.constant 1.000000e+00 : f32
    %339 = vector.broadcast %cst_146 : f32 to vector<8x128xf32>
    %340 = arith.addf %339, %338 : vector<8x128xf32>
    %341 = arith.divf %339, %340 : vector<8x128xf32>
    %342 = vector.extract_strided_slice %323 {offsets = [0, 256], sizes = [8, 128], strides = [1, 1]} : vector<8x384xf32> to vector<8x128xf32>
    %343 = vector.extract_strided_slice %325 {offsets = [0, 256], sizes = [8, 128], strides = [1, 1]} : vector<8x384xf32> to vector<8x128xf32>
    %344 = arith.mulf %333, %343 : vector<8x128xf32>
    %345 = arith.addf %342, %344 : vector<8x128xf32>
    %346 = math.tanh %345 : vector<8x128xf32>
    %cst_147 = arith.constant 1.000000e+00 : f32
    %347 = vector.broadcast %cst_147 : f32 to vector<8x128xf32>
    %348 = arith.subf %347, %341 : vector<8x128xf32>
    %349 = arith.mulf %348, %346 : vector<8x128xf32>
    %350 = arith.mulf %341, %320 : vector<8x128xf32>
    %351 = arith.addf %349, %350 : vector<8x128xf32>
    %c0_148 = arith.constant 0 : index
    %c0_149 = arith.constant 0 : index
    %352 = vector.load %arg22[%c0_148, %c0_149] : memref<64x128xf32, #tpu.memory_space<vmem>>, vector<8x128xf32>
    tpu.vector_store %arg22[%c0_148, %c0_149], %351 {strides = array<i32>} : memref<64x128xf32, #tpu.memory_space<vmem>>, vector<8x128xf32>,
    %c56_150 = arith.constant 56 : index
    %c0_151 = arith.constant 0 : index
    %353 = vector.load %arg23[%c56_150, %c0_151] : memref<64x128xf32, #tpu.memory_space<vmem>>, vector<8x128xf32>
    tpu.vector_store %arg23[%c56_150, %c0_151], %351 {strides = array<i32>} : memref<64x128xf32, #tpu.memory_space<vmem>>, vector<8x128xf32>,
    %c8_152 = arith.constant 8 : index
    %c0_153 = arith.constant 0 : index
    %354 = vector.load %arg18[%c8_152, %c0_153] : memref<64x384xf32, #tpu.memory_space<vmem>>, vector<8x384xf32>
    %c48_154 = arith.constant 48 : index
    %c0_155 = arith.constant 0 : index
    %355 = vector.load %arg19[%c48_154, %c0_155] : memref<64x384xf32, #tpu.memory_space<vmem>>, vector<8x384xf32>
    %356 = arith.addf %354, %355 : vector<8x384xf32>
    %cst_156 = arith.constant dense<0.000000e+00> : vector<8x384xf32>
    %357 = tpu.matmul %351, %316, %cst_156 {dimension_numbers = #tpu.dot_dimension_numbers<[1], [0], [0], [1], [0, 0, 1, 1], [], []>} : vector<8x128xf32>, vector<128x384xf32>, vector<8x384xf32> -> vector<8x384xf32>
    %358 = arith.addf %357, %319 : vector<8x384xf32>
    %359 = vector.extract_strided_slice %356 {offsets = [0, 0], sizes = [8, 128], strides = [1, 1]} : vector<8x384xf32> to vector<8x128xf32>
    %360 = vector.extract_strided_slice %358 {offsets = [0, 0], sizes = [8, 128], strides = [1, 1]} : vector<8x384xf32> to vector<8x128xf32>
    %361 = arith.addf %359, %360 : vector<8x128xf32>
    %362 = arith.negf %361 : vector<8x128xf32>
    %363 = math.exp %362 : vector<8x128xf32>
    %cst_157 = arith.constant 1.000000e+00 : f32
    %364 = vector.broadcast %cst_157 : f32 to vector<8x128xf32>
    %365 = arith.addf %364, %363 : vector<8x128xf32>
    %366 = arith.divf %364, %365 : vector<8x128xf32>
    %367 = vector.extract_strided_slice %356 {offsets = [0, 128], sizes = [8, 128], strides = [1, 1]} : vector<8x384xf32> to vector<8x128xf32>
    %368 = vector.extract_strided_slice %358 {offsets = [0, 128], sizes = [8, 128], strides = [1, 1]} : vector<8x384xf32> to vector<8x128xf32>
    %369 = arith.addf %367, %368 : vector<8x128xf32>
    %370 = arith.negf %369 : vector<8x128xf32>
    %371 = math.exp %370 : vector<8x128xf32>
    %cst_158 = arith.constant 1.000000e+00 : f32
    %372 = vector.broadcast %cst_158 : f32 to vector<8x128xf32>
    %373 = arith.addf %372, %371 : vector<8x128xf32>
    %374 = arith.divf %372, %373 : vector<8x128xf32>
    %375 = vector.extract_strided_slice %356 {offsets = [0, 256], sizes = [8, 128], strides = [1, 1]} : vector<8x384xf32> to vector<8x128xf32>
    %376 = vector.extract_strided_slice %358 {offsets = [0, 256], sizes = [8, 128], strides = [1, 1]} : vector<8x384xf32> to vector<8x128xf32>
    %377 = arith.mulf %366, %376 : vector<8x128xf32>
    %378 = arith.addf %375, %377 : vector<8x128xf32>
    %379 = math.tanh %378 : vector<8x128xf32>
    %cst_159 = arith.constant 1.000000e+00 : f32
    %380 = vector.broadcast %cst_159 : f32 to vector<8x128xf32>
    %381 = arith.subf %380, %374 : vector<8x128xf32>
    %382 = arith.mulf %381, %379 : vector<8x128xf32>
    %383 = arith.mulf %374, %351 : vector<8x128xf32>
    %384 = arith.addf %382, %383 : vector<8x128xf32>
    %c8_160 = arith.constant 8 : index
    %c0_161 = arith.constant 0 : index
    %385 = vector.load %arg22[%c8_160, %c0_161] : memref<64x128xf32, #tpu.memory_space<vmem>>, vector<8x128xf32>
    tpu.vector_store %arg22[%c8_160, %c0_161], %384 {strides = array<i32>} : memref<64x128xf32, #tpu.memory_space<vmem>>, vector<8x128xf32>,
    %c48_162 = arith.constant 48 : index
    %c0_163 = arith.constant 0 : index
    %386 = vector.load %arg23[%c48_162, %c0_163] : memref<64x128xf32, #tpu.memory_space<vmem>>, vector<8x128xf32>
    tpu.vector_store %arg23[%c48_162, %c0_163], %384 {strides = array<i32>} : memref<64x128xf32, #tpu.memory_space<vmem>>, vector<8x128xf32>,
    %c16_164 = arith.constant 16 : index
    %c0_165 = arith.constant 0 : index
    %387 = vector.load %arg18[%c16_164, %c0_165] : memref<64x384xf32, #tpu.memory_space<vmem>>, vector<8x384xf32>
    %c40_166 = arith.constant 40 : index
    %c0_167 = arith.constant 0 : index
    %388 = vector.load %arg19[%c40_166, %c0_167] : memref<64x384xf32, #tpu.memory_space<vmem>>, vector<8x384xf32>
    %389 = arith.addf %387, %388 : vector<8x384xf32>
    %cst_168 = arith.constant dense<0.000000e+00> : vector<8x384xf32>
    %390 = tpu.matmul %384, %316, %cst_168 {dimension_numbers = #tpu.dot_dimension_numbers<[1], [0], [0], [1], [0, 0, 1, 1], [], []>} : vector<8x128xf32>, vector<128x384xf32>, vector<8x384xf32> -> vector<8x384xf32>
    %391 = arith.addf %390, %319 : vector<8x384xf32>
    %392 = vector.extract_strided_slice %389 {offsets = [0, 0], sizes = [8, 128], strides = [1, 1]} : vector<8x384xf32> to vector<8x128xf32>
    %393 = vector.extract_strided_slice %391 {offsets = [0, 0], sizes = [8, 128], strides = [1, 1]} : vector<8x384xf32> to vector<8x128xf32>
    %394 = arith.addf %392, %393 : vector<8x128xf32>
    %395 = arith.negf %394 : vector<8x128xf32>
    %396 = math.exp %395 : vector<8x128xf32>
    %cst_169 = arith.constant 1.000000e+00 : f32
    %397 = vector.broadcast %cst_169 : f32 to vector<8x128xf32>
    %398 = arith.addf %397, %396 : vector<8x128xf32>
    %399 = arith.divf %397, %398 : vector<8x128xf32>
    %400 = vector.extract_strided_slice %389 {offsets = [0, 128], sizes = [8, 128], strides = [1, 1]} : vector<8x384xf32> to vector<8x128xf32>
    %401 = vector.extract_strided_slice %391 {offsets = [0, 128], sizes = [8, 128], strides = [1, 1]} : vector<8x384xf32> to vector<8x128xf32>
    %402 = arith.addf %400, %401 : vector<8x128xf32>
    %403 = arith.negf %402 : vector<8x128xf32>
    %404 = math.exp %403 : vector<8x128xf32>
    %cst_170 = arith.constant 1.000000e+00 : f32
    %405 = vector.broadcast %cst_170 : f32 to vector<8x128xf32>
    %406 = arith.addf %405, %404 : vector<8x128xf32>
    %407 = arith.divf %405, %406 : vector<8x128xf32>
    %408 = vector.extract_strided_slice %389 {offsets = [0, 256], sizes = [8, 128], strides = [1, 1]} : vector<8x384xf32> to vector<8x128xf32>
    %409 = vector.extract_strided_slice %391 {offsets = [0, 256], sizes = [8, 128], strides = [1, 1]} : vector<8x384xf32> to vector<8x128xf32>
    %410 = arith.mulf %399, %409 : vector<8x128xf32>
    %411 = arith.addf %408, %410 : vector<8x128xf32>
    %412 = math.tanh %411 : vector<8x128xf32>
    %cst_171 = arith.constant 1.000000e+00 : f32
    %413 = vector.broadcast %cst_171 : f32 to vector<8x128xf32>
    %414 = arith.subf %413, %407 : vector<8x128xf32>
    %415 = arith.mulf %414, %412 : vector<8x128xf32>
    %416 = arith.mulf %407, %384 : vector<8x128xf32>
    %417 = arith.addf %415, %416 : vector<8x128xf32>
    %c16_172 = arith.constant 16 : index
    %c0_173 = arith.constant 0 : index
    %418 = vector.load %arg22[%c16_172, %c0_173] : memref<64x128xf32, #tpu.memory_space<vmem>>, vector<8x128xf32>
    tpu.vector_store %arg22[%c16_172, %c0_173], %417 {strides = array<i32>} : memref<64x128xf32, #tpu.memory_space<vmem>>, vector<8x128xf32>,
    %c40_174 = arith.constant 40 : index
    %c0_175 = arith.constant 0 : index
    %419 = vector.load %arg23[%c40_174, %c0_175] : memref<64x128xf32, #tpu.memory_space<vmem>>, vector<8x128xf32>
    tpu.vector_store %arg23[%c40_174, %c0_175], %417 {strides = array<i32>} : memref<64x128xf32, #tpu.memory_space<vmem>>, vector<8x128xf32>,
    %c24_176 = arith.constant 24 : index
    %c0_177 = arith.constant 0 : index
    %420 = vector.load %arg18[%c24_176, %c0_177] : memref<64x384xf32, #tpu.memory_space<vmem>>, vector<8x384xf32>
    %c32_178 = arith.constant 32 : index
    %c0_179 = arith.constant 0 : index
    %421 = vector.load %arg19[%c32_178, %c0_179] : memref<64x384xf32, #tpu.memory_space<vmem>>, vector<8x384xf32>
    %422 = arith.addf %420, %421 : vector<8x384xf32>
    %cst_180 = arith.constant dense<0.000000e+00> : vector<8x384xf32>
    %423 = tpu.matmul %417, %316, %cst_180 {dimension_numbers = #tpu.dot_dimension_numbers<[1], [0], [0], [1], [0, 0, 1, 1], [], []>} : vector<8x128xf32>, vector<128x384xf32>, vector<8x384xf32> -> vector<8x384xf32>
    %424 = arith.addf %423, %319 : vector<8x384xf32>
    %425 = vector.extract_strided_slice %422 {offsets = [0, 0], sizes = [8, 128], strides = [1, 1]} : vector<8x384xf32> to vector<8x128xf32>
    %426 = vector.extract_strided_slice %424 {offsets = [0, 0], sizes = [8, 128], strides = [1, 1]} : vector<8x384xf32> to vector<8x128xf32>
    %427 = arith.addf %425, %426 : vector<8x128xf32>
    %428 = arith.negf %427 : vector<8x128xf32>
    %429 = math.exp %428 : vector<8x128xf32>
    %cst_181 = arith.constant 1.000000e+00 : f32
    %430 = vector.broadcast %cst_181 : f32 to vector<8x128xf32>
    %431 = arith.addf %430, %429 : vector<8x128xf32>
    %432 = arith.divf %430, %431 : vector<8x128xf32>
    %433 = vector.extract_strided_slice %422 {offsets = [0, 128], sizes = [8, 128], strides = [1, 1]} : vector<8x384xf32> to vector<8x128xf32>
    %434 = vector.extract_strided_slice %424 {offsets = [0, 128], sizes = [8, 128], strides = [1, 1]} : vector<8x384xf32> to vector<8x128xf32>
    %435 = arith.addf %433, %434 : vector<8x128xf32>
    %436 = arith.negf %435 : vector<8x128xf32>
    %437 = math.exp %436 : vector<8x128xf32>
    %cst_182 = arith.constant 1.000000e+00 : f32
    %438 = vector.broadcast %cst_182 : f32 to vector<8x128xf32>
    %439 = arith.addf %438, %437 : vector<8x128xf32>
    %440 = arith.divf %438, %439 : vector<8x128xf32>
    %441 = vector.extract_strided_slice %422 {offsets = [0, 256], sizes = [8, 128], strides = [1, 1]} : vector<8x384xf32> to vector<8x128xf32>
    %442 = vector.extract_strided_slice %424 {offsets = [0, 256], sizes = [8, 128], strides = [1, 1]} : vector<8x384xf32> to vector<8x128xf32>
    %443 = arith.mulf %432, %442 : vector<8x128xf32>
    %444 = arith.addf %441, %443 : vector<8x128xf32>
    %445 = math.tanh %444 : vector<8x128xf32>
    %cst_183 = arith.constant 1.000000e+00 : f32
    %446 = vector.broadcast %cst_183 : f32 to vector<8x128xf32>
    %447 = arith.subf %446, %440 : vector<8x128xf32>
    %448 = arith.mulf %447, %445 : vector<8x128xf32>
    %449 = arith.mulf %440, %417 : vector<8x128xf32>
    %450 = arith.addf %448, %449 : vector<8x128xf32>
    %c24_184 = arith.constant 24 : index
    %c0_185 = arith.constant 0 : index
    %451 = vector.load %arg22[%c24_184, %c0_185] : memref<64x128xf32, #tpu.memory_space<vmem>>, vector<8x128xf32>
    tpu.vector_store %arg22[%c24_184, %c0_185], %450 {strides = array<i32>} : memref<64x128xf32, #tpu.memory_space<vmem>>, vector<8x128xf32>,
    %c32_186 = arith.constant 32 : index
    %c0_187 = arith.constant 0 : index
    %452 = vector.load %arg23[%c32_186, %c0_187] : memref<64x128xf32, #tpu.memory_space<vmem>>, vector<8x128xf32>
    tpu.vector_store %arg23[%c32_186, %c0_187], %450 {strides = array<i32>} : memref<64x128xf32, #tpu.memory_space<vmem>>, vector<8x128xf32>,
    %c32_188 = arith.constant 32 : index
    %c0_189 = arith.constant 0 : index
    %453 = vector.load %arg18[%c32_188, %c0_189] : memref<64x384xf32, #tpu.memory_space<vmem>>, vector<8x384xf32>
    %c24_190 = arith.constant 24 : index
    %c0_191 = arith.constant 0 : index
    %454 = vector.load %arg19[%c24_190, %c0_191] : memref<64x384xf32, #tpu.memory_space<vmem>>, vector<8x384xf32>
    %455 = arith.addf %453, %454 : vector<8x384xf32>
    %cst_192 = arith.constant dense<0.000000e+00> : vector<8x384xf32>
    %456 = tpu.matmul %450, %316, %cst_192 {dimension_numbers = #tpu.dot_dimension_numbers<[1], [0], [0], [1], [0, 0, 1, 1], [], []>} : vector<8x128xf32>, vector<128x384xf32>, vector<8x384xf32> -> vector<8x384xf32>
    %457 = arith.addf %456, %319 : vector<8x384xf32>
    %458 = vector.extract_strided_slice %455 {offsets = [0, 0], sizes = [8, 128], strides = [1, 1]} : vector<8x384xf32> to vector<8x128xf32>
    %459 = vector.extract_strided_slice %457 {offsets = [0, 0], sizes = [8, 128], strides = [1, 1]} : vector<8x384xf32> to vector<8x128xf32>
    %460 = arith.addf %458, %459 : vector<8x128xf32>
    %461 = arith.negf %460 : vector<8x128xf32>
    %462 = math.exp %461 : vector<8x128xf32>
    %cst_193 = arith.constant 1.000000e+00 : f32
    %463 = vector.broadcast %cst_193 : f32 to vector<8x128xf32>
    %464 = arith.addf %463, %462 : vector<8x128xf32>
    %465 = arith.divf %463, %464 : vector<8x128xf32>
    %466 = vector.extract_strided_slice %455 {offsets = [0, 128], sizes = [8, 128], strides = [1, 1]} : vector<8x384xf32> to vector<8x128xf32>
    %467 = vector.extract_strided_slice %457 {offsets = [0, 128], sizes = [8, 128], strides = [1, 1]} : vector<8x384xf32> to vector<8x128xf32>
    %468 = arith.addf %466, %467 : vector<8x128xf32>
    %469 = arith.negf %468 : vector<8x128xf32>
    %470 = math.exp %469 : vector<8x128xf32>
    %cst_194 = arith.constant 1.000000e+00 : f32
    %471 = vector.broadcast %cst_194 : f32 to vector<8x128xf32>
    %472 = arith.addf %471, %470 : vector<8x128xf32>
    %473 = arith.divf %471, %472 : vector<8x128xf32>
    %474 = vector.extract_strided_slice %455 {offsets = [0, 256], sizes = [8, 128], strides = [1, 1]} : vector<8x384xf32> to vector<8x128xf32>
    %475 = vector.extract_strided_slice %457 {offsets = [0, 256], sizes = [8, 128], strides = [1, 1]} : vector<8x384xf32> to vector<8x128xf32>
    %476 = arith.mulf %465, %475 : vector<8x128xf32>
    %477 = arith.addf %474, %476 : vector<8x128xf32>
    %478 = math.tanh %477 : vector<8x128xf32>
    %cst_195 = arith.constant 1.000000e+00 : f32
    %479 = vector.broadcast %cst_195 : f32 to vector<8x128xf32>
    %480 = arith.subf %479, %473 : vector<8x128xf32>
    %481 = arith.mulf %480, %478 : vector<8x128xf32>
    %482 = arith.mulf %473, %450 : vector<8x128xf32>
    %483 = arith.addf %481, %482 : vector<8x128xf32>
    %c32_196 = arith.constant 32 : index
    %c0_197 = arith.constant 0 : index
    %484 = vector.load %arg22[%c32_196, %c0_197] : memref<64x128xf32, #tpu.memory_space<vmem>>, vector<8x128xf32>
    tpu.vector_store %arg22[%c32_196, %c0_197], %483 {strides = array<i32>} : memref<64x128xf32, #tpu.memory_space<vmem>>, vector<8x128xf32>,
    %c24_198 = arith.constant 24 : index
    %c0_199 = arith.constant 0 : index
    %485 = vector.load %arg23[%c24_198, %c0_199] : memref<64x128xf32, #tpu.memory_space<vmem>>, vector<8x128xf32>
    tpu.vector_store %arg23[%c24_198, %c0_199], %483 {strides = array<i32>} : memref<64x128xf32, #tpu.memory_space<vmem>>, vector<8x128xf32>,
    %c40_200 = arith.constant 40 : index
    %c0_201 = arith.constant 0 : index
    %486 = vector.load %arg18[%c40_200, %c0_201] : memref<64x384xf32, #tpu.memory_space<vmem>>, vector<8x384xf32>
    %c16_202 = arith.constant 16 : index
    %c0_203 = arith.constant 0 : index
    %487 = vector.load %arg19[%c16_202, %c0_203] : memref<64x384xf32, #tpu.memory_space<vmem>>, vector<8x384xf32>
    %488 = arith.addf %486, %487 : vector<8x384xf32>
    %cst_204 = arith.constant dense<0.000000e+00> : vector<8x384xf32>
    %489 = tpu.matmul %483, %316, %cst_204 {dimension_numbers = #tpu.dot_dimension_numbers<[1], [0], [0], [1], [0, 0, 1, 1], [], []>} : vector<8x128xf32>, vector<128x384xf32>, vector<8x384xf32> -> vector<8x384xf32>
    %490 = arith.addf %489, %319 : vector<8x384xf32>
    %491 = vector.extract_strided_slice %488 {offsets = [0, 0], sizes = [8, 128], strides = [1, 1]} : vector<8x384xf32> to vector<8x128xf32>
    %492 = vector.extract_strided_slice %490 {offsets = [0, 0], sizes = [8, 128], strides = [1, 1]} : vector<8x384xf32> to vector<8x128xf32>
    %493 = arith.addf %491, %492 : vector<8x128xf32>
    %494 = arith.negf %493 : vector<8x128xf32>
    %495 = math.exp %494 : vector<8x128xf32>
    %cst_205 = arith.constant 1.000000e+00 : f32
    %496 = vector.broadcast %cst_205 : f32 to vector<8x128xf32>
    %497 = arith.addf %496, %495 : vector<8x128xf32>
    %498 = arith.divf %496, %497 : vector<8x128xf32>
    %499 = vector.extract_strided_slice %488 {offsets = [0, 128], sizes = [8, 128], strides = [1, 1]} : vector<8x384xf32> to vector<8x128xf32>
    %500 = vector.extract_strided_slice %490 {offsets = [0, 128], sizes = [8, 128], strides = [1, 1]} : vector<8x384xf32> to vector<8x128xf32>
    %501 = arith.addf %499, %500 : vector<8x128xf32>
    %502 = arith.negf %501 : vector<8x128xf32>
    %503 = math.exp %502 : vector<8x128xf32>
    %cst_206 = arith.constant 1.000000e+00 : f32
    %504 = vector.broadcast %cst_206 : f32 to vector<8x128xf32>
    %505 = arith.addf %504, %503 : vector<8x128xf32>
    %506 = arith.divf %504, %505 : vector<8x128xf32>
    %507 = vector.extract_strided_slice %488 {offsets = [0, 256], sizes = [8, 128], strides = [1, 1]} : vector<8x384xf32> to vector<8x128xf32>
    %508 = vector.extract_strided_slice %490 {offsets = [0, 256], sizes = [8, 128], strides = [1, 1]} : vector<8x384xf32> to vector<8x128xf32>
    %509 = arith.mulf %498, %508 : vector<8x128xf32>
    %510 = arith.addf %507, %509 : vector<8x128xf32>
    %511 = math.tanh %510 : vector<8x128xf32>
    %cst_207 = arith.constant 1.000000e+00 : f32
    %512 = vector.broadcast %cst_207 : f32 to vector<8x128xf32>
    %513 = arith.subf %512, %506 : vector<8x128xf32>
    %514 = arith.mulf %513, %511 : vector<8x128xf32>
    %515 = arith.mulf %506, %483 : vector<8x128xf32>
    %516 = arith.addf %514, %515 : vector<8x128xf32>
    %c40_208 = arith.constant 40 : index
    %c0_209 = arith.constant 0 : index
    %517 = vector.load %arg22[%c40_208, %c0_209] : memref<64x128xf32, #tpu.memory_space<vmem>>, vector<8x128xf32>
    tpu.vector_store %arg22[%c40_208, %c0_209], %516 {strides = array<i32>} : memref<64x128xf32, #tpu.memory_space<vmem>>, vector<8x128xf32>,
    %c16_210 = arith.constant 16 : index
    %c0_211 = arith.constant 0 : index
    %518 = vector.load %arg23[%c16_210, %c0_211] : memref<64x128xf32, #tpu.memory_space<vmem>>, vector<8x128xf32>
    tpu.vector_store %arg23[%c16_210, %c0_211], %516 {strides = array<i32>} : memref<64x128xf32, #tpu.memory_space<vmem>>, vector<8x128xf32>,
    %c48_212 = arith.constant 48 : index
    %c0_213 = arith.constant 0 : index
    %519 = vector.load %arg18[%c48_212, %c0_213] : memref<64x384xf32, #tpu.memory_space<vmem>>, vector<8x384xf32>
    %c8_214 = arith.constant 8 : index
    %c0_215 = arith.constant 0 : index
    %520 = vector.load %arg19[%c8_214, %c0_215] : memref<64x384xf32, #tpu.memory_space<vmem>>, vector<8x384xf32>
    %521 = arith.addf %519, %520 : vector<8x384xf32>
    %cst_216 = arith.constant dense<0.000000e+00> : vector<8x384xf32>
    %522 = tpu.matmul %516, %316, %cst_216 {dimension_numbers = #tpu.dot_dimension_numbers<[1], [0], [0], [1], [0, 0, 1, 1], [], []>} : vector<8x128xf32>, vector<128x384xf32>, vector<8x384xf32> -> vector<8x384xf32>
    %523 = arith.addf %522, %319 : vector<8x384xf32>
    %524 = vector.extract_strided_slice %521 {offsets = [0, 0], sizes = [8, 128], strides = [1, 1]} : vector<8x384xf32> to vector<8x128xf32>
    %525 = vector.extract_strided_slice %523 {offsets = [0, 0], sizes = [8, 128], strides = [1, 1]} : vector<8x384xf32> to vector<8x128xf32>
    %526 = arith.addf %524, %525 : vector<8x128xf32>
    %527 = arith.negf %526 : vector<8x128xf32>
    %528 = math.exp %527 : vector<8x128xf32>
    %cst_217 = arith.constant 1.000000e+00 : f32
    %529 = vector.broadcast %cst_217 : f32 to vector<8x128xf32>
    %530 = arith.addf %529, %528 : vector<8x128xf32>
    %531 = arith.divf %529, %530 : vector<8x128xf32>
    %532 = vector.extract_strided_slice %521 {offsets = [0, 128], sizes = [8, 128], strides = [1, 1]} : vector<8x384xf32> to vector<8x128xf32>
    %533 = vector.extract_strided_slice %523 {offsets = [0, 128], sizes = [8, 128], strides = [1, 1]} : vector<8x384xf32> to vector<8x128xf32>
    %534 = arith.addf %532, %533 : vector<8x128xf32>
    %535 = arith.negf %534 : vector<8x128xf32>
    %536 = math.exp %535 : vector<8x128xf32>
    %cst_218 = arith.constant 1.000000e+00 : f32
    %537 = vector.broadcast %cst_218 : f32 to vector<8x128xf32>
    %538 = arith.addf %537, %536 : vector<8x128xf32>
    %539 = arith.divf %537, %538 : vector<8x128xf32>
    %540 = vector.extract_strided_slice %521 {offsets = [0, 256], sizes = [8, 128], strides = [1, 1]} : vector<8x384xf32> to vector<8x128xf32>
    %541 = vector.extract_strided_slice %523 {offsets = [0, 256], sizes = [8, 128], strides = [1, 1]} : vector<8x384xf32> to vector<8x128xf32>
    %542 = arith.mulf %531, %541 : vector<8x128xf32>
    %543 = arith.addf %540, %542 : vector<8x128xf32>
    %544 = math.tanh %543 : vector<8x128xf32>
    %cst_219 = arith.constant 1.000000e+00 : f32
    %545 = vector.broadcast %cst_219 : f32 to vector<8x128xf32>
    %546 = arith.subf %545, %539 : vector<8x128xf32>
    %547 = arith.mulf %546, %544 : vector<8x128xf32>
    %548 = arith.mulf %539, %516 : vector<8x128xf32>
    %549 = arith.addf %547, %548 : vector<8x128xf32>
    %c48_220 = arith.constant 48 : index
    %c0_221 = arith.constant 0 : index
    %550 = vector.load %arg22[%c48_220, %c0_221] : memref<64x128xf32, #tpu.memory_space<vmem>>, vector<8x128xf32>
    tpu.vector_store %arg22[%c48_220, %c0_221], %549 {strides = array<i32>} : memref<64x128xf32, #tpu.memory_space<vmem>>, vector<8x128xf32>,
    %c8_222 = arith.constant 8 : index
    %c0_223 = arith.constant 0 : index
    %551 = vector.load %arg23[%c8_222, %c0_223] : memref<64x128xf32, #tpu.memory_space<vmem>>, vector<8x128xf32>
    tpu.vector_store %arg23[%c8_222, %c0_223], %549 {strides = array<i32>} : memref<64x128xf32, #tpu.memory_space<vmem>>, vector<8x128xf32>,
    %c56_224 = arith.constant 56 : index
    %c0_225 = arith.constant 0 : index
    %552 = vector.load %arg18[%c56_224, %c0_225] : memref<64x384xf32, #tpu.memory_space<vmem>>, vector<8x384xf32>
    %c0_226 = arith.constant 0 : index
    %c0_227 = arith.constant 0 : index
    %553 = vector.load %arg19[%c0_226, %c0_227] : memref<64x384xf32, #tpu.memory_space<vmem>>, vector<8x384xf32>
    %554 = arith.addf %552, %553 : vector<8x384xf32>
    %cst_228 = arith.constant dense<0.000000e+00> : vector<8x384xf32>
    %555 = tpu.matmul %549, %316, %cst_228 {dimension_numbers = #tpu.dot_dimension_numbers<[1], [0], [0], [1], [0, 0, 1, 1], [], []>} : vector<8x128xf32>, vector<128x384xf32>, vector<8x384xf32> -> vector<8x384xf32>
    %556 = arith.addf %555, %319 : vector<8x384xf32>
    %557 = vector.extract_strided_slice %554 {offsets = [0, 0], sizes = [8, 128], strides = [1, 1]} : vector<8x384xf32> to vector<8x128xf32>
    %558 = vector.extract_strided_slice %556 {offsets = [0, 0], sizes = [8, 128], strides = [1, 1]} : vector<8x384xf32> to vector<8x128xf32>
    %559 = arith.addf %557, %558 : vector<8x128xf32>
    %560 = arith.negf %559 : vector<8x128xf32>
    %561 = math.exp %560 : vector<8x128xf32>
    %cst_229 = arith.constant 1.000000e+00 : f32
    %562 = vector.broadcast %cst_229 : f32 to vector<8x128xf32>
    %563 = arith.addf %562, %561 : vector<8x128xf32>
    %564 = arith.divf %562, %563 : vector<8x128xf32>
    %565 = vector.extract_strided_slice %554 {offsets = [0, 128], sizes = [8, 128], strides = [1, 1]} : vector<8x384xf32> to vector<8x128xf32>
    %566 = vector.extract_strided_slice %556 {offsets = [0, 128], sizes = [8, 128], strides = [1, 1]} : vector<8x384xf32> to vector<8x128xf32>
    %567 = arith.addf %565, %566 : vector<8x128xf32>
    %568 = arith.negf %567 : vector<8x128xf32>
    %569 = math.exp %568 : vector<8x128xf32>
    %cst_230 = arith.constant 1.000000e+00 : f32
    %570 = vector.broadcast %cst_230 : f32 to vector<8x128xf32>
    %571 = arith.addf %570, %569 : vector<8x128xf32>
    %572 = arith.divf %570, %571 : vector<8x128xf32>
    %573 = vector.extract_strided_slice %554 {offsets = [0, 256], sizes = [8, 128], strides = [1, 1]} : vector<8x384xf32> to vector<8x128xf32>
    %574 = vector.extract_strided_slice %556 {offsets = [0, 256], sizes = [8, 128], strides = [1, 1]} : vector<8x384xf32> to vector<8x128xf32>
    %575 = arith.mulf %564, %574 : vector<8x128xf32>
    %576 = arith.addf %573, %575 : vector<8x128xf32>
    %577 = math.tanh %576 : vector<8x128xf32>
    %cst_231 = arith.constant 1.000000e+00 : f32
    %578 = vector.broadcast %cst_231 : f32 to vector<8x128xf32>
    %579 = arith.subf %578, %572 : vector<8x128xf32>
    %580 = arith.mulf %579, %577 : vector<8x128xf32>
    %581 = arith.mulf %572, %549 : vector<8x128xf32>
    %582 = arith.addf %580, %581 : vector<8x128xf32>
    %c56_232 = arith.constant 56 : index
    %c0_233 = arith.constant 0 : index
    %583 = vector.load %arg22[%c56_232, %c0_233] : memref<64x128xf32, #tpu.memory_space<vmem>>, vector<8x128xf32>
    tpu.vector_store %arg22[%c56_232, %c0_233], %582 {strides = array<i32>} : memref<64x128xf32, #tpu.memory_space<vmem>>, vector<8x128xf32>,
    %c0_234 = arith.constant 0 : index
    %c0_235 = arith.constant 0 : index
    %584 = vector.load %arg23[%c0_234, %c0_235] : memref<64x128xf32, #tpu.memory_space<vmem>>, vector<8x128xf32>
    tpu.vector_store %arg23[%c0_234, %c0_235], %582 {strides = array<i32>} : memref<64x128xf32, #tpu.memory_space<vmem>>, vector<8x128xf32>,
    %c0_236 = arith.constant 0 : index
    %c0_237 = arith.constant 0 : index
    %585 = vector.load %arg22[%c0_236, %c0_237] : memref<64x128xf32, #tpu.memory_space<vmem>>, vector<64x128xf32>
    %c0_238 = arith.constant 0 : index
    %c0_239 = arith.constant 0 : index
    %586 = vector.load %arg23[%c0_238, %c0_239] : memref<64x128xf32, #tpu.memory_space<vmem>>, vector<64x128xf32>
    %cst_240 = arith.constant dense<0.000000e+00> : vector<64x128xf32>
    %587 = tpu.matmul %586, %14, %cst_240 {dimension_numbers = #tpu.dot_dimension_numbers<[1], [0], [0], [1], [0, 0, 1, 1], [], []>} : vector<64x128xf32>, vector<128x128xf32>, vector<64x128xf32> -> vector<64x128xf32>
    %588 = arith.addf %585, %587 : vector<64x128xf32>
    %589 = vector.extract_strided_slice %588 {offsets = [0, 0], sizes = [8, 128], strides = [1, 1]} : vector<64x128xf32> to vector<8x128xf32>
    %c0_241 = arith.constant 0 : index
    %c0_242 = arith.constant 0 : index
    %c0_243 = arith.constant 0 : index
    %590 = vector.load %arg16[%c0_241, %c0_242, %c0_243] : memref<8x8x128xf32, #tpu.memory_space<vmem>>, vector<1x8x128xf32>
    %591 = vector.shape_cast %590 : vector<1x8x128xf32> to vector<8x128xf32>
    %592 = vector.shape_cast %589 : vector<8x128xf32> to vector<1x8x128xf32>
    tpu.vector_store %arg16[%c0_241, %c0_242, %c0_243], %592 {strides = array<i32>} : memref<8x8x128xf32, #tpu.memory_space<vmem>>, vector<1x8x128xf32>,
    %593 = vector.extract_strided_slice %588 {offsets = [8, 0], sizes = [8, 128], strides = [1, 1]} : vector<64x128xf32> to vector<8x128xf32>
    %c1 = arith.constant 1 : index
    %c0_244 = arith.constant 0 : index
    %c0_245 = arith.constant 0 : index
    %594 = vector.load %arg16[%c1, %c0_244, %c0_245] : memref<8x8x128xf32, #tpu.memory_space<vmem>>, vector<1x8x128xf32>
    %595 = vector.shape_cast %594 : vector<1x8x128xf32> to vector<8x128xf32>
    %596 = vector.shape_cast %593 : vector<8x128xf32> to vector<1x8x128xf32>
    tpu.vector_store %arg16[%c1, %c0_244, %c0_245], %596 {strides = array<i32>} : memref<8x8x128xf32, #tpu.memory_space<vmem>>, vector<1x8x128xf32>,
    %597 = vector.extract_strided_slice %588 {offsets = [16, 0], sizes = [8, 128], strides = [1, 1]} : vector<64x128xf32> to vector<8x128xf32>
    %c2 = arith.constant 2 : index
    %c0_246 = arith.constant 0 : index
    %c0_247 = arith.constant 0 : index
    %598 = vector.load %arg16[%c2, %c0_246, %c0_247] : memref<8x8x128xf32, #tpu.memory_space<vmem>>, vector<1x8x128xf32>
    %599 = vector.shape_cast %598 : vector<1x8x128xf32> to vector<8x128xf32>
    %600 = vector.shape_cast %597 : vector<8x128xf32> to vector<1x8x128xf32>
    tpu.vector_store %arg16[%c2, %c0_246, %c0_247], %600 {strides = array<i32>} : memref<8x8x128xf32, #tpu.memory_space<vmem>>, vector<1x8x128xf32>,
    %601 = vector.extract_strided_slice %588 {offsets = [24, 0], sizes = [8, 128], strides = [1, 1]} : vector<64x128xf32> to vector<8x128xf32>
    %c3 = arith.constant 3 : index
    %c0_248 = arith.constant 0 : index
    %c0_249 = arith.constant 0 : index
    %602 = vector.load %arg16[%c3, %c0_248, %c0_249] : memref<8x8x128xf32, #tpu.memory_space<vmem>>, vector<1x8x128xf32>
    %603 = vector.shape_cast %602 : vector<1x8x128xf32> to vector<8x128xf32>
    %604 = vector.shape_cast %601 : vector<8x128xf32> to vector<1x8x128xf32>
    tpu.vector_store %arg16[%c3, %c0_248, %c0_249], %604 {strides = array<i32>} : memref<8x8x128xf32, #tpu.memory_space<vmem>>, vector<1x8x128xf32>,
    %605 = vector.extract_strided_slice %588 {offsets = [32, 0], sizes = [8, 128], strides = [1, 1]} : vector<64x128xf32> to vector<8x128xf32>
    %c4 = arith.constant 4 : index
    %c0_250 = arith.constant 0 : index
    %c0_251 = arith.constant 0 : index
    %606 = vector.load %arg16[%c4, %c0_250, %c0_251] : memref<8x8x128xf32, #tpu.memory_space<vmem>>, vector<1x8x128xf32>
    %607 = vector.shape_cast %606 : vector<1x8x128xf32> to vector<8x128xf32>
    %608 = vector.shape_cast %605 : vector<8x128xf32> to vector<1x8x128xf32>
    tpu.vector_store %arg16[%c4, %c0_250, %c0_251], %608 {strides = array<i32>} : memref<8x8x128xf32, #tpu.memory_space<vmem>>, vector<1x8x128xf32>,
    %609 = vector.extract_strided_slice %588 {offsets = [40, 0], sizes = [8, 128], strides = [1, 1]} : vector<64x128xf32> to vector<8x128xf32>
    %c5 = arith.constant 5 : index
    %c0_252 = arith.constant 0 : index
    %c0_253 = arith.constant 0 : index
    %610 = vector.load %arg16[%c5, %c0_252, %c0_253] : memref<8x8x128xf32, #tpu.memory_space<vmem>>, vector<1x8x128xf32>
    %611 = vector.shape_cast %610 : vector<1x8x128xf32> to vector<8x128xf32>
    %612 = vector.shape_cast %609 : vector<8x128xf32> to vector<1x8x128xf32>
    tpu.vector_store %arg16[%c5, %c0_252, %c0_253], %612 {strides = array<i32>} : memref<8x8x128xf32, #tpu.memory_space<vmem>>, vector<1x8x128xf32>,
    %613 = vector.extract_strided_slice %588 {offsets = [48, 0], sizes = [8, 128], strides = [1, 1]} : vector<64x128xf32> to vector<8x128xf32>
    %c6 = arith.constant 6 : index
    %c0_254 = arith.constant 0 : index
    %c0_255 = arith.constant 0 : index
    %614 = vector.load %arg16[%c6, %c0_254, %c0_255] : memref<8x8x128xf32, #tpu.memory_space<vmem>>, vector<1x8x128xf32>
    %615 = vector.shape_cast %614 : vector<1x8x128xf32> to vector<8x128xf32>
    %616 = vector.shape_cast %613 : vector<8x128xf32> to vector<1x8x128xf32>
    tpu.vector_store %arg16[%c6, %c0_254, %c0_255], %616 {strides = array<i32>} : memref<8x8x128xf32, #tpu.memory_space<vmem>>, vector<1x8x128xf32>,
    %617 = vector.extract_strided_slice %588 {offsets = [56, 0], sizes = [8, 128], strides = [1, 1]} : vector<64x128xf32> to vector<8x128xf32>
    %c7 = arith.constant 7 : index
    %c0_256 = arith.constant 0 : index
    %c0_257 = arith.constant 0 : index
    %618 = vector.load %arg16[%c7, %c0_256, %c0_257] : memref<8x8x128xf32, #tpu.memory_space<vmem>>, vector<1x8x128xf32>
    %619 = vector.shape_cast %618 : vector<1x8x128xf32> to vector<8x128xf32>
    %620 = vector.shape_cast %617 : vector<8x128xf32> to vector<1x8x128xf32>
    tpu.vector_store %arg16[%c7, %c0_256, %c0_257], %620 {strides = array<i32>} : memref<8x8x128xf32, #tpu.memory_space<vmem>>, vector<1x8x128xf32>,
    %c0_258 = arith.constant 0 : index
    %c0_259 = arith.constant 0 : index
    %c0_260 = arith.constant 0 : index
    %621 = vector.load %arg17[%c0_258, %c0_259, %c0_260] : memref<4x8x128xf32, #tpu.memory_space<vmem>>, vector<1x8x128xf32>
    %622 = vector.shape_cast %621 : vector<1x8x128xf32> to vector<8x128xf32>
    %623 = vector.shape_cast %293 : vector<8x128xf32> to vector<1x8x128xf32>
    tpu.vector_store %arg17[%c0_258, %c0_259, %c0_260], %623 {strides = array<i32>} : memref<4x8x128xf32, #tpu.memory_space<vmem>>, vector<1x8x128xf32>,
    %cst_261 = arith.constant dense<0.000000e+00> : vector<8x128xf32>
    %624 = tpu.matmul %293, %14, %cst_261 {dimension_numbers = #tpu.dot_dimension_numbers<[1], [0], [0], [1], [0, 0, 1, 1], [], []>} : vector<8x128xf32>, vector<128x128xf32>, vector<8x128xf32> -> vector<8x128xf32>
    %c1_262 = arith.constant 1 : index
    %c0_263 = arith.constant 0 : index
    %c0_264 = arith.constant 0 : index
    %625 = vector.load %arg17[%c1_262, %c0_263, %c0_264] : memref<4x8x128xf32, #tpu.memory_space<vmem>>, vector<1x8x128xf32>
    %626 = vector.shape_cast %625 : vector<1x8x128xf32> to vector<8x128xf32>
    %627 = vector.shape_cast %624 : vector<8x128xf32> to vector<1x8x128xf32>
    tpu.vector_store %arg17[%c1_262, %c0_263, %c0_264], %627 {strides = array<i32>} : memref<4x8x128xf32, #tpu.memory_space<vmem>>, vector<1x8x128xf32>,
    %c2_265 = arith.constant 2 : index
    %c0_266 = arith.constant 0 : index
    %c0_267 = arith.constant 0 : index
    %628 = vector.load %arg17[%c2_265, %c0_266, %c0_267] : memref<4x8x128xf32, #tpu.memory_space<vmem>>, vector<1x8x128xf32>
    %629 = vector.shape_cast %628 : vector<1x8x128xf32> to vector<8x128xf32>
    %630 = vector.shape_cast %582 : vector<8x128xf32> to vector<1x8x128xf32>
    tpu.vector_store %arg17[%c2_265, %c0_266, %c0_267], %630 {strides = array<i32>} : memref<4x8x128xf32, #tpu.memory_space<vmem>>, vector<1x8x128xf32>,
    %cst_268 = arith.constant dense<0.000000e+00> : vector<8x128xf32>
    %631 = tpu.matmul %582, %14, %cst_268 {dimension_numbers = #tpu.dot_dimension_numbers<[1], [0], [0], [1], [0, 0, 1, 1], [], []>} : vector<8x128xf32>, vector<128x128xf32>, vector<8x128xf32> -> vector<8x128xf32>
    %c3_269 = arith.constant 3 : index
    %c0_270 = arith.constant 0 : index
    %c0_271 = arith.constant 0 : index
    %632 = vector.load %arg17[%c3_269, %c0_270, %c0_271] : memref<4x8x128xf32, #tpu.memory_space<vmem>>, vector<1x8x128xf32>
    %633 = vector.shape_cast %632 : vector<1x8x128xf32> to vector<8x128xf32>
    %634 = vector.shape_cast %631 : vector<8x128xf32> to vector<1x8x128xf32>
    tpu.vector_store %arg17[%c3_269, %c0_270, %c0_271], %634 {strides = array<i32>} : memref<4x8x128xf32, #tpu.memory_space<vmem>>, vector<1x8x128xf32>,
    return
  }
}

</mosaic_0001>

<llo_original>
// kernel: teacher_encoder_forward.1
$region0: #{teacher_encoder_forward.1}
  #allocation0 [shape = 'u32[]', space=smem, size = 0x4, offset = 0x4, fixed_abs, tag = 'smem constant byte address 0x4 - core index']
  #allocation1 [shape = 'u32[144,128]{1,0:T(1,128)}', space=vmem, size = 0x12000, scoped, tag = 'internal scratch']
  #allocation2 [shape = 'f32[64,384]{1,0:T(8,128)}', space=vmem, size = 0x18000, scoped, tag = 'scratch operand']
  #allocation3 [shape = 'f32[64,384]{1,0:T(8,128)}', space=vmem, size = 0x18000, scoped, tag = 'scratch operand']
  #allocation4 [shape = 'f32[64,128]{1,0:T(8,128)}', space=vmem, size = 0x8000, scoped, tag = 'scratch operand']
  #allocation5 [shape = 'f32[64,128]{1,0:T(8,128)}', space=vmem, size = 0x8000, scoped, tag = 'scratch operand']
  #allocation6 [shape = 'f32[64,128]{1,0:T(8,128)}', space=vmem, size = 0x8000, scoped, tag = 'scratch operand']
  #allocation7 [shape = 'f32[64,128]{1,0:T(8,128)}', space=vmem, size = 0x8000, scoped, tag = 'scratch operand']
  %s0 = inlined_call_operand.vmem [shape: s32[64,1], index: 0, kind: input, shape index: {}]
  %s1 = inlined_call_operand.vmem [shape: f32[128,32], index: 1, kind: input, shape index: {}]
  %s2 = inlined_call_operand.vmem [shape: f32[32,384], index: 2, kind: input, shape index: {}]
  %s3 = inlined_call_operand.vmem [shape: f32[32,384], index: 3, kind: input, shape index: {}]
  %s4 = inlined_call_operand.vmem [shape: f32[1,384], index: 4, kind: input, shape index: {}]
  %s5 = inlined_call_operand.vmem [shape: f32[1,384], index: 5, kind: input, shape index: {}]
  %s6 = inlined_call_operand.hbm [shape: f32[128,384], index: 6, kind: input, shape index: {}]
  %s7 = inlined_call_operand.vmem [shape: f32[1,384], index: 7, kind: input, shape index: {}]
  %s8 = inlined_call_operand.hbm [shape: f32[128,384], index: 8, kind: input, shape index: {}]
  %s9 = inlined_call_operand.hbm [shape: f32[128,384], index: 9, kind: input, shape index: {}]
  %s10 = inlined_call_operand.hbm [shape: f32[128,384], index: 10, kind: input, shape index: {}]
  %s11 = inlined_call_operand.hbm [shape: f32[128,384], index: 11, kind: input, shape index: {}]
  %s12 = inlined_call_operand.vmem [shape: f32[1,384], index: 12, kind: input, shape index: {}]
  %s13 = inlined_call_operand.vmem [shape: f32[1,384], index: 13, kind: input, shape index: {}]
  %s14 = inlined_call_operand.hbm [shape: f32[128,384], index: 14, kind: input, shape index: {}]
  %s15 = inlined_call_operand.vmem [shape: f32[1,384], index: 15, kind: input, shape index: {}]
  %s16 = inlined_call_operand.vmem [shape: f32[8,8,128], index: 16, kind: output, shape index: {0}]
  %s17 = inlined_call_operand.vmem [shape: f32[4,8,128], index: 17, kind: output, shape index: {1}]
  %18 = xla_tuple %s16, %s17
  %s19 = sld [smem:[#allocation0]]
  $region106: #{teacher_encoder_forward.1} parent=0
    _
  %s21 = ssub.s32 1, %s19
  %s22 = scalar_select 0, %s21, %s19
  $region1: #{teacher_encoder_forward.1} parent=0
    #allocation8 [shape = 'u8[196608]{0}', space=vmem, size = 0x30000, scoped, tag = 'input window, operand 6, single buffered']
    #allocation9 [shape = 's32[1]{0}', space=sflag, size = 0x4, scoped, tag = 'scoped memory for teacher_encoder_forward.1']
    #allocation10 [shape = 'u8[196608]{0}', space=vmem, size = 0x30000, scoped, tag = 'input window, operand 8, single buffered']
    #allocation11 [shape = 's32[1]{0}', space=sflag, size = 0x4, scoped, tag = 'scoped memory for teacher_encoder_forward.1']
    #allocation12 [shape = 'u8[196608]{0}', space=vmem, size = 0x30000, scoped, tag = 'input window, operand 9, single buffered']
    #allocation13 [shape = 'u8[196608]{0}', space=vmem, size = 0x30000, scoped, tag = 'input window, operand 10, single buffered']
    #allocation14 [shape = 's32[1]{0}', space=sflag, size = 0x4, scoped, tag = 'scoped memory for teacher_encoder_forward.1']
    #allocation15 [shape = 'u8[196608]{0}', space=vmem, size = 0x30000, scoped, tag = 'input window, operand 11, single buffered']
    #allocation16 [shape = 'u8[196608]{0}', space=vmem, size = 0x30000, scoped, tag = 'input window, operand 14, single buffered']
    #allocation17 [shape = 's32[1]{0}', space=sflag, size = 0x4, scoped, tag = 'scoped memory for teacher_encoder_forward.1']
    %23 = vsyncpa [#allocation9], 0
    %24 = vsyncpa [#allocation11], 0
    %25 = vsyncpa [#allocation14], 0
    %26 = vsyncpa [#allocation17], 0
    // Predicated region
    $region2: #{teacher_encoder_forward.1} parent=1 // pred_check
      _
    $region3: #{teacher_encoder_forward.1} parent=1 // pred_check_branch
      %28 = sbr.rel (0) target = $region5
    $region4: #{teacher_encoder_forward.1} parent=1 // pred_region
      _
    $region5: #{teacher_encoder_forward.1} parent=1 // pred_fallthru
      _
    // Predicated region
    $region6: #{teacher_encoder_forward.1} parent=1 // pred_check
      _
    $region7: #{teacher_encoder_forward.1} parent=1 // pred_check_branch
      %30 = sbr.rel (0) target = $region9
    $region8: #{teacher_encoder_forward.1} parent=1 // pred_region
      _
    $region9: #{teacher_encoder_forward.1} parent=1 // pred_fallthru
      _
    // Predicated region
    $region10: #{teacher_encoder_forward.1} parent=1 // pred_check
      _
    $region11: #{teacher_encoder_forward.1} parent=1 // pred_check_branch
      %32 = sbr.rel (0) target = $region13
    $region12: #{teacher_encoder_forward.1} parent=1 // pred_region
      _
    $region13: #{teacher_encoder_forward.1} parent=1 // pred_fallthru
      _
    // Predicated region
    $region14: #{teacher_encoder_forward.1} parent=1 // pred_check
      _
    $region15: #{teacher_encoder_forward.1} parent=1 // pred_check_branch
      %34 = sbr.rel (0) target = $region17
    $region16: #{teacher_encoder_forward.1} parent=1 // pred_region
      _
    $region17: #{teacher_encoder_forward.1} parent=1 // pred_fallthru
      _
    // Predicated region
    $region18: #{teacher_encoder_forward.1} parent=1 // pred_check
      _
    $region19: #{teacher_encoder_forward.1} parent=1 // pred_check_branch
      %36 = sbr.rel (0) target = $region21
    $region20: #{teacher_encoder_forward.1} parent=1 // pred_region
      _
    $region21: #{teacher_encoder_forward.1} parent=1 // pred_fallthru
      _
    // Predicated region
    $region22: #{teacher_encoder_forward.1} parent=1 // pred_check
      _
    $region23: #{teacher_encoder_forward.1} parent=1 // pred_check_branch
      %38 = sbr.rel (0) target = $region25
    $region24: #{teacher_encoder_forward.1} parent=1 // pred_region
      _
    $region25: #{teacher_encoder_forward.1} parent=1 // pred_fallthru
      _
    // Predicated region
    $region26: #{teacher_encoder_forward.1} parent=1 // pred_check
      _
    $region27: #{teacher_encoder_forward.1} parent=1 // pred_check_branch
      %40 = sbr.rel (0) target = $region29
    $region28: #{teacher_encoder_forward.1} parent=1 // pred_region
      %s42 = ssub.s32 6144, 6144
      %43 = vsyncadd [#allocation9], %s42
      %s44 = sshll.u32 [#allocation8], 4
      %s45 = int_to_ptr.vmem [resolvable:$true] %s44
      %50 = dma.hbm_to_vmem [thread:$0]  %s6, 6144, %s45, [#allocation9], 384, 384, 24
    $region29: #{teacher_encoder_forward.1} parent=1 // pred_fallthru
      _
    // Predicated region
    $region30: #{teacher_encoder_forward.1} parent=1 // pred_check
      _
    $region31: #{teacher_encoder_forward.1} parent=1 // pred_check_branch
      %52 = sbr.rel (0) target = $region33
    $region32: #{teacher_encoder_forward.1} parent=1 // pred_region
      _
    $region33: #{teacher_encoder_forward.1} parent=1 // pred_fallthru
      _
    // Predicated region
    $region34: #{teacher_encoder_forward.1} parent=1 // pred_check
      _
    $region35: #{teacher_encoder_forward.1} parent=1 // pred_check_branch
      %54 = sbr.rel (0) target = $region37
    $region36: #{teacher_encoder_forward.1} parent=1 // pred_region
      %s56 = ssub.s32 6144, 6144
      %57 = vsyncadd [#allocation11], %s56
      %s58 = sshll.u32 [#allocation10], 4
      %s59 = int_to_ptr.vmem [resolvable:$true] %s58
      %64 = dma.hbm_to_vmem [thread:$0]  %s8, 6144, %s59, [#allocation11], 384, 384, 24
    $region37: #{teacher_encoder_forward.1} parent=1 // pred_fallthru
      _
    // Predicated region
    $region38: #{teacher_encoder_forward.1} parent=1 // pred_check
      _
    $region39: #{teacher_encoder_forward.1} parent=1 // pred_check_branch
      %66 = sbr.rel (0) target = $region41
    $region40: #{teacher_encoder_forward.1} parent=1 // pred_region
      %s68 = ssub.s32 6144, 6144
      %69 = vsyncadd [#allocation11], %s68
      %s70 = sshll.u32 [#allocation12], 4
      %s71 = int_to_ptr.vmem [resolvable:$true] %s70
      %76 = dma.hbm_to_vmem [thread:$0]  %s9, 6144, %s71, [#allocation11], 384, 384, 24
    $region41: #{teacher_encoder_forward.1} parent=1 // pred_fallthru
      _
    // Predicated region
    $region42: #{teacher_encoder_forward.1} parent=1 // pred_check
      _
    $region43: #{teacher_encoder_forward.1} parent=1 // pred_check_branch
      %78 = sbr.rel (0) target = $region45
    $region44: #{teacher_encoder_forward.1} parent=1 // pred_region
      %s80 = ssub.s32 6144, 6144
      %81 = vsyncadd [#allocation14], %s80
      %s82 = sshll.u32 [#allocation13], 4
      %s83 = int_to_ptr.vmem [resolvable:$true] %s82
      %88 = dma.hbm_to_vmem [thread:$0]  %s10, 6144, %s83, [#allocation14], 384, 384, 24
    $region45: #{teacher_encoder_forward.1} parent=1 // pred_fallthru
      _
    // Predicated region
    $region46: #{teacher_encoder_forward.1} parent=1 // pred_check
      _
    $region47: #{teacher_encoder_forward.1} parent=1 // pred_check_branch
      %90 = sbr.rel (0) target = $region49
    $region48: #{teacher_encoder_forward.1} parent=1 // pred_region
      %s92 = ssub.s32 6144, 6144
      %93 = vsyncadd [#allocation14], %s92
      %s94 = sshll.u32 [#allocation15], 4
      %s95 = int_to_ptr.vmem [resolvable:$true] %s94
      %100 = dma.hbm_to_vmem [thread:$0]  %s11, 6144, %s95, [#allocation14], 384, 384, 24
    $region49: #{teacher_encoder_forward.1} parent=1 // pred_fallthru
      _
    // Predicated region
    $region50: #{teacher_encoder_forward.1} parent=1 // pred_check
      _
    $region51: #{teacher_encoder_forward.1} parent=1 // pred_check_branch
      %102 = sbr.rel (0) target = $region53
    $region52: #{teacher_encoder_forward.1} parent=1 // pred_region
      _
    $region53: #{teacher_encoder_forward.1} parent=1 // pred_fallthru
      _
    // Predicated region
    $region54: #{teacher_encoder_forward.1} parent=1 // pred_check
      _
    $region55: #{teacher_encoder_forward.1} parent=1 // pred_check_branch
      %104 = sbr.rel (0) target = $region57
    $region56: #{teacher_encoder_forward.1} parent=1 // pred_region
      _
    $region57: #{teacher_encoder_forward.1} parent=1 // pred_fallthru
      _
    // Predicated region
    $region58: #{teacher_encoder_forward.1} parent=1 // pred_check
      _
    $region59: #{teacher_encoder_forward.1} parent=1 // pred_check_branch
      %106 = sbr.rel (0) target = $region61
    $region60: #{teacher_encoder_forward.1} parent=1 // pred_region
      %s108 = ssub.s32 6144, 6144
      %109 = vsyncadd [#allocation17], %s108
      %s110 = sshll.u32 [#allocation16], 4
      %s111 = int_to_ptr.vmem [resolvable:$true] %s110
      %116 = dma.hbm_to_vmem [thread:$0]  %s14, 6144, %s111, [#allocation17], 384, 384, 24
    $region61: #{teacher_encoder_forward.1} parent=1 // pred_fallthru
      _
    // Predicated region
    $region62: #{teacher_encoder_forward.1} parent=1 // pred_check
      _
    $region63: #{teacher_encoder_forward.1} parent=1 // pred_check_branch
      %118 = sbr.rel (0) target = $region65
    $region64: #{teacher_encoder_forward.1} parent=1 // pred_region
      _
    $region65: #{teacher_encoder_forward.1} parent=1 // pred_fallthru
      _
    // Predicated region
    $region66: #{teacher_encoder_forward.1} parent=1 // pred_check
      _
    $region67: #{teacher_encoder_forward.1} parent=1 // pred_check_branch
      %120 = sbr.rel (0) target = $region69
    $region68: #{teacher_encoder_forward.1} parent=1 // pred_region
      %121 = dma.done [#allocation9], 6144
    $region69: #{teacher_encoder_forward.1} parent=1 // pred_fallthru
      _
    // Predicated region
    $region70: #{teacher_encoder_forward.1} parent=1 // pred_check
      _
    $region71: #{teacher_encoder_forward.1} parent=1 // pred_check_branch
      %123 = sbr.rel (0) target = $region73
    $region72: #{teacher_encoder_forward.1} parent=1 // pred_region
      %124 = dma.done [#allocation11], 6144
    $region73: #{teacher_encoder_forward.1} parent=1 // pred_fallthru
      _
    // Predicated region
    $region74: #{teacher_encoder_forward.1} parent=1 // pred_check
      _
    $region75: #{teacher_encoder_forward.1} parent=1 // pred_check_branch
      %126 = sbr.rel (0) target = $region77
    $region76: #{teacher_encoder_forward.1} parent=1 // pred_region
      %127 = dma.done [#allocation11], 6144
    $region77: #{teacher_encoder_forward.1} parent=1 // pred_fallthru
      _
    // Predicated region
    $region78: #{teacher_encoder_forward.1} parent=1 // pred_check
      _
    $region79: #{teacher_encoder_forward.1} parent=1 // pred_check_branch
      %129 = sbr.rel (0) target = $region81
    $region80: #{teacher_encoder_forward.1} parent=1 // pred_region
      %130 = dma.done [#allocation14], 6144
    $region81: #{teacher_encoder_forward.1} parent=1 // pred_fallthru
      _
    // Predicated region
    $region82: #{teacher_encoder_forward.1} parent=1 // pred_check
      _
    $region83: #{teacher_encoder_forward.1} parent=1 // pred_check_branch
      %132 = sbr.rel (0) target = $region85
    $region84: #{teacher_encoder_forward.1} parent=1 // pred_region
      %133 = dma.done [#allocation14], 6144
    $region85: #{teacher_encoder_forward.1} parent=1 // pred_fallthru
      _
    // Predicated region
    $region86: #{teacher_encoder_forward.1} parent=1 // pred_check
      _
    $region87: #{teacher_encoder_forward.1} parent=1 // pred_check_branch
      %135 = sbr.rel (0) target = $region89
    $region88: #{teacher_encoder_forward.1} parent=1 // pred_region
      %136 = dma.done [#allocation17], 6144
    $region89: #{teacher_encoder_forward.1} parent=1 // pred_fallthru
      _
    %v137 = vld [vmem:[%s0] sm:$0xff]
    %v138 = vld [vmem:[%s0 + $0x8] sm:$0xff]
    %v139 = vld [vmem:[%s0 + $0x10] sm:$0xff]
    %v140 = vld [vmem:[%s0 + $0x18] sm:$0xff]
    %v141 = vld [vmem:[%s0 + $0x20] sm:$0xff]
    %v142 = vld [vmem:[%s0 + $0x28] sm:$0xff]
    %v143 = vld [vmem:[%s0 + $0x30] sm:$0xff]
    %v144 = vld [vmem:[%s0 + $0x38] sm:$0xff]
    %v145 = vlaneseq
    %v146 = vand.u32 %v145, 127
    %147 = vset.pattern.permute.xlu0 0
    %148 = vperm.xlu0 %147, %v137
    %v149 = vpop.permute.xlu0 %148
    %150 = vset.pattern.permute.xlu0 0
    %151 = vperm.xlu0 %150, %v138
    %v152 = vpop.permute.xlu0 %151
    %153 = vset.pattern.permute.xlu0 0
    %154 = vperm.xlu0 %153, %v139
    %v155 = vpop.permute.xlu0 %154
    %156 = vset.pattern.permute.xlu0 0
    %157 = vperm.xlu0 %156, %v140
    %v158 = vpop.permute.xlu0 %157
    %159 = vset.pattern.permute.xlu0 0
    %160 = vperm.xlu0 %159, %v141
    %v161 = vpop.permute.xlu0 %160
    %162 = vset.pattern.permute.xlu0 0
    %163 = vperm.xlu0 %162, %v142
    %v164 = vpop.permute.xlu0 %163
    %165 = vset.pattern.permute.xlu0 0
    %166 = vperm.xlu0 %165, %v143
    %v167 = vpop.permute.xlu0 %166
    %168 = vset.pattern.permute.xlu0 0
    %169 = vperm.xlu0 %168, %v144
    %v170 = vpop.permute.xlu0 %169
    %vm171 = vcmp.eq.s32.totalorder %v146, %v149
    %vm172 = vcmp.eq.s32.totalorder %v146, %v152
    %vm173 = vcmp.eq.s32.totalorder %v146, %v155
    %vm174 = vcmp.eq.s32.totalorder %v146, %v158
    %vm175 = vcmp.eq.s32.totalorder %v146, %v161
    %vm176 = vcmp.eq.s32.totalorder %v146, %v164
    %vm177 = vcmp.eq.s32.totalorder %v146, %v167
    %vm178 = vcmp.eq.s32.totalorder %v146, %v170
    %v179 = vsel %vm171, 1, 0
    %v180 = vsel %vm172, 1, 0
    %v181 = vsel %vm173, 1, 0
    %v182 = vsel %vm174, 1, 0
    %v183 = vsel %vm175, 1, 0
    %v184 = vsel %vm176, 1, 0
    %v185 = vsel %vm177, 1, 0
    %v186 = vsel %vm178, 1, 0
    %v187 = vcvt.s32.f32 %v179
    %v188 = vcvt.s32.f32 %v180
    %v189 = vcvt.s32.f32 %v181
    %v190 = vcvt.s32.f32 %v182
    %v191 = vcvt.s32.f32 %v183
    %v192 = vcvt.s32.f32 %v184
    %v193 = vcvt.s32.f32 %v185
    %v194 = vcvt.s32.f32 %v186
    %v195 = vld [vmem:[%s1] sm:$0xff]
    %v196 = vld [vmem:[%s1 + $0x8] sm:$0xff]
    %v197 = vld [vmem:[%s1 + $0x10] sm:$0xff]
    %v198 = vld [vmem:[%s1 + $0x18] sm:$0xff]
    %v199 = vld [vmem:[%s1 + $0x20] sm:$0xff]
    %v200 = vld [vmem:[%s1 + $0x28] sm:$0xff]
    %v201 = vld [vmem:[%s1 + $0x30] sm:$0xff]
    %v202 = vld [vmem:[%s1 + $0x38] sm:$0xff]
    %v203 = vld [vmem:[%s1 + $0x40] sm:$0xff]
    %v204 = vld [vmem:[%s1 + $0x48] sm:$0xff]
    %v205 = vld [vmem:[%s1 + $0x50] sm:$0xff]
    %v206 = vld [vmem:[%s1 + $0x58] sm:$0xff]
    %v207 = vld [vmem:[%s1 + $0x60] sm:$0xff]
    %v208 = vld [vmem:[%s1 + $0x68] sm:$0xff]
    %v209 = vld [vmem:[%s1 + $0x70] sm:$0xff]
    %v210 = vld [vmem:[%s1 + $0x78] sm:$0xff]
    %211 = vmatprep.subr.mxu0 0.0
    %212 = vmatpush1.msra.mxu0 %v210
    %213 = vmatprep.subr.mxu0 0.0
    %214 = vmatpush1.msra.mxu0 %v209
    %215 = vmatprep.subr.mxu0 0.0
    %216 = vmatpush1.msra.mxu0 %v208
    %217 = vmatprep.subr.mxu0 0.0
    %218 = vmatpush1.msra.mxu0 %v207
    %219 = vmatprep.subr.mxu0 0.0
    %220 = vmatpush1.msra.mxu0 %v206
    %221 = vmatprep.subr.mxu0 0.0
    %222 = vmatpush1.msra.mxu0 %v205
    %223 = vmatprep.subr.mxu0 0.0
    %224 = vmatpush1.msra.mxu0 %v204
    %225 = vmatprep.subr.mxu0 0.0
    %226 = vmatpush1.msra.mxu0 %v203
    %227 = vmatprep.subr.mxu0 0.0
    %228 = vmatpush1.msra.mxu0 %v202
    %229 = vmatprep.subr.mxu0 0.0
    %230 = vmatpush1.msra.mxu0 %v201
    %231 = vmatprep.subr.mxu0 0.0
    %232 = vmatpush1.msra.mxu0 %v200
    %233 = vmatprep.subr.mxu0 0.0
    %234 = vmatpush1.msra.mxu0 %v199
    %235 = vmatprep.subr.mxu0 0.0
    %236 = vmatpush1.msra.mxu0 %v198
    %237 = vmatprep.subr.mxu0 0.0
    %238 = vmatpush1.msra.mxu0 %v197
    %239 = vmatprep.subr.mxu0 0.0
    %240 = vmatpush1.msra.mxu0 %v196
    %241 = vmatprep.subr.mxu0 0.0
    %242 = vmatpush1.msra.mxu0 %v195
    %243 = vmatprep.subr.mxu0 0.0
    %244 = vmatpush2.msra.mxu0 0.0
    %245 = vmatprep.subr.mxu0 0.0
    %246 = vmatpush2.msra.mxu0 0.0
    %247 = vmatprep.subr.mxu0 0.0
    %248 = vmatpush2.msra.mxu0 0.0
    %249 = vmatprep.subr.mxu0 0.0
    %250 = vmatpush2.msra.mxu0 0.0
    %251 = vmatprep.subr.mxu0 0.0
    %252 = vmatpush2.msra.mxu0 0.0
    %253 = vmatprep.subr.mxu0 0.0
    %254 = vmatpush2.msra.mxu0 0.0
    %255 = vmatprep.subr.mxu0 0.0
    %256 = vmatpush2.msra.mxu0 0.0
    %257 = vmatprep.subr.mxu0 0.0
    %258 = vmatpush2.msra.mxu0 0.0
    %259 = vmatprep.subr.mxu0 0.0
    %260 = vmatpush2.msra.mxu0 0.0
    %261 = vmatprep.subr.mxu0 0.0
    %262 = vmatpush2.msra.mxu0 0.0
    %263 = vmatprep.subr.mxu0 0.0
    %264 = vmatpush2.msra.mxu0 0.0
    %265 = vmatprep.subr.mxu0 0.0
    %266 = vmatpush2.msra.mxu0 0.0
    %267 = vmatprep.subr.mxu0 0.0
    %268 = vmatpush2.msra.mxu0 0.0
    %269 = vmatprep.subr.mxu0 0.0
    %270 = vmatpush2.msra.mxu0 0.0
    %271 = vmatprep.subr.mxu0 0.0
    %272 = vmatpush2.msra.mxu0 0.0
    %273 = vmatprep.subr.mxu0 0.0
    %274 = vmatpush2.msra.mxu0 0.0
    %275 = vmatprep.mubr.f32.mxu0 0.0
    %276 = vmatmul.mubr.f32.gmra.mxu0 %v187
    %v277 = vpop.f32.mrf.mxu0
    %v278 = vadd.f32 0.0, %v277
    %v279 = vpop.f32.mrf.mxu0
    %280 = vmatprep.mubr.f32.mxu0 0.0
    %281 = vmatmul.mubr.f32.gmra.mxu0 %v188
    %v282 = vpop.f32.mrf.mxu0
    %v283 = vadd.f32 0.0, %v282
    %v284 = vpop.f32.mrf.mxu0
    %285 = vmatprep.mubr.f32.mxu0 0.0
    %286 = vmatmul.mubr.f32.gmra.mxu0 %v189
    %v287 = vpop.f32.mrf.mxu0
    %v288 = vadd.f32 0.0, %v287
    %v289 = vpop.f32.mrf.mxu0
    %290 = vmatprep.mubr.f32.mxu0 0.0
    %291 = vmatmul.mubr.f32.gmra.mxu0 %v190
    %v292 = vpop.f32.mrf.mxu0
    %v293 = vadd.f32 0.0, %v292
    %v294 = vpop.f32.mrf.mxu0
    %295 = vmatprep.mubr.f32.mxu0 0.0
    %296 = vmatmul.mubr.f32.gmra.mxu0 %v191
    %v297 = vpop.f32.mrf.mxu0
    %v298 = vadd.f32 0.0, %v297
    %v299 = vpop.f32.mrf.mxu0
    %300 = vmatprep.mubr.f32.mxu0 0.0
    %301 = vmatmul.mubr.f32.gmra.mxu0 %v192
    %v302 = vpop.f32.mrf.mxu0
    %v303 = vadd.f32 0.0, %v302
    %v304 = vpop.f32.mrf.mxu0
    %305 = vmatprep.mubr.f32.mxu0 0.0
    %306 = vmatmul.mubr.f32.gmra.mxu0 %v193
    %v307 = vpop.f32.mrf.mxu0
    %v308 = vadd.f32 0.0, %v307
    %v309 = vpop.f32.mrf.mxu0
    %310 = vmatprep.mubr.f32.mxu0 0.0
    %311 = vmatmul.mubr.f32.gmra.mxu0 %v194
    %v312 = vpop.f32.mrf.mxu0
    %v313 = vadd.f32 0.0, %v312
    %v314 = vpop.f32.mrf.mxu0
    %315 = vdwg.mxu0
    %v316 = vlaneseq
    %v317 = vshrl.u32 %v316, 7
    %v318 = vadd.s32 %v317, 8
    %v319 = vadd.s32 %v317, 16
    %v320 = vadd.s32 %v317, 24
    %v321 = vadd.s32 %v317, 32
    %v322 = vadd.s32 %v317, 40
    %v323 = vadd.s32 %v317, 48
    %v324 = vadd.s32 %v317, 56
    %v325 = vadd.s32 %v317, 64
    %v326 = vadd.s32 %v317, 72
    %v327 = vadd.s32 %v317, 80
    %v328 = vadd.s32 %v317, 88
    %v329 = vadd.s32 %v317, 96
    %v330 = vadd.s32 %v317, 104
    %v331 = vadd.s32 %v317, 112
    %v332 = vadd.s32 %v317, 120
    %v333 = vadd.s32 %v146, 32
    %vm334 = vcmp.eq.s32.totalorder %v317, %v333
    %vm335 = vcmp.eq.s32.totalorder %v318, %v333
    %vm336 = vcmp.eq.s32.totalorder %v319, %v333
    %vm337 = vcmp.eq.s32.totalorder %v320, %v333
    %vm338 = vcmp.eq.s32.totalorder %v321, %v333
    %vm339 = vcmp.eq.s32.totalorder %v322, %v333
    %vm340 = vcmp.eq.s32.totalorder %v323, %v333
    %vm341 = vcmp.eq.s32.totalorder %v324, %v333
    %vm342 = vcmp.eq.s32.totalorder %v325, %v333
    %vm343 = vcmp.eq.s32.totalorder %v326, %v333
    %vm344 = vcmp.eq.s32.totalorder %v327, %v333
    %vm345 = vcmp.eq.s32.totalorder %v328, %v333
    %vm346 = vcmp.eq.s32.totalorder %v329, %v333
    %vm347 = vcmp.eq.s32.totalorder %v330, %v333
    %vm348 = vcmp.eq.s32.totalorder %v331, %v333
    %vm349 = vcmp.eq.s32.totalorder %v332, %v333
    %v350 = vsel %vm334, 1, 0
    %v351 = vsel %vm335, 1, 0
    %v352 = vsel %vm336, 1, 0
    %v353 = vsel %vm337, 1, 0
    %v354 = vsel %vm338, 1, 0
    %v355 = vsel %vm339, 1, 0
    %v356 = vsel %vm340, 1, 0
    %v357 = vsel %vm341, 1, 0
    %v358 = vsel %vm342, 1, 0
    %v359 = vsel %vm343, 1, 0
    %v360 = vsel %vm344, 1, 0
    %v361 = vsel %vm345, 1, 0
    %v362 = vsel %vm346, 1, 0
    %v363 = vsel %vm347, 1, 0
    %v364 = vsel %vm348, 1, 0
    %v365 = vsel %vm349, 1, 0
    %v366 = vcvt.s32.f32 %v350
    %v367 = vcvt.s32.f32 %v351
    %v368 = vcvt.s32.f32 %v352
    %v369 = vcvt.s32.f32 %v353
    %v370 = vcvt.s32.f32 %v354
    %v371 = vcvt.s32.f32 %v355
    %v372 = vcvt.s32.f32 %v356
    %v373 = vcvt.s32.f32 %v357
    %v374 = vcvt.s32.f32 %v358
    %v375 = vcvt.s32.f32 %v359
    %v376 = vcvt.s32.f32 %v360
    %v377 = vcvt.s32.f32 %v361
    %v378 = vcvt.s32.f32 %v362
    %v379 = vcvt.s32.f32 %v363
    %v380 = vcvt.s32.f32 %v364
    %v381 = vcvt.s32.f32 %v365
    %v382 = vld [vmem:[%s2] sm:$0xff]
    %v383 = vld [vmem:[%s2 + $0x8] sm:$0xff]
    %v384 = vld [vmem:[%s2 + $0x10] sm:$0xff]
    %v385 = vld [vmem:[%s2 + $0x18] sm:$0xff]
    %v386 = vld [vmem:[%s2 + $0x20] sm:$0xff]
    %v387 = vld [vmem:[%s2 + $0x28] sm:$0xff]
    %v388 = vld [vmem:[%s2 + $0x30] sm:$0xff]
    %v389 = vld [vmem:[%s2 + $0x38] sm:$0xff]
    %v390 = vld [vmem:[%s2 + $0x40] sm:$0xff]
    %v391 = vld [vmem:[%s2 + $0x48] sm:$0xff]
    %v392 = vld [vmem:[%s2 + $0x50] sm:$0xff]
    %v393 = vld [vmem:[%s2 + $0x58] sm:$0xff]
    %v394 = vld [vmem:[%s4] sm:$0x7]
    %v396 = vlaneseq
    %v397 = vshrl.u32 %v396, 7
    %v398 = vsub.s32 0, %v397
    %v399 = vrot.slane %v394, %v398
    %v400 = vlaneseq
    %v401 = vshrl.u32 %v400, 7
    %v402 = vsub.s32 1, %v401
    %v403 = vrot.slane %v394, %v402
    %v404 = vlaneseq
    %v405 = vshrl.u32 %v404, 7
    %v406 = vsub.s32 2, %v405
    %v407 = vrot.slane %v394, %v406
    %vm411 = vcmask 261120
    %v413 = vsel %vm411, %v278, 0
    %v416 = vsel %vm411, %v283, 0
    %v419 = vsel %vm411, %v288, 0
    %v422 = vsel %vm411, %v293, 0
    %v425 = vsel %vm411, %v298, 0
    %v428 = vsel %vm411, %v303, 0
    %v431 = vsel %vm411, %v308, 0
    %v434 = vsel %vm411, %v313, 0
    %436 = vmatprep.subr.mxu0 0.0
    %437 = vmatpush1.msra.mxu0 0.0
    %438 = vmatprep.subr.mxu0 0.0
    %439 = vmatpush1.msra.mxu0 0.0
    %440 = vmatprep.subr.mxu0 0.0
    %441 = vmatpush1.msra.mxu0 0.0
    %442 = vmatprep.subr.mxu0 0.0
    %443 = vmatpush1.msra.mxu0 0.0
    %444 = vmatprep.subr.mxu0 0.0
    %445 = vmatpush1.msra.mxu0 0.0
    %446 = vmatprep.subr.mxu0 0.0
    %447 = vmatpush1.msra.mxu0 0.0
    %448 = vmatprep.subr.mxu0 0.0
    %449 = vmatpush1.msra.mxu0 0.0
    %450 = vmatprep.subr.mxu0 0.0
    %451 = vmatpush1.msra.mxu0 0.0
    %452 = vmatprep.subr.mxu0 0.0
    %453 = vmatpush1.msra.mxu0 0.0
    %454 = vmatprep.subr.mxu0 0.0
    %455 = vmatpush1.msra.mxu0 0.0
    %456 = vmatprep.subr.mxu0 0.0
    %457 = vmatpush1.msra.mxu0 0.0
    %458 = vmatprep.subr.mxu0 0.0
    %459 = vmatpush1.msra.mxu0 0.0
    %460 = vmatprep.subr.mxu0 %v392
    %461 = vmatpush1.msra.mxu0 %v391
    %462 = vmatprep.subr.mxu0 %v389
    %463 = vmatpush1.msra.mxu0 %v388
    %464 = vmatprep.subr.mxu0 %v386
    %465 = vmatpush1.msra.mxu0 %v385
    %466 = vmatprep.subr.mxu0 %v383
    %467 = vmatpush1.msra.mxu0 %v382
    %468 = vmatprep.subr.mxu0 0.0
    %469 = vmatpush2.msra.mxu0 0.0
    %470 = vmatprep.subr.mxu0 0.0
    %471 = vmatpush2.msra.mxu0 0.0
    %472 = vmatprep.subr.mxu0 0.0
    %473 = vmatpush2.msra.mxu0 0.0
    %474 = vmatprep.subr.mxu0 0.0
    %475 = vmatpush2.msra.mxu0 0.0
    %476 = vmatprep.subr.mxu0 0.0
    %477 = vmatpush2.msra.mxu0 0.0
    %478 = vmatprep.subr.mxu0 0.0
    %479 = vmatpush2.msra.mxu0 0.0
    %480 = vmatprep.subr.mxu0 0.0
    %481 = vmatpush2.msra.mxu0 0.0
    %482 = vmatprep.subr.mxu0 0.0
    %483 = vmatpush2.msra.mxu0 0.0
    %484 = vmatprep.subr.mxu0 0.0
    %485 = vmatpush2.msra.mxu0 0.0
    %486 = vmatprep.subr.mxu0 0.0
    %487 = vmatpush2.msra.mxu0 0.0
    %488 = vmatprep.subr.mxu0 0.0
    %489 = vmatpush2.msra.mxu0 0.0
    %490 = vmatprep.subr.mxu0 0.0
    %491 = vmatpush2.msra.mxu0 0.0
    %492 = vmatprep.subr.mxu0 0.0
    %493 = vmatpush2.msra.mxu0 0.0
    %494 = vmatprep.subr.mxu0 0.0
    %495 = vmatpush2.msra.mxu0 0.0
    %496 = vmatprep.subr.mxu0 0.0
    %497 = vmatpush2.msra.mxu0 0.0
    %498 = vmatprep.subr.mxu0 0.0
    %499 = vmatpush2.msra.mxu0 0.0
    %500 = vmatprep.mubr.f32.mxu0 0.0
    %501 = vmatmul.mubr.f32.gmra.mxu0 %v413
    %v502 = vpop.f32.mrf.mxu0
    %v503 = vadd.f32 %v399, %v502
    %v504 = vpop.f32.mrf.mxu0
    %v505 = vadd.f32 %v403, %v504
    %506 = vmatprep.mubr.f32.mxu0 0.0
    %507 = vmatmul.mubr.f32.gmra.mxu0 %v416
    %v508 = vpop.f32.mrf.mxu0
    %v509 = vadd.f32 %v399, %v508
    %v510 = vpop.f32.mrf.mxu0
    %v511 = vadd.f32 %v403, %v510
    %512 = vmatprep.mubr.f32.mxu0 0.0
    %513 = vmatmul.mubr.f32.gmra.mxu0 %v419
    %v514 = vpop.f32.mrf.mxu0
    %v515 = vadd.f32 %v399, %v514
    %v516 = vpop.f32.mrf.mxu0
    %v517 = vadd.f32 %v403, %v516
    %518 = vmatprep.mubr.f32.mxu0 0.0
    %519 = vmatmul.mubr.f32.gmra.mxu0 %v422
    %v520 = vpop.f32.mrf.mxu0
    %v521 = vadd.f32 %v399, %v520
    %v522 = vpop.f32.mrf.mxu0
    %v523 = vadd.f32 %v403, %v522
    %524 = vmatprep.mubr.f32.mxu0 0.0
    %525 = vmatmul.mubr.f32.gmra.mxu0 %v425
    %v526 = vpop.f32.mrf.mxu0
    %v527 = vadd.f32 %v399, %v526
    %v528 = vpop.f32.mrf.mxu0
    %v529 = vadd.f32 %v403, %v528
    %530 = vmatprep.mubr.f32.mxu0 0.0
    %531 = vmatmul.mubr.f32.gmra.mxu0 %v428
    %v532 = vpop.f32.mrf.mxu0
    %v533 = vadd.f32 %v399, %v532
    %v534 = vpop.f32.mrf.mxu0
    %v535 = vadd.f32 %v403, %v534
    %536 = vmatprep.mubr.f32.mxu0 0.0
    %537 = vmatmul.mubr.f32.gmra.mxu0 %v431
    %v538 = vpop.f32.mrf.mxu0
    %v539 = vadd.f32 %v399, %v538
    %v540 = vpop.f32.mrf.mxu0
    %v541 = vadd.f32 %v403, %v540
    %542 = vmatprep.mubr.f32.mxu0 0.0
    %543 = vmatmul.mubr.f32.gmra.mxu0 %v434
    %v544 = vpop.f32.mrf.mxu0
    %v545 = vadd.f32 %v399, %v544
    %v546 = vpop.f32.mrf.mxu0
    %v547 = vadd.f32 %v403, %v546
    %548 = vdwg.mxu0
    %549 = vmatprep.subr.mxu0 0.0
    %550 = vmatpush1.msra.mxu0 0.0
    %551 = vmatprep.subr.mxu0 0.0
    %552 = vmatpush1.msra.mxu0 0.0
    %553 = vmatprep.subr.mxu0 0.0
    %554 = vmatpush1.msra.mxu0 0.0
    %555 = vmatprep.subr.mxu0 0.0
    %556 = vmatpush1.msra.mxu0 0.0
    %557 = vmatprep.subr.mxu0 0.0
    %558 = vmatpush1.msra.mxu0 0.0
    %559 = vmatprep.subr.mxu0 0.0
    %560 = vmatpush1.msra.mxu0 0.0
    %561 = vmatprep.subr.mxu0 0.0
    %562 = vmatpush1.msra.mxu0 0.0
    %563 = vmatprep.subr.mxu0 0.0
    %564 = vmatpush1.msra.mxu0 0.0
    %565 = vmatprep.subr.mxu0 0.0
    %566 = vmatpush1.msra.mxu0 0.0
    %567 = vmatprep.subr.mxu0 0.0
    %568 = vmatpush1.msra.mxu0 0.0
    %569 = vmatprep.subr.mxu0 0.0
    %570 = vmatpush1.msra.mxu0 0.0
    %571 = vmatprep.subr.mxu0 0.0
    %572 = vmatpush1.msra.mxu0 0.0
    %573 = vmatprep.subr.mxu0 0.0
    %574 = vmatpush1.msra.mxu0 %v393
    %575 = vmatprep.subr.mxu0 0.0
    %576 = vmatpush1.msra.mxu0 %v390
    %577 = vmatprep.subr.mxu0 0.0
    %578 = vmatpush1.msra.mxu0 %v387
    %579 = vmatprep.subr.mxu0 0.0
    %580 = vmatpush1.msra.mxu0 %v384
    %581 = vmatprep.subr.mxu0 0.0
    %582 = vmatpush2.msra.mxu0 0.0
    %583 = vmatprep.subr.mxu0 0.0
    %584 = vmatpush2.msra.mxu0 0.0
    %585 = vmatprep.subr.mxu0 0.0
    %586 = vmatpush2.msra.mxu0 0.0
    %587 = vmatprep.subr.mxu0 0.0
    %588 = vmatpush2.msra.mxu0 0.0
    %589 = vmatprep.subr.mxu0 0.0
    %590 = vmatpush2.msra.mxu0 0.0
    %591 = vmatprep.subr.mxu0 0.0
    %592 = vmatpush2.msra.mxu0 0.0
    %593 = vmatprep.subr.mxu0 0.0
    %594 = vmatpush2.msra.mxu0 0.0
    %595 = vmatprep.subr.mxu0 0.0
    %596 = vmatpush2.msra.mxu0 0.0
    %597 = vmatprep.subr.mxu0 0.0
    %598 = vmatpush2.msra.mxu0 0.0
    %599 = vmatprep.subr.mxu0 0.0
    %600 = vmatpush2.msra.mxu0 0.0
    %601 = vmatprep.subr.mxu0 0.0
    %602 = vmatpush2.msra.mxu0 0.0
    %603 = vmatprep.subr.mxu0 0.0
    %604 = vmatpush2.msra.mxu0 0.0
    %605 = vmatprep.subr.mxu0 0.0
    %606 = vmatpush2.msra.mxu0 0.0
    %607 = vmatprep.subr.mxu0 0.0
    %608 = vmatpush2.msra.mxu0 0.0
    %609 = vmatprep.subr.mxu0 0.0
    %610 = vmatpush2.msra.mxu0 0.0
    %611 = vmatprep.subr.mxu0 0.0
    %612 = vmatpush2.msra.mxu0 0.0
    %613 = vmatprep.mubr.f32.mxu0 0.0
    %614 = vmatmul.mubr.f32.gmra.mxu0 %v413
    %v615 = vpop.f32.mrf.mxu0
    %v616 = vadd.f32 %v407, %v615
    %v617 = vpop.f32.mrf.mxu0
    %618 = vmatprep.mubr.f32.mxu0 0.0
    %619 = vmatmul.mubr.f32.gmra.mxu0 %v416
    %v620 = vpop.f32.mrf.mxu0
    %v621 = vadd.f32 %v407, %v620
    %v622 = vpop.f32.mrf.mxu0
    %623 = vmatprep.mubr.f32.mxu0 0.0
    %624 = vmatmul.mubr.f32.gmra.mxu0 %v419
    %v625 = vpop.f32.mrf.mxu0
    %v626 = vadd.f32 %v407, %v625
    %v627 = vpop.f32.mrf.mxu0
    %628 = vmatprep.mubr.f32.mxu0 0.0
    %629 = vmatmul.mubr.f32.gmra.mxu0 %v422
    %v630 = vpop.f32.mrf.mxu0
    %v631 = vadd.f32 %v407, %v630
    %v632 = vpop.f32.mrf.mxu0
    %633 = vmatprep.mubr.f32.mxu0 0.0
    %634 = vmatmul.mubr.f32.gmra.mxu0 %v425
    %v635 = vpop.f32.mrf.mxu0
    %v636 = vadd.f32 %v407, %v635
    %v637 = vpop.f32.mrf.mxu0
    %638 = vmatprep.mubr.f32.mxu0 0.0
    %639 = vmatmul.mubr.f32.gmra.mxu0 %v428
    %v640 = vpop.f32.mrf.mxu0
    %v641 = vadd.f32 %v407, %v640
    %v642 = vpop.f32.mrf.mxu0
    %643 = vmatprep.mubr.f32.mxu0 0.0
    %644 = vmatmul.mubr.f32.gmra.mxu0 %v431
    %v645 = vpop.f32.mrf.mxu0
    %v646 = vadd.f32 %v407, %v645
    %v647 = vpop.f32.mrf.mxu0
    %648 = vmatprep.mubr.f32.mxu0 0.0
    %649 = vmatmul.mubr.f32.gmra.mxu0 %v434
    %v650 = vpop.f32.mrf.mxu0
    %v651 = vadd.f32 %v407, %v650
    %v652 = vpop.f32.mrf.mxu0
    %653 = vdwg.mxu0
    %v654 = vld [vmem:[%s3] sm:$0xff]
    %v655 = vld [vmem:[%s3 + $0x8] sm:$0xff]
    %v656 = vld [vmem:[%s3 + $0x10] sm:$0xff]
    %v657 = vld [vmem:[%s3 + $0x18] sm:$0xff]
    %v658 = vld [vmem:[%s3 + $0x20] sm:$0xff]
    %v659 = vld [vmem:[%s3 + $0x28] sm:$0xff]
    %v660 = vld [vmem:[%s3 + $0x30] sm:$0xff]
    %v661 = vld [vmem:[%s3 + $0x38] sm:$0xff]
    %v662 = vld [vmem:[%s3 + $0x40] sm:$0xff]
    %v663 = vld [vmem:[%s3 + $0x48] sm:$0xff]
    %v664 = vld [vmem:[%s3 + $0x50] sm:$0xff]
    %v665 = vld [vmem:[%s3 + $0x58] sm:$0xff]
    %v666 = vld [vmem:[%s5] sm:$0x7]
    %v668 = vlaneseq
    %v669 = vshrl.u32 %v668, 7
    %v670 = vsub.s32 0, %v669
    %v671 = vrot.slane %v666, %v670
    %v672 = vlaneseq
    %v673 = vshrl.u32 %v672, 7
    %v674 = vsub.s32 1, %v673
    %v675 = vrot.slane %v666, %v674
    %v676 = vlaneseq
    %v677 = vshrl.u32 %v676, 7
    %v678 = vsub.s32 2, %v677
    %v679 = vrot.slane %v666, %v678
    %683 = vmatprep.subr.mxu0 0.0
    %684 = vmatpush1.msra.mxu0 0.0
    %685 = vmatprep.subr.mxu0 0.0
    %686 = vmatpush1.msra.mxu0 0.0
    %687 = vmatprep.subr.mxu0 0.0
    %688 = vmatpush1.msra.mxu0 0.0
    %689 = vmatprep.subr.mxu0 0.0
    %690 = vmatpush1.msra.mxu0 0.0
    %691 = vmatprep.subr.mxu0 0.0
    %692 = vmatpush1.msra.mxu0 0.0
    %693 = vmatprep.subr.mxu0 0.0
    %694 = vmatpush1.msra.mxu0 0.0
    %695 = vmatprep.subr.mxu0 0.0
    %696 = vmatpush1.msra.mxu0 0.0
    %697 = vmatprep.subr.mxu0 0.0
    %698 = vmatpush1.msra.mxu0 0.0
    %699 = vmatprep.subr.mxu0 0.0
    %700 = vmatpush1.msra.mxu0 0.0
    %701 = vmatprep.subr.mxu0 0.0
    %702 = vmatpush1.msra.mxu0 0.0
    %703 = vmatprep.subr.mxu0 0.0
    %704 = vmatpush1.msra.mxu0 0.0
    %705 = vmatprep.subr.mxu0 0.0
    %706 = vmatpush1.msra.mxu0 0.0
    %707 = vmatprep.subr.mxu0 %v664
    %708 = vmatpush1.msra.mxu0 %v663
    %709 = vmatprep.subr.mxu0 %v661
    %710 = vmatpush1.msra.mxu0 %v660
    %711 = vmatprep.subr.mxu0 %v658
    %712 = vmatpush1.msra.mxu0 %v657
    %713 = vmatprep.subr.mxu0 %v655
    %714 = vmatpush1.msra.mxu0 %v654
    %715 = vmatprep.subr.mxu0 0.0
    %716 = vmatpush2.msra.mxu0 0.0
    %717 = vmatprep.subr.mxu0 0.0
    %718 = vmatpush2.msra.mxu0 0.0
    %719 = vmatprep.subr.mxu0 0.0
    %720 = vmatpush2.msra.mxu0 0.0
    %721 = vmatprep.subr.mxu0 0.0
    %722 = vmatpush2.msra.mxu0 0.0
    %723 = vmatprep.subr.mxu0 0.0
    %724 = vmatpush2.msra.mxu0 0.0
    %725 = vmatprep.subr.mxu0 0.0
    %726 = vmatpush2.msra.mxu0 0.0
    %727 = vmatprep.subr.mxu0 0.0
    %728 = vmatpush2.msra.mxu0 0.0
    %729 = vmatprep.subr.mxu0 0.0
    %730 = vmatpush2.msra.mxu0 0.0
    %731 = vmatprep.subr.mxu0 0.0
    %732 = vmatpush2.msra.mxu0 0.0
    %733 = vmatprep.subr.mxu0 0.0
    %734 = vmatpush2.msra.mxu0 0.0
    %735 = vmatprep.subr.mxu0 0.0
    %736 = vmatpush2.msra.mxu0 0.0
    %737 = vmatprep.subr.mxu0 0.0
    %738 = vmatpush2.msra.mxu0 0.0
    %739 = vmatprep.subr.mxu0 0.0
    %740 = vmatpush2.msra.mxu0 0.0
    %741 = vmatprep.subr.mxu0 0.0
    %742 = vmatpush2.msra.mxu0 0.0
    %743 = vmatprep.subr.mxu0 0.0
    %744 = vmatpush2.msra.mxu0 0.0
    %745 = vmatprep.subr.mxu0 0.0
    %746 = vmatpush2.msra.mxu0 0.0
    %747 = vmatprep.mubr.f32.mxu0 0.0
    %748 = vmatmul.mubr.f32.gmra.mxu0 %v413
    %v749 = vpop.f32.mrf.mxu0
    %v750 = vadd.f32 %v671, %v749
    %v751 = vpop.f32.mrf.mxu0
    %v752 = vadd.f32 %v675, %v751
    %753 = vmatprep.mubr.f32.mxu0 0.0
    %754 = vmatmul.mubr.f32.gmra.mxu0 %v416
    %v755 = vpop.f32.mrf.mxu0
    %v756 = vadd.f32 %v671, %v755
    %v757 = vpop.f32.mrf.mxu0
    %v758 = vadd.f32 %v675, %v757
    %759 = vmatprep.mubr.f32.mxu0 0.0
    %760 = vmatmul.mubr.f32.gmra.mxu0 %v419
    %v761 = vpop.f32.mrf.mxu0
    %v762 = vadd.f32 %v671, %v761
    %v763 = vpop.f32.mrf.mxu0
    %v764 = vadd.f32 %v675, %v763
    %765 = vmatprep.mubr.f32.mxu0 0.0
    %766 = vmatmul.mubr.f32.gmra.mxu0 %v422
    %v767 = vpop.f32.mrf.mxu0
    %v768 = vadd.f32 %v671, %v767
    %v769 = vpop.f32.mrf.mxu0
    %v770 = vadd.f32 %v675, %v769
    %771 = vmatprep.mubr.f32.mxu0 0.0
    %772 = vmatmul.mubr.f32.gmra.mxu0 %v425
    %v773 = vpop.f32.mrf.mxu0
    %v774 = vadd.f32 %v671, %v773
    %v775 = vpop.f32.mrf.mxu0
    %v776 = vadd.f32 %v675, %v775
    %777 = vmatprep.mubr.f32.mxu0 0.0
    %778 = vmatmul.mubr.f32.gmra.mxu0 %v428
    %v779 = vpop.f32.mrf.mxu0
    %v780 = vadd.f32 %v671, %v779
    %v781 = vpop.f32.mrf.mxu0
    %v782 = vadd.f32 %v675, %v781
    %783 = vmatprep.mubr.f32.mxu0 0.0
    %784 = vmatmul.mubr.f32.gmra.mxu0 %v431
    %v785 = vpop.f32.mrf.mxu0
    %v786 = vadd.f32 %v671, %v785
    %v787 = vpop.f32.mrf.mxu0
    %v788 = vadd.f32 %v675, %v787
    %789 = vmatprep.mubr.f32.mxu0 0.0
    %790 = vmatmul.mubr.f32.gmra.mxu0 %v434
    %v791 = vpop.f32.mrf.mxu0
    %v792 = vadd.f32 %v671, %v791
    %v793 = vpop.f32.mrf.mxu0
    %v794 = vadd.f32 %v675, %v793
    %795 = vdwg.mxu0
    %796 = vmatprep.subr.mxu0 0.0
    %797 = vmatpush1.msra.mxu0 0.0
    %798 = vmatprep.subr.mxu0 0.0
    %799 = vmatpush1.msra.mxu0 0.0
    %800 = vmatprep.subr.mxu0 0.0
    %801 = vmatpush1.msra.mxu0 0.0
    %802 = vmatprep.subr.mxu0 0.0
    %803 = vmatpush1.msra.mxu0 0.0
    %804 = vmatprep.subr.mxu0 0.0
    %805 = vmatpush1.msra.mxu0 0.0
    %806 = vmatprep.subr.mxu0 0.0
    %807 = vmatpush1.msra.mxu0 0.0
    %808 = vmatprep.subr.mxu0 0.0
    %809 = vmatpush1.msra.mxu0 0.0
    %810 = vmatprep.subr.mxu0 0.0
    %811 = vmatpush1.msra.mxu0 0.0
    %812 = vmatprep.subr.mxu0 0.0
    %813 = vmatpush1.msra.mxu0 0.0
    %814 = vmatprep.subr.mxu0 0.0
    %815 = vmatpush1.msra.mxu0 0.0
    %816 = vmatprep.subr.mxu0 0.0
    %817 = vmatpush1.msra.mxu0 0.0
    %818 = vmatprep.subr.mxu0 0.0
    %819 = vmatpush1.msra.mxu0 0.0
    %820 = vmatprep.subr.mxu0 0.0
    %821 = vmatpush1.msra.mxu0 %v665
    %822 = vmatprep.subr.mxu0 0.0
    %823 = vmatpush1.msra.mxu0 %v662
    %824 = vmatprep.subr.mxu0 0.0
    %825 = vmatpush1.msra.mxu0 %v659
    %826 = vmatprep.subr.mxu0 0.0
    %827 = vmatpush1.msra.mxu0 %v656
    %828 = vmatprep.subr.mxu0 0.0
    %829 = vmatpush2.msra.mxu0 0.0
    %830 = vmatprep.subr.mxu0 0.0
    %831 = vmatpush2.msra.mxu0 0.0
    %832 = vmatprep.subr.mxu0 0.0
    %833 = vmatpush2.msra.mxu0 0.0
    %834 = vmatprep.subr.mxu0 0.0
    %835 = vmatpush2.msra.mxu0 0.0
    %836 = vmatprep.subr.mxu0 0.0
    %837 = vmatpush2.msra.mxu0 0.0
    %838 = vmatprep.subr.mxu0 0.0
    %839 = vmatpush2.msra.mxu0 0.0
    %840 = vmatprep.subr.mxu0 0.0
    %841 = vmatpush2.msra.mxu0 0.0
    %842 = vmatprep.subr.mxu0 0.0
    %843 = vmatpush2.msra.mxu0 0.0
    %844 = vmatprep.subr.mxu0 0.0
    %845 = vmatpush2.msra.mxu0 0.0
    %846 = vmatprep.subr.mxu0 0.0
    %847 = vmatpush2.msra.mxu0 0.0
    %848 = vmatprep.subr.mxu0 0.0
    %849 = vmatpush2.msra.mxu0 0.0
    %850 = vmatprep.subr.mxu0 0.0
    %851 = vmatpush2.msra.mxu0 0.0
    %852 = vmatprep.subr.mxu0 0.0
    %853 = vmatpush2.msra.mxu0 0.0
    %854 = vmatprep.subr.mxu0 0.0
    %855 = vmatpush2.msra.mxu0 0.0
    %856 = vmatprep.subr.mxu0 0.0
    %857 = vmatpush2.msra.mxu0 0.0
    %858 = vmatprep.subr.mxu0 0.0
    %859 = vmatpush2.msra.mxu0 0.0
    %860 = vmatprep.mubr.f32.mxu0 0.0
    %861 = vmatmul.mubr.f32.gmra.mxu0 %v413
    %v862 = vpop.f32.mrf.mxu0
    %v863 = vadd.f32 %v679, %v862
    %v864 = vpop.f32.mrf.mxu0
    %865 = vmatprep.mubr.f32.mxu0 0.0
    %866 = vmatmul.mubr.f32.gmra.mxu0 %v416
    %v867 = vpop.f32.mrf.mxu0
    %v868 = vadd.f32 %v679, %v867
    %v869 = vpop.f32.mrf.mxu0
    %870 = vmatprep.mubr.f32.mxu0 0.0
    %871 = vmatmul.mubr.f32.gmra.mxu0 %v419
    %v872 = vpop.f32.mrf.mxu0
    %v873 = vadd.f32 %v679, %v872
    %v874 = vpop.f32.mrf.mxu0
    %875 = vmatprep.mubr.f32.mxu0 0.0
    %876 = vmatmul.mubr.f32.gmra.mxu0 %v422
    %v877 = vpop.f32.mrf.mxu0
    %v878 = vadd.f32 %v679, %v877
    %v879 = vpop.f32.mrf.mxu0
    %880 = vmatprep.mubr.f32.mxu0 0.0
    %881 = vmatmul.mubr.f32.gmra.mxu0 %v425
    %v882 = vpop.f32.mrf.mxu0
    %v883 = vadd.f32 %v679, %v882
    %v884 = vpop.f32.mrf.mxu0
    %885 = vmatprep.mubr.f32.mxu0 0.0
    %886 = vmatmul.mubr.f32.gmra.mxu0 %v428
    %v887 = vpop.f32.mrf.mxu0
    %v888 = vadd.f32 %v679, %v887
    %v889 = vpop.f32.mrf.mxu0
    %890 = vmatprep.mubr.f32.mxu0 0.0
    %891 = vmatmul.mubr.f32.gmra.mxu0 %v431
    %v892 = vpop.f32.mrf.mxu0
    %v893 = vadd.f32 %v679, %v892
    %v894 = vpop.f32.mrf.mxu0
    %895 = vmatprep.mubr.f32.mxu0 0.0
    %896 = vmatmul.mubr.f32.gmra.mxu0 %v434
    %v897 = vpop.f32.mrf.mxu0
    %v898 = vadd.f32 %v679, %v897
    %v899 = vpop.f32.mrf.mxu0
    %900 = vdwg.mxu0
    %901 = vst [vmem:[#allocation2] sm:$0xff] %v503
    %902 = vst [vmem:[#allocation2 + $0x8] sm:$0xff] %v505
    %903 = vst [vmem:[#allocation2 + $0x10] sm:$0xff] %v616
    %904 = vst [vmem:[#allocation2 + $0x18] sm:$0xff] %v509
    %905 = vst [vmem:[#allocation2 + $0x20] sm:$0xff] %v511
    %906 = vst [vmem:[#allocation2 + $0x28] sm:$0xff] %v621
    %907 = vst [vmem:[#allocation2 + $0x30] sm:$0xff] %v515
    %908 = vst [vmem:[#allocation2 + $0x38] sm:$0xff] %v517
    %909 = vst [vmem:[#allocation2 + $0x40] sm:$0xff] %v626
    %910 = vst [vmem:[#allocation2 + $0x48] sm:$0xff] %v521
    %911 = vst [vmem:[#allocation2 + $0x50] sm:$0xff] %v523
    %912 = vst [vmem:[#allocation2 + $0x58] sm:$0xff] %v631
    %913 = vst [vmem:[#allocation2 + $0x60] sm:$0xff] %v527
    %914 = vst [vmem:[#allocation2 + $0x68] sm:$0xff] %v529
    %915 = vst [vmem:[#allocation2 + $0x70] sm:$0xff] %v636
    %916 = vst [vmem:[#allocation2 + $0x78] sm:$0xff] %v533
    %917 = vst [vmem:[#allocation2 + $0x80] sm:$0xff] %v535
    %918 = vst [vmem:[#allocation2 + $0x88] sm:$0xff] %v641
    %919 = vst [vmem:[#allocation2 + $0x90] sm:$0xff] %v539
    %920 = vst [vmem:[#allocation2 + $0x98] sm:$0xff] %v541
    %921 = vst [vmem:[#allocation2 + $0xa0] sm:$0xff] %v646
    %922 = vst [vmem:[#allocation2 + $0xa8] sm:$0xff] %v545
    %923 = vst [vmem:[#allocation2 + $0xb0] sm:$0xff] %v547
    %924 = vst [vmem:[#allocation2 + $0xb8] sm:$0xff] %v651
    %925 = vst [vmem:[#allocation3] sm:$0xff] %v750
    %926 = vst [vmem:[#allocation3 + $0x8] sm:$0xff] %v752
    %927 = vst [vmem:[#allocation3 + $0x10] sm:$0xff] %v863
    %928 = vst [vmem:[#allocation3 + $0x18] sm:$0xff] %v756
    %929 = vst [vmem:[#allocation3 + $0x20] sm:$0xff] %v758
    %930 = vst [vmem:[#allocation3 + $0x28] sm:$0xff] %v868
    %931 = vst [vmem:[#allocation3 + $0x30] sm:$0xff] %v762
    %932 = vst [vmem:[#allocation3 + $0x38] sm:$0xff] %v764
    %933 = vst [vmem:[#allocation3 + $0x40] sm:$0xff] %v873
    %934 = vst [vmem:[#allocation3 + $0x48] sm:$0xff] %v768
    %935 = vst [vmem:[#allocation3 + $0x50] sm:$0xff] %v770
    %936 = vst [vmem:[#allocation3 + $0x58] sm:$0xff] %v878
    %937 = vst [vmem:[#allocation3 + $0x60] sm:$0xff] %v774
    %938 = vst [vmem:[#allocation3 + $0x68] sm:$0xff] %v776
    %939 = vst [vmem:[#allocation3 + $0x70] sm:$0xff] %v883
    %940 = vst [vmem:[#allocation3 + $0x78] sm:$0xff] %v780
    %941 = vst [vmem:[#allocation3 + $0x80] sm:$0xff] %v782
    %942 = vst [vmem:[#allocation3 + $0x88] sm:$0xff] %v888
    %943 = vst [vmem:[#allocation3 + $0x90] sm:$0xff] %v786
    %944 = vst [vmem:[#allocation3 + $0x98] sm:$0xff] %v788
    %945 = vst [vmem:[#allocation3 + $0xa0] sm:$0xff] %v893
    %946 = vst [vmem:[#allocation3 + $0xa8] sm:$0xff] %v792
    %947 = vst [vmem:[#allocation3 + $0xb0] sm:$0xff] %v794
    %948 = vst [vmem:[#allocation3 + $0xb8] sm:$0xff] %v898
    %v949 = vld [vmem:[#allocation8] sm:$0xff]
    %v950 = vld [vmem:[#allocation8 + $0x8] sm:$0xff]
    %v951 = vld [vmem:[#allocation8 + $0x10] sm:$0xff]
    %v952 = vld [vmem:[#allocation8 + $0x18] sm:$0xff]
    %v953 = vld [vmem:[#allocation8 + $0x20] sm:$0xff]
    %v954 = vld [vmem:[#allocation8 + $0x28] sm:$0xff]
    %v955 = vld [vmem:[#allocation8 + $0x30] sm:$0xff]
    %v956 = vld [vmem:[#allocation8 + $0x38] sm:$0xff]
    %v957 = vld [vmem:[#allocation8 + $0x40] sm:$0xff]
    %v958 = vld [vmem:[#allocation8 + $0x48] sm:$0xff]
    %v959 = vld [vmem:[#allocation8 + $0x50] sm:$0xff]
    %v960 = vld [vmem:[#allocation8 + $0x58] sm:$0xff]
    %v961 = vld [vmem:[#allocation8 + $0x60] sm:$0xff]
    %v962 = vld [vmem:[#allocation8 + $0x68] sm:$0xff]
    %v963 = vld [vmem:[#allocation8 + $0x70] sm:$0xff]
    %v964 = vld [vmem:[#allocation8 + $0x78] sm:$0xff]
    %v965 = vld [vmem:[#allocation8 + $0x80] sm:$0xff]
    %v966 = vld [vmem:[#allocation8 + $0x88] sm:$0xff]
    %v967 = vld [vmem:[#allocation8 + $0x90] sm:$0xff]
    %v968 = vld [vmem:[#allocation8 + $0x98] sm:$0xff]
    %v969 = vld [vmem:[#allocation8 + $0xa0] sm:$0xff]
    %v970 = vld [vmem:[#allocation8 + $0xa8] sm:$0xff]
    %v971 = vld [vmem:[#allocation8 + $0xb0] sm:$0xff]
    %v972 = vld [vmem:[#allocation8 + $0xb8] sm:$0xff]
    %v973 = vld [vmem:[#allocation8 + $0xc0] sm:$0xff]
    %v974 = vld [vmem:[#allocation8 + $0xc8] sm:$0xff]
    %v975 = vld [vmem:[#allocation8 + $0xd0] sm:$0xff]
    %v976 = vld [vmem:[#allocation8 + $0xd8] sm:$0xff]
    %v977 = vld [vmem:[#allocation8 + $0xe0] sm:$0xff]
    %v978 = vld [vmem:[#allocation8 + $0xe8] sm:$0xff]
    %v979 = vld [vmem:[#allocation8 + $0xf0] sm:$0xff]
    %v980 = vld [vmem:[#allocation8 + $0xf8] sm:$0xff]
    %v981 = vld [vmem:[#allocation8 + $0x100] sm:$0xff]
    %v982 = vld [vmem:[#allocation8 + $0x108] sm:$0xff]
    %v983 = vld [vmem:[#allocation8 + $0x110] sm:$0xff]
    %v984 = vld [vmem:[#allocation8 + $0x118] sm:$0xff]
    %v985 = vld [vmem:[#allocation8 + $0x120] sm:$0xff]
    %v986 = vld [vmem:[#allocation8 + $0x128] sm:$0xff]
    %v987 = vld [vmem:[#allocation8 + $0x130] sm:$0xff]
    %v988 = vld [vmem:[#allocation8 + $0x138] sm:$0xff]
    %v989 = vld [vmem:[#allocation8 + $0x140] sm:$0xff]
    %v990 = vld [vmem:[#allocation8 + $0x148] sm:$0xff]
    %v991 = vld [vmem:[#allocation8 + $0x150] sm:$0xff]
    %v992 = vld [vmem:[#allocation8 + $0x158] sm:$0xff]
    %v993 = vld [vmem:[#allocation8 + $0x160] sm:$0xff]
    %v994 = vld [vmem:[#allocation8 + $0x168] sm:$0xff]
    %v995 = vld [vmem:[#allocation8 + $0x170] sm:$0xff]
    %v996 = vld [vmem:[#allocation8 + $0x178] sm:$0xff]
    %v997 = vld [vmem:[%s7] sm:$0x7]
    %v999 = vlaneseq
    %v1000 = vshrl.u32 %v999, 7
    %v1001 = vsub.s32 0, %v1000
    %v1002 = vrot.slane %v997, %v1001
    %v1003 = vlaneseq
    %v1004 = vshrl.u32 %v1003, 7
    %v1005 = vsub.s32 1, %v1004
    %v1006 = vrot.slane %v997, %v1005
    %v1007 = vlaneseq
    %v1008 = vshrl.u32 %v1007, 7
    %v1009 = vsub.s32 2, %v1008
    %v1010 = vrot.slane %v997, %v1009
    %v1014 = vld [vmem:[#allocation2] sm:$0xff]
    %v1015 = vld [vmem:[#allocation2 + $0x8] sm:$0xff]
    %v1016 = vld [vmem:[#allocation2 + $0x10] sm:$0xff]
    %v1017 = vld [vmem:[#allocation3 + $0xa8] sm:$0xff]
    %v1018 = vld [vmem:[#allocation3 + $0xb0] sm:$0xff]
    %v1019 = vld [vmem:[#allocation3 + $0xb8] sm:$0xff]
    %v1020 = vadd.f32 %v1014, %v1017
    %v1021 = vadd.f32 %v1015, %v1018
    %v1022 = vadd.f32 %v1016, %v1019
    %1023 = vmatprep.subr.mxu0 %v995
    %1024 = vmatpush1.msra.mxu0 %v994
    %1025 = vmatprep.subr.mxu0 %v992
    %1026 = vmatpush1.msra.mxu0 %v991
    %1027 = vmatprep.subr.mxu0 %v989
    %1028 = vmatpush1.msra.mxu0 %v988
    %1029 = vmatprep.subr.mxu0 %v986
    %1030 = vmatpush1.msra.mxu0 %v985
    %1031 = vmatprep.subr.mxu0 %v983
    %1032 = vmatpush1.msra.mxu0 %v982
    %1033 = vmatprep.subr.mxu0 %v980
    %1034 = vmatpush1.msra.mxu0 %v979
    %1035 = vmatprep.subr.mxu0 %v977
    %1036 = vmatpush1.msra.mxu0 %v976
    %1037 = vmatprep.subr.mxu0 %v974
    %1038 = vmatpush1.msra.mxu0 %v973
    %1039 = vmatprep.subr.mxu0 %v971
    %1040 = vmatpush1.msra.mxu0 %v970
    %1041 = vmatprep.subr.mxu0 %v968
    %1042 = vmatpush1.msra.mxu0 %v967
    %1043 = vmatprep.subr.mxu0 %v965
    %1044 = vmatpush1.msra.mxu0 %v964
    %1045 = vmatprep.subr.mxu0 %v962
    %1046 = vmatpush1.msra.mxu0 %v961
    %1047 = vmatprep.subr.mxu0 %v959
    %1048 = vmatpush1.msra.mxu0 %v958
    %1049 = vmatprep.subr.mxu0 %v956
    %1050 = vmatpush1.msra.mxu0 %v955
    %1051 = vmatprep.subr.mxu0 %v953
    %1052 = vmatpush1.msra.mxu0 %v952
    %1053 = vmatprep.subr.mxu0 %v950
    %1054 = vmatpush1.msra.mxu0 %v949
    %1055 = vmatprep.subr.mxu0 0.0
    %1056 = vmatpush2.msra.mxu0 0.0
    %1057 = vmatprep.subr.mxu0 0.0
    %1058 = vmatpush2.msra.mxu0 0.0
    %1059 = vmatprep.subr.mxu0 0.0
    %1060 = vmatpush2.msra.mxu0 0.0
    %1061 = vmatprep.subr.mxu0 0.0
    %1062 = vmatpush2.msra.mxu0 0.0
    %1063 = vmatprep.subr.mxu0 0.0
    %1064 = vmatpush2.msra.mxu0 0.0
    %1065 = vmatprep.subr.mxu0 0.0
    %1066 = vmatpush2.msra.mxu0 0.0
    %1067 = vmatprep.subr.mxu0 0.0
    %1068 = vmatpush2.msra.mxu0 0.0
    %1069 = vmatprep.subr.mxu0 0.0
    %1070 = vmatpush2.msra.mxu0 0.0
    %1071 = vmatprep.subr.mxu0 0.0
    %1072 = vmatpush2.msra.mxu0 0.0
    %1073 = vmatprep.subr.mxu0 0.0
    %1074 = vmatpush2.msra.mxu0 0.0
    %1075 = vmatprep.subr.mxu0 0.0
    %1076 = vmatpush2.msra.mxu0 0.0
    %1077 = vmatprep.subr.mxu0 0.0
    %1078 = vmatpush2.msra.mxu0 0.0
    %1079 = vmatprep.subr.mxu0 0.0
    %1080 = vmatpush2.msra.mxu0 0.0
    %1081 = vmatprep.subr.mxu0 0.0
    %1082 = vmatpush2.msra.mxu0 0.0
    %1083 = vmatprep.subr.mxu0 0.0
    %1084 = vmatpush2.msra.mxu0 0.0
    %1085 = vmatprep.subr.mxu0 0.0
    %1086 = vmatpush2.msra.mxu0 0.0
    %1087 = vmatprep.mubr.f32.mxu0 0.0
    %1088 = vmatmul.mubr.f32.gmra.mxu0 0.0
    %v1089 = vpop.f32.mrf.mxu0
    %v1090 = vadd.f32 %v1002, %v1089
    %v1091 = vpop.f32.mrf.mxu0
    %v1092 = vadd.f32 %v1006, %v1091
    %1093 = vdwg.mxu0
    %1094 = vmatprep.subr.mxu0 0.0
    %1095 = vmatpush1.msra.mxu0 %v996
    %1096 = vmatprep.subr.mxu0 0.0
    %1097 = vmatpush1.msra.mxu0 %v993
    %1098 = vmatprep.subr.mxu0 0.0
    %1099 = vmatpush1.msra.mxu0 %v990
    %1100 = vmatprep.subr.mxu0 0.0
    %1101 = vmatpush1.msra.mxu0 %v987
    %1102 = vmatprep.subr.mxu0 0.0
    %1103 = vmatpush1.msra.mxu0 %v984
    %1104 = vmatprep.subr.mxu0 0.0
    %1105 = vmatpush1.msra.mxu0 %v981
    %1106 = vmatprep.subr.mxu0 0.0
    %1107 = vmatpush1.msra.mxu0 %v978
    %1108 = vmatprep.subr.mxu0 0.0
    %1109 = vmatpush1.msra.mxu0 %v975
    %1110 = vmatprep.subr.mxu0 0.0
    %1111 = vmatpush1.msra.mxu0 %v972
    %1112 = vmatprep.subr.mxu0 0.0
    %1113 = vmatpush1.msra.mxu0 %v969
    %1114 = vmatprep.subr.mxu0 0.0
    %1115 = vmatpush1.msra.mxu0 %v966
    %1116 = vmatprep.subr.mxu0 0.0
    %1117 = vmatpush1.msra.mxu0 %v963
    %1118 = vmatprep.subr.mxu0 0.0
    %1119 = vmatpush1.msra.mxu0 %v960
    %1120 = vmatprep.subr.mxu0 0.0
    %1121 = vmatpush1.msra.mxu0 %v957
    %1122 = vmatprep.subr.mxu0 0.0
    %1123 = vmatpush1.msra.mxu0 %v954
    %1124 = vmatprep.subr.mxu0 0.0
    %1125 = vmatpush1.msra.mxu0 %v951
    %1126 = vmatprep.subr.mxu0 0.0
    %1127 = vmatpush2.msra.mxu0 0.0
    %1128 = vmatprep.subr.mxu0 0.0
    %1129 = vmatpush2.msra.mxu0 0.0
    %1130 = vmatprep.subr.mxu0 0.0
    %1131 = vmatpush2.msra.mxu0 0.0
    %1132 = vmatprep.subr.mxu0 0.0
    %1133 = vmatpush2.msra.mxu0 0.0
    %1134 = vmatprep.subr.mxu0 0.0
    %1135 = vmatpush2.msra.mxu0 0.0
    %1136 = vmatprep.subr.mxu0 0.0
    %1137 = vmatpush2.msra.mxu0 0.0
    %1138 = vmatprep.subr.mxu0 0.0
    %1139 = vmatpush2.msra.mxu0 0.0
    %1140 = vmatprep.subr.mxu0 0.0
    %1141 = vmatpush2.msra.mxu0 0.0
    %1142 = vmatprep.subr.mxu0 0.0
    %1143 = vmatpush2.msra.mxu0 0.0
    %1144 = vmatprep.subr.mxu0 0.0
    %1145 = vmatpush2.msra.mxu0 0.0
    %1146 = vmatprep.subr.mxu0 0.0
    %1147 = vmatpush2.msra.mxu0 0.0
    %1148 = vmatprep.subr.mxu0 0.0
    %1149 = vmatpush2.msra.mxu0 0.0
    %1150 = vmatprep.subr.mxu0 0.0
    %1151 = vmatpush2.msra.mxu0 0.0
    %1152 = vmatprep.subr.mxu0 0.0
    %1153 = vmatpush2.msra.mxu0 0.0
    %1154 = vmatprep.subr.mxu0 0.0
    %1155 = vmatpush2.msra.mxu0 0.0
    %1156 = vmatprep.subr.mxu0 0.0
    %1157 = vmatpush2.msra.mxu0 0.0
    %1158 = vmatprep.mubr.f32.mxu0 0.0
    %1159 = vmatmul.mubr.f32.gmra.mxu0 0.0
    %v1160 = vpop.f32.mrf.mxu0
    %v1161 = vadd.f32 %v1010, %v1160
    %v1162 = vpop.f32.mrf.mxu0
    %1163 = vdwg.mxu0
    %v1164 = vadd.f32 %v1020, %v1090
    %v1165 = vxor.u32 %v1164, 2147483648
    %v1166 = vmul.f32 %v1165, 1.442695
    %v1167 = vpow.pop %v1166
    %v1168 = vadd.f32 %v1167, 1.0
    %v1169 = vrcp.pop %v1168
    %v1170 = vmul.f32 1.0, %v1169
    %v1171 = vadd.f32 %v1021, %v1092
    %v1172 = vxor.u32 %v1171, 2147483648
    %v1173 = vmul.f32 %v1172, 1.442695
    %v1174 = vpow.pop %v1173
    %v1175 = vadd.f32 %v1174, 1.0
    %v1176 = vrcp.pop %v1175
    %v1177 = vmul.f32 1.0, %v1176
    %v1178 = vmul.f32 %v1170, %v1161
    %v1179 = vadd.f32 %v1022, %v1178
    %v1180 = vtanh.pop %v1179
    %v1181 = vsub.f32 1.0, %v1177
    %v1182 = vmul.f32 %v1181, %v1180
    %v1183 = vmul.f32 %v1177, 0.0
    %v1184 = vadd.f32 %v1182, %v1183
    %1185 = vst [vmem:[#allocation4] sm:$0xff] %v1184
    %1186 = vst [vmem:[#allocation5 + $0x38] sm:$0xff] %v1184
    %v1187 = vld [vmem:[#allocation2 + $0x18] sm:$0xff]
    %v1188 = vld [vmem:[#allocation2 + $0x20] sm:$0xff]
    %v1189 = vld [vmem:[#allocation2 + $0x28] sm:$0xff]
    %v1190 = vld [vmem:[#allocation3 + $0x90] sm:$0xff]
    %v1191 = vld [vmem:[#allocation3 + $0x98] sm:$0xff]
    %v1192 = vld [vmem:[#allocation3 + $0xa0] sm:$0xff]
    %v1193 = vadd.f32 %v1187, %v1190
    %v1194 = vadd.f32 %v1188, %v1191
    %v1195 = vadd.f32 %v1189, %v1192
    %1196 = vmatprep.subr.mxu0 %v995
    %1197 = vmatpush1.msra.mxu0 %v994
    %1198 = vmatprep.subr.mxu0 %v992
    %1199 = vmatpush1.msra.mxu0 %v991
    %1200 = vmatprep.subr.mxu0 %v989
    %1201 = vmatpush1.msra.mxu0 %v988
    %1202 = vmatprep.subr.mxu0 %v986
    %1203 = vmatpush1.msra.mxu0 %v985
    %1204 = vmatprep.subr.mxu0 %v983
    %1205 = vmatpush1.msra.mxu0 %v982
    %1206 = vmatprep.subr.mxu0 %v980
    %1207 = vmatpush1.msra.mxu0 %v979
    %1208 = vmatprep.subr.mxu0 %v977
    %1209 = vmatpush1.msra.mxu0 %v976
    %1210 = vmatprep.subr.mxu0 %v974
    %1211 = vmatpush1.msra.mxu0 %v973
    %1212 = vmatprep.subr.mxu0 %v971
    %1213 = vmatpush1.msra.mxu0 %v970
    %1214 = vmatprep.subr.mxu0 %v968
    %1215 = vmatpush1.msra.mxu0 %v967
    %1216 = vmatprep.subr.mxu0 %v965
    %1217 = vmatpush1.msra.mxu0 %v964
    %1218 = vmatprep.subr.mxu0 %v962
    %1219 = vmatpush1.msra.mxu0 %v961
    %1220 = vmatprep.subr.mxu0 %v959
    %1221 = vmatpush1.msra.mxu0 %v958
    %1222 = vmatprep.subr.mxu0 %v956
    %1223 = vmatpush1.msra.mxu0 %v955
    %1224 = vmatprep.subr.mxu0 %v953
    %1225 = vmatpush1.msra.mxu0 %v952
    %1226 = vmatprep.subr.mxu0 %v950
    %1227 = vmatpush1.msra.mxu0 %v949
    %1228 = vmatprep.subr.mxu0 0.0
    %1229 = vmatpush2.msra.mxu0 0.0
    %1230 = vmatprep.subr.mxu0 0.0
    %1231 = vmatpush2.msra.mxu0 0.0
    %1232 = vmatprep.subr.mxu0 0.0
    %1233 = vmatpush2.msra.mxu0 0.0
    %1234 = vmatprep.subr.mxu0 0.0
    %1235 = vmatpush2.msra.mxu0 0.0
    %1236 = vmatprep.subr.mxu0 0.0
    %1237 = vmatpush2.msra.mxu0 0.0
    %1238 = vmatprep.subr.mxu0 0.0
    %1239 = vmatpush2.msra.mxu0 0.0
    %1240 = vmatprep.subr.mxu0 0.0
    %1241 = vmatpush2.msra.mxu0 0.0
    %1242 = vmatprep.subr.mxu0 0.0
    %1243 = vmatpush2.msra.mxu0 0.0
    %1244 = vmatprep.subr.mxu0 0.0
    %1245 = vmatpush2.msra.mxu0 0.0
    %1246 = vmatprep.subr.mxu0 0.0
    %1247 = vmatpush2.msra.mxu0 0.0
    %1248 = vmatprep.subr.mxu0 0.0
    %1249 = vmatpush2.msra.mxu0 0.0
    %1250 = vmatprep.subr.mxu0 0.0
    %1251 = vmatpush2.msra.mxu0 0.0
    %1252 = vmatprep.subr.mxu0 0.0
    %1253 = vmatpush2.msra.mxu0 0.0
    %1254 = vmatprep.subr.mxu0 0.0
    %1255 = vmatpush2.msra.mxu0 0.0
    %1256 = vmatprep.subr.mxu0 0.0
    %1257 = vmatpush2.msra.mxu0 0.0
    %1258 = vmatprep.subr.mxu0 0.0
    %1259 = vmatpush2.msra.mxu0 0.0
    %1260 = vmatprep.mubr.f32.mxu0 0.0
    %1261 = vmatmul.mubr.f32.gmra.mxu0 %v1184
    %v1262 = vpop.f32.mrf.mxu0
    %v1263 = vadd.f32 %v1002, %v1262
    %v1264 = vpop.f32.mrf.mxu0
    %v1265 = vadd.f32 %v1006, %v1264
    %1266 = vdwg.mxu0
    %1267 = vmatprep.subr.mxu0 0.0
    %1268 = vmatpush1.msra.mxu0 %v996
    %1269 = vmatprep.subr.mxu0 0.0
    %1270 = vmatpush1.msra.mxu0 %v993
    %1271 = vmatprep.subr.mxu0 0.0
    %1272 = vmatpush1.msra.mxu0 %v990
    %1273 = vmatprep.subr.mxu0 0.0
    %1274 = vmatpush1.msra.mxu0 %v987
    %1275 = vmatprep.subr.mxu0 0.0
    %1276 = vmatpush1.msra.mxu0 %v984
    %1277 = vmatprep.subr.mxu0 0.0
    %1278 = vmatpush1.msra.mxu0 %v981
    %1279 = vmatprep.subr.mxu0 0.0
    %1280 = vmatpush1.msra.mxu0 %v978
    %1281 = vmatprep.subr.mxu0 0.0
    %1282 = vmatpush1.msra.mxu0 %v975
    %1283 = vmatprep.subr.mxu0 0.0
    %1284 = vmatpush1.msra.mxu0 %v972
    %1285 = vmatprep.subr.mxu0 0.0
    %1286 = vmatpush1.msra.mxu0 %v969
    %1287 = vmatprep.subr.mxu0 0.0
    %1288 = vmatpush1.msra.mxu0 %v966
    %1289 = vmatprep.subr.mxu0 0.0
    %1290 = vmatpush1.msra.mxu0 %v963
    %1291 = vmatprep.subr.mxu0 0.0
    %1292 = vmatpush1.msra.mxu0 %v960
    %1293 = vmatprep.subr.mxu0 0.0
    %1294 = vmatpush1.msra.mxu0 %v957
    %1295 = vmatprep.subr.mxu0 0.0
    %1296 = vmatpush1.msra.mxu0 %v954
    %1297 = vmatprep.subr.mxu0 0.0
    %1298 = vmatpush1.msra.mxu0 %v951
    %1299 = vmatprep.subr.mxu0 0.0
    %1300 = vmatpush2.msra.mxu0 0.0
    %1301 = vmatprep.subr.mxu0 0.0
    %1302 = vmatpush2.msra.mxu0 0.0
    %1303 = vmatprep.subr.mxu0 0.0
    %1304 = vmatpush2.msra.mxu0 0.0
    %1305 = vmatprep.subr.mxu0 0.0
    %1306 = vmatpush2.msra.mxu0 0.0
    %1307 = vmatprep.subr.mxu0 0.0
    %1308 = vmatpush2.msra.mxu0 0.0
    %1309 = vmatprep.subr.mxu0 0.0
    %1310 = vmatpush2.msra.mxu0 0.0
    %1311 = vmatprep.subr.mxu0 0.0
    %1312 = vmatpush2.msra.mxu0 0.0
    %1313 = vmatprep.subr.mxu0 0.0
    %1314 = vmatpush2.msra.mxu0 0.0
    %1315 = vmatprep.subr.mxu0 0.0
    %1316 = vmatpush2.msra.mxu0 0.0
    %1317 = vmatprep.subr.mxu0 0.0
    %1318 = vmatpush2.msra.mxu0 0.0
    %1319 = vmatprep.subr.mxu0 0.0
    %1320 = vmatpush2.msra.mxu0 0.0
    %1321 = vmatprep.subr.mxu0 0.0
    %1322 = vmatpush2.msra.mxu0 0.0
    %1323 = vmatprep.subr.mxu0 0.0
    %1324 = vmatpush2.msra.mxu0 0.0
    %1325 = vmatprep.subr.mxu0 0.0
    %1326 = vmatpush2.msra.mxu0 0.0
    %1327 = vmatprep.subr.mxu0 0.0
    %1328 = vmatpush2.msra.mxu0 0.0
    %1329 = vmatprep.subr.mxu0 0.0
    %1330 = vmatpush2.msra.mxu0 0.0
    %1331 = vmatprep.mubr.f32.mxu0 0.0
    %1332 = vmatmul.mubr.f32.gmra.mxu0 %v1184
    %v1333 = vpop.f32.mrf.mxu0
    %v1334 = vadd.f32 %v1010, %v1333
    %v1335 = vpop.f32.mrf.mxu0
    %1336 = vdwg.mxu0
    %v1337 = vadd.f32 %v1193, %v1263
    %v1338 = vxor.u32 %v1337, 2147483648
    %v1339 = vmul.f32 %v1338, 1.442695
    %v1340 = vpow.pop %v1339
    %v1341 = vadd.f32 %v1340, 1.0
    %v1342 = vrcp.pop %v1341
    %v1343 = vmul.f32 1.0, %v1342
    %v1344 = vadd.f32 %v1194, %v1265
    %v1345 = vxor.u32 %v1344, 2147483648
    %v1346 = vmul.f32 %v1345, 1.442695
    %v1347 = vpow.pop %v1346
    %v1348 = vadd.f32 %v1347, 1.0
    %v1349 = vrcp.pop %v1348
    %v1350 = vmul.f32 1.0, %v1349
    %v1351 = vmul.f32 %v1343, %v1334
    %v1352 = vadd.f32 %v1195, %v1351
    %v1353 = vtanh.pop %v1352
    %v1354 = vsub.f32 1.0, %v1350
    %v1355 = vmul.f32 %v1354, %v1353
    %v1356 = vmul.f32 %v1350, %v1184
    %v1357 = vadd.f32 %v1355, %v1356
    %1358 = vst [vmem:[#allocation4 + $0x8] sm:$0xff] %v1357
    %1359 = vst [vmem:[#allocation5 + $0x30] sm:$0xff] %v1357
    %v1360 = vld [vmem:[#allocation2 + $0x30] sm:$0xff]
    %v1361 = vld [vmem:[#allocation2 + $0x38] sm:$0xff]
    %v1362 = vld [vmem:[#allocation2 + $0x40] sm:$0xff]
    %v1363 = vld [vmem:[#allocation3 + $0x78] sm:$0xff]
    %v1364 = vld [vmem:[#allocation3 + $0x80] sm:$0xff]
    %v1365 = vld [vmem:[#allocation3 + $0x88] sm:$0xff]
    %v1366 = vadd.f32 %v1360, %v1363
    %v1367 = vadd.f32 %v1361, %v1364
    %v1368 = vadd.f32 %v1362, %v1365
    %1369 = vmatprep.subr.mxu0 %v995
    %1370 = vmatpush1.msra.mxu0 %v994
    %1371 = vmatprep.subr.mxu0 %v992
    %1372 = vmatpush1.msra.mxu0 %v991
    %1373 = vmatprep.subr.mxu0 %v989
    %1374 = vmatpush1.msra.mxu0 %v988
    %1375 = vmatprep.subr.mxu0 %v986
    %1376 = vmatpush1.msra.mxu0 %v985
    %1377 = vmatprep.subr.mxu0 %v983
    %1378 = vmatpush1.msra.mxu0 %v982
    %1379 = vmatprep.subr.mxu0 %v980
    %1380 = vmatpush1.msra.mxu0 %v979
    %1381 = vmatprep.subr.mxu0 %v977
    %1382 = vmatpush1.msra.mxu0 %v976
    %1383 = vmatprep.subr.mxu0 %v974
    %1384 = vmatpush1.msra.mxu0 %v973
    %1385 = vmatprep.subr.mxu0 %v971
    %1386 = vmatpush1.msra.mxu0 %v970
    %1387 = vmatprep.subr.mxu0 %v968
    %1388 = vmatpush1.msra.mxu0 %v967
    %1389 = vmatprep.subr.mxu0 %v965
    %1390 = vmatpush1.msra.mxu0 %v964
    %1391 = vmatprep.subr.mxu0 %v962
    %1392 = vmatpush1.msra.mxu0 %v961
    %1393 = vmatprep.subr.mxu0 %v959
    %1394 = vmatpush1.msra.mxu0 %v958
    %1395 = vmatprep.subr.mxu0 %v956
    %1396 = vmatpush1.msra.mxu0 %v955
    %1397 = vmatprep.subr.mxu0 %v953
    %1398 = vmatpush1.msra.mxu0 %v952
    %1399 = vmatprep.subr.mxu0 %v950
    %1400 = vmatpush1.msra.mxu0 %v949
    %1401 = vmatprep.subr.mxu0 0.0
    %1402 = vmatpush2.msra.mxu0 0.0
    %1403 = vmatprep.subr.mxu0 0.0
    %1404 = vmatpush2.msra.mxu0 0.0
    %1405 = vmatprep.subr.mxu0 0.0
    %1406 = vmatpush2.msra.mxu0 0.0
    %1407 = vmatprep.subr.mxu0 0.0
    %1408 = vmatpush2.msra.mxu0 0.0
    %1409 = vmatprep.subr.mxu0 0.0
    %1410 = vmatpush2.msra.mxu0 0.0
    %1411 = vmatprep.subr.mxu0 0.0
    %1412 = vmatpush2.msra.mxu0 0.0
    %1413 = vmatprep.subr.mxu0 0.0
    %1414 = vmatpush2.msra.mxu0 0.0
    %1415 = vmatprep.subr.mxu0 0.0
    %1416 = vmatpush2.msra.mxu0 0.0
    %1417 = vmatprep.subr.mxu0 0.0
    %1418 = vmatpush2.msra.mxu0 0.0
    %1419 = vmatprep.subr.mxu0 0.0
    %1420 = vmatpush2.msra.mxu0 0.0
    %1421 = vmatprep.subr.mxu0 0.0
    %1422 = vmatpush2.msra.mxu0 0.0
    %1423 = vmatprep.subr.mxu0 0.0
    %1424 = vmatpush2.msra.mxu0 0.0
    %1425 = vmatprep.subr.mxu0 0.0
    %1426 = vmatpush2.msra.mxu0 0.0
    %1427 = vmatprep.subr.mxu0 0.0
    %1428 = vmatpush2.msra.mxu0 0.0
    %1429 = vmatprep.subr.mxu0 0.0
    %1430 = vmatpush2.msra.mxu0 0.0
    %1431 = vmatprep.subr.mxu0 0.0
    %1432 = vmatpush2.msra.mxu0 0.0
    %1433 = vmatprep.mubr.f32.mxu0 0.0
    %1434 = vmatmul.mubr.f32.gmra.mxu0 %v1357
    %v1435 = vpop.f32.mrf.mxu0
    %v1436 = vadd.f32 %v1002, %v1435
    %v1437 = vpop.f32.mrf.mxu0
    %v1438 = vadd.f32 %v1006, %v1437
    %1439 = vdwg.mxu0
    %1440 = vmatprep.subr.mxu0 0.0
    %1441 = vmatpush1.msra.mxu0 %v996
    %1442 = vmatprep.subr.mxu0 0.0
    %1443 = vmatpush1.msra.mxu0 %v993
    %1444 = vmatprep.subr.mxu0 0.0
    %1445 = vmatpush1.msra.mxu0 %v990
    %1446 = vmatprep.subr.mxu0 0.0
    %1447 = vmatpush1.msra.mxu0 %v987
    %1448 = vmatprep.subr.mxu0 0.0
    %1449 = vmatpush1.msra.mxu0 %v984
    %1450 = vmatprep.subr.mxu0 0.0
    %1451 = vmatpush1.msra.mxu0 %v981
    %1452 = vmatprep.subr.mxu0 0.0
    %1453 = vmatpush1.msra.mxu0 %v978
    %1454 = vmatprep.subr.mxu0 0.0
    %1455 = vmatpush1.msra.mxu0 %v975
    %1456 = vmatprep.subr.mxu0 0.0
    %1457 = vmatpush1.msra.mxu0 %v972
    %1458 = vmatprep.subr.mxu0 0.0
    %1459 = vmatpush1.msra.mxu0 %v969
    %1460 = vmatprep.subr.mxu0 0.0
    %1461 = vmatpush1.msra.mxu0 %v966
    %1462 = vmatprep.subr.mxu0 0.0
    %1463 = vmatpush1.msra.mxu0 %v963
    %1464 = vmatprep.subr.mxu0 0.0
    %1465 = vmatpush1.msra.mxu0 %v960
    %1466 = vmatprep.subr.mxu0 0.0
    %1467 = vmatpush1.msra.mxu0 %v957
    %1468 = vmatprep.subr.mxu0 0.0
    %1469 = vmatpush1.msra.mxu0 %v954
    %1470 = vmatprep.subr.mxu0 0.0
    %1471 = vmatpush1.msra.mxu0 %v951
    %1472 = vmatprep.subr.mxu0 0.0
    %1473 = vmatpush2.msra.mxu0 0.0
    %1474 = vmatprep.subr.mxu0 0.0
    %1475 = vmatpush2.msra.mxu0 0.0
    %1476 = vmatprep.subr.mxu0 0.0
    %1477 = vmatpush2.msra.mxu0 0.0
    %1478 = vmatprep.subr.mxu0 0.0
    %1479 = vmatpush2.msra.mxu0 0.0
    %1480 = vmatprep.subr.mxu0 0.0
    %1481 = vmatpush2.msra.mxu0 0.0
    %1482 = vmatprep.subr.mxu0 0.0
    %1483 = vmatpush2.msra.mxu0 0.0
    %1484 = vmatprep.subr.mxu0 0.0
    %1485 = vmatpush2.msra.mxu0 0.0
    %1486 = vmatprep.subr.mxu0 0.0
    %1487 = vmatpush2.msra.mxu0 0.0
    %1488 = vmatprep.subr.mxu0 0.0
    %1489 = vmatpush2.msra.mxu0 0.0
    %1490 = vmatprep.subr.mxu0 0.0
    %1491 = vmatpush2.msra.mxu0 0.0
    %1492 = vmatprep.subr.mxu0 0.0
    %1493 = vmatpush2.msra.mxu0 0.0
    %1494 = vmatprep.subr.mxu0 0.0
    %1495 = vmatpush2.msra.mxu0 0.0
    %1496 = vmatprep.subr.mxu0 0.0
    %1497 = vmatpush2.msra.mxu0 0.0
    %1498 = vmatprep.subr.mxu0 0.0
    %1499 = vmatpush2.msra.mxu0 0.0
    %1500 = vmatprep.subr.mxu0 0.0
    %1501 = vmatpush2.msra.mxu0 0.0
    %1502 = vmatprep.subr.mxu0 0.0
    %1503 = vmatpush2.msra.mxu0 0.0
    %1504 = vmatprep.mubr.f32.mxu0 0.0
    %1505 = vmatmul.mubr.f32.gmra.mxu0 %v1357
    %v1506 = vpop.f32.mrf.mxu0
    %v1507 = vadd.f32 %v1010, %v1506
    %v1508 = vpop.f32.mrf.mxu0
    %1509 = vdwg.mxu0
    %v1510 = vadd.f32 %v1366, %v1436
    %v1511 = vxor.u32 %v1510, 2147483648
    %v1512 = vmul.f32 %v1511, 1.442695
    %v1513 = vpow.pop %v1512
    %v1514 = vadd.f32 %v1513, 1.0
    %v1515 = vrcp.pop %v1514
    %v1516 = vmul.f32 1.0, %v1515
    %v1517 = vadd.f32 %v1367, %v1438
    %v1518 = vxor.u32 %v1517, 2147483648
    %v1519 = vmul.f32 %v1518, 1.442695
    %v1520 = vpow.pop %v1519
    %v1521 = vadd.f32 %v1520, 1.0
    %v1522 = vrcp.pop %v1521
    %v1523 = vmul.f32 1.0, %v1522
    %v1524 = vmul.f32 %v1516, %v1507
    %v1525 = vadd.f32 %v1368, %v1524
    %v1526 = vtanh.pop %v1525
    %v1527 = vsub.f32 1.0, %v1523
    %v1528 = vmul.f32 %v1527, %v1526
    %v1529 = vmul.f32 %v1523, %v1357
    %v1530 = vadd.f32 %v1528, %v1529
    %1531 = vst [vmem:[#allocation4 + $0x10] sm:$0xff] %v1530
    %1532 = vst [vmem:[#allocation5 + $0x28] sm:$0xff] %v1530
    %v1533 = vld [vmem:[#allocation2 + $0x48] sm:$0xff]
    %v1534 = vld [vmem:[#allocation2 + $0x50] sm:$0xff]
    %v1535 = vld [vmem:[#allocation2 + $0x58] sm:$0xff]
    %v1536 = vld [vmem:[#allocation3 + $0x60] sm:$0xff]
    %v1537 = vld [vmem:[#allocation3 + $0x68] sm:$0xff]
    %v1538 = vld [vmem:[#allocation3 + $0x70] sm:$0xff]
    %v1539 = vadd.f32 %v1533, %v1536
    %v1540 = vadd.f32 %v1534, %v1537
    %v1541 = vadd.f32 %v1535, %v1538
    %1542 = vmatprep.subr.mxu0 %v995
    %1543 = vmatpush1.msra.mxu0 %v994
    %1544 = vmatprep.subr.mxu0 %v992
    %1545 = vmatpush1.msra.mxu0 %v991
    %1546 = vmatprep.subr.mxu0 %v989
    %1547 = vmatpush1.msra.mxu0 %v988
    %1548 = vmatprep.subr.mxu0 %v986
    %1549 = vmatpush1.msra.mxu0 %v985
    %1550 = vmatprep.subr.mxu0 %v983
    %1551 = vmatpush1.msra.mxu0 %v982
    %1552 = vmatprep.subr.mxu0 %v980
    %1553 = vmatpush1.msra.mxu0 %v979
    %1554 = vmatprep.subr.mxu0 %v977
    %1555 = vmatpush1.msra.mxu0 %v976
    %1556 = vmatprep.subr.mxu0 %v974
    %1557 = vmatpush1.msra.mxu0 %v973
    %1558 = vmatprep.subr.mxu0 %v971
    %1559 = vmatpush1.msra.mxu0 %v970
    %1560 = vmatprep.subr.mxu0 %v968
    %1561 = vmatpush1.msra.mxu0 %v967
    %1562 = vmatprep.subr.mxu0 %v965
    %1563 = vmatpush1.msra.mxu0 %v964
    %1564 = vmatprep.subr.mxu0 %v962
    %1565 = vmatpush1.msra.mxu0 %v961
    %1566 = vmatprep.subr.mxu0 %v959
    %1567 = vmatpush1.msra.mxu0 %v958
    %1568 = vmatprep.subr.mxu0 %v956
    %1569 = vmatpush1.msra.mxu0 %v955
    %1570 = vmatprep.subr.mxu0 %v953
    %1571 = vmatpush1.msra.mxu0 %v952
    %1572 = vmatprep.subr.mxu0 %v950
    %1573 = vmatpush1.msra.mxu0 %v949
    %1574 = vmatprep.subr.mxu0 0.0
    %1575 = vmatpush2.msra.mxu0 0.0
    %1576 = vmatprep.subr.mxu0 0.0
    %1577 = vmatpush2.msra.mxu0 0.0
    %1578 = vmatprep.subr.mxu0 0.0
    %1579 = vmatpush2.msra.mxu0 0.0
    %1580 = vmatprep.subr.mxu0 0.0
    %1581 = vmatpush2.msra.mxu0 0.0
    %1582 = vmatprep.subr.mxu0 0.0
    %1583 = vmatpush2.msra.mxu0 0.0
    %1584 = vmatprep.subr.mxu0 0.0
    %1585 = vmatpush2.msra.mxu0 0.0
    %1586 = vmatprep.subr.mxu0 0.0
    %1587 = vmatpush2.msra.mxu0 0.0
    %1588 = vmatprep.subr.mxu0 0.0
    %1589 = vmatpush2.msra.mxu0 0.0
    %1590 = vmatprep.subr.mxu0 0.0
    %1591 = vmatpush2.msra.mxu0 0.0
    %1592 = vmatprep.subr.mxu0 0.0
    %1593 = vmatpush2.msra.mxu0 0.0
    %1594 = vmatprep.subr.mxu0 0.0
    %1595 = vmatpush2.msra.mxu0 0.0
    %1596 = vmatprep.subr.mxu0 0.0
    %1597 = vmatpush2.msra.mxu0 0.0
    %1598 = vmatprep.subr.mxu0 0.0
    %1599 = vmatpush2.msra.mxu0 0.0
    %1600 = vmatprep.subr.mxu0 0.0
    %1601 = vmatpush2.msra.mxu0 0.0
    %1602 = vmatprep.subr.mxu0 0.0
    %1603 = vmatpush2.msra.mxu0 0.0
    %1604 = vmatprep.subr.mxu0 0.0
    %1605 = vmatpush2.msra.mxu0 0.0
    %1606 = vmatprep.mubr.f32.mxu0 0.0
    %1607 = vmatmul.mubr.f32.gmra.mxu0 %v1530
    %v1608 = vpop.f32.mrf.mxu0
    %v1609 = vadd.f32 %v1002, %v1608
    %v1610 = vpop.f32.mrf.mxu0
    %v1611 = vadd.f32 %v1006, %v1610
    %1612 = vdwg.mxu0
    %1613 = vmatprep.subr.mxu0 0.0
    %1614 = vmatpush1.msra.mxu0 %v996
    %1615 = vmatprep.subr.mxu0 0.0
    %1616 = vmatpush1.msra.mxu0 %v993
    %1617 = vmatprep.subr.mxu0 0.0
    %1618 = vmatpush1.msra.mxu0 %v990
    %1619 = vmatprep.subr.mxu0 0.0
    %1620 = vmatpush1.msra.mxu0 %v987
    %1621 = vmatprep.subr.mxu0 0.0
    %1622 = vmatpush1.msra.mxu0 %v984
    %1623 = vmatprep.subr.mxu0 0.0
    %1624 = vmatpush1.msra.mxu0 %v981
    %1625 = vmatprep.subr.mxu0 0.0
    %1626 = vmatpush1.msra.mxu0 %v978
    %1627 = vmatprep.subr.mxu0 0.0
    %1628 = vmatpush1.msra.mxu0 %v975
    %1629 = vmatprep.subr.mxu0 0.0
    %1630 = vmatpush1.msra.mxu0 %v972
    %1631 = vmatprep.subr.mxu0 0.0
    %1632 = vmatpush1.msra.mxu0 %v969
    %1633 = vmatprep.subr.mxu0 0.0
    %1634 = vmatpush1.msra.mxu0 %v966
    %1635 = vmatprep.subr.mxu0 0.0
    %1636 = vmatpush1.msra.mxu0 %v963
    %1637 = vmatprep.subr.mxu0 0.0
    %1638 = vmatpush1.msra.mxu0 %v960
    %1639 = vmatprep.subr.mxu0 0.0
    %1640 = vmatpush1.msra.mxu0 %v957
    %1641 = vmatprep.subr.mxu0 0.0
    %1642 = vmatpush1.msra.mxu0 %v954
    %1643 = vmatprep.subr.mxu0 0.0
    %1644 = vmatpush1.msra.mxu0 %v951
    %1645 = vmatprep.subr.mxu0 0.0
    %1646 = vmatpush2.msra.mxu0 0.0
    %1647 = vmatprep.subr.mxu0 0.0
    %1648 = vmatpush2.msra.mxu0 0.0
    %1649 = vmatprep.subr.mxu0 0.0
    %1650 = vmatpush2.msra.mxu0 0.0
    %1651 = vmatprep.subr.mxu0 0.0
    %1652 = vmatpush2.msra.mxu0 0.0
    %1653 = vmatprep.subr.mxu0 0.0
    %1654 = vmatpush2.msra.mxu0 0.0
    %1655 = vmatprep.subr.mxu0 0.0
    %1656 = vmatpush2.msra.mxu0 0.0
    %1657 = vmatprep.subr.mxu0 0.0
    %1658 = vmatpush2.msra.mxu0 0.0
    %1659 = vmatprep.subr.mxu0 0.0
    %1660 = vmatpush2.msra.mxu0 0.0
    %1661 = vmatprep.subr.mxu0 0.0
    %1662 = vmatpush2.msra.mxu0 0.0
    %1663 = vmatprep.subr.mxu0 0.0
    %1664 = vmatpush2.msra.mxu0 0.0
    %1665 = vmatprep.subr.mxu0 0.0
    %1666 = vmatpush2.msra.mxu0 0.0
    %1667 = vmatprep.subr.mxu0 0.0
    %1668 = vmatpush2.msra.mxu0 0.0
    %1669 = vmatprep.subr.mxu0 0.0
    %1670 = vmatpush2.msra.mxu0 0.0
    %1671 = vmatprep.subr.mxu0 0.0
    %1672 = vmatpush2.msra.mxu0 0.0
    %1673 = vmatprep.subr.mxu0 0.0
    %1674 = vmatpush2.msra.mxu0 0.0
    %1675 = vmatprep.subr.mxu0 0.0
    %1676 = vmatpush2.msra.mxu0 0.0
    %1677 = vmatprep.mubr.f32.mxu0 0.0
    %1678 = vmatmul.mubr.f32.gmra.mxu0 %v1530
    %v1679 = vpop.f32.mrf.mxu0
    %v1680 = vadd.f32 %v1010, %v1679
    %v1681 = vpop.f32.mrf.mxu0
    %1682 = vdwg.mxu0
    %v1683 = vadd.f32 %v1539, %v1609
    %v1684 = vxor.u32 %v1683, 2147483648
    %v1685 = vmul.f32 %v1684, 1.442695
    %v1686 = vpow.pop %v1685
    %v1687 = vadd.f32 %v1686, 1.0
    %v1688 = vrcp.pop %v1687
    %v1689 = vmul.f32 1.0, %v1688
    %v1690 = vadd.f32 %v1540, %v1611
    %v1691 = vxor.u32 %v1690, 2147483648
    %v1692 = vmul.f32 %v1691, 1.442695
    %v1693 = vpow.pop %v1692
    %v1694 = vadd.f32 %v1693, 1.0
    %v1695 = vrcp.pop %v1694
    %v1696 = vmul.f32 1.0, %v1695
    %v1697 = vmul.f32 %v1689, %v1680
    %v1698 = vadd.f32 %v1541, %v1697
    %v1699 = vtanh.pop %v1698
    %v1700 = vsub.f32 1.0, %v1696
    %v1701 = vmul.f32 %v1700, %v1699
    %v1702 = vmul.f32 %v1696, %v1530
    %v1703 = vadd.f32 %v1701, %v1702
    %1704 = vst [vmem:[#allocation4 + $0x18] sm:$0xff] %v1703
    %1705 = vst [vmem:[#allocation5 + $0x20] sm:$0xff] %v1703
    %v1706 = vld [vmem:[#allocation2 + $0x60] sm:$0xff]
    %v1707 = vld [vmem:[#allocation2 + $0x68] sm:$0xff]
    %v1708 = vld [vmem:[#allocation2 + $0x70] sm:$0xff]
    %v1709 = vld [vmem:[#allocation3 + $0x48] sm:$0xff]
    %v1710 = vld [vmem:[#allocation3 + $0x50] sm:$0xff]
    %v1711 = vld [vmem:[#allocation3 + $0x58] sm:$0xff]
    %v1712 = vadd.f32 %v1706, %v1709
    %v1713 = vadd.f32 %v1707, %v1710
    %v1714 = vadd.f32 %v1708, %v1711
    %1715 = vmatprep.subr.mxu0 %v995
    %1716 = vmatpush1.msra.mxu0 %v994
    %1717 = vmatprep.subr.mxu0 %v992
    %1718 = vmatpush1.msra.mxu0 %v991
    %1719 = vmatprep.subr.mxu0 %v989
    %1720 = vmatpush1.msra.mxu0 %v988
    %1721 = vmatprep.subr.mxu0 %v986
    %1722 = vmatpush1.msra.mxu0 %v985
    %1723 = vmatprep.subr.mxu0 %v983
    %1724 = vmatpush1.msra.mxu0 %v982
    %1725 = vmatprep.subr.mxu0 %v980
    %1726 = vmatpush1.msra.mxu0 %v979
    %1727 = vmatprep.subr.mxu0 %v977
    %1728 = vmatpush1.msra.mxu0 %v976
    %1729 = vmatprep.subr.mxu0 %v974
    %1730 = vmatpush1.msra.mxu0 %v973
    %1731 = vmatprep.subr.mxu0 %v971
    %1732 = vmatpush1.msra.mxu0 %v970
    %1733 = vmatprep.subr.mxu0 %v968
    %1734 = vmatpush1.msra.mxu0 %v967
    %1735 = vmatprep.subr.mxu0 %v965
    %1736 = vmatpush1.msra.mxu0 %v964
    %1737 = vmatprep.subr.mxu0 %v962
    %1738 = vmatpush1.msra.mxu0 %v961
    %1739 = vmatprep.subr.mxu0 %v959
    %1740 = vmatpush1.msra.mxu0 %v958
    %1741 = vmatprep.subr.mxu0 %v956
    %1742 = vmatpush1.msra.mxu0 %v955
    %1743 = vmatprep.subr.mxu0 %v953
    %1744 = vmatpush1.msra.mxu0 %v952
    %1745 = vmatprep.subr.mxu0 %v950
    %1746 = vmatpush1.msra.mxu0 %v949
    %1747 = vmatprep.subr.mxu0 0.0
    %1748 = vmatpush2.msra.mxu0 0.0
    %1749 = vmatprep.subr.mxu0 0.0
    %1750 = vmatpush2.msra.mxu0 0.0
    %1751 = vmatprep.subr.mxu0 0.0
    %1752 = vmatpush2.msra.mxu0 0.0
    %1753 = vmatprep.subr.mxu0 0.0
    %1754 = vmatpush2.msra.mxu0 0.0
    %1755 = vmatprep.subr.mxu0 0.0
    %1756 = vmatpush2.msra.mxu0 0.0
    %1757 = vmatprep.subr.mxu0 0.0
    %1758 = vmatpush2.msra.mxu0 0.0
    %1759 = vmatprep.subr.mxu0 0.0
    %1760 = vmatpush2.msra.mxu0 0.0
    %1761 = vmatprep.subr.mxu0 0.0
    %1762 = vmatpush2.msra.mxu0 0.0
    %1763 = vmatprep.subr.mxu0 0.0
    %1764 = vmatpush2.msra.mxu0 0.0
    %1765 = vmatprep.subr.mxu0 0.0
    %1766 = vmatpush2.msra.mxu0 0.0
    %1767 = vmatprep.subr.mxu0 0.0
    %1768 = vmatpush2.msra.mxu0 0.0
    %1769 = vmatprep.subr.mxu0 0.0
    %1770 = vmatpush2.msra.mxu0 0.0
    %1771 = vmatprep.subr.mxu0 0.0
    %1772 = vmatpush2.msra.mxu0 0.0
    %1773 = vmatprep.subr.mxu0 0.0
    %1774 = vmatpush2.msra.mxu0 0.0
    %1775 = vmatprep.subr.mxu0 0.0
    %1776 = vmatpush2.msra.mxu0 0.0
    %1777 = vmatprep.subr.mxu0 0.0
    %1778 = vmatpush2.msra.mxu0 0.0
    %1779 = vmatprep.mubr.f32.mxu0 0.0
    %1780 = vmatmul.mubr.f32.gmra.mxu0 %v1703
    %v1781 = vpop.f32.mrf.mxu0
    %v1782 = vadd.f32 %v1002, %v1781
    %v1783 = vpop.f32.mrf.mxu0
    %v1784 = vadd.f32 %v1006, %v1783
    %1785 = vdwg.mxu0
    %1786 = vmatprep.subr.mxu0 0.0
    %1787 = vmatpush1.msra.mxu0 %v996
    %1788 = vmatprep.subr.mxu0 0.0
    %1789 = vmatpush1.msra.mxu0 %v993
    %1790 = vmatprep.subr.mxu0 0.0
    %1791 = vmatpush1.msra.mxu0 %v990
    %1792 = vmatprep.subr.mxu0 0.0
    %1793 = vmatpush1.msra.mxu0 %v987
    %1794 = vmatprep.subr.mxu0 0.0
    %1795 = vmatpush1.msra.mxu0 %v984
    %1796 = vmatprep.subr.mxu0 0.0
    %1797 = vmatpush1.msra.mxu0 %v981
    %1798 = vmatprep.subr.mxu0 0.0
    %1799 = vmatpush1.msra.mxu0 %v978
    %1800 = vmatprep.subr.mxu0 0.0
    %1801 = vmatpush1.msra.mxu0 %v975
    %1802 = vmatprep.subr.mxu0 0.0
    %1803 = vmatpush1.msra.mxu0 %v972
    %1804 = vmatprep.subr.mxu0 0.0
    %1805 = vmatpush1.msra.mxu0 %v969
    %1806 = vmatprep.subr.mxu0 0.0
    %1807 = vmatpush1.msra.mxu0 %v966
    %1808 = vmatprep.subr.mxu0 0.0
    %1809 = vmatpush1.msra.mxu0 %v963
    %1810 = vmatprep.subr.mxu0 0.0
    %1811 = vmatpush1.msra.mxu0 %v960
    %1812 = vmatprep.subr.mxu0 0.0
    %1813 = vmatpush1.msra.mxu0 %v957
    %1814 = vmatprep.subr.mxu0 0.0
    %1815 = vmatpush1.msra.mxu0 %v954
    %1816 = vmatprep.subr.mxu0 0.0
    %1817 = vmatpush1.msra.mxu0 %v951
    %1818 = vmatprep.subr.mxu0 0.0
    %1819 = vmatpush2.msra.mxu0 0.0
    %1820 = vmatprep.subr.mxu0 0.0
    %1821 = vmatpush2.msra.mxu0 0.0
    %1822 = vmatprep.subr.mxu0 0.0
    %1823 = vmatpush2.msra.mxu0 0.0
    %1824 = vmatprep.subr.mxu0 0.0
    %1825 = vmatpush2.msra.mxu0 0.0
    %1826 = vmatprep.subr.mxu0 0.0
    %1827 = vmatpush2.msra.mxu0 0.0
    %1828 = vmatprep.subr.mxu0 0.0
    %1829 = vmatpush2.msra.mxu0 0.0
    %1830 = vmatprep.subr.mxu0 0.0
    %1831 = vmatpush2.msra.mxu0 0.0
    %1832 = vmatprep.subr.mxu0 0.0
    %1833 = vmatpush2.msra.mxu0 0.0
    %1834 = vmatprep.subr.mxu0 0.0
    %1835 = vmatpush2.msra.mxu0 0.0
    %1836 = vmatprep.subr.mxu0 0.0
    %1837 = vmatpush2.msra.mxu0 0.0
    %1838 = vmatprep.subr.mxu0 0.0
    %1839 = vmatpush2.msra.mxu0 0.0
    %1840 = vmatprep.subr.mxu0 0.0
    %1841 = vmatpush2.msra.mxu0 0.0
    %1842 = vmatprep.subr.mxu0 0.0
    %1843 = vmatpush2.msra.mxu0 0.0
    %1844 = vmatprep.subr.mxu0 0.0
    %1845 = vmatpush2.msra.mxu0 0.0
    %1846 = vmatprep.subr.mxu0 0.0
    %1847 = vmatpush2.msra.mxu0 0.0
    %1848 = vmatprep.subr.mxu0 0.0
    %1849 = vmatpush2.msra.mxu0 0.0
    %1850 = vmatprep.mubr.f32.mxu0 0.0
    %1851 = vmatmul.mubr.f32.gmra.mxu0 %v1703
    %v1852 = vpop.f32.mrf.mxu0
    %v1853 = vadd.f32 %v1010, %v1852
    %v1854 = vpop.f32.mrf.mxu0
    %1855 = vdwg.mxu0
    %v1856 = vadd.f32 %v1712, %v1782
    %v1857 = vxor.u32 %v1856, 2147483648
    %v1858 = vmul.f32 %v1857, 1.442695
    %v1859 = vpow.pop %v1858
    %v1860 = vadd.f32 %v1859, 1.0
    %v1861 = vrcp.pop %v1860
    %v1862 = vmul.f32 1.0, %v1861
    %v1863 = vadd.f32 %v1713, %v1784
    %v1864 = vxor.u32 %v1863, 2147483648
    %v1865 = vmul.f32 %v1864, 1.442695
    %v1866 = vpow.pop %v1865
    %v1867 = vadd.f32 %v1866, 1.0
    %v1868 = vrcp.pop %v1867
    %v1869 = vmul.f32 1.0, %v1868
    %v1870 = vmul.f32 %v1862, %v1853
    %v1871 = vadd.f32 %v1714, %v1870
    %v1872 = vtanh.pop %v1871
    %v1873 = vsub.f32 1.0, %v1869
    %v1874 = vmul.f32 %v1873, %v1872
    %v1875 = vmul.f32 %v1869, %v1703
    %v1876 = vadd.f32 %v1874, %v1875
    %1877 = vst [vmem:[#allocation4 + $0x20] sm:$0xff] %v1876
    %1878 = vst [vmem:[#allocation5 + $0x18] sm:$0xff] %v1876
    %v1879 = vld [vmem:[#allocation2 + $0x78] sm:$0xff]
    %v1880 = vld [vmem:[#allocation2 + $0x80] sm:$0xff]
    %v1881 = vld [vmem:[#allocation2 + $0x88] sm:$0xff]
    %v1882 = vld [vmem:[#allocation3 + $0x30] sm:$0xff]
    %v1883 = vld [vmem:[#allocation3 + $0x38] sm:$0xff]
    %v1884 = vld [vmem:[#allocation3 + $0x40] sm:$0xff]
    %v1885 = vadd.f32 %v1879, %v1882
    %v1886 = vadd.f32 %v1880, %v1883
    %v1887 = vadd.f32 %v1881, %v1884
    %1888 = vmatprep.subr.mxu0 %v995
    %1889 = vmatpush1.msra.mxu0 %v994
    %1890 = vmatprep.subr.mxu0 %v992
    %1891 = vmatpush1.msra.mxu0 %v991
    %1892 = vmatprep.subr.mxu0 %v989
    %1893 = vmatpush1.msra.mxu0 %v988
    %1894 = vmatprep.subr.mxu0 %v986
    %1895 = vmatpush1.msra.mxu0 %v985
    %1896 = vmatprep.subr.mxu0 %v983
    %1897 = vmatpush1.msra.mxu0 %v982
    %1898 = vmatprep.subr.mxu0 %v980
    %1899 = vmatpush1.msra.mxu0 %v979
    %1900 = vmatprep.subr.mxu0 %v977
    %1901 = vmatpush1.msra.mxu0 %v976
    %1902 = vmatprep.subr.mxu0 %v974
    %1903 = vmatpush1.msra.mxu0 %v973
    %1904 = vmatprep.subr.mxu0 %v971
    %1905 = vmatpush1.msra.mxu0 %v970
    %1906 = vmatprep.subr.mxu0 %v968
    %1907 = vmatpush1.msra.mxu0 %v967
    %1908 = vmatprep.subr.mxu0 %v965
    %1909 = vmatpush1.msra.mxu0 %v964
    %1910 = vmatprep.subr.mxu0 %v962
    %1911 = vmatpush1.msra.mxu0 %v961
    %1912 = vmatprep.subr.mxu0 %v959
    %1913 = vmatpush1.msra.mxu0 %v958
    %1914 = vmatprep.subr.mxu0 %v956
    %1915 = vmatpush1.msra.mxu0 %v955
    %1916 = vmatprep.subr.mxu0 %v953
    %1917 = vmatpush1.msra.mxu0 %v952
    %1918 = vmatprep.subr.mxu0 %v950
    %1919 = vmatpush1.msra.mxu0 %v949
    %1920 = vmatprep.subr.mxu0 0.0
    %1921 = vmatpush2.msra.mxu0 0.0
    %1922 = vmatprep.subr.mxu0 0.0
    %1923 = vmatpush2.msra.mxu0 0.0
    %1924 = vmatprep.subr.mxu0 0.0
    %1925 = vmatpush2.msra.mxu0 0.0
    %1926 = vmatprep.subr.mxu0 0.0
    %1927 = vmatpush2.msra.mxu0 0.0
    %1928 = vmatprep.subr.mxu0 0.0
    %1929 = vmatpush2.msra.mxu0 0.0
    %1930 = vmatprep.subr.mxu0 0.0
    %1931 = vmatpush2.msra.mxu0 0.0
    %1932 = vmatprep.subr.mxu0 0.0
    %1933 = vmatpush2.msra.mxu0 0.0
    %1934 = vmatprep.subr.mxu0 0.0
    %1935 = vmatpush2.msra.mxu0 0.0
    %1936 = vmatprep.subr.mxu0 0.0
    %1937 = vmatpush2.msra.mxu0 0.0
    %1938 = vmatprep.subr.mxu0 0.0
    %1939 = vmatpush2.msra.mxu0 0.0
    %1940 = vmatprep.subr.mxu0 0.0
    %1941 = vmatpush2.msra.mxu0 0.0
    %1942 = vmatprep.subr.mxu0 0.0
    %1943 = vmatpush2.msra.mxu0 0.0
    %1944 = vmatprep.subr.mxu0 0.0
    %1945 = vmatpush2.msra.mxu0 0.0
    %1946 = vmatprep.subr.mxu0 0.0
    %1947 = vmatpush2.msra.mxu0 0.0
    %1948 = vmatprep.subr.mxu0 0.0
    %1949 = vmatpush2.msra.mxu0 0.0
    %1950 = vmatprep.subr.mxu0 0.0
    %1951 = vmatpush2.msra.mxu0 0.0
    %1952 = vmatprep.mubr.f32.mxu0 0.0
    %1953 = vmatmul.mubr.f32.gmra.mxu0 %v1876
    %v1954 = vpop.f32.mrf.mxu0
    %v1955 = vadd.f32 %v1002, %v1954
    %v1956 = vpop.f32.mrf.mxu0
    %v1957 = vadd.f32 %v1006, %v1956
    %1958 = vdwg.mxu0
    %1959 = vmatprep.subr.mxu0 0.0
    %1960 = vmatpush1.msra.mxu0 %v996
    %1961 = vmatprep.subr.mxu0 0.0
    %1962 = vmatpush1.msra.mxu0 %v993
    %1963 = vmatprep.subr.mxu0 0.0
    %1964 = vmatpush1.msra.mxu0 %v990
    %1965 = vmatprep.subr.mxu0 0.0
    %1966 = vmatpush1.msra.mxu0 %v987
    %1967 = vmatprep.subr.mxu0 0.0
    %1968 = vmatpush1.msra.mxu0 %v984
    %1969 = vmatprep.subr.mxu0 0.0
    %1970 = vmatpush1.msra.mxu0 %v981
    %1971 = vmatprep.subr.mxu0 0.0
    %1972 = vmatpush1.msra.mxu0 %v978
    %1973 = vmatprep.subr.mxu0 0.0
    %1974 = vmatpush1.msra.mxu0 %v975
    %1975 = vmatprep.subr.mxu0 0.0
    %1976 = vmatpush1.msra.mxu0 %v972
    %1977 = vmatprep.subr.mxu0 0.0
    %1978 = vmatpush1.msra.mxu0 %v969
    %1979 = vmatprep.subr.mxu0 0.0
    %1980 = vmatpush1.msra.mxu0 %v966
    %1981 = vmatprep.subr.mxu0 0.0
    %1982 = vmatpush1.msra.mxu0 %v963
    %1983 = vmatprep.subr.mxu0 0.0
    %1984 = vmatpush1.msra.mxu0 %v960
    %1985 = vmatprep.subr.mxu0 0.0
    %1986 = vmatpush1.msra.mxu0 %v957
    %1987 = vmatprep.subr.mxu0 0.0
    %1988 = vmatpush1.msra.mxu0 %v954
    %1989 = vmatprep.subr.mxu0 0.0
    %1990 = vmatpush1.msra.mxu0 %v951
    %1991 = vmatprep.subr.mxu0 0.0
    %1992 = vmatpush2.msra.mxu0 0.0
    %1993 = vmatprep.subr.mxu0 0.0
    %1994 = vmatpush2.msra.mxu0 0.0
    %1995 = vmatprep.subr.mxu0 0.0
    %1996 = vmatpush2.msra.mxu0 0.0
    %1997 = vmatprep.subr.mxu0 0.0
    %1998 = vmatpush2.msra.mxu0 0.0
    %1999 = vmatprep.subr.mxu0 0.0
    %2000 = vmatpush2.msra.mxu0 0.0
    %2001 = vmatprep.subr.mxu0 0.0
    %2002 = vmatpush2.msra.mxu0 0.0
    %2003 = vmatprep.subr.mxu0 0.0
    %2004 = vmatpush2.msra.mxu0 0.0
    %2005 = vmatprep.subr.mxu0 0.0
    %2006 = vmatpush2.msra.mxu0 0.0
    %2007 = vmatprep.subr.mxu0 0.0
    %2008 = vmatpush2.msra.mxu0 0.0
    %2009 = vmatprep.subr.mxu0 0.0
    %2010 = vmatpush2.msra.mxu0 0.0
    %2011 = vmatprep.subr.mxu0 0.0
    %2012 = vmatpush2.msra.mxu0 0.0
    %2013 = vmatprep.subr.mxu0 0.0
    %2014 = vmatpush2.msra.mxu0 0.0
    %2015 = vmatprep.subr.mxu0 0.0
    %2016 = vmatpush2.msra.mxu0 0.0
    %2017 = vmatprep.subr.mxu0 0.0
    %2018 = vmatpush2.msra.mxu0 0.0
    %2019 = vmatprep.subr.mxu0 0.0
    %2020 = vmatpush2.msra.mxu0 0.0
    %2021 = vmatprep.subr.mxu0 0.0
    %2022 = vmatpush2.msra.mxu0 0.0
    %2023 = vmatprep.mubr.f32.mxu0 0.0
    %2024 = vmatmul.mubr.f32.gmra.mxu0 %v1876
    %v2025 = vpop.f32.mrf.mxu0
    %v2026 = vadd.f32 %v1010, %v2025
    %v2027 = vpop.f32.mrf.mxu0
    %2028 = vdwg.mxu0
    %v2029 = vadd.f32 %v1885, %v1955
    %v2030 = vxor.u32 %v2029, 2147483648
    %v2031 = vmul.f32 %v2030, 1.442695
    %v2032 = vpow.pop %v2031
    %v2033 = vadd.f32 %v2032, 1.0
    %v2034 = vrcp.pop %v2033
    %v2035 = vmul.f32 1.0, %v2034
    %v2036 = vadd.f32 %v1886, %v1957
    %v2037 = vxor.u32 %v2036, 2147483648
    %v2038 = vmul.f32 %v2037, 1.442695
    %v2039 = vpow.pop %v2038
    %v2040 = vadd.f32 %v2039, 1.0
    %v2041 = vrcp.pop %v2040
    %v2042 = vmul.f32 1.0, %v2041
    %v2043 = vmul.f32 %v2035, %v2026
    %v2044 = vadd.f32 %v1887, %v2043
    %v2045 = vtanh.pop %v2044
    %v2046 = vsub.f32 1.0, %v2042
    %v2047 = vmul.f32 %v2046, %v2045
    %v2048 = vmul.f32 %v2042, %v1876
    %v2049 = vadd.f32 %v2047, %v2048
    %2050 = vst [vmem:[#allocation4 + $0x28] sm:$0xff] %v2049
    %2051 = vst [vmem:[#allocation5 + $0x10] sm:$0xff] %v2049
    %v2052 = vld [vmem:[#allocation2 + $0x90] sm:$0xff]
    %v2053 = vld [vmem:[#allocation2 + $0x98] sm:$0xff]
    %v2054 = vld [vmem:[#allocation2 + $0xa0] sm:$0xff]
    %v2055 = vld [vmem:[#allocation3 + $0x18] sm:$0xff]
    %v2056 = vld [vmem:[#allocation3 + $0x20] sm:$0xff]
    %v2057 = vld [vmem:[#allocation3 + $0x28] sm:$0xff]
    %v2058 = vadd.f32 %v2052, %v2055
    %v2059 = vadd.f32 %v2053, %v2056
    %v2060 = vadd.f32 %v2054, %v2057
    %2061 = vmatprep.subr.mxu0 %v995
    %2062 = vmatpush1.msra.mxu0 %v994
    %2063 = vmatprep.subr.mxu0 %v992
    %2064 = vmatpush1.msra.mxu0 %v991
    %2065 = vmatprep.subr.mxu0 %v989
    %2066 = vmatpush1.msra.mxu0 %v988
    %2067 = vmatprep.subr.mxu0 %v986
    %2068 = vmatpush1.msra.mxu0 %v985
    %2069 = vmatprep.subr.mxu0 %v983
    %2070 = vmatpush1.msra.mxu0 %v982
    %2071 = vmatprep.subr.mxu0 %v980
    %2072 = vmatpush1.msra.mxu0 %v979
    %2073 = vmatprep.subr.mxu0 %v977
    %2074 = vmatpush1.msra.mxu0 %v976
    %2075 = vmatprep.subr.mxu0 %v974
    %2076 = vmatpush1.msra.mxu0 %v973
    %2077 = vmatprep.subr.mxu0 %v971
    %2078 = vmatpush1.msra.mxu0 %v970
    %2079 = vmatprep.subr.mxu0 %v968
    %2080 = vmatpush1.msra.mxu0 %v967
    %2081 = vmatprep.subr.mxu0 %v965
    %2082 = vmatpush1.msra.mxu0 %v964
    %2083 = vmatprep.subr.mxu0 %v962
    %2084 = vmatpush1.msra.mxu0 %v961
    %2085 = vmatprep.subr.mxu0 %v959
    %2086 = vmatpush1.msra.mxu0 %v958
    %2087 = vmatprep.subr.mxu0 %v956
    %2088 = vmatpush1.msra.mxu0 %v955
    %2089 = vmatprep.subr.mxu0 %v953
    %2090 = vmatpush1.msra.mxu0 %v952
    %2091 = vmatprep.subr.mxu0 %v950
    %2092 = vmatpush1.msra.mxu0 %v949
    %2093 = vmatprep.subr.mxu0 0.0
    %2094 = vmatpush2.msra.mxu0 0.0
    %2095 = vmatprep.subr.mxu0 0.0
    %2096 = vmatpush2.msra.mxu0 0.0
    %2097 = vmatprep.subr.mxu0 0.0
    %2098 = vmatpush2.msra.mxu0 0.0
    %2099 = vmatprep.subr.mxu0 0.0
    %2100 = vmatpush2.msra.mxu0 0.0
    %2101 = vmatprep.subr.mxu0 0.0
    %2102 = vmatpush2.msra.mxu0 0.0
    %2103 = vmatprep.subr.mxu0 0.0
    %2104 = vmatpush2.msra.mxu0 0.0
    %2105 = vmatprep.subr.mxu0 0.0
    %2106 = vmatpush2.msra.mxu0 0.0
    %2107 = vmatprep.subr.mxu0 0.0
    %2108 = vmatpush2.msra.mxu0 0.0
    %2109 = vmatprep.subr.mxu0 0.0
    %2110 = vmatpush2.msra.mxu0 0.0
    %2111 = vmatprep.subr.mxu0 0.0
    %2112 = vmatpush2.msra.mxu0 0.0
    %2113 = vmatprep.subr.mxu0 0.0
    %2114 = vmatpush2.msra.mxu0 0.0
    %2115 = vmatprep.subr.mxu0 0.0
    %2116 = vmatpush2.msra.mxu0 0.0
    %2117 = vmatprep.subr.mxu0 0.0
    %2118 = vmatpush2.msra.mxu0 0.0
    %2119 = vmatprep.subr.mxu0 0.0
    %2120 = vmatpush2.msra.mxu0 0.0
    %2121 = vmatprep.subr.mxu0 0.0
    %2122 = vmatpush2.msra.mxu0 0.0
    %2123 = vmatprep.subr.mxu0 0.0
    %2124 = vmatpush2.msra.mxu0 0.0
    %2125 = vmatprep.mubr.f32.mxu0 0.0
    %2126 = vmatmul.mubr.f32.gmra.mxu0 %v2049
    %v2127 = vpop.f32.mrf.mxu0
    %v2128 = vadd.f32 %v1002, %v2127
    %v2129 = vpop.f32.mrf.mxu0
    %v2130 = vadd.f32 %v1006, %v2129
    %2131 = vdwg.mxu0
    %2132 = vmatprep.subr.mxu0 0.0
    %2133 = vmatpush1.msra.mxu0 %v996
    %2134 = vmatprep.subr.mxu0 0.0
    %2135 = vmatpush1.msra.mxu0 %v993
    %2136 = vmatprep.subr.mxu0 0.0
    %2137 = vmatpush1.msra.mxu0 %v990
    %2138 = vmatprep.subr.mxu0 0.0
    %2139 = vmatpush1.msra.mxu0 %v987
    %2140 = vmatprep.subr.mxu0 0.0
    %2141 = vmatpush1.msra.mxu0 %v984
    %2142 = vmatprep.subr.mxu0 0.0
    %2143 = vmatpush1.msra.mxu0 %v981
    %2144 = vmatprep.subr.mxu0 0.0
    %2145 = vmatpush1.msra.mxu0 %v978
    %2146 = vmatprep.subr.mxu0 0.0
    %2147 = vmatpush1.msra.mxu0 %v975
    %2148 = vmatprep.subr.mxu0 0.0
    %2149 = vmatpush1.msra.mxu0 %v972
    %2150 = vmatprep.subr.mxu0 0.0
    %2151 = vmatpush1.msra.mxu0 %v969
    %2152 = vmatprep.subr.mxu0 0.0
    %2153 = vmatpush1.msra.mxu0 %v966
    %2154 = vmatprep.subr.mxu0 0.0
    %2155 = vmatpush1.msra.mxu0 %v963
    %2156 = vmatprep.subr.mxu0 0.0
    %2157 = vmatpush1.msra.mxu0 %v960
    %2158 = vmatprep.subr.mxu0 0.0
    %2159 = vmatpush1.msra.mxu0 %v957
    %2160 = vmatprep.subr.mxu0 0.0
    %2161 = vmatpush1.msra.mxu0 %v954
    %2162 = vmatprep.subr.mxu0 0.0
    %2163 = vmatpush1.msra.mxu0 %v951
    %2164 = vmatprep.subr.mxu0 0.0
    %2165 = vmatpush2.msra.mxu0 0.0
    %2166 = vmatprep.subr.mxu0 0.0
    %2167 = vmatpush2.msra.mxu0 0.0
    %2168 = vmatprep.subr.mxu0 0.0
    %2169 = vmatpush2.msra.mxu0 0.0
    %2170 = vmatprep.subr.mxu0 0.0
    %2171 = vmatpush2.msra.mxu0 0.0
    %2172 = vmatprep.subr.mxu0 0.0
    %2173 = vmatpush2.msra.mxu0 0.0
    %2174 = vmatprep.subr.mxu0 0.0
    %2175 = vmatpush2.msra.mxu0 0.0
    %2176 = vmatprep.subr.mxu0 0.0
    %2177 = vmatpush2.msra.mxu0 0.0
    %2178 = vmatprep.subr.mxu0 0.0
    %2179 = vmatpush2.msra.mxu0 0.0
    %2180 = vmatprep.subr.mxu0 0.0
    %2181 = vmatpush2.msra.mxu0 0.0
    %2182 = vmatprep.subr.mxu0 0.0
    %2183 = vmatpush2.msra.mxu0 0.0
    %2184 = vmatprep.subr.mxu0 0.0
    %2185 = vmatpush2.msra.mxu0 0.0
    %2186 = vmatprep.subr.mxu0 0.0
    %2187 = vmatpush2.msra.mxu0 0.0
    %2188 = vmatprep.subr.mxu0 0.0
    %2189 = vmatpush2.msra.mxu0 0.0
    %2190 = vmatprep.subr.mxu0 0.0
    %2191 = vmatpush2.msra.mxu0 0.0
    %2192 = vmatprep.subr.mxu0 0.0
    %2193 = vmatpush2.msra.mxu0 0.0
    %2194 = vmatprep.subr.mxu0 0.0
    %2195 = vmatpush2.msra.mxu0 0.0
    %2196 = vmatprep.mubr.f32.mxu0 0.0
    %2197 = vmatmul.mubr.f32.gmra.mxu0 %v2049
    %v2198 = vpop.f32.mrf.mxu0
    %v2199 = vadd.f32 %v1010, %v2198
    %v2200 = vpop.f32.mrf.mxu0
    %2201 = vdwg.mxu0
    %v2202 = vadd.f32 %v2058, %v2128
    %v2203 = vxor.u32 %v2202, 2147483648
    %v2204 = vmul.f32 %v2203, 1.442695
    %v2205 = vpow.pop %v2204
    %v2206 = vadd.f32 %v2205, 1.0
    %v2207 = vrcp.pop %v2206
    %v2208 = vmul.f32 1.0, %v2207
    %v2209 = vadd.f32 %v2059, %v2130
    %v2210 = vxor.u32 %v2209, 2147483648
    %v2211 = vmul.f32 %v2210, 1.442695
    %v2212 = vpow.pop %v2211
    %v2213 = vadd.f32 %v2212, 1.0
    %v2214 = vrcp.pop %v2213
    %v2215 = vmul.f32 1.0, %v2214
    %v2216 = vmul.f32 %v2208, %v2199
    %v2217 = vadd.f32 %v2060, %v2216
    %v2218 = vtanh.pop %v2217
    %v2219 = vsub.f32 1.0, %v2215
    %v2220 = vmul.f32 %v2219, %v2218
    %v2221 = vmul.f32 %v2215, %v2049
    %v2222 = vadd.f32 %v2220, %v2221
    %2223 = vst [vmem:[#allocation4 + $0x30] sm:$0xff] %v2222
    %2224 = vst [vmem:[#allocation5 + $0x8] sm:$0xff] %v2222
    %v2225 = vld [vmem:[#allocation2 + $0xa8] sm:$0xff]
    %v2226 = vld [vmem:[#allocation2 + $0xb0] sm:$0xff]
    %v2227 = vld [vmem:[#allocation2 + $0xb8] sm:$0xff]
    %v2228 = vld [vmem:[#allocation3] sm:$0xff]
    %v2229 = vld [vmem:[#allocation3 + $0x8] sm:$0xff]
    %v2230 = vld [vmem:[#allocation3 + $0x10] sm:$0xff]
    %v2231 = vadd.f32 %v2225, %v2228
    %v2232 = vadd.f32 %v2226, %v2229
    %v2233 = vadd.f32 %v2227, %v2230
    %2234 = vmatprep.subr.mxu0 %v995
    %2235 = vmatpush1.msra.mxu0 %v994
    %2236 = vmatprep.subr.mxu0 %v992
    %2237 = vmatpush1.msra.mxu0 %v991
    %2238 = vmatprep.subr.mxu0 %v989
    %2239 = vmatpush1.msra.mxu0 %v988
    %2240 = vmatprep.subr.mxu0 %v986
    %2241 = vmatpush1.msra.mxu0 %v985
    %2242 = vmatprep.subr.mxu0 %v983
    %2243 = vmatpush1.msra.mxu0 %v982
    %2244 = vmatprep.subr.mxu0 %v980
    %2245 = vmatpush1.msra.mxu0 %v979
    %2246 = vmatprep.subr.mxu0 %v977
    %2247 = vmatpush1.msra.mxu0 %v976
    %2248 = vmatprep.subr.mxu0 %v974
    %2249 = vmatpush1.msra.mxu0 %v973
    %2250 = vmatprep.subr.mxu0 %v971
    %2251 = vmatpush1.msra.mxu0 %v970
    %2252 = vmatprep.subr.mxu0 %v968
    %2253 = vmatpush1.msra.mxu0 %v967
    %2254 = vmatprep.subr.mxu0 %v965
    %2255 = vmatpush1.msra.mxu0 %v964
    %2256 = vmatprep.subr.mxu0 %v962
    %2257 = vmatpush1.msra.mxu0 %v961
    %2258 = vmatprep.subr.mxu0 %v959
    %2259 = vmatpush1.msra.mxu0 %v958
    %2260 = vmatprep.subr.mxu0 %v956
    %2261 = vmatpush1.msra.mxu0 %v955
    %2262 = vmatprep.subr.mxu0 %v953
    %2263 = vmatpush1.msra.mxu0 %v952
    %2264 = vmatprep.subr.mxu0 %v950
    %2265 = vmatpush1.msra.mxu0 %v949
    %2266 = vmatprep.subr.mxu0 0.0
    %2267 = vmatpush2.msra.mxu0 0.0
    %2268 = vmatprep.subr.mxu0 0.0
    %2269 = vmatpush2.msra.mxu0 0.0
    %2270 = vmatprep.subr.mxu0 0.0
    %2271 = vmatpush2.msra.mxu0 0.0
    %2272 = vmatprep.subr.mxu0 0.0
    %2273 = vmatpush2.msra.mxu0 0.0
    %2274 = vmatprep.subr.mxu0 0.0
    %2275 = vmatpush2.msra.mxu0 0.0
    %2276 = vmatprep.subr.mxu0 0.0
    %2277 = vmatpush2.msra.mxu0 0.0
    %2278 = vmatprep.subr.mxu0 0.0
    %2279 = vmatpush2.msra.mxu0 0.0
    %2280 = vmatprep.subr.mxu0 0.0
    %2281 = vmatpush2.msra.mxu0 0.0
    %2282 = vmatprep.subr.mxu0 0.0
    %2283 = vmatpush2.msra.mxu0 0.0
    %2284 = vmatprep.subr.mxu0 0.0
    %2285 = vmatpush2.msra.mxu0 0.0
    %2286 = vmatprep.subr.mxu0 0.0
    %2287 = vmatpush2.msra.mxu0 0.0
    %2288 = vmatprep.subr.mxu0 0.0
    %2289 = vmatpush2.msra.mxu0 0.0
    %2290 = vmatprep.subr.mxu0 0.0
    %2291 = vmatpush2.msra.mxu0 0.0
    %2292 = vmatprep.subr.mxu0 0.0
    %2293 = vmatpush2.msra.mxu0 0.0
    %2294 = vmatprep.subr.mxu0 0.0
    %2295 = vmatpush2.msra.mxu0 0.0
    %2296 = vmatprep.subr.mxu0 0.0
    %2297 = vmatpush2.msra.mxu0 0.0
    %2298 = vmatprep.mubr.f32.mxu0 0.0
    %2299 = vmatmul.mubr.f32.gmra.mxu0 %v2222
    %v2300 = vpop.f32.mrf.mxu0
    %v2301 = vadd.f32 %v1002, %v2300
    %v2302 = vpop.f32.mrf.mxu0
    %v2303 = vadd.f32 %v1006, %v2302
    %2304 = vdwg.mxu0
    %2305 = vmatprep.subr.mxu0 0.0
    %2306 = vmatpush1.msra.mxu0 %v996
    %2307 = vmatprep.subr.mxu0 0.0
    %2308 = vmatpush1.msra.mxu0 %v993
    %2309 = vmatprep.subr.mxu0 0.0
    %2310 = vmatpush1.msra.mxu0 %v990
    %2311 = vmatprep.subr.mxu0 0.0
    %2312 = vmatpush1.msra.mxu0 %v987
    %2313 = vmatprep.subr.mxu0 0.0
    %2314 = vmatpush1.msra.mxu0 %v984
    %2315 = vmatprep.subr.mxu0 0.0
    %2316 = vmatpush1.msra.mxu0 %v981
    %2317 = vmatprep.subr.mxu0 0.0
    %2318 = vmatpush1.msra.mxu0 %v978
    %2319 = vmatprep.subr.mxu0 0.0
    %2320 = vmatpush1.msra.mxu0 %v975
    %2321 = vmatprep.subr.mxu0 0.0
    %2322 = vmatpush1.msra.mxu0 %v972
    %2323 = vmatprep.subr.mxu0 0.0
    %2324 = vmatpush1.msra.mxu0 %v969
    %2325 = vmatprep.subr.mxu0 0.0
    %2326 = vmatpush1.msra.mxu0 %v966
    %2327 = vmatprep.subr.mxu0 0.0
    %2328 = vmatpush1.msra.mxu0 %v963
    %2329 = vmatprep.subr.mxu0 0.0
    %2330 = vmatpush1.msra.mxu0 %v960
    %2331 = vmatprep.subr.mxu0 0.0
    %2332 = vmatpush1.msra.mxu0 %v957
    %2333 = vmatprep.subr.mxu0 0.0
    %2334 = vmatpush1.msra.mxu0 %v954
    %2335 = vmatprep.subr.mxu0 0.0
    %2336 = vmatpush1.msra.mxu0 %v951
    %2337 = vmatprep.subr.mxu0 0.0
    %2338 = vmatpush2.msra.mxu0 0.0
    %2339 = vmatprep.subr.mxu0 0.0
    %2340 = vmatpush2.msra.mxu0 0.0
    %2341 = vmatprep.subr.mxu0 0.0
    %2342 = vmatpush2.msra.mxu0 0.0
    %2343 = vmatprep.subr.mxu0 0.0
    %2344 = vmatpush2.msra.mxu0 0.0
    %2345 = vmatprep.subr.mxu0 0.0
    %2346 = vmatpush2.msra.mxu0 0.0
    %2347 = vmatprep.subr.mxu0 0.0
    %2348 = vmatpush2.msra.mxu0 0.0
    %2349 = vmatprep.subr.mxu0 0.0
    %2350 = vmatpush2.msra.mxu0 0.0
    %2351 = vmatprep.subr.mxu0 0.0
    %2352 = vmatpush2.msra.mxu0 0.0
    %2353 = vmatprep.subr.mxu0 0.0
    %2354 = vmatpush2.msra.mxu0 0.0
    %2355 = vmatprep.subr.mxu0 0.0
    %2356 = vmatpush2.msra.mxu0 0.0
    %2357 = vmatprep.subr.mxu0 0.0
    %2358 = vmatpush2.msra.mxu0 0.0
    %2359 = vmatprep.subr.mxu0 0.0
    %2360 = vmatpush2.msra.mxu0 0.0
    %2361 = vmatprep.subr.mxu0 0.0
    %2362 = vmatpush2.msra.mxu0 0.0
    %2363 = vmatprep.subr.mxu0 0.0
    %2364 = vmatpush2.msra.mxu0 0.0
    %2365 = vmatprep.subr.mxu0 0.0
    %2366 = vmatpush2.msra.mxu0 0.0
    %2367 = vmatprep.subr.mxu0 0.0
    %2368 = vmatpush2.msra.mxu0 0.0
    %2369 = vmatprep.mubr.f32.mxu0 0.0
    %2370 = vmatmul.mubr.f32.gmra.mxu0 %v2222
    %v2371 = vpop.f32.mrf.mxu0
    %v2372 = vadd.f32 %v1010, %v2371
    %v2373 = vpop.f32.mrf.mxu0
    %2374 = vdwg.mxu0
    %v2375 = vadd.f32 %v2231, %v2301
    %v2376 = vxor.u32 %v2375, 2147483648
    %v2377 = vmul.f32 %v2376, 1.442695
    %v2378 = vpow.pop %v2377
    %v2379 = vadd.f32 %v2378, 1.0
    %v2380 = vrcp.pop %v2379
    %v2381 = vmul.f32 1.0, %v2380
    %v2382 = vadd.f32 %v2232, %v2303
    %v2383 = vxor.u32 %v2382, 2147483648
    %v2384 = vmul.f32 %v2383, 1.442695
    %v2385 = vpow.pop %v2384
    %v2386 = vadd.f32 %v2385, 1.0
    %v2387 = vrcp.pop %v2386
    %v2388 = vmul.f32 1.0, %v2387
    %v2389 = vmul.f32 %v2381, %v2372
    %v2390 = vadd.f32 %v2233, %v2389
    %v2391 = vtanh.pop %v2390
    %v2392 = vsub.f32 1.0, %v2388
    %v2393 = vmul.f32 %v2392, %v2391
    %v2394 = vmul.f32 %v2388, %v2222
    %v2395 = vadd.f32 %v2393, %v2394
    %2396 = vst [vmem:[#allocation4 + $0x38] sm:$0xff] %v2395
    %2397 = vst [vmem:[#allocation5] sm:$0xff] %v2395
    %v2398 = vld [vmem:[#allocation4] sm:$0xff]
    %v2399 = vld [vmem:[#allocation4 + $0x8] sm:$0xff]
    %v2400 = vld [vmem:[#allocation4 + $0x10] sm:$0xff]
    %v2401 = vld [vmem:[#allocation4 + $0x18] sm:$0xff]
    %v2402 = vld [vmem:[#allocation4 + $0x20] sm:$0xff]
    %v2403 = vld [vmem:[#allocation4 + $0x28] sm:$0xff]
    %v2404 = vld [vmem:[#allocation4 + $0x30] sm:$0xff]
    %v2405 = vld [vmem:[#allocation4 + $0x38] sm:$0xff]
    %v2406 = vld [vmem:[#allocation5] sm:$0xff]
    %v2407 = vld [vmem:[#allocation5 + $0x8] sm:$0xff]
    %v2408 = vld [vmem:[#allocation5 + $0x10] sm:$0xff]
    %v2409 = vld [vmem:[#allocation5 + $0x18] sm:$0xff]
    %v2410 = vld [vmem:[#allocation5 + $0x20] sm:$0xff]
    %v2411 = vld [vmem:[#allocation5 + $0x28] sm:$0xff]
    %v2412 = vld [vmem:[#allocation5 + $0x30] sm:$0xff]
    %v2413 = vld [vmem:[#allocation5 + $0x38] sm:$0xff]
    %v2414 = vld [vmem:[#allocation10] sm:$0xff]
    %v2415 = vld [vmem:[#allocation10 + $0x8] sm:$0xff]
    %v2416 = vld [vmem:[#allocation10 + $0x10] sm:$0xff]
    %v2417 = vld [vmem:[#allocation10 + $0x18] sm:$0xff]
    %v2418 = vld [vmem:[#allocation10 + $0x20] sm:$0xff]
    %v2419 = vld [vmem:[#allocation10 + $0x28] sm:$0xff]
    %v2420 = vld [vmem:[#allocation10 + $0x30] sm:$0xff]
    %v2421 = vld [vmem:[#allocation10 + $0x38] sm:$0xff]
    %v2422 = vld [vmem:[#allocation10 + $0x40] sm:$0xff]
    %v2423 = vld [vmem:[#allocation10 + $0x48] sm:$0xff]
    %v2424 = vld [vmem:[#allocation10 + $0x50] sm:$0xff]
    %v2425 = vld [vmem:[#allocation10 + $0x58] sm:$0xff]
    %v2426 = vld [vmem:[#allocation10 + $0x60] sm:$0xff]
    %v2427 = vld [vmem:[#allocation10 + $0x68] sm:$0xff]
    %v2428 = vld [vmem:[#allocation10 + $0x70] sm:$0xff]
    %v2429 = vld [vmem:[#allocation10 + $0x78] sm:$0xff]
    %v2430 = vld [vmem:[#allocation10 + $0x80] sm:$0xff]
    %v2431 = vld [vmem:[#allocation10 + $0x88] sm:$0xff]
    %v2432 = vld [vmem:[#allocation10 + $0x90] sm:$0xff]
    %v2433 = vld [vmem:[#allocation10 + $0x98] sm:$0xff]
    %v2434 = vld [vmem:[#allocation10 + $0xa0] sm:$0xff]
    %v2435 = vld [vmem:[#allocation10 + $0xa8] sm:$0xff]
    %v2436 = vld [vmem:[#allocation10 + $0xb0] sm:$0xff]
    %v2437 = vld [vmem:[#allocation10 + $0xb8] sm:$0xff]
    %v2438 = vld [vmem:[#allocation10 + $0xc0] sm:$0xff]
    %v2439 = vld [vmem:[#allocation10 + $0xc8] sm:$0xff]
    %v2440 = vld [vmem:[#allocation10 + $0xd0] sm:$0xff]
    %v2441 = vld [vmem:[#allocation10 + $0xd8] sm:$0xff]
    %v2442 = vld [vmem:[#allocation10 + $0xe0] sm:$0xff]
    %v2443 = vld [vmem:[#allocation10 + $0xe8] sm:$0xff]
    %v2444 = vld [vmem:[#allocation10 + $0xf0] sm:$0xff]
    %v2445 = vld [vmem:[#allocation10 + $0xf8] sm:$0xff]
    %v2446 = vld [vmem:[#allocation10 + $0x100] sm:$0xff]
    %v2447 = vld [vmem:[#allocation10 + $0x108] sm:$0xff]
    %v2448 = vld [vmem:[#allocation10 + $0x110] sm:$0xff]
    %v2449 = vld [vmem:[#allocation10 + $0x118] sm:$0xff]
    %v2450 = vld [vmem:[#allocation10 + $0x120] sm:$0xff]
    %v2451 = vld [vmem:[#allocation10 + $0x128] sm:$0xff]
    %v2452 = vld [vmem:[#allocation10 + $0x130] sm:$0xff]
    %v2453 = vld [vmem:[#allocation10 + $0x138] sm:$0xff]
    %v2454 = vld [vmem:[#allocation10 + $0x140] sm:$0xff]
    %v2455 = vld [vmem:[#allocation10 + $0x148] sm:$0xff]
    %v2456 = vld [vmem:[#allocation10 + $0x150] sm:$0xff]
    %v2457 = vld [vmem:[#allocation10 + $0x158] sm:$0xff]
    %v2458 = vld [vmem:[#allocation10 + $0x160] sm:$0xff]
    %v2459 = vld [vmem:[#allocation10 + $0x168] sm:$0xff]
    %v2460 = vld [vmem:[#allocation10 + $0x170] sm:$0xff]
    %v2461 = vld [vmem:[#allocation10 + $0x178] sm:$0xff]
    %v2462 = vld [vmem:[#allocation12] sm:$0xff]
    %v2463 = vld [vmem:[#allocation12 + $0x8] sm:$0xff]
    %v2464 = vld [vmem:[#allocation12 + $0x10] sm:$0xff]
    %v2465 = vld [vmem:[#allocation12 + $0x18] sm:$0xff]
    %v2466 = vld [vmem:[#allocation12 + $0x20] sm:$0xff]
    %v2467 = vld [vmem:[#allocation12 + $0x28] sm:$0xff]
    %v2468 = vld [vmem:[#allocation12 + $0x30] sm:$0xff]
    %v2469 = vld [vmem:[#allocation12 + $0x38] sm:$0xff]
    %v2470 = vld [vmem:[#allocation12 + $0x40] sm:$0xff]
    %v2471 = vld [vmem:[#allocation12 + $0x48] sm:$0xff]
    %v2472 = vld [vmem:[#allocation12 + $0x50] sm:$0xff]
    %v2473 = vld [vmem:[#allocation12 + $0x58] sm:$0xff]
    %v2474 = vld [vmem:[#allocation12 + $0x60] sm:$0xff]
    %v2475 = vld [vmem:[#allocation12 + $0x68] sm:$0xff]
    %v2476 = vld [vmem:[#allocation12 + $0x70] sm:$0xff]
    %v2477 = vld [vmem:[#allocation12 + $0x78] sm:$0xff]
    %v2478 = vld [vmem:[#allocation12 + $0x80] sm:$0xff]
    %v2479 = vld [vmem:[#allocation12 + $0x88] sm:$0xff]
    %v2480 = vld [vmem:[#allocation12 + $0x90] sm:$0xff]
    %v2481 = vld [vmem:[#allocation12 + $0x98] sm:$0xff]
    %v2482 = vld [vmem:[#allocation12 + $0xa0] sm:$0xff]
    %v2483 = vld [vmem:[#allocation12 + $0xa8] sm:$0xff]
    %v2484 = vld [vmem:[#allocation12 + $0xb0] sm:$0xff]
    %v2485 = vld [vmem:[#allocation12 + $0xb8] sm:$0xff]
    %v2486 = vld [vmem:[#allocation12 + $0xc0] sm:$0xff]
    %v2487 = vld [vmem:[#allocation12 + $0xc8] sm:$0xff]
    %v2488 = vld [vmem:[#allocation12 + $0xd0] sm:$0xff]
    %v2489 = vld [vmem:[#allocation12 + $0xd8] sm:$0xff]
    %v2490 = vld [vmem:[#allocation12 + $0xe0] sm:$0xff]
    %v2491 = vld [vmem:[#allocation12 + $0xe8] sm:$0xff]
    %v2492 = vld [vmem:[#allocation12 + $0xf0] sm:$0xff]
    %v2493 = vld [vmem:[#allocation12 + $0xf8] sm:$0xff]
    %v2494 = vld [vmem:[#allocation12 + $0x100] sm:$0xff]
    %v2495 = vld [vmem:[#allocation12 + $0x108] sm:$0xff]
    %v2496 = vld [vmem:[#allocation12 + $0x110] sm:$0xff]
    %v2497 = vld [vmem:[#allocation12 + $0x118] sm:$0xff]
    %v2498 = vld [vmem:[#allocation12 + $0x120] sm:$0xff]
    %v2499 = vld [vmem:[#allocation12 + $0x128] sm:$0xff]
    %v2500 = vld [vmem:[#allocation12 + $0x130] sm:$0xff]
    %v2501 = vld [vmem:[#allocation12 + $0x138] sm:$0xff]
    %v2502 = vld [vmem:[#allocation12 + $0x140] sm:$0xff]
    %v2503 = vld [vmem:[#allocation12 + $0x148] sm:$0xff]
    %v2504 = vld [vmem:[#allocation12 + $0x150] sm:$0xff]
    %v2505 = vld [vmem:[#allocation12 + $0x158] sm:$0xff]
    %v2506 = vld [vmem:[#allocation12 + $0x160] sm:$0xff]
    %v2507 = vld [vmem:[#allocation12 + $0x168] sm:$0xff]
    %v2508 = vld [vmem:[#allocation12 + $0x170] sm:$0xff]
    %v2509 = vld [vmem:[#allocation12 + $0x178] sm:$0xff]
    %2510 = vmatprep.subr.mxu0 %v2508
    %2511 = vmatpush1.msra.mxu0 %v2507
    %2512 = vmatprep.subr.mxu0 %v2505
    %2513 = vmatpush1.msra.mxu0 %v2504
    %2514 = vmatprep.subr.mxu0 %v2502
    %2515 = vmatpush1.msra.mxu0 %v2501
    %2516 = vmatprep.subr.mxu0 %v2499
    %2517 = vmatpush1.msra.mxu0 %v2498
    %2518 = vmatprep.subr.mxu0 %v2496
    %2519 = vmatpush1.msra.mxu0 %v2495
    %2520 = vmatprep.subr.mxu0 %v2493
    %2521 = vmatpush1.msra.mxu0 %v2492
    %2522 = vmatprep.subr.mxu0 %v2490
    %2523 = vmatpush1.msra.mxu0 %v2489
    %2524 = vmatprep.subr.mxu0 %v2487
    %2525 = vmatpush1.msra.mxu0 %v2486
    %2526 = vmatprep.subr.mxu0 %v2484
    %2527 = vmatpush1.msra.mxu0 %v2483
    %2528 = vmatprep.subr.mxu0 %v2481
    %2529 = vmatpush1.msra.mxu0 %v2480
    %2530 = vmatprep.subr.mxu0 %v2478
    %2531 = vmatpush1.msra.mxu0 %v2477
    %2532 = vmatprep.subr.mxu0 %v2475
    %2533 = vmatpush1.msra.mxu0 %v2474
    %2534 = vmatprep.subr.mxu0 %v2472
    %2535 = vmatpush1.msra.mxu0 %v2471
    %2536 = vmatprep.subr.mxu0 %v2469
    %2537 = vmatpush1.msra.mxu0 %v2468
    %2538 = vmatprep.subr.mxu0 %v2466
    %2539 = vmatpush1.msra.mxu0 %v2465
    %2540 = vmatprep.subr.mxu0 %v2463
    %2541 = vmatpush1.msra.mxu0 %v2462
    %2542 = vmatprep.subr.mxu0 0.0
    %2543 = vmatpush2.msra.mxu0 0.0
    %2544 = vmatprep.subr.mxu0 0.0
    %2545 = vmatpush2.msra.mxu0 0.0
    %2546 = vmatprep.subr.mxu0 0.0
    %2547 = vmatpush2.msra.mxu0 0.0
    %2548 = vmatprep.subr.mxu0 0.0
    %2549 = vmatpush2.msra.mxu0 0.0
    %2550 = vmatprep.subr.mxu0 0.0
    %2551 = vmatpush2.msra.mxu0 0.0
    %2552 = vmatprep.subr.mxu0 0.0
    %2553 = vmatpush2.msra.mxu0 0.0
    %2554 = vmatprep.subr.mxu0 0.0
    %2555 = vmatpush2.msra.mxu0 0.0
    %2556 = vmatprep.subr.mxu0 0.0
    %2557 = vmatpush2.msra.mxu0 0.0
    %2558 = vmatprep.subr.mxu0 0.0
    %2559 = vmatpush2.msra.mxu0 0.0
    %2560 = vmatprep.subr.mxu0 0.0
    %2561 = vmatpush2.msra.mxu0 0.0
    %2562 = vmatprep.subr.mxu0 0.0
    %2563 = vmatpush2.msra.mxu0 0.0
    %2564 = vmatprep.subr.mxu0 0.0
    %2565 = vmatpush2.msra.mxu0 0.0
    %2566 = vmatprep.subr.mxu0 0.0
    %2567 = vmatpush2.msra.mxu0 0.0
    %2568 = vmatprep.subr.mxu0 0.0
    %2569 = vmatpush2.msra.mxu0 0.0
    %2570 = vmatprep.subr.mxu0 0.0
    %2571 = vmatpush2.msra.mxu0 0.0
    %2572 = vmatprep.subr.mxu0 0.0
    %2573 = vmatpush2.msra.mxu0 0.0
    %2574 = vmatprep.mubr.f32.mxu0 0.0
    %2575 = vmatmul.mubr.f32.gmra.mxu0 %v2406
    %v2576 = vpop.f32.mrf.mxu0
    %v2577 = vadd.f32 0.0, %v2576
    %v2578 = vpop.f32.mrf.mxu0
    %v2579 = vadd.f32 0.0, %v2578
    %2580 = vmatprep.mubr.f32.mxu0 0.0
    %2581 = vmatmul.mubr.f32.gmra.mxu0 %v2407
    %v2582 = vpop.f32.mrf.mxu0
    %v2583 = vadd.f32 0.0, %v2582
    %v2584 = vpop.f32.mrf.mxu0
    %v2585 = vadd.f32 0.0, %v2584
    %2586 = vmatprep.mubr.f32.mxu0 0.0
    %2587 = vmatmul.mubr.f32.gmra.mxu0 %v2408
    %v2588 = vpop.f32.mrf.mxu0
    %v2589 = vadd.f32 0.0, %v2588
    %v2590 = vpop.f32.mrf.mxu0
    %v2591 = vadd.f32 0.0, %v2590
    %2592 = vmatprep.mubr.f32.mxu0 0.0
    %2593 = vmatmul.mubr.f32.gmra.mxu0 %v2409
    %v2594 = vpop.f32.mrf.mxu0
    %v2595 = vadd.f32 0.0, %v2594
    %v2596 = vpop.f32.mrf.mxu0
    %v2597 = vadd.f32 0.0, %v2596
    %2598 = vmatprep.mubr.f32.mxu0 0.0
    %2599 = vmatmul.mubr.f32.gmra.mxu0 %v2410
    %v2600 = vpop.f32.mrf.mxu0
    %v2601 = vadd.f32 0.0, %v2600
    %v2602 = vpop.f32.mrf.mxu0
    %v2603 = vadd.f32 0.0, %v2602
    %2604 = vmatprep.mubr.f32.mxu0 0.0
    %2605 = vmatmul.mubr.f32.gmra.mxu0 %v2411
    %v2606 = vpop.f32.mrf.mxu0
    %v2607 = vadd.f32 0.0, %v2606
    %v2608 = vpop.f32.mrf.mxu0
    %v2609 = vadd.f32 0.0, %v2608
    %2610 = vmatprep.mubr.f32.mxu0 0.0
    %2611 = vmatmul.mubr.f32.gmra.mxu0 %v2412
    %v2612 = vpop.f32.mrf.mxu0
    %v2613 = vadd.f32 0.0, %v2612
    %v2614 = vpop.f32.mrf.mxu0
    %v2615 = vadd.f32 0.0, %v2614
    %2616 = vmatprep.mubr.f32.mxu0 0.0
    %2617 = vmatmul.mubr.f32.gmra.mxu0 %v2413
    %v2618 = vpop.f32.mrf.mxu0
    %v2619 = vadd.f32 0.0, %v2618
    %v2620 = vpop.f32.mrf.mxu0
    %v2621 = vadd.f32 0.0, %v2620
    %2622 = vdwg.mxu0
    %2623 = vmatprep.subr.mxu0 0.0
    %2624 = vmatpush1.msra.mxu0 %v2509
    %2625 = vmatprep.subr.mxu0 0.0
    %2626 = vmatpush1.msra.mxu0 %v2506
    %2627 = vmatprep.subr.mxu0 0.0
    %2628 = vmatpush1.msra.mxu0 %v2503
    %2629 = vmatprep.subr.mxu0 0.0
    %2630 = vmatpush1.msra.mxu0 %v2500
    %2631 = vmatprep.subr.mxu0 0.0
    %2632 = vmatpush1.msra.mxu0 %v2497
    %2633 = vmatprep.subr.mxu0 0.0
    %2634 = vmatpush1.msra.mxu0 %v2494
    %2635 = vmatprep.subr.mxu0 0.0
    %2636 = vmatpush1.msra.mxu0 %v2491
    %2637 = vmatprep.subr.mxu0 0.0
    %2638 = vmatpush1.msra.mxu0 %v2488
    %2639 = vmatprep.subr.mxu0 0.0
    %2640 = vmatpush1.msra.mxu0 %v2485
    %2641 = vmatprep.subr.mxu0 0.0
    %2642 = vmatpush1.msra.mxu0 %v2482
    %2643 = vmatprep.subr.mxu0 0.0
    %2644 = vmatpush1.msra.mxu0 %v2479
    %2645 = vmatprep.subr.mxu0 0.0
    %2646 = vmatpush1.msra.mxu0 %v2476
    %2647 = vmatprep.subr.mxu0 0.0
    %2648 = vmatpush1.msra.mxu0 %v2473
    %2649 = vmatprep.subr.mxu0 0.0
    %2650 = vmatpush1.msra.mxu0 %v2470
    %2651 = vmatprep.subr.mxu0 0.0
    %2652 = vmatpush1.msra.mxu0 %v2467
    %2653 = vmatprep.subr.mxu0 0.0
    %2654 = vmatpush1.msra.mxu0 %v2464
    %2655 = vmatprep.subr.mxu0 0.0
    %2656 = vmatpush2.msra.mxu0 0.0
    %2657 = vmatprep.subr.mxu0 0.0
    %2658 = vmatpush2.msra.mxu0 0.0
    %2659 = vmatprep.subr.mxu0 0.0
    %2660 = vmatpush2.msra.mxu0 0.0
    %2661 = vmatprep.subr.mxu0 0.0
    %2662 = vmatpush2.msra.mxu0 0.0
    %2663 = vmatprep.subr.mxu0 0.0
    %2664 = vmatpush2.msra.mxu0 0.0
    %2665 = vmatprep.subr.mxu0 0.0
    %2666 = vmatpush2.msra.mxu0 0.0
    %2667 = vmatprep.subr.mxu0 0.0
    %2668 = vmatpush2.msra.mxu0 0.0
    %2669 = vmatprep.subr.mxu0 0.0
    %2670 = vmatpush2.msra.mxu0 0.0
    %2671 = vmatprep.subr.mxu0 0.0
    %2672 = vmatpush2.msra.mxu0 0.0
    %2673 = vmatprep.subr.mxu0 0.0
    %2674 = vmatpush2.msra.mxu0 0.0
    %2675 = vmatprep.subr.mxu0 0.0
    %2676 = vmatpush2.msra.mxu0 0.0
    %2677 = vmatprep.subr.mxu0 0.0
    %2678 = vmatpush2.msra.mxu0 0.0
    %2679 = vmatprep.subr.mxu0 0.0
    %2680 = vmatpush2.msra.mxu0 0.0
    %2681 = vmatprep.subr.mxu0 0.0
    %2682 = vmatpush2.msra.mxu0 0.0
    %2683 = vmatprep.subr.mxu0 0.0
    %2684 = vmatpush2.msra.mxu0 0.0
    %2685 = vmatprep.subr.mxu0 0.0
    %2686 = vmatpush2.msra.mxu0 0.0
    %2687 = vmatprep.mubr.f32.mxu0 0.0
    %2688 = vmatmul.mubr.f32.gmra.mxu0 %v2406
    %v2689 = vpop.f32.mrf.mxu0
    %v2690 = vadd.f32 0.0, %v2689
    %v2691 = vpop.f32.mrf.mxu0
    %2692 = vmatprep.mubr.f32.mxu0 0.0
    %2693 = vmatmul.mubr.f32.gmra.mxu0 %v2407
    %v2694 = vpop.f32.mrf.mxu0
    %v2695 = vadd.f32 0.0, %v2694
    %v2696 = vpop.f32.mrf.mxu0
    %2697 = vmatprep.mubr.f32.mxu0 0.0
    %2698 = vmatmul.mubr.f32.gmra.mxu0 %v2408
    %v2699 = vpop.f32.mrf.mxu0
    %v2700 = vadd.f32 0.0, %v2699
    %v2701 = vpop.f32.mrf.mxu0
    %2702 = vmatprep.mubr.f32.mxu0 0.0
    %2703 = vmatmul.mubr.f32.gmra.mxu0 %v2409
    %v2704 = vpop.f32.mrf.mxu0
    %v2705 = vadd.f32 0.0, %v2704
    %v2706 = vpop.f32.mrf.mxu0
    %2707 = vmatprep.mubr.f32.mxu0 0.0
    %2708 = vmatmul.mubr.f32.gmra.mxu0 %v2410
    %v2709 = vpop.f32.mrf.mxu0
    %v2710 = vadd.f32 0.0, %v2709
    %v2711 = vpop.f32.mrf.mxu0
    %2712 = vmatprep.mubr.f32.mxu0 0.0
    %2713 = vmatmul.mubr.f32.gmra.mxu0 %v2411
    %v2714 = vpop.f32.mrf.mxu0
    %v2715 = vadd.f32 0.0, %v2714
    %v2716 = vpop.f32.mrf.mxu0
    %2717 = vmatprep.mubr.f32.mxu0 0.0
    %2718 = vmatmul.mubr.f32.gmra.mxu0 %v2412
    %v2719 = vpop.f32.mrf.mxu0
    %v2720 = vadd.f32 0.0, %v2719
    %v2721 = vpop.f32.mrf.mxu0
    %2722 = vmatprep.mubr.f32.mxu0 0.0
    %2723 = vmatmul.mubr.f32.gmra.mxu0 %v2413
    %v2724 = vpop.f32.mrf.mxu0
    %v2725 = vadd.f32 0.0, %v2724
    %v2726 = vpop.f32.mrf.mxu0
    %2727 = vdwg.mxu0
    %2728 = vmatprep.subr.mxu0 %v2460
    %2729 = vmatpush1.msra.mxu0 %v2459
    %2730 = vmatprep.subr.mxu0 %v2457
    %2731 = vmatpush1.msra.mxu0 %v2456
    %2732 = vmatprep.subr.mxu0 %v2454
    %2733 = vmatpush1.msra.mxu0 %v2453
    %2734 = vmatprep.subr.mxu0 %v2451
    %2735 = vmatpush1.msra.mxu0 %v2450
    %2736 = vmatprep.subr.mxu0 %v2448
    %2737 = vmatpush1.msra.mxu0 %v2447
    %2738 = vmatprep.subr.mxu0 %v2445
    %2739 = vmatpush1.msra.mxu0 %v2444
    %2740 = vmatprep.subr.mxu0 %v2442
    %2741 = vmatpush1.msra.mxu0 %v2441
    %2742 = vmatprep.subr.mxu0 %v2439
    %2743 = vmatpush1.msra.mxu0 %v2438
    %2744 = vmatprep.subr.mxu0 %v2436
    %2745 = vmatpush1.msra.mxu0 %v2435
    %2746 = vmatprep.subr.mxu0 %v2433
    %2747 = vmatpush1.msra.mxu0 %v2432
    %2748 = vmatprep.subr.mxu0 %v2430
    %2749 = vmatpush1.msra.mxu0 %v2429
    %2750 = vmatprep.subr.mxu0 %v2427
    %2751 = vmatpush1.msra.mxu0 %v2426
    %2752 = vmatprep.subr.mxu0 %v2424
    %2753 = vmatpush1.msra.mxu0 %v2423
    %2754 = vmatprep.subr.mxu0 %v2421
    %2755 = vmatpush1.msra.mxu0 %v2420
    %2756 = vmatprep.subr.mxu0 %v2418
    %2757 = vmatpush1.msra.mxu0 %v2417
    %2758 = vmatprep.subr.mxu0 %v2415
    %2759 = vmatpush1.msra.mxu0 %v2414
    %2760 = vmatprep.subr.mxu0 0.0
    %2761 = vmatpush2.msra.mxu0 0.0
    %2762 = vmatprep.subr.mxu0 0.0
    %2763 = vmatpush2.msra.mxu0 0.0
    %2764 = vmatprep.subr.mxu0 0.0
    %2765 = vmatpush2.msra.mxu0 0.0
    %2766 = vmatprep.subr.mxu0 0.0
    %2767 = vmatpush2.msra.mxu0 0.0
    %2768 = vmatprep.subr.mxu0 0.0
    %2769 = vmatpush2.msra.mxu0 0.0
    %2770 = vmatprep.subr.mxu0 0.0
    %2771 = vmatpush2.msra.mxu0 0.0
    %2772 = vmatprep.subr.mxu0 0.0
    %2773 = vmatpush2.msra.mxu0 0.0
    %2774 = vmatprep.subr.mxu0 0.0
    %2775 = vmatpush2.msra.mxu0 0.0
    %2776 = vmatprep.subr.mxu0 0.0
    %2777 = vmatpush2.msra.mxu0 0.0
    %2778 = vmatprep.subr.mxu0 0.0
    %2779 = vmatpush2.msra.mxu0 0.0
    %2780 = vmatprep.subr.mxu0 0.0
    %2781 = vmatpush2.msra.mxu0 0.0
    %2782 = vmatprep.subr.mxu0 0.0
    %2783 = vmatpush2.msra.mxu0 0.0
    %2784 = vmatprep.subr.mxu0 0.0
    %2785 = vmatpush2.msra.mxu0 0.0
    %2786 = vmatprep.subr.mxu0 0.0
    %2787 = vmatpush2.msra.mxu0 0.0
    %2788 = vmatprep.subr.mxu0 0.0
    %2789 = vmatpush2.msra.mxu0 0.0
    %2790 = vmatprep.subr.mxu0 0.0
    %2791 = vmatpush2.msra.mxu0 0.0
    %2792 = vmatprep.mubr.f32.mxu0 0.0
    %2793 = vmatmul.mubr.f32.gmra.mxu0 %v2398
    %v2794 = vpop.f32.mrf.mxu0
    %v2795 = vadd.f32 %v2577, %v2794
    %v2796 = vpop.f32.mrf.mxu0
    %v2797 = vadd.f32 %v2579, %v2796
    %2798 = vmatprep.mubr.f32.mxu0 0.0
    %2799 = vmatmul.mubr.f32.gmra.mxu0 %v2399
    %v2800 = vpop.f32.mrf.mxu0
    %v2801 = vadd.f32 %v2583, %v2800
    %v2802 = vpop.f32.mrf.mxu0
    %v2803 = vadd.f32 %v2585, %v2802
    %2804 = vmatprep.mubr.f32.mxu0 0.0
    %2805 = vmatmul.mubr.f32.gmra.mxu0 %v2400
    %v2806 = vpop.f32.mrf.mxu0
    %v2807 = vadd.f32 %v2589, %v2806
    %v2808 = vpop.f32.mrf.mxu0
    %v2809 = vadd.f32 %v2591, %v2808
    %2810 = vmatprep.mubr.f32.mxu0 0.0
    %2811 = vmatmul.mubr.f32.gmra.mxu0 %v2401
    %v2812 = vpop.f32.mrf.mxu0
    %v2813 = vadd.f32 %v2595, %v2812
    %v2814 = vpop.f32.mrf.mxu0
    %v2815 = vadd.f32 %v2597, %v2814
    %2816 = vmatprep.mubr.f32.mxu0 0.0
    %2817 = vmatmul.mubr.f32.gmra.mxu0 %v2402
    %v2818 = vpop.f32.mrf.mxu0
    %v2819 = vadd.f32 %v2601, %v2818
    %v2820 = vpop.f32.mrf.mxu0
    %v2821 = vadd.f32 %v2603, %v2820
    %2822 = vmatprep.mubr.f32.mxu0 0.0
    %2823 = vmatmul.mubr.f32.gmra.mxu0 %v2403
    %v2824 = vpop.f32.mrf.mxu0
    %v2825 = vadd.f32 %v2607, %v2824
    %v2826 = vpop.f32.mrf.mxu0
    %v2827 = vadd.f32 %v2609, %v2826
    %2828 = vmatprep.mubr.f32.mxu0 0.0
    %2829 = vmatmul.mubr.f32.gmra.mxu0 %v2404
    %v2830 = vpop.f32.mrf.mxu0
    %v2831 = vadd.f32 %v2613, %v2830
    %v2832 = vpop.f32.mrf.mxu0
    %v2833 = vadd.f32 %v2615, %v2832
    %2834 = vmatprep.mubr.f32.mxu0 0.0
    %2835 = vmatmul.mubr.f32.gmra.mxu0 %v2405
    %v2836 = vpop.f32.mrf.mxu0
    %v2837 = vadd.f32 %v2619, %v2836
    %v2838 = vpop.f32.mrf.mxu0
    %v2839 = vadd.f32 %v2621, %v2838
    %2840 = vdwg.mxu0
    %2841 = vmatprep.subr.mxu0 0.0
    %2842 = vmatpush1.msra.mxu0 %v2461
    %2843 = vmatprep.subr.mxu0 0.0
    %2844 = vmatpush1.msra.mxu0 %v2458
    %2845 = vmatprep.subr.mxu0 0.0
    %2846 = vmatpush1.msra.mxu0 %v2455
    %2847 = vmatprep.subr.mxu0 0.0
    %2848 = vmatpush1.msra.mxu0 %v2452
    %2849 = vmatprep.subr.mxu0 0.0
    %2850 = vmatpush1.msra.mxu0 %v2449
    %2851 = vmatprep.subr.mxu0 0.0
    %2852 = vmatpush1.msra.mxu0 %v2446
    %2853 = vmatprep.subr.mxu0 0.0
    %2854 = vmatpush1.msra.mxu0 %v2443
    %2855 = vmatprep.subr.mxu0 0.0
    %2856 = vmatpush1.msra.mxu0 %v2440
    %2857 = vmatprep.subr.mxu0 0.0
    %2858 = vmatpush1.msra.mxu0 %v2437
    %2859 = vmatprep.subr.mxu0 0.0
    %2860 = vmatpush1.msra.mxu0 %v2434
    %2861 = vmatprep.subr.mxu0 0.0
    %2862 = vmatpush1.msra.mxu0 %v2431
    %2863 = vmatprep.subr.mxu0 0.0
    %2864 = vmatpush1.msra.mxu0 %v2428
    %2865 = vmatprep.subr.mxu0 0.0
    %2866 = vmatpush1.msra.mxu0 %v2425
    %2867 = vmatprep.subr.mxu0 0.0
    %2868 = vmatpush1.msra.mxu0 %v2422
    %2869 = vmatprep.subr.mxu0 0.0
    %2870 = vmatpush1.msra.mxu0 %v2419
    %2871 = vmatprep.subr.mxu0 0.0
    %2872 = vmatpush1.msra.mxu0 %v2416
    %2873 = vmatprep.subr.mxu0 0.0
    %2874 = vmatpush2.msra.mxu0 0.0
    %2875 = vmatprep.subr.mxu0 0.0
    %2876 = vmatpush2.msra.mxu0 0.0
    %2877 = vmatprep.subr.mxu0 0.0
    %2878 = vmatpush2.msra.mxu0 0.0
    %2879 = vmatprep.subr.mxu0 0.0
    %2880 = vmatpush2.msra.mxu0 0.0
    %2881 = vmatprep.subr.mxu0 0.0
    %2882 = vmatpush2.msra.mxu0 0.0
    %2883 = vmatprep.subr.mxu0 0.0
    %2884 = vmatpush2.msra.mxu0 0.0
    %2885 = vmatprep.subr.mxu0 0.0
    %2886 = vmatpush2.msra.mxu0 0.0
    %2887 = vmatprep.subr.mxu0 0.0
    %2888 = vmatpush2.msra.mxu0 0.0
    %2889 = vmatprep.subr.mxu0 0.0
    %2890 = vmatpush2.msra.mxu0 0.0
    %2891 = vmatprep.subr.mxu0 0.0
    %2892 = vmatpush2.msra.mxu0 0.0
    %2893 = vmatprep.subr.mxu0 0.0
    %2894 = vmatpush2.msra.mxu0 0.0
    %2895 = vmatprep.subr.mxu0 0.0
    %2896 = vmatpush2.msra.mxu0 0.0
    %2897 = vmatprep.subr.mxu0 0.0
    %2898 = vmatpush2.msra.mxu0 0.0
    %2899 = vmatprep.subr.mxu0 0.0
    %2900 = vmatpush2.msra.mxu0 0.0
    %2901 = vmatprep.subr.mxu0 0.0
    %2902 = vmatpush2.msra.mxu0 0.0
    %2903 = vmatprep.subr.mxu0 0.0
    %2904 = vmatpush2.msra.mxu0 0.0
    %2905 = vmatprep.mubr.f32.mxu0 0.0
    %2906 = vmatmul.mubr.f32.gmra.mxu0 %v2398
    %v2907 = vpop.f32.mrf.mxu0
    %v2908 = vadd.f32 %v2690, %v2907
    %v2909 = vpop.f32.mrf.mxu0
    %2910 = vmatprep.mubr.f32.mxu0 0.0
    %2911 = vmatmul.mubr.f32.gmra.mxu0 %v2399
    %v2912 = vpop.f32.mrf.mxu0
    %v2913 = vadd.f32 %v2695, %v2912
    %v2914 = vpop.f32.mrf.mxu0
    %2915 = vmatprep.mubr.f32.mxu0 0.0
    %2916 = vmatmul.mubr.f32.gmra.mxu0 %v2400
    %v2917 = vpop.f32.mrf.mxu0
    %v2918 = vadd.f32 %v2700, %v2917
    %v2919 = vpop.f32.mrf.mxu0
    %2920 = vmatprep.mubr.f32.mxu0 0.0
    %2921 = vmatmul.mubr.f32.gmra.mxu0 %v2401
    %v2922 = vpop.f32.mrf.mxu0
    %v2923 = vadd.f32 %v2705, %v2922
    %v2924 = vpop.f32.mrf.mxu0
    %2925 = vmatprep.mubr.f32.mxu0 0.0
    %2926 = vmatmul.mubr.f32.gmra.mxu0 %v2402
    %v2927 = vpop.f32.mrf.mxu0
    %v2928 = vadd.f32 %v2710, %v2927
    %v2929 = vpop.f32.mrf.mxu0
    %2930 = vmatprep.mubr.f32.mxu0 0.0
    %2931 = vmatmul.mubr.f32.gmra.mxu0 %v2403
    %v2932 = vpop.f32.mrf.mxu0
    %v2933 = vadd.f32 %v2715, %v2932
    %v2934 = vpop.f32.mrf.mxu0
    %2935 = vmatprep.mubr.f32.mxu0 0.0
    %2936 = vmatmul.mubr.f32.gmra.mxu0 %v2404
    %v2937 = vpop.f32.mrf.mxu0
    %v2938 = vadd.f32 %v2720, %v2937
    %v2939 = vpop.f32.mrf.mxu0
    %2940 = vmatprep.mubr.f32.mxu0 0.0
    %2941 = vmatmul.mubr.f32.gmra.mxu0 %v2405
    %v2942 = vpop.f32.mrf.mxu0
    %v2943 = vadd.f32 %v2725, %v2942
    %v2944 = vpop.f32.mrf.mxu0
    %2945 = vdwg.mxu0
    %v2946 = vld [vmem:[%s12] sm:$0x7]
    %v2948 = vlaneseq
    %v2949 = vshrl.u32 %v2948, 7
    %v2950 = vsub.s32 0, %v2949
    %v2951 = vrot.slane %v2946, %v2950
    %v2952 = vlaneseq
    %v2953 = vshrl.u32 %v2952, 7
    %v2954 = vsub.s32 1, %v2953
    %v2955 = vrot.slane %v2946, %v2954
    %v2956 = vlaneseq
    %v2957 = vshrl.u32 %v2956, 7
    %v2958 = vsub.s32 2, %v2957
    %v2959 = vrot.slane %v2946, %v2958
    %v2963 = vadd.f32 %v2795, %v2951
    %v2964 = vadd.f32 %v2797, %v2955
    %v2965 = vadd.f32 %v2908, %v2959
    %v2966 = vadd.f32 %v2801, %v2951
    %v2967 = vadd.f32 %v2803, %v2955
    %v2968 = vadd.f32 %v2913, %v2959
    %v2969 = vadd.f32 %v2807, %v2951
    %v2970 = vadd.f32 %v2809, %v2955
    %v2971 = vadd.f32 %v2918, %v2959
    %v2972 = vadd.f32 %v2813, %v2951
    %v2973 = vadd.f32 %v2815, %v2955
    %v2974 = vadd.f32 %v2923, %v2959
    %v2975 = vadd.f32 %v2819, %v2951
    %v2976 = vadd.f32 %v2821, %v2955
    %v2977 = vadd.f32 %v2928, %v2959
    %v2978 = vadd.f32 %v2825, %v2951
    %v2979 = vadd.f32 %v2827, %v2955
    %v2980 = vadd.f32 %v2933, %v2959
    %v2981 = vadd.f32 %v2831, %v2951
    %v2982 = vadd.f32 %v2833, %v2955
    %v2983 = vadd.f32 %v2938, %v2959
    %v2984 = vadd.f32 %v2837, %v2951
    %v2985 = vadd.f32 %v2839, %v2955
    %v2986 = vadd.f32 %v2943, %v2959
    %v2987 = vld [vmem:[#allocation13] sm:$0xff]
    %v2988 = vld [vmem:[#allocation13 + $0x8] sm:$0xff]
    %v2989 = vld [vmem:[#allocation13 + $0x10] sm:$0xff]
    %v2990 = vld [vmem:[#allocation13 + $0x18] sm:$0xff]
    %v2991 = vld [vmem:[#allocation13 + $0x20] sm:$0xff]
    %v2992 = vld [vmem:[#allocation13 + $0x28] sm:$0xff]
    %v2993 = vld [vmem:[#allocation13 + $0x30] sm:$0xff]
    %v2994 = vld [vmem:[#allocation13 + $0x38] sm:$0xff]
    %v2995 = vld [vmem:[#allocation13 + $0x40] sm:$0xff]
    %v2996 = vld [vmem:[#allocation13 + $0x48] sm:$0xff]
    %v2997 = vld [vmem:[#allocation13 + $0x50] sm:$0xff]
    %v2998 = vld [vmem:[#allocation13 + $0x58] sm:$0xff]
    %v2999 = vld [vmem:[#allocation13 + $0x60] sm:$0xff]
    %v3000 = vld [vmem:[#allocation13 + $0x68] sm:$0xff]
    %v3001 = vld [vmem:[#allocation13 + $0x70] sm:$0xff]
    %v3002 = vld [vmem:[#allocation13 + $0x78] sm:$0xff]
    %v3003 = vld [vmem:[#allocation13 + $0x80] sm:$0xff]
    %v3004 = vld [vmem:[#allocation13 + $0x88] sm:$0xff]
    %v3005 = vld [vmem:[#allocation13 + $0x90] sm:$0xff]
    %v3006 = vld [vmem:[#allocation13 + $0x98] sm:$0xff]
    %v3007 = vld [vmem:[#allocation13 + $0xa0] sm:$0xff]
    %v3008 = vld [vmem:[#allocation13 + $0xa8] sm:$0xff]
    %v3009 = vld [vmem:[#allocation13 + $0xb0] sm:$0xff]
    %v3010 = vld [vmem:[#allocation13 + $0xb8] sm:$0xff]
    %v3011 = vld [vmem:[#allocation13 + $0xc0] sm:$0xff]
    %v3012 = vld [vmem:[#allocation13 + $0xc8] sm:$0xff]
    %v3013 = vld [vmem:[#allocation13 + $0xd0] sm:$0xff]
    %v3014 = vld [vmem:[#allocation13 + $0xd8] sm:$0xff]
    %v3015 = vld [vmem:[#allocation13 + $0xe0] sm:$0xff]
    %v3016 = vld [vmem:[#allocation13 + $0xe8] sm:$0xff]
    %v3017 = vld [vmem:[#allocation13 + $0xf0] sm:$0xff]
    %v3018 = vld [vmem:[#allocation13 + $0xf8] sm:$0xff]
    %v3019 = vld [vmem:[#allocation13 + $0x100] sm:$0xff]
    %v3020 = vld [vmem:[#allocation13 + $0x108] sm:$0xff]
    %v3021 = vld [vmem:[#allocation13 + $0x110] sm:$0xff]
    %v3022 = vld [vmem:[#allocation13 + $0x118] sm:$0xff]
    %v3023 = vld [vmem:[#allocation13 + $0x120] sm:$0xff]
    %v3024 = vld [vmem:[#allocation13 + $0x128] sm:$0xff]
    %v3025 = vld [vmem:[#allocation13 + $0x130] sm:$0xff]
    %v3026 = vld [vmem:[#allocation13 + $0x138] sm:$0xff]
    %v3027 = vld [vmem:[#allocation13 + $0x140] sm:$0xff]
    %v3028 = vld [vmem:[#allocation13 + $0x148] sm:$0xff]
    %v3029 = vld [vmem:[#allocation13 + $0x150] sm:$0xff]
    %v3030 = vld [vmem:[#allocation13 + $0x158] sm:$0xff]
    %v3031 = vld [vmem:[#allocation13 + $0x160] sm:$0xff]
    %v3032 = vld [vmem:[#allocation13 + $0x168] sm:$0xff]
    %v3033 = vld [vmem:[#allocation13 + $0x170] sm:$0xff]
    %v3034 = vld [vmem:[#allocation13 + $0x178] sm:$0xff]
    %v3035 = vld [vmem:[#allocation15] sm:$0xff]
    %v3036 = vld [vmem:[#allocation15 + $0x8] sm:$0xff]
    %v3037 = vld [vmem:[#allocation15 + $0x10] sm:$0xff]
    %v3038 = vld [vmem:[#allocation15 + $0x18] sm:$0xff]
    %v3039 = vld [vmem:[#allocation15 + $0x20] sm:$0xff]
    %v3040 = vld [vmem:[#allocation15 + $0x28] sm:$0xff]
    %v3041 = vld [vmem:[#allocation15 + $0x30] sm:$0xff]
    %v3042 = vld [vmem:[#allocation15 + $0x38] sm:$0xff]
    %v3043 = vld [vmem:[#allocation15 + $0x40] sm:$0xff]
    %v3044 = vld [vmem:[#allocation15 + $0x48] sm:$0xff]
    %v3045 = vld [vmem:[#allocation15 + $0x50] sm:$0xff]
    %v3046 = vld [vmem:[#allocation15 + $0x58] sm:$0xff]
    %v3047 = vld [vmem:[#allocation15 + $0x60] sm:$0xff]
    %v3048 = vld [vmem:[#allocation15 + $0x68] sm:$0xff]
    %v3049 = vld [vmem:[#allocation15 + $0x70] sm:$0xff]
    %v3050 = vld [vmem:[#allocation15 + $0x78] sm:$0xff]
    %v3051 = vld [vmem:[#allocation15 + $0x80] sm:$0xff]
    %v3052 = vld [vmem:[#allocation15 + $0x88] sm:$0xff]
    %v3053 = vld [vmem:[#allocation15 + $0x90] sm:$0xff]
    %v3054 = vld [vmem:[#allocation15 + $0x98] sm:$0xff]
    %v3055 = vld [vmem:[#allocation15 + $0xa0] sm:$0xff]
    %v3056 = vld [vmem:[#allocation15 + $0xa8] sm:$0xff]
    %v3057 = vld [vmem:[#allocation15 + $0xb0] sm:$0xff]
    %v3058 = vld [vmem:[#allocation15 + $0xb8] sm:$0xff]
    %v3059 = vld [vmem:[#allocation15 + $0xc0] sm:$0xff]
    %v3060 = vld [vmem:[#allocation15 + $0xc8] sm:$0xff]
    %v3061 = vld [vmem:[#allocation15 + $0xd0] sm:$0xff]
    %v3062 = vld [vmem:[#allocation15 + $0xd8] sm:$0xff]
    %v3063 = vld [vmem:[#allocation15 + $0xe0] sm:$0xff]
    %v3064 = vld [vmem:[#allocation15 + $0xe8] sm:$0xff]
    %v3065 = vld [vmem:[#allocation15 + $0xf0] sm:$0xff]
    %v3066 = vld [vmem:[#allocation15 + $0xf8] sm:$0xff]
    %v3067 = vld [vmem:[#allocation15 + $0x100] sm:$0xff]
    %v3068 = vld [vmem:[#allocation15 + $0x108] sm:$0xff]
    %v3069 = vld [vmem:[#allocation15 + $0x110] sm:$0xff]
    %v3070 = vld [vmem:[#allocation15 + $0x118] sm:$0xff]
    %v3071 = vld [vmem:[#allocation15 + $0x120] sm:$0xff]
    %v3072 = vld [vmem:[#allocation15 + $0x128] sm:$0xff]
    %v3073 = vld [vmem:[#allocation15 + $0x130] sm:$0xff]
    %v3074 = vld [vmem:[#allocation15 + $0x138] sm:$0xff]
    %v3075 = vld [vmem:[#allocation15 + $0x140] sm:$0xff]
    %v3076 = vld [vmem:[#allocation15 + $0x148] sm:$0xff]
    %v3077 = vld [vmem:[#allocation15 + $0x150] sm:$0xff]
    %v3078 = vld [vmem:[#allocation15 + $0x158] sm:$0xff]
    %v3079 = vld [vmem:[#allocation15 + $0x160] sm:$0xff]
    %v3080 = vld [vmem:[#allocation15 + $0x168] sm:$0xff]
    %v3081 = vld [vmem:[#allocation15 + $0x170] sm:$0xff]
    %v3082 = vld [vmem:[#allocation15 + $0x178] sm:$0xff]
    %3083 = vmatprep.subr.mxu0 %v3081
    %3084 = vmatpush1.msra.mxu0 %v3080
    %3085 = vmatprep.subr.mxu0 %v3078
    %3086 = vmatpush1.msra.mxu0 %v3077
    %3087 = vmatprep.subr.mxu0 %v3075
    %3088 = vmatpush1.msra.mxu0 %v3074
    %3089 = vmatprep.subr.mxu0 %v3072
    %3090 = vmatpush1.msra.mxu0 %v3071
    %3091 = vmatprep.subr.mxu0 %v3069
    %3092 = vmatpush1.msra.mxu0 %v3068
    %3093 = vmatprep.subr.mxu0 %v3066
    %3094 = vmatpush1.msra.mxu0 %v3065
    %3095 = vmatprep.subr.mxu0 %v3063
    %3096 = vmatpush1.msra.mxu0 %v3062
    %3097 = vmatprep.subr.mxu0 %v3060
    %3098 = vmatpush1.msra.mxu0 %v3059
    %3099 = vmatprep.subr.mxu0 %v3057
    %3100 = vmatpush1.msra.mxu0 %v3056
    %3101 = vmatprep.subr.mxu0 %v3054
    %3102 = vmatpush1.msra.mxu0 %v3053
    %3103 = vmatprep.subr.mxu0 %v3051
    %3104 = vmatpush1.msra.mxu0 %v3050
    %3105 = vmatprep.subr.mxu0 %v3048
    %3106 = vmatpush1.msra.mxu0 %v3047
    %3107 = vmatprep.subr.mxu0 %v3045
    %3108 = vmatpush1.msra.mxu0 %v3044
    %3109 = vmatprep.subr.mxu0 %v3042
    %3110 = vmatpush1.msra.mxu0 %v3041
    %3111 = vmatprep.subr.mxu0 %v3039
    %3112 = vmatpush1.msra.mxu0 %v3038
    %3113 = vmatprep.subr.mxu0 %v3036
    %3114 = vmatpush1.msra.mxu0 %v3035
    %3115 = vmatprep.subr.mxu0 0.0
    %3116 = vmatpush2.msra.mxu0 0.0
    %3117 = vmatprep.subr.mxu0 0.0
    %3118 = vmatpush2.msra.mxu0 0.0
    %3119 = vmatprep.subr.mxu0 0.0
    %3120 = vmatpush2.msra.mxu0 0.0
    %3121 = vmatprep.subr.mxu0 0.0
    %3122 = vmatpush2.msra.mxu0 0.0
    %3123 = vmatprep.subr.mxu0 0.0
    %3124 = vmatpush2.msra.mxu0 0.0
    %3125 = vmatprep.subr.mxu0 0.0
    %3126 = vmatpush2.msra.mxu0 0.0
    %3127 = vmatprep.subr.mxu0 0.0
    %3128 = vmatpush2.msra.mxu0 0.0
    %3129 = vmatprep.subr.mxu0 0.0
    %3130 = vmatpush2.msra.mxu0 0.0
    %3131 = vmatprep.subr.mxu0 0.0
    %3132 = vmatpush2.msra.mxu0 0.0
    %3133 = vmatprep.subr.mxu0 0.0
    %3134 = vmatpush2.msra.mxu0 0.0
    %3135 = vmatprep.subr.mxu0 0.0
    %3136 = vmatpush2.msra.mxu0 0.0
    %3137 = vmatprep.subr.mxu0 0.0
    %3138 = vmatpush2.msra.mxu0 0.0
    %3139 = vmatprep.subr.mxu0 0.0
    %3140 = vmatpush2.msra.mxu0 0.0
    %3141 = vmatprep.subr.mxu0 0.0
    %3142 = vmatpush2.msra.mxu0 0.0
    %3143 = vmatprep.subr.mxu0 0.0
    %3144 = vmatpush2.msra.mxu0 0.0
    %3145 = vmatprep.subr.mxu0 0.0
    %3146 = vmatpush2.msra.mxu0 0.0
    %3147 = vmatprep.mubr.f32.mxu0 0.0
    %3148 = vmatmul.mubr.f32.gmra.mxu0 %v2406
    %v3149 = vpop.f32.mrf.mxu0
    %v3150 = vadd.f32 0.0, %v3149
    %v3151 = vpop.f32.mrf.mxu0
    %v3152 = vadd.f32 0.0, %v3151
    %3153 = vmatprep.mubr.f32.mxu0 0.0
    %3154 = vmatmul.mubr.f32.gmra.mxu0 %v2407
    %v3155 = vpop.f32.mrf.mxu0
    %v3156 = vadd.f32 0.0, %v3155
    %v3157 = vpop.f32.mrf.mxu0
    %v3158 = vadd.f32 0.0, %v3157
    %3159 = vmatprep.mubr.f32.mxu0 0.0
    %3160 = vmatmul.mubr.f32.gmra.mxu0 %v2408
    %v3161 = vpop.f32.mrf.mxu0
    %v3162 = vadd.f32 0.0, %v3161
    %v3163 = vpop.f32.mrf.mxu0
    %v3164 = vadd.f32 0.0, %v3163
    %3165 = vmatprep.mubr.f32.mxu0 0.0
    %3166 = vmatmul.mubr.f32.gmra.mxu0 %v2409
    %v3167 = vpop.f32.mrf.mxu0
    %v3168 = vadd.f32 0.0, %v3167
    %v3169 = vpop.f32.mrf.mxu0
    %v3170 = vadd.f32 0.0, %v3169
    %3171 = vmatprep.mubr.f32.mxu0 0.0
    %3172 = vmatmul.mubr.f32.gmra.mxu0 %v2410
    %v3173 = vpop.f32.mrf.mxu0
    %v3174 = vadd.f32 0.0, %v3173
    %v3175 = vpop.f32.mrf.mxu0
    %v3176 = vadd.f32 0.0, %v3175
    %3177 = vmatprep.mubr.f32.mxu0 0.0
    %3178 = vmatmul.mubr.f32.gmra.mxu0 %v2411
    %v3179 = vpop.f32.mrf.mxu0
    %v3180 = vadd.f32 0.0, %v3179
    %v3181 = vpop.f32.mrf.mxu0
    %v3182 = vadd.f32 0.0, %v3181
    %3183 = vmatprep.mubr.f32.mxu0 0.0
    %3184 = vmatmul.mubr.f32.gmra.mxu0 %v2412
    %v3185 = vpop.f32.mrf.mxu0
    %v3186 = vadd.f32 0.0, %v3185
    %v3187 = vpop.f32.mrf.mxu0
    %v3188 = vadd.f32 0.0, %v3187
    %3189 = vmatprep.mubr.f32.mxu0 0.0
    %3190 = vmatmul.mubr.f32.gmra.mxu0 %v2413
    %v3191 = vpop.f32.mrf.mxu0
    %v3192 = vadd.f32 0.0, %v3191
    %v3193 = vpop.f32.mrf.mxu0
    %v3194 = vadd.f32 0.0, %v3193
    %3195 = vdwg.mxu0
    %3196 = vmatprep.subr.mxu0 0.0
    %3197 = vmatpush1.msra.mxu0 %v3082
    %3198 = vmatprep.subr.mxu0 0.0
    %3199 = vmatpush1.msra.mxu0 %v3079
    %3200 = vmatprep.subr.mxu0 0.0
    %3201 = vmatpush1.msra.mxu0 %v3076
    %3202 = vmatprep.subr.mxu0 0.0
    %3203 = vmatpush1.msra.mxu0 %v3073
    %3204 = vmatprep.subr.mxu0 0.0
    %3205 = vmatpush1.msra.mxu0 %v3070
    %3206 = vmatprep.subr.mxu0 0.0
    %3207 = vmatpush1.msra.mxu0 %v3067
    %3208 = vmatprep.subr.mxu0 0.0
    %3209 = vmatpush1.msra.mxu0 %v3064
    %3210 = vmatprep.subr.mxu0 0.0
    %3211 = vmatpush1.msra.mxu0 %v3061
    %3212 = vmatprep.subr.mxu0 0.0
    %3213 = vmatpush1.msra.mxu0 %v3058
    %3214 = vmatprep.subr.mxu0 0.0
    %3215 = vmatpush1.msra.mxu0 %v3055
    %3216 = vmatprep.subr.mxu0 0.0
    %3217 = vmatpush1.msra.mxu0 %v3052
    %3218 = vmatprep.subr.mxu0 0.0
    %3219 = vmatpush1.msra.mxu0 %v3049
    %3220 = vmatprep.subr.mxu0 0.0
    %3221 = vmatpush1.msra.mxu0 %v3046
    %3222 = vmatprep.subr.mxu0 0.0
    %3223 = vmatpush1.msra.mxu0 %v3043
    %3224 = vmatprep.subr.mxu0 0.0
    %3225 = vmatpush1.msra.mxu0 %v3040
    %3226 = vmatprep.subr.mxu0 0.0
    %3227 = vmatpush1.msra.mxu0 %v3037
    %3228 = vmatprep.subr.mxu0 0.0
    %3229 = vmatpush2.msra.mxu0 0.0
    %3230 = vmatprep.subr.mxu0 0.0
    %3231 = vmatpush2.msra.mxu0 0.0
    %3232 = vmatprep.subr.mxu0 0.0
    %3233 = vmatpush2.msra.mxu0 0.0
    %3234 = vmatprep.subr.mxu0 0.0
    %3235 = vmatpush2.msra.mxu0 0.0
    %3236 = vmatprep.subr.mxu0 0.0
    %3237 = vmatpush2.msra.mxu0 0.0
    %3238 = vmatprep.subr.mxu0 0.0
    %3239 = vmatpush2.msra.mxu0 0.0
    %3240 = vmatprep.subr.mxu0 0.0
    %3241 = vmatpush2.msra.mxu0 0.0
    %3242 = vmatprep.subr.mxu0 0.0
    %3243 = vmatpush2.msra.mxu0 0.0
    %3244 = vmatprep.subr.mxu0 0.0
    %3245 = vmatpush2.msra.mxu0 0.0
    %3246 = vmatprep.subr.mxu0 0.0
    %3247 = vmatpush2.msra.mxu0 0.0
    %3248 = vmatprep.subr.mxu0 0.0
    %3249 = vmatpush2.msra.mxu0 0.0
    %3250 = vmatprep.subr.mxu0 0.0
    %3251 = vmatpush2.msra.mxu0 0.0
    %3252 = vmatprep.subr.mxu0 0.0
    %3253 = vmatpush2.msra.mxu0 0.0
    %3254 = vmatprep.subr.mxu0 0.0
    %3255 = vmatpush2.msra.mxu0 0.0
    %3256 = vmatprep.subr.mxu0 0.0
    %3257 = vmatpush2.msra.mxu0 0.0
    %3258 = vmatprep.subr.mxu0 0.0
    %3259 = vmatpush2.msra.mxu0 0.0
    %3260 = vmatprep.mubr.f32.mxu0 0.0
    %3261 = vmatmul.mubr.f32.gmra.mxu0 %v2406
    %v3262 = vpop.f32.mrf.mxu0
    %v3263 = vadd.f32 0.0, %v3262
    %v3264 = vpop.f32.mrf.mxu0
    %3265 = vmatprep.mubr.f32.mxu0 0.0
    %3266 = vmatmul.mubr.f32.gmra.mxu0 %v2407
    %v3267 = vpop.f32.mrf.mxu0
    %v3268 = vadd.f32 0.0, %v3267
    %v3269 = vpop.f32.mrf.mxu0
    %3270 = vmatprep.mubr.f32.mxu0 0.0
    %3271 = vmatmul.mubr.f32.gmra.mxu0 %v2408
    %v3272 = vpop.f32.mrf.mxu0
    %v3273 = vadd.f32 0.0, %v3272
    %v3274 = vpop.f32.mrf.mxu0
    %3275 = vmatprep.mubr.f32.mxu0 0.0
    %3276 = vmatmul.mubr.f32.gmra.mxu0 %v2409
    %v3277 = vpop.f32.mrf.mxu0
    %v3278 = vadd.f32 0.0, %v3277
    %v3279 = vpop.f32.mrf.mxu0
    %3280 = vmatprep.mubr.f32.mxu0 0.0
    %3281 = vmatmul.mubr.f32.gmra.mxu0 %v2410
    %v3282 = vpop.f32.mrf.mxu0
    %v3283 = vadd.f32 0.0, %v3282
    %v3284 = vpop.f32.mrf.mxu0
    %3285 = vmatprep.mubr.f32.mxu0 0.0
    %3286 = vmatmul.mubr.f32.gmra.mxu0 %v2411
    %v3287 = vpop.f32.mrf.mxu0
    %v3288 = vadd.f32 0.0, %v3287
    %v3289 = vpop.f32.mrf.mxu0
    %3290 = vmatprep.mubr.f32.mxu0 0.0
    %3291 = vmatmul.mubr.f32.gmra.mxu0 %v2412
    %v3292 = vpop.f32.mrf.mxu0
    %v3293 = vadd.f32 0.0, %v3292
    %v3294 = vpop.f32.mrf.mxu0
    %3295 = vmatprep.mubr.f32.mxu0 0.0
    %3296 = vmatmul.mubr.f32.gmra.mxu0 %v2413
    %v3297 = vpop.f32.mrf.mxu0
    %v3298 = vadd.f32 0.0, %v3297
    %v3299 = vpop.f32.mrf.mxu0
    %3300 = vdwg.mxu0
    %3301 = vmatprep.subr.mxu0 %v3033
    %3302 = vmatpush1.msra.mxu0 %v3032
    %3303 = vmatprep.subr.mxu0 %v3030
    %3304 = vmatpush1.msra.mxu0 %v3029
    %3305 = vmatprep.subr.mxu0 %v3027
    %3306 = vmatpush1.msra.mxu0 %v3026
    %3307 = vmatprep.subr.mxu0 %v3024
    %3308 = vmatpush1.msra.mxu0 %v3023
    %3309 = vmatprep.subr.mxu0 %v3021
    %3310 = vmatpush1.msra.mxu0 %v3020
    %3311 = vmatprep.subr.mxu0 %v3018
    %3312 = vmatpush1.msra.mxu0 %v3017
    %3313 = vmatprep.subr.mxu0 %v3015
    %3314 = vmatpush1.msra.mxu0 %v3014
    %3315 = vmatprep.subr.mxu0 %v3012
    %3316 = vmatpush1.msra.mxu0 %v3011
    %3317 = vmatprep.subr.mxu0 %v3009
    %3318 = vmatpush1.msra.mxu0 %v3008
    %3319 = vmatprep.subr.mxu0 %v3006
    %3320 = vmatpush1.msra.mxu0 %v3005
    %3321 = vmatprep.subr.mxu0 %v3003
    %3322 = vmatpush1.msra.mxu0 %v3002
    %3323 = vmatprep.subr.mxu0 %v3000
    %3324 = vmatpush1.msra.mxu0 %v2999
    %3325 = vmatprep.subr.mxu0 %v2997
    %3326 = vmatpush1.msra.mxu0 %v2996
    %3327 = vmatprep.subr.mxu0 %v2994
    %3328 = vmatpush1.msra.mxu0 %v2993
    %3329 = vmatprep.subr.mxu0 %v2991
    %3330 = vmatpush1.msra.mxu0 %v2990
    %3331 = vmatprep.subr.mxu0 %v2988
    %3332 = vmatpush1.msra.mxu0 %v2987
    %3333 = vmatprep.subr.mxu0 0.0
    %3334 = vmatpush2.msra.mxu0 0.0
    %3335 = vmatprep.subr.mxu0 0.0
    %3336 = vmatpush2.msra.mxu0 0.0
    %3337 = vmatprep.subr.mxu0 0.0
    %3338 = vmatpush2.msra.mxu0 0.0
    %3339 = vmatprep.subr.mxu0 0.0
    %3340 = vmatpush2.msra.mxu0 0.0
    %3341 = vmatprep.subr.mxu0 0.0
    %3342 = vmatpush2.msra.mxu0 0.0
    %3343 = vmatprep.subr.mxu0 0.0
    %3344 = vmatpush2.msra.mxu0 0.0
    %3345 = vmatprep.subr.mxu0 0.0
    %3346 = vmatpush2.msra.mxu0 0.0
    %3347 = vmatprep.subr.mxu0 0.0
    %3348 = vmatpush2.msra.mxu0 0.0
    %3349 = vmatprep.subr.mxu0 0.0
    %3350 = vmatpush2.msra.mxu0 0.0
    %3351 = vmatprep.subr.mxu0 0.0
    %3352 = vmatpush2.msra.mxu0 0.0
    %3353 = vmatprep.subr.mxu0 0.0
    %3354 = vmatpush2.msra.mxu0 0.0
    %3355 = vmatprep.subr.mxu0 0.0
    %3356 = vmatpush2.msra.mxu0 0.0
    %3357 = vmatprep.subr.mxu0 0.0
    %3358 = vmatpush2.msra.mxu0 0.0
    %3359 = vmatprep.subr.mxu0 0.0
    %3360 = vmatpush2.msra.mxu0 0.0
    %3361 = vmatprep.subr.mxu0 0.0
    %3362 = vmatpush2.msra.mxu0 0.0
    %3363 = vmatprep.subr.mxu0 0.0
    %3364 = vmatpush2.msra.mxu0 0.0
    %3365 = vmatprep.mubr.f32.mxu0 0.0
    %3366 = vmatmul.mubr.f32.gmra.mxu0 %v2398
    %v3367 = vpop.f32.mrf.mxu0
    %v3368 = vadd.f32 %v3150, %v3367
    %v3369 = vpop.f32.mrf.mxu0
    %v3370 = vadd.f32 %v3152, %v3369
    %3371 = vmatprep.mubr.f32.mxu0 0.0
    %3372 = vmatmul.mubr.f32.gmra.mxu0 %v2399
    %v3373 = vpop.f32.mrf.mxu0
    %v3374 = vadd.f32 %v3156, %v3373
    %v3375 = vpop.f32.mrf.mxu0
    %v3376 = vadd.f32 %v3158, %v3375
    %3377 = vmatprep.mubr.f32.mxu0 0.0
    %3378 = vmatmul.mubr.f32.gmra.mxu0 %v2400
    %v3379 = vpop.f32.mrf.mxu0
    %v3380 = vadd.f32 %v3162, %v3379
    %v3381 = vpop.f32.mrf.mxu0
    %v3382 = vadd.f32 %v3164, %v3381
    %3383 = vmatprep.mubr.f32.mxu0 0.0
    %3384 = vmatmul.mubr.f32.gmra.mxu0 %v2401
    %v3385 = vpop.f32.mrf.mxu0
    %v3386 = vadd.f32 %v3168, %v3385
    %v3387 = vpop.f32.mrf.mxu0
    %v3388 = vadd.f32 %v3170, %v3387
    %3389 = vmatprep.mubr.f32.mxu0 0.0
    %3390 = vmatmul.mubr.f32.gmra.mxu0 %v2402
    %v3391 = vpop.f32.mrf.mxu0
    %v3392 = vadd.f32 %v3174, %v3391
    %v3393 = vpop.f32.mrf.mxu0
    %v3394 = vadd.f32 %v3176, %v3393
    %3395 = vmatprep.mubr.f32.mxu0 0.0
    %3396 = vmatmul.mubr.f32.gmra.mxu0 %v2403
    %v3397 = vpop.f32.mrf.mxu0
    %v3398 = vadd.f32 %v3180, %v3397
    %v3399 = vpop.f32.mrf.mxu0
    %v3400 = vadd.f32 %v3182, %v3399
    %3401 = vmatprep.mubr.f32.mxu0 0.0
    %3402 = vmatmul.mubr.f32.gmra.mxu0 %v2404
    %v3403 = vpop.f32.mrf.mxu0
    %v3404 = vadd.f32 %v3186, %v3403
    %v3405 = vpop.f32.mrf.mxu0
    %v3406 = vadd.f32 %v3188, %v3405
    %3407 = vmatprep.mubr.f32.mxu0 0.0
    %3408 = vmatmul.mubr.f32.gmra.mxu0 %v2405
    %v3409 = vpop.f32.mrf.mxu0
    %v3410 = vadd.f32 %v3192, %v3409
    %v3411 = vpop.f32.mrf.mxu0
    %v3412 = vadd.f32 %v3194, %v3411
    %3413 = vdwg.mxu0
    %3414 = vmatprep.subr.mxu0 0.0
    %3415 = vmatpush1.msra.mxu0 %v3034
    %3416 = vmatprep.subr.mxu0 0.0
    %3417 = vmatpush1.msra.mxu0 %v3031
    %3418 = vmatprep.subr.mxu0 0.0
    %3419 = vmatpush1.msra.mxu0 %v3028
    %3420 = vmatprep.subr.mxu0 0.0
    %3421 = vmatpush1.msra.mxu0 %v3025
    %3422 = vmatprep.subr.mxu0 0.0
    %3423 = vmatpush1.msra.mxu0 %v3022
    %3424 = vmatprep.subr.mxu0 0.0
    %3425 = vmatpush1.msra.mxu0 %v3019
    %3426 = vmatprep.subr.mxu0 0.0
    %3427 = vmatpush1.msra.mxu0 %v3016
    %3428 = vmatprep.subr.mxu0 0.0
    %3429 = vmatpush1.msra.mxu0 %v3013
    %3430 = vmatprep.subr.mxu0 0.0
    %3431 = vmatpush1.msra.mxu0 %v3010
    %3432 = vmatprep.subr.mxu0 0.0
    %3433 = vmatpush1.msra.mxu0 %v3007
    %3434 = vmatprep.subr.mxu0 0.0
    %3435 = vmatpush1.msra.mxu0 %v3004
    %3436 = vmatprep.subr.mxu0 0.0
    %3437 = vmatpush1.msra.mxu0 %v3001
    %3438 = vmatprep.subr.mxu0 0.0
    %3439 = vmatpush1.msra.mxu0 %v2998
    %3440 = vmatprep.subr.mxu0 0.0
    %3441 = vmatpush1.msra.mxu0 %v2995
    %3442 = vmatprep.subr.mxu0 0.0
    %3443 = vmatpush1.msra.mxu0 %v2992
    %3444 = vmatprep.subr.mxu0 0.0
    %3445 = vmatpush1.msra.mxu0 %v2989
    %3446 = vmatprep.subr.mxu0 0.0
    %3447 = vmatpush2.msra.mxu0 0.0
    %3448 = vmatprep.subr.mxu0 0.0
    %3449 = vmatpush2.msra.mxu0 0.0
    %3450 = vmatprep.subr.mxu0 0.0
    %3451 = vmatpush2.msra.mxu0 0.0
    %3452 = vmatprep.subr.mxu0 0.0
    %3453 = vmatpush2.msra.mxu0 0.0
    %3454 = vmatprep.subr.mxu0 0.0
    %3455 = vmatpush2.msra.mxu0 0.0
    %3456 = vmatprep.subr.mxu0 0.0
    %3457 = vmatpush2.msra.mxu0 0.0
    %3458 = vmatprep.subr.mxu0 0.0
    %3459 = vmatpush2.msra.mxu0 0.0
    %3460 = vmatprep.subr.mxu0 0.0
    %3461 = vmatpush2.msra.mxu0 0.0
    %3462 = vmatprep.subr.mxu0 0.0
    %3463 = vmatpush2.msra.mxu0 0.0
    %3464 = vmatprep.subr.mxu0 0.0
    %3465 = vmatpush2.msra.mxu0 0.0
    %3466 = vmatprep.subr.mxu0 0.0
    %3467 = vmatpush2.msra.mxu0 0.0
    %3468 = vmatprep.subr.mxu0 0.0
    %3469 = vmatpush2.msra.mxu0 0.0
    %3470 = vmatprep.subr.mxu0 0.0
    %3471 = vmatpush2.msra.mxu0 0.0
    %3472 = vmatprep.subr.mxu0 0.0
    %3473 = vmatpush2.msra.mxu0 0.0
    %3474 = vmatprep.subr.mxu0 0.0
    %3475 = vmatpush2.msra.mxu0 0.0
    %3476 = vmatprep.subr.mxu0 0.0
    %3477 = vmatpush2.msra.mxu0 0.0
    %3478 = vmatprep.mubr.f32.mxu0 0.0
    %3479 = vmatmul.mubr.f32.gmra.mxu0 %v2398
    %v3480 = vpop.f32.mrf.mxu0
    %v3481 = vadd.f32 %v3263, %v3480
    %v3482 = vpop.f32.mrf.mxu0
    %3483 = vmatprep.mubr.f32.mxu0 0.0
    %3484 = vmatmul.mubr.f32.gmra.mxu0 %v2399
    %v3485 = vpop.f32.mrf.mxu0
    %v3486 = vadd.f32 %v3268, %v3485
    %v3487 = vpop.f32.mrf.mxu0
    %3488 = vmatprep.mubr.f32.mxu0 0.0
    %3489 = vmatmul.mubr.f32.gmra.mxu0 %v2400
    %v3490 = vpop.f32.mrf.mxu0
    %v3491 = vadd.f32 %v3273, %v3490
    %v3492 = vpop.f32.mrf.mxu0
    %3493 = vmatprep.mubr.f32.mxu0 0.0
    %3494 = vmatmul.mubr.f32.gmra.mxu0 %v2401
    %v3495 = vpop.f32.mrf.mxu0
    %v3496 = vadd.f32 %v3278, %v3495
    %v3497 = vpop.f32.mrf.mxu0
    %3498 = vmatprep.mubr.f32.mxu0 0.0
    %3499 = vmatmul.mubr.f32.gmra.mxu0 %v2402
    %v3500 = vpop.f32.mrf.mxu0
    %v3501 = vadd.f32 %v3283, %v3500
    %v3502 = vpop.f32.mrf.mxu0
    %3503 = vmatprep.mubr.f32.mxu0 0.0
    %3504 = vmatmul.mubr.f32.gmra.mxu0 %v2403
    %v3505 = vpop.f32.mrf.mxu0
    %v3506 = vadd.f32 %v3288, %v3505
    %v3507 = vpop.f32.mrf.mxu0
    %3508 = vmatprep.mubr.f32.mxu0 0.0
    %3509 = vmatmul.mubr.f32.gmra.mxu0 %v2404
    %v3510 = vpop.f32.mrf.mxu0
    %v3511 = vadd.f32 %v3293, %v3510
    %v3512 = vpop.f32.mrf.mxu0
    %3513 = vmatprep.mubr.f32.mxu0 0.0
    %3514 = vmatmul.mubr.f32.gmra.mxu0 %v2405
    %v3515 = vpop.f32.mrf.mxu0
    %v3516 = vadd.f32 %v3298, %v3515
    %v3517 = vpop.f32.mrf.mxu0
    %3518 = vdwg.mxu0
    %v3519 = vld [vmem:[%s13] sm:$0x7]
    %v3521 = vlaneseq
    %v3522 = vshrl.u32 %v3521, 7
    %v3523 = vsub.s32 0, %v3522
    %v3524 = vrot.slane %v3519, %v3523
    %v3525 = vlaneseq
    %v3526 = vshrl.u32 %v3525, 7
    %v3527 = vsub.s32 1, %v3526
    %v3528 = vrot.slane %v3519, %v3527
    %v3529 = vlaneseq
    %v3530 = vshrl.u32 %v3529, 7
    %v3531 = vsub.s32 2, %v3530
    %v3532 = vrot.slane %v3519, %v3531
    %v3536 = vadd.f32 %v3368, %v3524
    %v3537 = vadd.f32 %v3370, %v3528
    %v3538 = vadd.f32 %v3481, %v3532
    %v3539 = vadd.f32 %v3374, %v3524
    %v3540 = vadd.f32 %v3376, %v3528
    %v3541 = vadd.f32 %v3486, %v3532
    %v3542 = vadd.f32 %v3380, %v3524
    %v3543 = vadd.f32 %v3382, %v3528
    %v3544 = vadd.f32 %v3491, %v3532
    %v3545 = vadd.f32 %v3386, %v3524
    %v3546 = vadd.f32 %v3388, %v3528
    %v3547 = vadd.f32 %v3496, %v3532
    %v3548 = vadd.f32 %v3392, %v3524
    %v3549 = vadd.f32 %v3394, %v3528
    %v3550 = vadd.f32 %v3501, %v3532
    %v3551 = vadd.f32 %v3398, %v3524
    %v3552 = vadd.f32 %v3400, %v3528
    %v3553 = vadd.f32 %v3506, %v3532
    %v3554 = vadd.f32 %v3404, %v3524
    %v3555 = vadd.f32 %v3406, %v3528
    %v3556 = vadd.f32 %v3511, %v3532
    %v3557 = vadd.f32 %v3410, %v3524
    %v3558 = vadd.f32 %v3412, %v3528
    %v3559 = vadd.f32 %v3516, %v3532
    %3560 = vst [vmem:[#allocation2] sm:$0xff] %v2963
    %3561 = vst [vmem:[#allocation2 + $0x8] sm:$0xff] %v2964
    %3562 = vst [vmem:[#allocation2 + $0x10] sm:$0xff] %v2965
    %3563 = vst [vmem:[#allocation2 + $0x18] sm:$0xff] %v2966
    %3564 = vst [vmem:[#allocation2 + $0x20] sm:$0xff] %v2967
    %3565 = vst [vmem:[#allocation2 + $0x28] sm:$0xff] %v2968
    %3566 = vst [vmem:[#allocation2 + $0x30] sm:$0xff] %v2969
    %3567 = vst [vmem:[#allocation2 + $0x38] sm:$0xff] %v2970
    %3568 = vst [vmem:[#allocation2 + $0x40] sm:$0xff] %v2971
    %3569 = vst [vmem:[#allocation2 + $0x48] sm:$0xff] %v2972
    %3570 = vst [vmem:[#allocation2 + $0x50] sm:$0xff] %v2973
    %3571 = vst [vmem:[#allocation2 + $0x58] sm:$0xff] %v2974
    %3572 = vst [vmem:[#allocation2 + $0x60] sm:$0xff] %v2975
    %3573 = vst [vmem:[#allocation2 + $0x68] sm:$0xff] %v2976
    %3574 = vst [vmem:[#allocation2 + $0x70] sm:$0xff] %v2977
    %3575 = vst [vmem:[#allocation2 + $0x78] sm:$0xff] %v2978
    %3576 = vst [vmem:[#allocation2 + $0x80] sm:$0xff] %v2979
    %3577 = vst [vmem:[#allocation2 + $0x88] sm:$0xff] %v2980
    %3578 = vst [vmem:[#allocation2 + $0x90] sm:$0xff] %v2981
    %3579 = vst [vmem:[#allocation2 + $0x98] sm:$0xff] %v2982
    %3580 = vst [vmem:[#allocation2 + $0xa0] sm:$0xff] %v2983
    %3581 = vst [vmem:[#allocation2 + $0xa8] sm:$0xff] %v2984
    %3582 = vst [vmem:[#allocation2 + $0xb0] sm:$0xff] %v2985
    %3583 = vst [vmem:[#allocation2 + $0xb8] sm:$0xff] %v2986
    %3584 = vst [vmem:[#allocation3] sm:$0xff] %v3536
    %3585 = vst [vmem:[#allocation3 + $0x8] sm:$0xff] %v3537
    %3586 = vst [vmem:[#allocation3 + $0x10] sm:$0xff] %v3538
    %3587 = vst [vmem:[#allocation3 + $0x18] sm:$0xff] %v3539
    %3588 = vst [vmem:[#allocation3 + $0x20] sm:$0xff] %v3540
    %3589 = vst [vmem:[#allocation3 + $0x28] sm:$0xff] %v3541
    %3590 = vst [vmem:[#allocation3 + $0x30] sm:$0xff] %v3542
    %3591 = vst [vmem:[#allocation3 + $0x38] sm:$0xff] %v3543
    %3592 = vst [vmem:[#allocation3 + $0x40] sm:$0xff] %v3544
    %3593 = vst [vmem:[#allocation3 + $0x48] sm:$0xff] %v3545
    %3594 = vst [vmem:[#allocation3 + $0x50] sm:$0xff] %v3546
    %3595 = vst [vmem:[#allocation3 + $0x58] sm:$0xff] %v3547
    %3596 = vst [vmem:[#allocation3 + $0x60] sm:$0xff] %v3548
    %3597 = vst [vmem:[#allocation3 + $0x68] sm:$0xff] %v3549
    %3598 = vst [vmem:[#allocation3 + $0x70] sm:$0xff] %v3550
    %3599 = vst [vmem:[#allocation3 + $0x78] sm:$0xff] %v3551
    %3600 = vst [vmem:[#allocation3 + $0x80] sm:$0xff] %v3552
    %3601 = vst [vmem:[#allocation3 + $0x88] sm:$0xff] %v3553
    %3602 = vst [vmem:[#allocation3 + $0x90] sm:$0xff] %v3554
    %3603 = vst [vmem:[#allocation3 + $0x98] sm:$0xff] %v3555
    %3604 = vst [vmem:[#allocation3 + $0xa0] sm:$0xff] %v3556
    %3605 = vst [vmem:[#allocation3 + $0xa8] sm:$0xff] %v3557
    %3606 = vst [vmem:[#allocation3 + $0xb0] sm:$0xff] %v3558
    %3607 = vst [vmem:[#allocation3 + $0xb8] sm:$0xff] %v3559
    %v3608 = vld [vmem:[#allocation16] sm:$0xff]
    %v3609 = vld [vmem:[#allocation16 + $0x8] sm:$0xff]
    %v3610 = vld [vmem:[#allocation16 + $0x10] sm:$0xff]
    %v3611 = vld [vmem:[#allocation16 + $0x18] sm:$0xff]
    %v3612 = vld [vmem:[#allocation16 + $0x20] sm:$0xff]
    %v3613 = vld [vmem:[#allocation16 + $0x28] sm:$0xff]
    %v3614 = vld [vmem:[#allocation16 + $0x30] sm:$0xff]
    %v3615 = vld [vmem:[#allocation16 + $0x38] sm:$0xff]
    %v3616 = vld [vmem:[#allocation16 + $0x40] sm:$0xff]
    %v3617 = vld [vmem:[#allocation16 + $0x48] sm:$0xff]
    %v3618 = vld [vmem:[#allocation16 + $0x50] sm:$0xff]
    %v3619 = vld [vmem:[#allocation16 + $0x58] sm:$0xff]
    %v3620 = vld [vmem:[#allocation16 + $0x60] sm:$0xff]
    %v3621 = vld [vmem:[#allocation16 + $0x68] sm:$0xff]
    %v3622 = vld [vmem:[#allocation16 + $0x70] sm:$0xff]
    %v3623 = vld [vmem:[#allocation16 + $0x78] sm:$0xff]
    %v3624 = vld [vmem:[#allocation16 + $0x80] sm:$0xff]
    %v3625 = vld [vmem:[#allocation16 + $0x88] sm:$0xff]
    %v3626 = vld [vmem:[#allocation16 + $0x90] sm:$0xff]
    %v3627 = vld [vmem:[#allocation16 + $0x98] sm:$0xff]
    %v3628 = vld [vmem:[#allocation16 + $0xa0] sm:$0xff]
    %v3629 = vld [vmem:[#allocation16 + $0xa8] sm:$0xff]
    %v3630 = vld [vmem:[#allocation16 + $0xb0] sm:$0xff]
    %v3631 = vld [vmem:[#allocation16 + $0xb8] sm:$0xff]
    %v3632 = vld [vmem:[#allocation16 + $0xc0] sm:$0xff]
    %v3633 = vld [vmem:[#allocation16 + $0xc8] sm:$0xff]
    %v3634 = vld [vmem:[#allocation16 + $0xd0] sm:$0xff]
    %v3635 = vld [vmem:[#allocation16 + $0xd8] sm:$0xff]
    %v3636 = vld [vmem:[#allocation16 + $0xe0] sm:$0xff]
    %v3637 = vld [vmem:[#allocation16 + $0xe8] sm:$0xff]
    %v3638 = vld [vmem:[#allocation16 + $0xf0] sm:$0xff]
    %v3639 = vld [vmem:[#allocation16 + $0xf8] sm:$0xff]
    %v3640 = vld [vmem:[#allocation16 + $0x100] sm:$0xff]
    %v3641 = vld [vmem:[#allocation16 + $0x108] sm:$0xff]
    %v3642 = vld [vmem:[#allocation16 + $0x110] sm:$0xff]
    %v3643 = vld [vmem:[#allocation16 + $0x118] sm:$0xff]
    %v3644 = vld [vmem:[#allocation16 + $0x120] sm:$0xff]
    %v3645 = vld [vmem:[#allocation16 + $0x128] sm:$0xff]
    %v3646 = vld [vmem:[#allocation16 + $0x130] sm:$0xff]
    %v3647 = vld [vmem:[#allocation16 + $0x138] sm:$0xff]
    %v3648 = vld [vmem:[#allocation16 + $0x140] sm:$0xff]
    %v3649 = vld [vmem:[#allocation16 + $0x148] sm:$0xff]
    %v3650 = vld [vmem:[#allocation16 + $0x150] sm:$0xff]
    %v3651 = vld [vmem:[#allocation16 + $0x158] sm:$0xff]
    %v3652 = vld [vmem:[#allocation16 + $0x160] sm:$0xff]
    %v3653 = vld [vmem:[#allocation16 + $0x168] sm:$0xff]
    %v3654 = vld [vmem:[#allocation16 + $0x170] sm:$0xff]
    %v3655 = vld [vmem:[#allocation16 + $0x178] sm:$0xff]
    %v3656 = vld [vmem:[%s15] sm:$0x7]
    %v3658 = vlaneseq
    %v3659 = vshrl.u32 %v3658, 7
    %v3660 = vsub.s32 0, %v3659
    %v3661 = vrot.slane %v3656, %v3660
    %v3662 = vlaneseq
    %v3663 = vshrl.u32 %v3662, 7
    %v3664 = vsub.s32 1, %v3663
    %v3665 = vrot.slane %v3656, %v3664
    %v3666 = vlaneseq
    %v3667 = vshrl.u32 %v3666, 7
    %v3668 = vsub.s32 2, %v3667
    %v3669 = vrot.slane %v3656, %v3668
    %v3673 = vld [vmem:[#allocation2] sm:$0xff]
    %v3674 = vld [vmem:[#allocation2 + $0x8] sm:$0xff]
    %v3675 = vld [vmem:[#allocation2 + $0x10] sm:$0xff]
    %v3676 = vld [vmem:[#allocation3 + $0xa8] sm:$0xff]
    %v3677 = vld [vmem:[#allocation3 + $0xb0] sm:$0xff]
    %v3678 = vld [vmem:[#allocation3 + $0xb8] sm:$0xff]
    %v3679 = vadd.f32 %v3673, %v3676
    %v3680 = vadd.f32 %v3674, %v3677
    %v3681 = vadd.f32 %v3675, %v3678
    %3682 = vmatprep.subr.mxu0 %v3654
    %3683 = vmatpush1.msra.mxu0 %v3653
    %3684 = vmatprep.subr.mxu0 %v3651
    %3685 = vmatpush1.msra.mxu0 %v3650
    %3686 = vmatprep.subr.mxu0 %v3648
    %3687 = vmatpush1.msra.mxu0 %v3647
    %3688 = vmatprep.subr.mxu0 %v3645
    %3689 = vmatpush1.msra.mxu0 %v3644
    %3690 = vmatprep.subr.mxu0 %v3642
    %3691 = vmatpush1.msra.mxu0 %v3641
    %3692 = vmatprep.subr.mxu0 %v3639
    %3693 = vmatpush1.msra.mxu0 %v3638
    %3694 = vmatprep.subr.mxu0 %v3636
    %3695 = vmatpush1.msra.mxu0 %v3635
    %3696 = vmatprep.subr.mxu0 %v3633
    %3697 = vmatpush1.msra.mxu0 %v3632
    %3698 = vmatprep.subr.mxu0 %v3630
    %3699 = vmatpush1.msra.mxu0 %v3629
    %3700 = vmatprep.subr.mxu0 %v3627
    %3701 = vmatpush1.msra.mxu0 %v3626
    %3702 = vmatprep.subr.mxu0 %v3624
    %3703 = vmatpush1.msra.mxu0 %v3623
    %3704 = vmatprep.subr.mxu0 %v3621
    %3705 = vmatpush1.msra.mxu0 %v3620
    %3706 = vmatprep.subr.mxu0 %v3618
    %3707 = vmatpush1.msra.mxu0 %v3617
    %3708 = vmatprep.subr.mxu0 %v3615
    %3709 = vmatpush1.msra.mxu0 %v3614
    %3710 = vmatprep.subr.mxu0 %v3612
    %3711 = vmatpush1.msra.mxu0 %v3611
    %3712 = vmatprep.subr.mxu0 %v3609
    %3713 = vmatpush1.msra.mxu0 %v3608
    %3714 = vmatprep.subr.mxu0 0.0
    %3715 = vmatpush2.msra.mxu0 0.0
    %3716 = vmatprep.subr.mxu0 0.0
    %3717 = vmatpush2.msra.mxu0 0.0
    %3718 = vmatprep.subr.mxu0 0.0
    %3719 = vmatpush2.msra.mxu0 0.0
    %3720 = vmatprep.subr.mxu0 0.0
    %3721 = vmatpush2.msra.mxu0 0.0
    %3722 = vmatprep.subr.mxu0 0.0
    %3723 = vmatpush2.msra.mxu0 0.0
    %3724 = vmatprep.subr.mxu0 0.0
    %3725 = vmatpush2.msra.mxu0 0.0
    %3726 = vmatprep.subr.mxu0 0.0
    %3727 = vmatpush2.msra.mxu0 0.0
    %3728 = vmatprep.subr.mxu0 0.0
    %3729 = vmatpush2.msra.mxu0 0.0
    %3730 = vmatprep.subr.mxu0 0.0
    %3731 = vmatpush2.msra.mxu0 0.0
    %3732 = vmatprep.subr.mxu0 0.0
    %3733 = vmatpush2.msra.mxu0 0.0
    %3734 = vmatprep.subr.mxu0 0.0
    %3735 = vmatpush2.msra.mxu0 0.0
    %3736 = vmatprep.subr.mxu0 0.0
    %3737 = vmatpush2.msra.mxu0 0.0
    %3738 = vmatprep.subr.mxu0 0.0
    %3739 = vmatpush2.msra.mxu0 0.0
    %3740 = vmatprep.subr.mxu0 0.0
    %3741 = vmatpush2.msra.mxu0 0.0
    %3742 = vmatprep.subr.mxu0 0.0
    %3743 = vmatpush2.msra.mxu0 0.0
    %3744 = vmatprep.subr.mxu0 0.0
    %3745 = vmatpush2.msra.mxu0 0.0
    %3746 = vmatprep.mubr.f32.mxu0 0.0
    %3747 = vmatmul.mubr.f32.gmra.mxu0 0.0
    %v3748 = vpop.f32.mrf.mxu0
    %v3749 = vadd.f32 %v3661, %v3748
    %v3750 = vpop.f32.mrf.mxu0
    %v3751 = vadd.f32 %v3665, %v3750
    %3752 = vdwg.mxu0
    %3753 = vmatprep.subr.mxu0 0.0
    %3754 = vmatpush1.msra.mxu0 %v3655
    %3755 = vmatprep.subr.mxu0 0.0
    %3756 = vmatpush1.msra.mxu0 %v3652
    %3757 = vmatprep.subr.mxu0 0.0
    %3758 = vmatpush1.msra.mxu0 %v3649
    %3759 = vmatprep.subr.mxu0 0.0
    %3760 = vmatpush1.msra.mxu0 %v3646
    %3761 = vmatprep.subr.mxu0 0.0
    %3762 = vmatpush1.msra.mxu0 %v3643
    %3763 = vmatprep.subr.mxu0 0.0
    %3764 = vmatpush1.msra.mxu0 %v3640
    %3765 = vmatprep.subr.mxu0 0.0
    %3766 = vmatpush1.msra.mxu0 %v3637
    %3767 = vmatprep.subr.mxu0 0.0
    %3768 = vmatpush1.msra.mxu0 %v3634
    %3769 = vmatprep.subr.mxu0 0.0
    %3770 = vmatpush1.msra.mxu0 %v3631
    %3771 = vmatprep.subr.mxu0 0.0
    %3772 = vmatpush1.msra.mxu0 %v3628
    %3773 = vmatprep.subr.mxu0 0.0
    %3774 = vmatpush1.msra.mxu0 %v3625
    %3775 = vmatprep.subr.mxu0 0.0
    %3776 = vmatpush1.msra.mxu0 %v3622
    %3777 = vmatprep.subr.mxu0 0.0
    %3778 = vmatpush1.msra.mxu0 %v3619
    %3779 = vmatprep.subr.mxu0 0.0
    %3780 = vmatpush1.msra.mxu0 %v3616
    %3781 = vmatprep.subr.mxu0 0.0
    %3782 = vmatpush1.msra.mxu0 %v3613
    %3783 = vmatprep.subr.mxu0 0.0
    %3784 = vmatpush1.msra.mxu0 %v3610
    %3785 = vmatprep.subr.mxu0 0.0
    %3786 = vmatpush2.msra.mxu0 0.0
    %3787 = vmatprep.subr.mxu0 0.0
    %3788 = vmatpush2.msra.mxu0 0.0
    %3789 = vmatprep.subr.mxu0 0.0
    %3790 = vmatpush2.msra.mxu0 0.0
    %3791 = vmatprep.subr.mxu0 0.0
    %3792 = vmatpush2.msra.mxu0 0.0
    %3793 = vmatprep.subr.mxu0 0.0
    %3794 = vmatpush2.msra.mxu0 0.0
    %3795 = vmatprep.subr.mxu0 0.0
    %3796 = vmatpush2.msra.mxu0 0.0
    %3797 = vmatprep.subr.mxu0 0.0
    %3798 = vmatpush2.msra.mxu0 0.0
    %3799 = vmatprep.subr.mxu0 0.0
    %3800 = vmatpush2.msra.mxu0 0.0
    %3801 = vmatprep.subr.mxu0 0.0
    %3802 = vmatpush2.msra.mxu0 0.0
    %3803 = vmatprep.subr.mxu0 0.0
    %3804 = vmatpush2.msra.mxu0 0.0
    %3805 = vmatprep.subr.mxu0 0.0
    %3806 = vmatpush2.msra.mxu0 0.0
    %3807 = vmatprep.subr.mxu0 0.0
    %3808 = vmatpush2.msra.mxu0 0.0
    %3809 = vmatprep.subr.mxu0 0.0
    %3810 = vmatpush2.msra.mxu0 0.0
    %3811 = vmatprep.subr.mxu0 0.0
    %3812 = vmatpush2.msra.mxu0 0.0
    %3813 = vmatprep.subr.mxu0 0.0
    %3814 = vmatpush2.msra.mxu0 0.0
    %3815 = vmatprep.subr.mxu0 0.0
    %3816 = vmatpush2.msra.mxu0 0.0
    %3817 = vmatprep.mubr.f32.mxu0 0.0
    %3818 = vmatmul.mubr.f32.gmra.mxu0 0.0
    %v3819 = vpop.f32.mrf.mxu0
    %v3820 = vadd.f32 %v3669, %v3819
    %v3821 = vpop.f32.mrf.mxu0
    %3822 = vdwg.mxu0
    %v3823 = vadd.f32 %v3679, %v3749
    %v3824 = vxor.u32 %v3823, 2147483648
    %v3825 = vmul.f32 %v3824, 1.442695
    %v3826 = vpow.pop %v3825
    %v3827 = vadd.f32 %v3826, 1.0
    %v3828 = vrcp.pop %v3827
    %v3829 = vmul.f32 1.0, %v3828
    %v3830 = vadd.f32 %v3680, %v3751
    %v3831 = vxor.u32 %v3830, 2147483648
    %v3832 = vmul.f32 %v3831, 1.442695
    %v3833 = vpow.pop %v3832
    %v3834 = vadd.f32 %v3833, 1.0
    %v3835 = vrcp.pop %v3834
    %v3836 = vmul.f32 1.0, %v3835
    %v3837 = vmul.f32 %v3829, %v3820
    %v3838 = vadd.f32 %v3681, %v3837
    %v3839 = vtanh.pop %v3838
    %v3840 = vsub.f32 1.0, %v3836
    %v3841 = vmul.f32 %v3840, %v3839
    %v3842 = vmul.f32 %v3836, 0.0
    %v3843 = vadd.f32 %v3841, %v3842
    %3844 = vst [vmem:[#allocation6] sm:$0xff] %v3843
    %3845 = vst [vmem:[#allocation7 + $0x38] sm:$0xff] %v3843
    %v3846 = vld [vmem:[#allocation2 + $0x18] sm:$0xff]
    %v3847 = vld [vmem:[#allocation2 + $0x20] sm:$0xff]
    %v3848 = vld [vmem:[#allocation2 + $0x28] sm:$0xff]
    %v3849 = vld [vmem:[#allocation3 + $0x90] sm:$0xff]
    %v3850 = vld [vmem:[#allocation3 + $0x98] sm:$0xff]
    %v3851 = vld [vmem:[#allocation3 + $0xa0] sm:$0xff]
    %v3852 = vadd.f32 %v3846, %v3849
    %v3853 = vadd.f32 %v3847, %v3850
    %v3854 = vadd.f32 %v3848, %v3851
    %3855 = vmatprep.subr.mxu0 %v3654
    %3856 = vmatpush1.msra.mxu0 %v3653
    %3857 = vmatprep.subr.mxu0 %v3651
    %3858 = vmatpush1.msra.mxu0 %v3650
    %3859 = vmatprep.subr.mxu0 %v3648
    %3860 = vmatpush1.msra.mxu0 %v3647
    %3861 = vmatprep.subr.mxu0 %v3645
    %3862 = vmatpush1.msra.mxu0 %v3644
    %3863 = vmatprep.subr.mxu0 %v3642
    %3864 = vmatpush1.msra.mxu0 %v3641
    %3865 = vmatprep.subr.mxu0 %v3639
    %3866 = vmatpush1.msra.mxu0 %v3638
    %3867 = vmatprep.subr.mxu0 %v3636
    %3868 = vmatpush1.msra.mxu0 %v3635
    %3869 = vmatprep.subr.mxu0 %v3633
    %3870 = vmatpush1.msra.mxu0 %v3632
    %3871 = vmatprep.subr.mxu0 %v3630
    %3872 = vmatpush1.msra.mxu0 %v3629
    %3873 = vmatprep.subr.mxu0 %v3627
    %3874 = vmatpush1.msra.mxu0 %v3626
    %3875 = vmatprep.subr.mxu0 %v3624
    %3876 = vmatpush1.msra.mxu0 %v3623
    %3877 = vmatprep.subr.mxu0 %v3621
    %3878 = vmatpush1.msra.mxu0 %v3620
    %3879 = vmatprep.subr.mxu0 %v3618
    %3880 = vmatpush1.msra.mxu0 %v3617
    %3881 = vmatprep.subr.mxu0 %v3615
    %3882 = vmatpush1.msra.mxu0 %v3614
    %3883 = vmatprep.subr.mxu0 %v3612
    %3884 = vmatpush1.msra.mxu0 %v3611
    %3885 = vmatprep.subr.mxu0 %v3609
    %3886 = vmatpush1.msra.mxu0 %v3608
    %3887 = vmatprep.subr.mxu0 0.0
    %3888 = vmatpush2.msra.mxu0 0.0
    %3889 = vmatprep.subr.mxu0 0.0
    %3890 = vmatpush2.msra.mxu0 0.0
    %3891 = vmatprep.subr.mxu0 0.0
    %3892 = vmatpush2.msra.mxu0 0.0
    %3893 = vmatprep.subr.mxu0 0.0
    %3894 = vmatpush2.msra.mxu0 0.0
    %3895 = vmatprep.subr.mxu0 0.0
    %3896 = vmatpush2.msra.mxu0 0.0
    %3897 = vmatprep.subr.mxu0 0.0
    %3898 = vmatpush2.msra.mxu0 0.0
    %3899 = vmatprep.subr.mxu0 0.0
    %3900 = vmatpush2.msra.mxu0 0.0
    %3901 = vmatprep.subr.mxu0 0.0
    %3902 = vmatpush2.msra.mxu0 0.0
    %3903 = vmatprep.subr.mxu0 0.0
    %3904 = vmatpush2.msra.mxu0 0.0
    %3905 = vmatprep.subr.mxu0 0.0
    %3906 = vmatpush2.msra.mxu0 0.0
    %3907 = vmatprep.subr.mxu0 0.0
    %3908 = vmatpush2.msra.mxu0 0.0
    %3909 = vmatprep.subr.mxu0 0.0
    %3910 = vmatpush2.msra.mxu0 0.0
    %3911 = vmatprep.subr.mxu0 0.0
    %3912 = vmatpush2.msra.mxu0 0.0
    %3913 = vmatprep.subr.mxu0 0.0
    %3914 = vmatpush2.msra.mxu0 0.0
    %3915 = vmatprep.subr.mxu0 0.0
    %3916 = vmatpush2.msra.mxu0 0.0
    %3917 = vmatprep.subr.mxu0 0.0
    %3918 = vmatpush2.msra.mxu0 0.0
    %3919 = vmatprep.mubr.f32.mxu0 0.0
    %3920 = vmatmul.mubr.f32.gmra.mxu0 %v3843
    %v3921 = vpop.f32.mrf.mxu0
    %v3922 = vadd.f32 %v3661, %v3921
    %v3923 = vpop.f32.mrf.mxu0
    %v3924 = vadd.f32 %v3665, %v3923
    %3925 = vdwg.mxu0
    %3926 = vmatprep.subr.mxu0 0.0
    %3927 = vmatpush1.msra.mxu0 %v3655
    %3928 = vmatprep.subr.mxu0 0.0
    %3929 = vmatpush1.msra.mxu0 %v3652
    %3930 = vmatprep.subr.mxu0 0.0
    %3931 = vmatpush1.msra.mxu0 %v3649
    %3932 = vmatprep.subr.mxu0 0.0
    %3933 = vmatpush1.msra.mxu0 %v3646
    %3934 = vmatprep.subr.mxu0 0.0
    %3935 = vmatpush1.msra.mxu0 %v3643
    %3936 = vmatprep.subr.mxu0 0.0
    %3937 = vmatpush1.msra.mxu0 %v3640
    %3938 = vmatprep.subr.mxu0 0.0
    %3939 = vmatpush1.msra.mxu0 %v3637
    %3940 = vmatprep.subr.mxu0 0.0
    %3941 = vmatpush1.msra.mxu0 %v3634
    %3942 = vmatprep.subr.mxu0 0.0
    %3943 = vmatpush1.msra.mxu0 %v3631
    %3944 = vmatprep.subr.mxu0 0.0
    %3945 = vmatpush1.msra.mxu0 %v3628
    %3946 = vmatprep.subr.mxu0 0.0
    %3947 = vmatpush1.msra.mxu0 %v3625
    %3948 = vmatprep.subr.mxu0 0.0
    %3949 = vmatpush1.msra.mxu0 %v3622
    %3950 = vmatprep.subr.mxu0 0.0
    %3951 = vmatpush1.msra.mxu0 %v3619
    %3952 = vmatprep.subr.mxu0 0.0
    %3953 = vmatpush1.msra.mxu0 %v3616
    %3954 = vmatprep.subr.mxu0 0.0
    %3955 = vmatpush1.msra.mxu0 %v3613
    %3956 = vmatprep.subr.mxu0 0.0
    %3957 = vmatpush1.msra.mxu0 %v3610
    %3958 = vmatprep.subr.mxu0 0.0
    %3959 = vmatpush2.msra.mxu0 0.0
    %3960 = vmatprep.subr.mxu0 0.0
    %3961 = vmatpush2.msra.mxu0 0.0
    %3962 = vmatprep.subr.mxu0 0.0
    %3963 = vmatpush2.msra.mxu0 0.0
    %3964 = vmatprep.subr.mxu0 0.0
    %3965 = vmatpush2.msra.mxu0 0.0
    %3966 = vmatprep.subr.mxu0 0.0
    %3967 = vmatpush2.msra.mxu0 0.0
    %3968 = vmatprep.subr.mxu0 0.0
    %3969 = vmatpush2.msra.mxu0 0.0
    %3970 = vmatprep.subr.mxu0 0.0
    %3971 = vmatpush2.msra.mxu0 0.0
    %3972 = vmatprep.subr.mxu0 0.0
    %3973 = vmatpush2.msra.mxu0 0.0
    %3974 = vmatprep.subr.mxu0 0.0
    %3975 = vmatpush2.msra.mxu0 0.0
    %3976 = vmatprep.subr.mxu0 0.0
    %3977 = vmatpush2.msra.mxu0 0.0
    %3978 = vmatprep.subr.mxu0 0.0
    %3979 = vmatpush2.msra.mxu0 0.0
    %3980 = vmatprep.subr.mxu0 0.0
    %3981 = vmatpush2.msra.mxu0 0.0
    %3982 = vmatprep.subr.mxu0 0.0
    %3983 = vmatpush2.msra.mxu0 0.0
    %3984 = vmatprep.subr.mxu0 0.0
    %3985 = vmatpush2.msra.mxu0 0.0
    %3986 = vmatprep.subr.mxu0 0.0
    %3987 = vmatpush2.msra.mxu0 0.0
    %3988 = vmatprep.subr.mxu0 0.0
    %3989 = vmatpush2.msra.mxu0 0.0
    %3990 = vmatprep.mubr.f32.mxu0 0.0
    %3991 = vmatmul.mubr.f32.gmra.mxu0 %v3843
    %v3992 = vpop.f32.mrf.mxu0
    %v3993 = vadd.f32 %v3669, %v3992
    %v3994 = vpop.f32.mrf.mxu0
    %3995 = vdwg.mxu0
    %v3996 = vadd.f32 %v3852, %v3922
    %v3997 = vxor.u32 %v3996, 2147483648
    %v3998 = vmul.f32 %v3997, 1.442695
    %v3999 = vpow.pop %v3998
    %v4000 = vadd.f32 %v3999, 1.0
    %v4001 = vrcp.pop %v4000
    %v4002 = vmul.f32 1.0, %v4001
    %v4003 = vadd.f32 %v3853, %v3924
    %v4004 = vxor.u32 %v4003, 2147483648
    %v4005 = vmul.f32 %v4004, 1.442695
    %v4006 = vpow.pop %v4005
    %v4007 = vadd.f32 %v4006, 1.0
    %v4008 = vrcp.pop %v4007
    %v4009 = vmul.f32 1.0, %v4008
    %v4010 = vmul.f32 %v4002, %v3993
    %v4011 = vadd.f32 %v3854, %v4010
    %v4012 = vtanh.pop %v4011
    %v4013 = vsub.f32 1.0, %v4009
    %v4014 = vmul.f32 %v4013, %v4012
    %v4015 = vmul.f32 %v4009, %v3843
    %v4016 = vadd.f32 %v4014, %v4015
    %4017 = vst [vmem:[#allocation6 + $0x8] sm:$0xff] %v4016
    %4018 = vst [vmem:[#allocation7 + $0x30] sm:$0xff] %v4016
    %v4019 = vld [vmem:[#allocation2 + $0x30] sm:$0xff]
    %v4020 = vld [vmem:[#allocation2 + $0x38] sm:$0xff]
    %v4021 = vld [vmem:[#allocation2 + $0x40] sm:$0xff]
    %v4022 = vld [vmem:[#allocation3 + $0x78] sm:$0xff]
    %v4023 = vld [vmem:[#allocation3 + $0x80] sm:$0xff]
    %v4024 = vld [vmem:[#allocation3 + $0x88] sm:$0xff]
    %v4025 = vadd.f32 %v4019, %v4022
    %v4026 = vadd.f32 %v4020, %v4023
    %v4027 = vadd.f32 %v4021, %v4024
    %4028 = vmatprep.subr.mxu0 %v3654
    %4029 = vmatpush1.msra.mxu0 %v3653
    %4030 = vmatprep.subr.mxu0 %v3651
    %4031 = vmatpush1.msra.mxu0 %v3650
    %4032 = vmatprep.subr.mxu0 %v3648
    %4033 = vmatpush1.msra.mxu0 %v3647
    %4034 = vmatprep.subr.mxu0 %v3645
    %4035 = vmatpush1.msra.mxu0 %v3644
    %4036 = vmatprep.subr.mxu0 %v3642
    %4037 = vmatpush1.msra.mxu0 %v3641
    %4038 = vmatprep.subr.mxu0 %v3639
    %4039 = vmatpush1.msra.mxu0 %v3638
    %4040 = vmatprep.subr.mxu0 %v3636
    %4041 = vmatpush1.msra.mxu0 %v3635
    %4042 = vmatprep.subr.mxu0 %v3633
    %4043 = vmatpush1.msra.mxu0 %v3632
    %4044 = vmatprep.subr.mxu0 %v3630
    %4045 = vmatpush1.msra.mxu0 %v3629
    %4046 = vmatprep.subr.mxu0 %v3627
    %4047 = vmatpush1.msra.mxu0 %v3626
    %4048 = vmatprep.subr.mxu0 %v3624
    %4049 = vmatpush1.msra.mxu0 %v3623
    %4050 = vmatprep.subr.mxu0 %v3621
    %4051 = vmatpush1.msra.mxu0 %v3620
    %4052 = vmatprep.subr.mxu0 %v3618
    %4053 = vmatpush1.msra.mxu0 %v3617
    %4054 = vmatprep.subr.mxu0 %v3615
    %4055 = vmatpush1.msra.mxu0 %v3614
    %4056 = vmatprep.subr.mxu0 %v3612
    %4057 = vmatpush1.msra.mxu0 %v3611
    %4058 = vmatprep.subr.mxu0 %v3609
    %4059 = vmatpush1.msra.mxu0 %v3608
    %4060 = vmatprep.subr.mxu0 0.0
    %4061 = vmatpush2.msra.mxu0 0.0
    %4062 = vmatprep.subr.mxu0 0.0
    %4063 = vmatpush2.msra.mxu0 0.0
    %4064 = vmatprep.subr.mxu0 0.0
    %4065 = vmatpush2.msra.mxu0 0.0
    %4066 = vmatprep.subr.mxu0 0.0
    %4067 = vmatpush2.msra.mxu0 0.0
    %4068 = vmatprep.subr.mxu0 0.0
    %4069 = vmatpush2.msra.mxu0 0.0
    %4070 = vmatprep.subr.mxu0 0.0
    %4071 = vmatpush2.msra.mxu0 0.0
    %4072 = vmatprep.subr.mxu0 0.0
    %4073 = vmatpush2.msra.mxu0 0.0
    %4074 = vmatprep.subr.mxu0 0.0
    %4075 = vmatpush2.msra.mxu0 0.0
    %4076 = vmatprep.subr.mxu0 0.0
    %4077 = vmatpush2.msra.mxu0 0.0
    %4078 = vmatprep.subr.mxu0 0.0
    %4079 = vmatpush2.msra.mxu0 0.0
    %4080 = vmatprep.subr.mxu0 0.0
    %4081 = vmatpush2.msra.mxu0 0.0
    %4082 = vmatprep.subr.mxu0 0.0
    %4083 = vmatpush2.msra.mxu0 0.0
    %4084 = vmatprep.subr.mxu0 0.0
    %4085 = vmatpush2.msra.mxu0 0.0
    %4086 = vmatprep.subr.mxu0 0.0
    %4087 = vmatpush2.msra.mxu0 0.0
    %4088 = vmatprep.subr.mxu0 0.0
    %4089 = vmatpush2.msra.mxu0 0.0
    %4090 = vmatprep.subr.mxu0 0.0
    %4091 = vmatpush2.msra.mxu0 0.0
    %4092 = vmatprep.mubr.f32.mxu0 0.0
    %4093 = vmatmul.mubr.f32.gmra.mxu0 %v4016
    %v4094 = vpop.f32.mrf.mxu0
    %v4095 = vadd.f32 %v3661, %v4094
    %v4096 = vpop.f32.mrf.mxu0
    %v4097 = vadd.f32 %v3665, %v4096
    %4098 = vdwg.mxu0
    %4099 = vmatprep.subr.mxu0 0.0
    %4100 = vmatpush1.msra.mxu0 %v3655
    %4101 = vmatprep.subr.mxu0 0.0
    %4102 = vmatpush1.msra.mxu0 %v3652
    %4103 = vmatprep.subr.mxu0 0.0
    %4104 = vmatpush1.msra.mxu0 %v3649
    %4105 = vmatprep.subr.mxu0 0.0
    %4106 = vmatpush1.msra.mxu0 %v3646
    %4107 = vmatprep.subr.mxu0 0.0
    %4108 = vmatpush1.msra.mxu0 %v3643
    %4109 = vmatprep.subr.mxu0 0.0
    %4110 = vmatpush1.msra.mxu0 %v3640
    %4111 = vmatprep.subr.mxu0 0.0
    %4112 = vmatpush1.msra.mxu0 %v3637
    %4113 = vmatprep.subr.mxu0 0.0
    %4114 = vmatpush1.msra.mxu0 %v3634
    %4115 = vmatprep.subr.mxu0 0.0
    %4116 = vmatpush1.msra.mxu0 %v3631
    %4117 = vmatprep.subr.mxu0 0.0
    %4118 = vmatpush1.msra.mxu0 %v3628
    %4119 = vmatprep.subr.mxu0 0.0
    %4120 = vmatpush1.msra.mxu0 %v3625
    %4121 = vmatprep.subr.mxu0 0.0
    %4122 = vmatpush1.msra.mxu0 %v3622
    %4123 = vmatprep.subr.mxu0 0.0
    %4124 = vmatpush1.msra.mxu0 %v3619
    %4125 = vmatprep.subr.mxu0 0.0
    %4126 = vmatpush1.msra.mxu0 %v3616
    %4127 = vmatprep.subr.mxu0 0.0
    %4128 = vmatpush1.msra.mxu0 %v3613
    %4129 = vmatprep.subr.mxu0 0.0
    %4130 = vmatpush1.msra.mxu0 %v3610
    %4131 = vmatprep.subr.mxu0 0.0
    %4132 = vmatpush2.msra.mxu0 0.0
    %4133 = vmatprep.subr.mxu0 0.0
    %4134 = vmatpush2.msra.mxu0 0.0
    %4135 = vmatprep.subr.mxu0 0.0
    %4136 = vmatpush2.msra.mxu0 0.0
    %4137 = vmatprep.subr.mxu0 0.0
    %4138 = vmatpush2.msra.mxu0 0.0
    %4139 = vmatprep.subr.mxu0 0.0
    %4140 = vmatpush2.msra.mxu0 0.0
    %4141 = vmatprep.subr.mxu0 0.0
    %4142 = vmatpush2.msra.mxu0 0.0
    %4143 = vmatprep.subr.mxu0 0.0
    %4144 = vmatpush2.msra.mxu0 0.0
    %4145 = vmatprep.subr.mxu0 0.0
    %4146 = vmatpush2.msra.mxu0 0.0
    %4147 = vmatprep.subr.mxu0 0.0
    %4148 = vmatpush2.msra.mxu0 0.0
    %4149 = vmatprep.subr.mxu0 0.0
    %4150 = vmatpush2.msra.mxu0 0.0
    %4151 = vmatprep.subr.mxu0 0.0
    %4152 = vmatpush2.msra.mxu0 0.0
    %4153 = vmatprep.subr.mxu0 0.0
    %4154 = vmatpush2.msra.mxu0 0.0
    %4155 = vmatprep.subr.mxu0 0.0
    %4156 = vmatpush2.msra.mxu0 0.0
    %4157 = vmatprep.subr.mxu0 0.0
    %4158 = vmatpush2.msra.mxu0 0.0
    %4159 = vmatprep.subr.mxu0 0.0
    %4160 = vmatpush2.msra.mxu0 0.0
    %4161 = vmatprep.subr.mxu0 0.0
    %4162 = vmatpush2.msra.mxu0 0.0
    %4163 = vmatprep.mubr.f32.mxu0 0.0
    %4164 = vmatmul.mubr.f32.gmra.mxu0 %v4016
    %v4165 = vpop.f32.mrf.mxu0
    %v4166 = vadd.f32 %v3669, %v4165
    %v4167 = vpop.f32.mrf.mxu0
    %4168 = vdwg.mxu0
    %v4169 = vadd.f32 %v4025, %v4095
    %v4170 = vxor.u32 %v4169, 2147483648
    %v4171 = vmul.f32 %v4170, 1.442695
    %v4172 = vpow.pop %v4171
    %v4173 = vadd.f32 %v4172, 1.0
    %v4174 = vrcp.pop %v4173
    %v4175 = vmul.f32 1.0, %v4174
    %v4176 = vadd.f32 %v4026, %v4097
    %v4177 = vxor.u32 %v4176, 2147483648
    %v4178 = vmul.f32 %v4177, 1.442695
    %v4179 = vpow.pop %v4178
    %v4180 = vadd.f32 %v4179, 1.0
    %v4181 = vrcp.pop %v4180
    %v4182 = vmul.f32 1.0, %v4181
    %v4183 = vmul.f32 %v4175, %v4166
    %v4184 = vadd.f32 %v4027, %v4183
    %v4185 = vtanh.pop %v4184
    %v4186 = vsub.f32 1.0, %v4182
    %v4187 = vmul.f32 %v4186, %v4185
    %v4188 = vmul.f32 %v4182, %v4016
    %v4189 = vadd.f32 %v4187, %v4188
    %4190 = vst [vmem:[#allocation6 + $0x10] sm:$0xff] %v4189
    %4191 = vst [vmem:[#allocation7 + $0x28] sm:$0xff] %v4189
    %v4192 = vld [vmem:[#allocation2 + $0x48] sm:$0xff]
    %v4193 = vld [vmem:[#allocation2 + $0x50] sm:$0xff]
    %v4194 = vld [vmem:[#allocation2 + $0x58] sm:$0xff]
    %v4195 = vld [vmem:[#allocation3 + $0x60] sm:$0xff]
    %v4196 = vld [vmem:[#allocation3 + $0x68] sm:$0xff]
    %v4197 = vld [vmem:[#allocation3 + $0x70] sm:$0xff]
    %v4198 = vadd.f32 %v4192, %v4195
    %v4199 = vadd.f32 %v4193, %v4196
    %v4200 = vadd.f32 %v4194, %v4197
    %4201 = vmatprep.subr.mxu0 %v3654
    %4202 = vmatpush1.msra.mxu0 %v3653
    %4203 = vmatprep.subr.mxu0 %v3651
    %4204 = vmatpush1.msra.mxu0 %v3650
    %4205 = vmatprep.subr.mxu0 %v3648
    %4206 = vmatpush1.msra.mxu0 %v3647
    %4207 = vmatprep.subr.mxu0 %v3645
    %4208 = vmatpush1.msra.mxu0 %v3644
    %4209 = vmatprep.subr.mxu0 %v3642
    %4210 = vmatpush1.msra.mxu0 %v3641
    %4211 = vmatprep.subr.mxu0 %v3639
    %4212 = vmatpush1.msra.mxu0 %v3638
    %4213 = vmatprep.subr.mxu0 %v3636
    %4214 = vmatpush1.msra.mxu0 %v3635
    %4215 = vmatprep.subr.mxu0 %v3633
    %4216 = vmatpush1.msra.mxu0 %v3632
    %4217 = vmatprep.subr.mxu0 %v3630
    %4218 = vmatpush1.msra.mxu0 %v3629
    %4219 = vmatprep.subr.mxu0 %v3627
    %4220 = vmatpush1.msra.mxu0 %v3626
    %4221 = vmatprep.subr.mxu0 %v3624
    %4222 = vmatpush1.msra.mxu0 %v3623
    %4223 = vmatprep.subr.mxu0 %v3621
    %4224 = vmatpush1.msra.mxu0 %v3620
    %4225 = vmatprep.subr.mxu0 %v3618
    %4226 = vmatpush1.msra.mxu0 %v3617
    %4227 = vmatprep.subr.mxu0 %v3615
    %4228 = vmatpush1.msra.mxu0 %v3614
    %4229 = vmatprep.subr.mxu0 %v3612
    %4230 = vmatpush1.msra.mxu0 %v3611
    %4231 = vmatprep.subr.mxu0 %v3609
    %4232 = vmatpush1.msra.mxu0 %v3608
    %4233 = vmatprep.subr.mxu0 0.0
    %4234 = vmatpush2.msra.mxu0 0.0
    %4235 = vmatprep.subr.mxu0 0.0
    %4236 = vmatpush2.msra.mxu0 0.0
    %4237 = vmatprep.subr.mxu0 0.0
    %4238 = vmatpush2.msra.mxu0 0.0
    %4239 = vmatprep.subr.mxu0 0.0
    %4240 = vmatpush2.msra.mxu0 0.0
    %4241 = vmatprep.subr.mxu0 0.0
    %4242 = vmatpush2.msra.mxu0 0.0
    %4243 = vmatprep.subr.mxu0 0.0
    %4244 = vmatpush2.msra.mxu0 0.0
    %4245 = vmatprep.subr.mxu0 0.0
    %4246 = vmatpush2.msra.mxu0 0.0
    %4247 = vmatprep.subr.mxu0 0.0
    %4248 = vmatpush2.msra.mxu0 0.0
    %4249 = vmatprep.subr.mxu0 0.0
    %4250 = vmatpush2.msra.mxu0 0.0
    %4251 = vmatprep.subr.mxu0 0.0
    %4252 = vmatpush2.msra.mxu0 0.0
    %4253 = vmatprep.subr.mxu0 0.0
    %4254 = vmatpush2.msra.mxu0 0.0
    %4255 = vmatprep.subr.mxu0 0.0
    %4256 = vmatpush2.msra.mxu0 0.0
    %4257 = vmatprep.subr.mxu0 0.0
    %4258 = vmatpush2.msra.mxu0 0.0
    %4259 = vmatprep.subr.mxu0 0.0
    %4260 = vmatpush2.msra.mxu0 0.0
    %4261 = vmatprep.subr.mxu0 0.0
    %4262 = vmatpush2.msra.mxu0 0.0
    %4263 = vmatprep.subr.mxu0 0.0
    %4264 = vmatpush2.msra.mxu0 0.0
    %4265 = vmatprep.mubr.f32.mxu0 0.0
    %4266 = vmatmul.mubr.f32.gmra.mxu0 %v4189
    %v4267 = vpop.f32.mrf.mxu0
    %v4268 = vadd.f32 %v3661, %v4267
    %v4269 = vpop.f32.mrf.mxu0
    %v4270 = vadd.f32 %v3665, %v4269
    %4271 = vdwg.mxu0
    %4272 = vmatprep.subr.mxu0 0.0
    %4273 = vmatpush1.msra.mxu0 %v3655
    %4274 = vmatprep.subr.mxu0 0.0
    %4275 = vmatpush1.msra.mxu0 %v3652
    %4276 = vmatprep.subr.mxu0 0.0
    %4277 = vmatpush1.msra.mxu0 %v3649
    %4278 = vmatprep.subr.mxu0 0.0
    %4279 = vmatpush1.msra.mxu0 %v3646
    %4280 = vmatprep.subr.mxu0 0.0
    %4281 = vmatpush1.msra.mxu0 %v3643
    %4282 = vmatprep.subr.mxu0 0.0
    %4283 = vmatpush1.msra.mxu0 %v3640
    %4284 = vmatprep.subr.mxu0 0.0
    %4285 = vmatpush1.msra.mxu0 %v3637
    %4286 = vmatprep.subr.mxu0 0.0
    %4287 = vmatpush1.msra.mxu0 %v3634
    %4288 = vmatprep.subr.mxu0 0.0
    %4289 = vmatpush1.msra.mxu0 %v3631
    %4290 = vmatprep.subr.mxu0 0.0
    %4291 = vmatpush1.msra.mxu0 %v3628
    %4292 = vmatprep.subr.mxu0 0.0
    %4293 = vmatpush1.msra.mxu0 %v3625
    %4294 = vmatprep.subr.mxu0 0.0
    %4295 = vmatpush1.msra.mxu0 %v3622
    %4296 = vmatprep.subr.mxu0 0.0
    %4297 = vmatpush1.msra.mxu0 %v3619
    %4298 = vmatprep.subr.mxu0 0.0
    %4299 = vmatpush1.msra.mxu0 %v3616
    %4300 = vmatprep.subr.mxu0 0.0
    %4301 = vmatpush1.msra.mxu0 %v3613
    %4302 = vmatprep.subr.mxu0 0.0
    %4303 = vmatpush1.msra.mxu0 %v3610
    %4304 = vmatprep.subr.mxu0 0.0
    %4305 = vmatpush2.msra.mxu0 0.0
    %4306 = vmatprep.subr.mxu0 0.0
    %4307 = vmatpush2.msra.mxu0 0.0
    %4308 = vmatprep.subr.mxu0 0.0
    %4309 = vmatpush2.msra.mxu0 0.0
    %4310 = vmatprep.subr.mxu0 0.0
    %4311 = vmatpush2.msra.mxu0 0.0
    %4312 = vmatprep.subr.mxu0 0.0
    %4313 = vmatpush2.msra.mxu0 0.0
    %4314 = vmatprep.subr.mxu0 0.0
    %4315 = vmatpush2.msra.mxu0 0.0
    %4316 = vmatprep.subr.mxu0 0.0
    %4317 = vmatpush2.msra.mxu0 0.0
    %4318 = vmatprep.subr.mxu0 0.0
    %4319 = vmatpush2.msra.mxu0 0.0
    %4320 = vmatprep.subr.mxu0 0.0
    %4321 = vmatpush2.msra.mxu0 0.0
    %4322 = vmatprep.subr.mxu0 0.0
    %4323 = vmatpush2.msra.mxu0 0.0
    %4324 = vmatprep.subr.mxu0 0.0
    %4325 = vmatpush2.msra.mxu0 0.0
    %4326 = vmatprep.subr.mxu0 0.0
    %4327 = vmatpush2.msra.mxu0 0.0
    %4328 = vmatprep.subr.mxu0 0.0
    %4329 = vmatpush2.msra.mxu0 0.0
    %4330 = vmatprep.subr.mxu0 0.0
    %4331 = vmatpush2.msra.mxu0 0.0
    %4332 = vmatprep.subr.mxu0 0.0
    %4333 = vmatpush2.msra.mxu0 0.0
    %4334 = vmatprep.subr.mxu0 0.0
    %4335 = vmatpush2.msra.mxu0 0.0
    %4336 = vmatprep.mubr.f32.mxu0 0.0
    %4337 = vmatmul.mubr.f32.gmra.mxu0 %v4189
    %v4338 = vpop.f32.mrf.mxu0
    %v4339 = vadd.f32 %v3669, %v4338
    %v4340 = vpop.f32.mrf.mxu0
    %4341 = vdwg.mxu0
    %v4342 = vadd.f32 %v4198, %v4268
    %v4343 = vxor.u32 %v4342, 2147483648
    %v4344 = vmul.f32 %v4343, 1.442695
    %v4345 = vpow.pop %v4344
    %v4346 = vadd.f32 %v4345, 1.0
    %v4347 = vrcp.pop %v4346
    %v4348 = vmul.f32 1.0, %v4347
    %v4349 = vadd.f32 %v4199, %v4270
    %v4350 = vxor.u32 %v4349, 2147483648
    %v4351 = vmul.f32 %v4350, 1.442695
    %v4352 = vpow.pop %v4351
    %v4353 = vadd.f32 %v4352, 1.0
    %v4354 = vrcp.pop %v4353
    %v4355 = vmul.f32 1.0, %v4354
    %v4356 = vmul.f32 %v4348, %v4339
    %v4357 = vadd.f32 %v4200, %v4356
    %v4358 = vtanh.pop %v4357
    %v4359 = vsub.f32 1.0, %v4355
    %v4360 = vmul.f32 %v4359, %v4358
    %v4361 = vmul.f32 %v4355, %v4189
    %v4362 = vadd.f32 %v4360, %v4361
    %4363 = vst [vmem:[#allocation6 + $0x18] sm:$0xff] %v4362
    %4364 = vst [vmem:[#allocation7 + $0x20] sm:$0xff] %v4362
    %v4365 = vld [vmem:[#allocation2 + $0x60] sm:$0xff]
    %v4366 = vld [vmem:[#allocation2 + $0x68] sm:$0xff]
    %v4367 = vld [vmem:[#allocation2 + $0x70] sm:$0xff]
    %v4368 = vld [vmem:[#allocation3 + $0x48] sm:$0xff]
    %v4369 = vld [vmem:[#allocation3 + $0x50] sm:$0xff]
    %v4370 = vld [vmem:[#allocation3 + $0x58] sm:$0xff]
    %v4371 = vadd.f32 %v4365, %v4368
    %v4372 = vadd.f32 %v4366, %v4369
    %v4373 = vadd.f32 %v4367, %v4370
    %4374 = vmatprep.subr.mxu0 %v3654
    %4375 = vmatpush1.msra.mxu0 %v3653
    %4376 = vmatprep.subr.mxu0 %v3651
    %4377 = vmatpush1.msra.mxu0 %v3650
    %4378 = vmatprep.subr.mxu0 %v3648
    %4379 = vmatpush1.msra.mxu0 %v3647
    %4380 = vmatprep.subr.mxu0 %v3645
    %4381 = vmatpush1.msra.mxu0 %v3644
    %4382 = vmatprep.subr.mxu0 %v3642
    %4383 = vmatpush1.msra.mxu0 %v3641
    %4384 = vmatprep.subr.mxu0 %v3639
    %4385 = vmatpush1.msra.mxu0 %v3638
    %4386 = vmatprep.subr.mxu0 %v3636
    %4387 = vmatpush1.msra.mxu0 %v3635
    %4388 = vmatprep.subr.mxu0 %v3633
    %4389 = vmatpush1.msra.mxu0 %v3632
    %4390 = vmatprep.subr.mxu0 %v3630
    %4391 = vmatpush1.msra.mxu0 %v3629
    %4392 = vmatprep.subr.mxu0 %v3627
    %4393 = vmatpush1.msra.mxu0 %v3626
    %4394 = vmatprep.subr.mxu0 %v3624
    %4395 = vmatpush1.msra.mxu0 %v3623
    %4396 = vmatprep.subr.mxu0 %v3621
    %4397 = vmatpush1.msra.mxu0 %v3620
    %4398 = vmatprep.subr.mxu0 %v3618
    %4399 = vmatpush1.msra.mxu0 %v3617
    %4400 = vmatprep.subr.mxu0 %v3615
    %4401 = vmatpush1.msra.mxu0 %v3614
    %4402 = vmatprep.subr.mxu0 %v3612
    %4403 = vmatpush1.msra.mxu0 %v3611
    %4404 = vmatprep.subr.mxu0 %v3609
    %4405 = vmatpush1.msra.mxu0 %v3608
    %4406 = vmatprep.subr.mxu0 0.0
    %4407 = vmatpush2.msra.mxu0 0.0
    %4408 = vmatprep.subr.mxu0 0.0
    %4409 = vmatpush2.msra.mxu0 0.0
    %4410 = vmatprep.subr.mxu0 0.0
    %4411 = vmatpush2.msra.mxu0 0.0
    %4412 = vmatprep.subr.mxu0 0.0
    %4413 = vmatpush2.msra.mxu0 0.0
    %4414 = vmatprep.subr.mxu0 0.0
    %4415 = vmatpush2.msra.mxu0 0.0
    %4416 = vmatprep.subr.mxu0 0.0
    %4417 = vmatpush2.msra.mxu0 0.0
    %4418 = vmatprep.subr.mxu0 0.0
    %4419 = vmatpush2.msra.mxu0 0.0
    %4420 = vmatprep.subr.mxu0 0.0
    %4421 = vmatpush2.msra.mxu0 0.0
    %4422 = vmatprep.subr.mxu0 0.0
    %4423 = vmatpush2.msra.mxu0 0.0
    %4424 = vmatprep.subr.mxu0 0.0
    %4425 = vmatpush2.msra.mxu0 0.0
    %4426 = vmatprep.subr.mxu0 0.0
    %4427 = vmatpush2.msra.mxu0 0.0
    %4428 = vmatprep.subr.mxu0 0.0
    %4429 = vmatpush2.msra.mxu0 0.0
    %4430 = vmatprep.subr.mxu0 0.0
    %4431 = vmatpush2.msra.mxu0 0.0
    %4432 = vmatprep.subr.mxu0 0.0
    %4433 = vmatpush2.msra.mxu0 0.0
    %4434 = vmatprep.subr.mxu0 0.0
    %4435 = vmatpush2.msra.mxu0 0.0
    %4436 = vmatprep.subr.mxu0 0.0
    %4437 = vmatpush2.msra.mxu0 0.0
    %4438 = vmatprep.mubr.f32.mxu0 0.0
    %4439 = vmatmul.mubr.f32.gmra.mxu0 %v4362
    %v4440 = vpop.f32.mrf.mxu0
    %v4441 = vadd.f32 %v3661, %v4440
    %v4442 = vpop.f32.mrf.mxu0
    %v4443 = vadd.f32 %v3665, %v4442
    %4444 = vdwg.mxu0
    %4445 = vmatprep.subr.mxu0 0.0
    %4446 = vmatpush1.msra.mxu0 %v3655
    %4447 = vmatprep.subr.mxu0 0.0
    %4448 = vmatpush1.msra.mxu0 %v3652
    %4449 = vmatprep.subr.mxu0 0.0
    %4450 = vmatpush1.msra.mxu0 %v3649
    %4451 = vmatprep.subr.mxu0 0.0
    %4452 = vmatpush1.msra.mxu0 %v3646
    %4453 = vmatprep.subr.mxu0 0.0
    %4454 = vmatpush1.msra.mxu0 %v3643
    %4455 = vmatprep.subr.mxu0 0.0
    %4456 = vmatpush1.msra.mxu0 %v3640
    %4457 = vmatprep.subr.mxu0 0.0
    %4458 = vmatpush1.msra.mxu0 %v3637
    %4459 = vmatprep.subr.mxu0 0.0
    %4460 = vmatpush1.msra.mxu0 %v3634
    %4461 = vmatprep.subr.mxu0 0.0
    %4462 = vmatpush1.msra.mxu0 %v3631
    %4463 = vmatprep.subr.mxu0 0.0
    %4464 = vmatpush1.msra.mxu0 %v3628
    %4465 = vmatprep.subr.mxu0 0.0
    %4466 = vmatpush1.msra.mxu0 %v3625
    %4467 = vmatprep.subr.mxu0 0.0
    %4468 = vmatpush1.msra.mxu0 %v3622
    %4469 = vmatprep.subr.mxu0 0.0
    %4470 = vmatpush1.msra.mxu0 %v3619
    %4471 = vmatprep.subr.mxu0 0.0
    %4472 = vmatpush1.msra.mxu0 %v3616
    %4473 = vmatprep.subr.mxu0 0.0
    %4474 = vmatpush1.msra.mxu0 %v3613
    %4475 = vmatprep.subr.mxu0 0.0
    %4476 = vmatpush1.msra.mxu0 %v3610
    %4477 = vmatprep.subr.mxu0 0.0
    %4478 = vmatpush2.msra.mxu0 0.0
    %4479 = vmatprep.subr.mxu0 0.0
    %4480 = vmatpush2.msra.mxu0 0.0
    %4481 = vmatprep.subr.mxu0 0.0
    %4482 = vmatpush2.msra.mxu0 0.0
    %4483 = vmatprep.subr.mxu0 0.0
    %4484 = vmatpush2.msra.mxu0 0.0
    %4485 = vmatprep.subr.mxu0 0.0
    %4486 = vmatpush2.msra.mxu0 0.0
    %4487 = vmatprep.subr.mxu0 0.0
    %4488 = vmatpush2.msra.mxu0 0.0
    %4489 = vmatprep.subr.mxu0 0.0
    %4490 = vmatpush2.msra.mxu0 0.0
    %4491 = vmatprep.subr.mxu0 0.0
    %4492 = vmatpush2.msra.mxu0 0.0
    %4493 = vmatprep.subr.mxu0 0.0
    %4494 = vmatpush2.msra.mxu0 0.0
    %4495 = vmatprep.subr.mxu0 0.0
    %4496 = vmatpush2.msra.mxu0 0.0
    %4497 = vmatprep.subr.mxu0 0.0
    %4498 = vmatpush2.msra.mxu0 0.0
    %4499 = vmatprep.subr.mxu0 0.0
    %4500 = vmatpush2.msra.mxu0 0.0
    %4501 = vmatprep.subr.mxu0 0.0
    %4502 = vmatpush2.msra.mxu0 0.0
    %4503 = vmatprep.subr.mxu0 0.0
    %4504 = vmatpush2.msra.mxu0 0.0
    %4505 = vmatprep.subr.mxu0 0.0
    %4506 = vmatpush2.msra.mxu0 0.0
    %4507 = vmatprep.subr.mxu0 0.0
    %4508 = vmatpush2.msra.mxu0 0.0
    %4509 = vmatprep.mubr.f32.mxu0 0.0
    %4510 = vmatmul.mubr.f32.gmra.mxu0 %v4362
    %v4511 = vpop.f32.mrf.mxu0
    %v4512 = vadd.f32 %v3669, %v4511
    %v4513 = vpop.f32.mrf.mxu0
    %4514 = vdwg.mxu0
    %v4515 = vadd.f32 %v4371, %v4441
    %v4516 = vxor.u32 %v4515, 2147483648
    %v4517 = vmul.f32 %v4516, 1.442695
    %v4518 = vpow.pop %v4517
    %v4519 = vadd.f32 %v4518, 1.0
    %v4520 = vrcp.pop %v4519
    %v4521 = vmul.f32 1.0, %v4520
    %v4522 = vadd.f32 %v4372, %v4443
    %v4523 = vxor.u32 %v4522, 2147483648
    %v4524 = vmul.f32 %v4523, 1.442695
    %v4525 = vpow.pop %v4524
    %v4526 = vadd.f32 %v4525, 1.0
    %v4527 = vrcp.pop %v4526
    %v4528 = vmul.f32 1.0, %v4527
    %v4529 = vmul.f32 %v4521, %v4512
    %v4530 = vadd.f32 %v4373, %v4529
    %v4531 = vtanh.pop %v4530
    %v4532 = vsub.f32 1.0, %v4528
    %v4533 = vmul.f32 %v4532, %v4531
    %v4534 = vmul.f32 %v4528, %v4362
    %v4535 = vadd.f32 %v4533, %v4534
    %4536 = vst [vmem:[#allocation6 + $0x20] sm:$0xff] %v4535
    %4537 = vst [vmem:[#allocation7 + $0x18] sm:$0xff] %v4535
    %v4538 = vld [vmem:[#allocation2 + $0x78] sm:$0xff]
    %v4539 = vld [vmem:[#allocation2 + $0x80] sm:$0xff]
    %v4540 = vld [vmem:[#allocation2 + $0x88] sm:$0xff]
    %v4541 = vld [vmem:[#allocation3 + $0x30] sm:$0xff]
    %v4542 = vld [vmem:[#allocation3 + $0x38] sm:$0xff]
    %v4543 = vld [vmem:[#allocation3 + $0x40] sm:$0xff]
    %v4544 = vadd.f32 %v4538, %v4541
    %v4545 = vadd.f32 %v4539, %v4542
    %v4546 = vadd.f32 %v4540, %v4543
    %4547 = vmatprep.subr.mxu0 %v3654
    %4548 = vmatpush1.msra.mxu0 %v3653
    %4549 = vmatprep.subr.mxu0 %v3651
    %4550 = vmatpush1.msra.mxu0 %v3650
    %4551 = vmatprep.subr.mxu0 %v3648
    %4552 = vmatpush1.msra.mxu0 %v3647
    %4553 = vmatprep.subr.mxu0 %v3645
    %4554 = vmatpush1.msra.mxu0 %v3644
    %4555 = vmatprep.subr.mxu0 %v3642
    %4556 = vmatpush1.msra.mxu0 %v3641
    %4557 = vmatprep.subr.mxu0 %v3639
    %4558 = vmatpush1.msra.mxu0 %v3638
    %4559 = vmatprep.subr.mxu0 %v3636
    %4560 = vmatpush1.msra.mxu0 %v3635
    %4561 = vmatprep.subr.mxu0 %v3633
    %4562 = vmatpush1.msra.mxu0 %v3632
    %4563 = vmatprep.subr.mxu0 %v3630
    %4564 = vmatpush1.msra.mxu0 %v3629
    %4565 = vmatprep.subr.mxu0 %v3627
    %4566 = vmatpush1.msra.mxu0 %v3626
    %4567 = vmatprep.subr.mxu0 %v3624
    %4568 = vmatpush1.msra.mxu0 %v3623
    %4569 = vmatprep.subr.mxu0 %v3621
    %4570 = vmatpush1.msra.mxu0 %v3620
    %4571 = vmatprep.subr.mxu0 %v3618
    %4572 = vmatpush1.msra.mxu0 %v3617
    %4573 = vmatprep.subr.mxu0 %v3615
    %4574 = vmatpush1.msra.mxu0 %v3614
    %4575 = vmatprep.subr.mxu0 %v3612
    %4576 = vmatpush1.msra.mxu0 %v3611
    %4577 = vmatprep.subr.mxu0 %v3609
    %4578 = vmatpush1.msra.mxu0 %v3608
    %4579 = vmatprep.subr.mxu0 0.0
    %4580 = vmatpush2.msra.mxu0 0.0
    %4581 = vmatprep.subr.mxu0 0.0
    %4582 = vmatpush2.msra.mxu0 0.0
    %4583 = vmatprep.subr.mxu0 0.0
    %4584 = vmatpush2.msra.mxu0 0.0
    %4585 = vmatprep.subr.mxu0 0.0
    %4586 = vmatpush2.msra.mxu0 0.0
    %4587 = vmatprep.subr.mxu0 0.0
    %4588 = vmatpush2.msra.mxu0 0.0
    %4589 = vmatprep.subr.mxu0 0.0
    %4590 = vmatpush2.msra.mxu0 0.0
    %4591 = vmatprep.subr.mxu0 0.0
    %4592 = vmatpush2.msra.mxu0 0.0
    %4593 = vmatprep.subr.mxu0 0.0
    %4594 = vmatpush2.msra.mxu0 0.0
    %4595 = vmatprep.subr.mxu0 0.0
    %4596 = vmatpush2.msra.mxu0 0.0
    %4597 = vmatprep.subr.mxu0 0.0
    %4598 = vmatpush2.msra.mxu0 0.0
    %4599 = vmatprep.subr.mxu0 0.0
    %4600 = vmatpush2.msra.mxu0 0.0
    %4601 = vmatprep.subr.mxu0 0.0
    %4602 = vmatpush2.msra.mxu0 0.0
    %4603 = vmatprep.subr.mxu0 0.0
    %4604 = vmatpush2.msra.mxu0 0.0
    %4605 = vmatprep.subr.mxu0 0.0
    %4606 = vmatpush2.msra.mxu0 0.0
    %4607 = vmatprep.subr.mxu0 0.0
    %4608 = vmatpush2.msra.mxu0 0.0
    %4609 = vmatprep.subr.mxu0 0.0
    %4610 = vmatpush2.msra.mxu0 0.0
    %4611 = vmatprep.mubr.f32.mxu0 0.0
    %4612 = vmatmul.mubr.f32.gmra.mxu0 %v4535
    %v4613 = vpop.f32.mrf.mxu0
    %v4614 = vadd.f32 %v3661, %v4613
    %v4615 = vpop.f32.mrf.mxu0
    %v4616 = vadd.f32 %v3665, %v4615
    %4617 = vdwg.mxu0
    %4618 = vmatprep.subr.mxu0 0.0
    %4619 = vmatpush1.msra.mxu0 %v3655
    %4620 = vmatprep.subr.mxu0 0.0
    %4621 = vmatpush1.msra.mxu0 %v3652
    %4622 = vmatprep.subr.mxu0 0.0
    %4623 = vmatpush1.msra.mxu0 %v3649
    %4624 = vmatprep.subr.mxu0 0.0
    %4625 = vmatpush1.msra.mxu0 %v3646
    %4626 = vmatprep.subr.mxu0 0.0
    %4627 = vmatpush1.msra.mxu0 %v3643
    %4628 = vmatprep.subr.mxu0 0.0
    %4629 = vmatpush1.msra.mxu0 %v3640
    %4630 = vmatprep.subr.mxu0 0.0
    %4631 = vmatpush1.msra.mxu0 %v3637
    %4632 = vmatprep.subr.mxu0 0.0
    %4633 = vmatpush1.msra.mxu0 %v3634
    %4634 = vmatprep.subr.mxu0 0.0
    %4635 = vmatpush1.msra.mxu0 %v3631
    %4636 = vmatprep.subr.mxu0 0.0
    %4637 = vmatpush1.msra.mxu0 %v3628
    %4638 = vmatprep.subr.mxu0 0.0
    %4639 = vmatpush1.msra.mxu0 %v3625
    %4640 = vmatprep.subr.mxu0 0.0
    %4641 = vmatpush1.msra.mxu0 %v3622
    %4642 = vmatprep.subr.mxu0 0.0
    %4643 = vmatpush1.msra.mxu0 %v3619
    %4644 = vmatprep.subr.mxu0 0.0
    %4645 = vmatpush1.msra.mxu0 %v3616
    %4646 = vmatprep.subr.mxu0 0.0
    %4647 = vmatpush1.msra.mxu0 %v3613
    %4648 = vmatprep.subr.mxu0 0.0
    %4649 = vmatpush1.msra.mxu0 %v3610
    %4650 = vmatprep.subr.mxu0 0.0
    %4651 = vmatpush2.msra.mxu0 0.0
    %4652 = vmatprep.subr.mxu0 0.0
    %4653 = vmatpush2.msra.mxu0 0.0
    %4654 = vmatprep.subr.mxu0 0.0
    %4655 = vmatpush2.msra.mxu0 0.0
    %4656 = vmatprep.subr.mxu0 0.0
    %4657 = vmatpush2.msra.mxu0 0.0
    %4658 = vmatprep.subr.mxu0 0.0
    %4659 = vmatpush2.msra.mxu0 0.0
    %4660 = vmatprep.subr.mxu0 0.0
    %4661 = vmatpush2.msra.mxu0 0.0
    %4662 = vmatprep.subr.mxu0 0.0
    %4663 = vmatpush2.msra.mxu0 0.0
    %4664 = vmatprep.subr.mxu0 0.0
    %4665 = vmatpush2.msra.mxu0 0.0
    %4666 = vmatprep.subr.mxu0 0.0
    %4667 = vmatpush2.msra.mxu0 0.0
    %4668 = vmatprep.subr.mxu0 0.0
    %4669 = vmatpush2.msra.mxu0 0.0
    %4670 = vmatprep.subr.mxu0 0.0
    %4671 = vmatpush2.msra.mxu0 0.0
    %4672 = vmatprep.subr.mxu0 0.0
    %4673 = vmatpush2.msra.mxu0 0.0
    %4674 = vmatprep.subr.mxu0 0.0
    %4675 = vmatpush2.msra.mxu0 0.0
    %4676 = vmatprep.subr.mxu0 0.0
    %4677 = vmatpush2.msra.mxu0 0.0
    %4678 = vmatprep.subr.mxu0 0.0
    %4679 = vmatpush2.msra.mxu0 0.0
    %4680 = vmatprep.subr.mxu0 0.0
    %4681 = vmatpush2.msra.mxu0 0.0
    %4682 = vmatprep.mubr.f32.mxu0 0.0
    %4683 = vmatmul.mubr.f32.gmra.mxu0 %v4535
    %v4684 = vpop.f32.mrf.mxu0
    %v4685 = vadd.f32 %v3669, %v4684
    %v4686 = vpop.f32.mrf.mxu0
    %4687 = vdwg.mxu0
    %v4688 = vadd.f32 %v4544, %v4614
    %v4689 = vxor.u32 %v4688, 2147483648
    %v4690 = vmul.f32 %v4689, 1.442695
    %v4691 = vpow.pop %v4690
    %v4692 = vadd.f32 %v4691, 1.0
    %v4693 = vrcp.pop %v4692
    %v4694 = vmul.f32 1.0, %v4693
    %v4695 = vadd.f32 %v4545, %v4616
    %v4696 = vxor.u32 %v4695, 2147483648
    %v4697 = vmul.f32 %v4696, 1.442695
    %v4698 = vpow.pop %v4697
    %v4699 = vadd.f32 %v4698, 1.0
    %v4700 = vrcp.pop %v4699
    %v4701 = vmul.f32 1.0, %v4700
    %v4702 = vmul.f32 %v4694, %v4685
    %v4703 = vadd.f32 %v4546, %v4702
    %v4704 = vtanh.pop %v4703
    %v4705 = vsub.f32 1.0, %v4701
    %v4706 = vmul.f32 %v4705, %v4704
    %v4707 = vmul.f32 %v4701, %v4535
    %v4708 = vadd.f32 %v4706, %v4707
    %4709 = vst [vmem:[#allocation6 + $0x28] sm:$0xff] %v4708
    %4710 = vst [vmem:[#allocation7 + $0x10] sm:$0xff] %v4708
    %v4711 = vld [vmem:[#allocation2 + $0x90] sm:$0xff]
    %v4712 = vld [vmem:[#allocation2 + $0x98] sm:$0xff]
    %v4713 = vld [vmem:[#allocation2 + $0xa0] sm:$0xff]
    %v4714 = vld [vmem:[#allocation3 + $0x18] sm:$0xff]
    %v4715 = vld [vmem:[#allocation3 + $0x20] sm:$0xff]
    %v4716 = vld [vmem:[#allocation3 + $0x28] sm:$0xff]
    %v4717 = vadd.f32 %v4711, %v4714
    %v4718 = vadd.f32 %v4712, %v4715
    %v4719 = vadd.f32 %v4713, %v4716
    %4720 = vmatprep.subr.mxu0 %v3654
    %4721 = vmatpush1.msra.mxu0 %v3653
    %4722 = vmatprep.subr.mxu0 %v3651
    %4723 = vmatpush1.msra.mxu0 %v3650
    %4724 = vmatprep.subr.mxu0 %v3648
    %4725 = vmatpush1.msra.mxu0 %v3647
    %4726 = vmatprep.subr.mxu0 %v3645
    %4727 = vmatpush1.msra.mxu0 %v3644
    %4728 = vmatprep.subr.mxu0 %v3642
    %4729 = vmatpush1.msra.mxu0 %v3641
    %4730 = vmatprep.subr.mxu0 %v3639
    %4731 = vmatpush1.msra.mxu0 %v3638
    %4732 = vmatprep.subr.mxu0 %v3636
    %4733 = vmatpush1.msra.mxu0 %v3635
    %4734 = vmatprep.subr.mxu0 %v3633
    %4735 = vmatpush1.msra.mxu0 %v3632
    %4736 = vmatprep.subr.mxu0 %v3630
    %4737 = vmatpush1.msra.mxu0 %v3629
    %4738 = vmatprep.subr.mxu0 %v3627
    %4739 = vmatpush1.msra.mxu0 %v3626
    %4740 = vmatprep.subr.mxu0 %v3624
    %4741 = vmatpush1.msra.mxu0 %v3623
    %4742 = vmatprep.subr.mxu0 %v3621
    %4743 = vmatpush1.msra.mxu0 %v3620
    %4744 = vmatprep.subr.mxu0 %v3618
    %4745 = vmatpush1.msra.mxu0 %v3617
    %4746 = vmatprep.subr.mxu0 %v3615
    %4747 = vmatpush1.msra.mxu0 %v3614
    %4748 = vmatprep.subr.mxu0 %v3612
    %4749 = vmatpush1.msra.mxu0 %v3611
    %4750 = vmatprep.subr.mxu0 %v3609
    %4751 = vmatpush1.msra.mxu0 %v3608
    %4752 = vmatprep.subr.mxu0 0.0
    %4753 = vmatpush2.msra.mxu0 0.0
    %4754 = vmatprep.subr.mxu0 0.0
    %4755 = vmatpush2.msra.mxu0 0.0
    %4756 = vmatprep.subr.mxu0 0.0
    %4757 = vmatpush2.msra.mxu0 0.0
    %4758 = vmatprep.subr.mxu0 0.0
    %4759 = vmatpush2.msra.mxu0 0.0
    %4760 = vmatprep.subr.mxu0 0.0
    %4761 = vmatpush2.msra.mxu0 0.0
    %4762 = vmatprep.subr.mxu0 0.0
    %4763 = vmatpush2.msra.mxu0 0.0
    %4764 = vmatprep.subr.mxu0 0.0
    %4765 = vmatpush2.msra.mxu0 0.0
    %4766 = vmatprep.subr.mxu0 0.0
    %4767 = vmatpush2.msra.mxu0 0.0
    %4768 = vmatprep.subr.mxu0 0.0
    %4769 = vmatpush2.msra.mxu0 0.0
    %4770 = vmatprep.subr.mxu0 0.0
    %4771 = vmatpush2.msra.mxu0 0.0
    %4772 = vmatprep.subr.mxu0 0.0
    %4773 = vmatpush2.msra.mxu0 0.0
    %4774 = vmatprep.subr.mxu0 0.0
    %4775 = vmatpush2.msra.mxu0 0.0
    %4776 = vmatprep.subr.mxu0 0.0
    %4777 = vmatpush2.msra.mxu0 0.0
    %4778 = vmatprep.subr.mxu0 0.0
    %4779 = vmatpush2.msra.mxu0 0.0
    %4780 = vmatprep.subr.mxu0 0.0
    %4781 = vmatpush2.msra.mxu0 0.0
    %4782 = vmatprep.subr.mxu0 0.0
    %4783 = vmatpush2.msra.mxu0 0.0
    %4784 = vmatprep.mubr.f32.mxu0 0.0
    %4785 = vmatmul.mubr.f32.gmra.mxu0 %v4708
    %v4786 = vpop.f32.mrf.mxu0
    %v4787 = vadd.f32 %v3661, %v4786
    %v4788 = vpop.f32.mrf.mxu0
    %v4789 = vadd.f32 %v3665, %v4788
    %4790 = vdwg.mxu0
    %4791 = vmatprep.subr.mxu0 0.0
    %4792 = vmatpush1.msra.mxu0 %v3655
    %4793 = vmatprep.subr.mxu0 0.0
    %4794 = vmatpush1.msra.mxu0 %v3652
    %4795 = vmatprep.subr.mxu0 0.0
    %4796 = vmatpush1.msra.mxu0 %v3649
    %4797 = vmatprep.subr.mxu0 0.0
    %4798 = vmatpush1.msra.mxu0 %v3646
    %4799 = vmatprep.subr.mxu0 0.0
    %4800 = vmatpush1.msra.mxu0 %v3643
    %4801 = vmatprep.subr.mxu0 0.0
    %4802 = vmatpush1.msra.mxu0 %v3640
    %4803 = vmatprep.subr.mxu0 0.0
    %4804 = vmatpush1.msra.mxu0 %v3637
    %4805 = vmatprep.subr.mxu0 0.0
    %4806 = vmatpush1.msra.mxu0 %v3634
    %4807 = vmatprep.subr.mxu0 0.0
    %4808 = vmatpush1.msra.mxu0 %v3631
    %4809 = vmatprep.subr.mxu0 0.0
    %4810 = vmatpush1.msra.mxu0 %v3628
    %4811 = vmatprep.subr.mxu0 0.0
    %4812 = vmatpush1.msra.mxu0 %v3625
    %4813 = vmatprep.subr.mxu0 0.0
    %4814 = vmatpush1.msra.mxu0 %v3622
    %4815 = vmatprep.subr.mxu0 0.0
    %4816 = vmatpush1.msra.mxu0 %v3619
    %4817 = vmatprep.subr.mxu0 0.0
    %4818 = vmatpush1.msra.mxu0 %v3616
    %4819 = vmatprep.subr.mxu0 0.0
    %4820 = vmatpush1.msra.mxu0 %v3613
    %4821 = vmatprep.subr.mxu0 0.0
    %4822 = vmatpush1.msra.mxu0 %v3610
    %4823 = vmatprep.subr.mxu0 0.0
    %4824 = vmatpush2.msra.mxu0 0.0
    %4825 = vmatprep.subr.mxu0 0.0
    %4826 = vmatpush2.msra.mxu0 0.0
    %4827 = vmatprep.subr.mxu0 0.0
    %4828 = vmatpush2.msra.mxu0 0.0
    %4829 = vmatprep.subr.mxu0 0.0
    %4830 = vmatpush2.msra.mxu0 0.0
    %4831 = vmatprep.subr.mxu0 0.0
    %4832 = vmatpush2.msra.mxu0 0.0
    %4833 = vmatprep.subr.mxu0 0.0
    %4834 = vmatpush2.msra.mxu0 0.0
    %4835 = vmatprep.subr.mxu0 0.0
    %4836 = vmatpush2.msra.mxu0 0.0
    %4837 = vmatprep.subr.mxu0 0.0
    %4838 = vmatpush2.msra.mxu0 0.0
    %4839 = vmatprep.subr.mxu0 0.0
    %4840 = vmatpush2.msra.mxu0 0.0
    %4841 = vmatprep.subr.mxu0 0.0
    %4842 = vmatpush2.msra.mxu0 0.0
    %4843 = vmatprep.subr.mxu0 0.0
    %4844 = vmatpush2.msra.mxu0 0.0
    %4845 = vmatprep.subr.mxu0 0.0
    %4846 = vmatpush2.msra.mxu0 0.0
    %4847 = vmatprep.subr.mxu0 0.0
    %4848 = vmatpush2.msra.mxu0 0.0
    %4849 = vmatprep.subr.mxu0 0.0
    %4850 = vmatpush2.msra.mxu0 0.0
    %4851 = vmatprep.subr.mxu0 0.0
    %4852 = vmatpush2.msra.mxu0 0.0
    %4853 = vmatprep.subr.mxu0 0.0
    %4854 = vmatpush2.msra.mxu0 0.0
    %4855 = vmatprep.mubr.f32.mxu0 0.0
    %4856 = vmatmul.mubr.f32.gmra.mxu0 %v4708
    %v4857 = vpop.f32.mrf.mxu0
    %v4858 = vadd.f32 %v3669, %v4857
    %v4859 = vpop.f32.mrf.mxu0
    %4860 = vdwg.mxu0
    %v4861 = vadd.f32 %v4717, %v4787
    %v4862 = vxor.u32 %v4861, 2147483648
    %v4863 = vmul.f32 %v4862, 1.442695
    %v4864 = vpow.pop %v4863
    %v4865 = vadd.f32 %v4864, 1.0
    %v4866 = vrcp.pop %v4865
    %v4867 = vmul.f32 1.0, %v4866
    %v4868 = vadd.f32 %v4718, %v4789
    %v4869 = vxor.u32 %v4868, 2147483648
    %v4870 = vmul.f32 %v4869, 1.442695
    %v4871 = vpow.pop %v4870
    %v4872 = vadd.f32 %v4871, 1.0
    %v4873 = vrcp.pop %v4872
    %v4874 = vmul.f32 1.0, %v4873
    %v4875 = vmul.f32 %v4867, %v4858
    %v4876 = vadd.f32 %v4719, %v4875
    %v4877 = vtanh.pop %v4876
    %v4878 = vsub.f32 1.0, %v4874
    %v4879 = vmul.f32 %v4878, %v4877
    %v4880 = vmul.f32 %v4874, %v4708
    %v4881 = vadd.f32 %v4879, %v4880
    %4882 = vst [vmem:[#allocation6 + $0x30] sm:$0xff] %v4881
    %4883 = vst [vmem:[#allocation7 + $0x8] sm:$0xff] %v4881
    %v4884 = vld [vmem:[#allocation2 + $0xa8] sm:$0xff]
    %v4885 = vld [vmem:[#allocation2 + $0xb0] sm:$0xff]
    %v4886 = vld [vmem:[#allocation2 + $0xb8] sm:$0xff]
    %v4887 = vld [vmem:[#allocation3] sm:$0xff]
    %v4888 = vld [vmem:[#allocation3 + $0x8] sm:$0xff]
    %v4889 = vld [vmem:[#allocation3 + $0x10] sm:$0xff]
    %v4890 = vadd.f32 %v4884, %v4887
    %v4891 = vadd.f32 %v4885, %v4888
    %v4892 = vadd.f32 %v4886, %v4889
    %4893 = vmatprep.subr.mxu0 %v3654
    %4894 = vmatpush1.msra.mxu0 %v3653
    %4895 = vmatprep.subr.mxu0 %v3651
    %4896 = vmatpush1.msra.mxu0 %v3650
    %4897 = vmatprep.subr.mxu0 %v3648
    %4898 = vmatpush1.msra.mxu0 %v3647
    %4899 = vmatprep.subr.mxu0 %v3645
    %4900 = vmatpush1.msra.mxu0 %v3644
    %4901 = vmatprep.subr.mxu0 %v3642
    %4902 = vmatpush1.msra.mxu0 %v3641
    %4903 = vmatprep.subr.mxu0 %v3639
    %4904 = vmatpush1.msra.mxu0 %v3638
    %4905 = vmatprep.subr.mxu0 %v3636
    %4906 = vmatpush1.msra.mxu0 %v3635
    %4907 = vmatprep.subr.mxu0 %v3633
    %4908 = vmatpush1.msra.mxu0 %v3632
    %4909 = vmatprep.subr.mxu0 %v3630
    %4910 = vmatpush1.msra.mxu0 %v3629
    %4911 = vmatprep.subr.mxu0 %v3627
    %4912 = vmatpush1.msra.mxu0 %v3626
    %4913 = vmatprep.subr.mxu0 %v3624
    %4914 = vmatpush1.msra.mxu0 %v3623
    %4915 = vmatprep.subr.mxu0 %v3621
    %4916 = vmatpush1.msra.mxu0 %v3620
    %4917 = vmatprep.subr.mxu0 %v3618
    %4918 = vmatpush1.msra.mxu0 %v3617
    %4919 = vmatprep.subr.mxu0 %v3615
    %4920 = vmatpush1.msra.mxu0 %v3614
    %4921 = vmatprep.subr.mxu0 %v3612
    %4922 = vmatpush1.msra.mxu0 %v3611
    %4923 = vmatprep.subr.mxu0 %v3609
    %4924 = vmatpush1.msra.mxu0 %v3608
    %4925 = vmatprep.subr.mxu0 0.0
    %4926 = vmatpush2.msra.mxu0 0.0
    %4927 = vmatprep.subr.mxu0 0.0
    %4928 = vmatpush2.msra.mxu0 0.0
    %4929 = vmatprep.subr.mxu0 0.0
    %4930 = vmatpush2.msra.mxu0 0.0
    %4931 = vmatprep.subr.mxu0 0.0
    %4932 = vmatpush2.msra.mxu0 0.0
    %4933 = vmatprep.subr.mxu0 0.0
    %4934 = vmatpush2.msra.mxu0 0.0
    %4935 = vmatprep.subr.mxu0 0.0
    %4936 = vmatpush2.msra.mxu0 0.0
    %4937 = vmatprep.subr.mxu0 0.0
    %4938 = vmatpush2.msra.mxu0 0.0
    %4939 = vmatprep.subr.mxu0 0.0
    %4940 = vmatpush2.msra.mxu0 0.0
    %4941 = vmatprep.subr.mxu0 0.0
    %4942 = vmatpush2.msra.mxu0 0.0
    %4943 = vmatprep.subr.mxu0 0.0
    %4944 = vmatpush2.msra.mxu0 0.0
    %4945 = vmatprep.subr.mxu0 0.0
    %4946 = vmatpush2.msra.mxu0 0.0
    %4947 = vmatprep.subr.mxu0 0.0
    %4948 = vmatpush2.msra.mxu0 0.0
    %4949 = vmatprep.subr.mxu0 0.0
    %4950 = vmatpush2.msra.mxu0 0.0
    %4951 = vmatprep.subr.mxu0 0.0
    %4952 = vmatpush2.msra.mxu0 0.0
    %4953 = vmatprep.subr.mxu0 0.0
    %4954 = vmatpush2.msra.mxu0 0.0
    %4955 = vmatprep.subr.mxu0 0.0
    %4956 = vmatpush2.msra.mxu0 0.0
    %4957 = vmatprep.mubr.f32.mxu0 0.0
    %4958 = vmatmul.mubr.f32.gmra.mxu0 %v4881
    %v4959 = vpop.f32.mrf.mxu0
    %v4960 = vadd.f32 %v3661, %v4959
    %v4961 = vpop.f32.mrf.mxu0
    %v4962 = vadd.f32 %v3665, %v4961
    %4963 = vdwg.mxu0
    %4964 = vmatprep.subr.mxu0 0.0
    %4965 = vmatpush1.msra.mxu0 %v3655
    %4966 = vmatprep.subr.mxu0 0.0
    %4967 = vmatpush1.msra.mxu0 %v3652
    %4968 = vmatprep.subr.mxu0 0.0
    %4969 = vmatpush1.msra.mxu0 %v3649
    %4970 = vmatprep.subr.mxu0 0.0
    %4971 = vmatpush1.msra.mxu0 %v3646
    %4972 = vmatprep.subr.mxu0 0.0
    %4973 = vmatpush1.msra.mxu0 %v3643
    %4974 = vmatprep.subr.mxu0 0.0
    %4975 = vmatpush1.msra.mxu0 %v3640
    %4976 = vmatprep.subr.mxu0 0.0
    %4977 = vmatpush1.msra.mxu0 %v3637
    %4978 = vmatprep.subr.mxu0 0.0
    %4979 = vmatpush1.msra.mxu0 %v3634
    %4980 = vmatprep.subr.mxu0 0.0
    %4981 = vmatpush1.msra.mxu0 %v3631
    %4982 = vmatprep.subr.mxu0 0.0
    %4983 = vmatpush1.msra.mxu0 %v3628
    %4984 = vmatprep.subr.mxu0 0.0
    %4985 = vmatpush1.msra.mxu0 %v3625
    %4986 = vmatprep.subr.mxu0 0.0
    %4987 = vmatpush1.msra.mxu0 %v3622
    %4988 = vmatprep.subr.mxu0 0.0
    %4989 = vmatpush1.msra.mxu0 %v3619
    %4990 = vmatprep.subr.mxu0 0.0
    %4991 = vmatpush1.msra.mxu0 %v3616
    %4992 = vmatprep.subr.mxu0 0.0
    %4993 = vmatpush1.msra.mxu0 %v3613
    %4994 = vmatprep.subr.mxu0 0.0
    %4995 = vmatpush1.msra.mxu0 %v3610
    %4996 = vmatprep.subr.mxu0 0.0
    %4997 = vmatpush2.msra.mxu0 0.0
    %4998 = vmatprep.subr.mxu0 0.0
    %4999 = vmatpush2.msra.mxu0 0.0
    %5000 = vmatprep.subr.mxu0 0.0
    %5001 = vmatpush2.msra.mxu0 0.0
    %5002 = vmatprep.subr.mxu0 0.0
    %5003 = vmatpush2.msra.mxu0 0.0
    %5004 = vmatprep.subr.mxu0 0.0
    %5005 = vmatpush2.msra.mxu0 0.0
    %5006 = vmatprep.subr.mxu0 0.0
    %5007 = vmatpush2.msra.mxu0 0.0
    %5008 = vmatprep.subr.mxu0 0.0
    %5009 = vmatpush2.msra.mxu0 0.0
    %5010 = vmatprep.subr.mxu0 0.0
    %5011 = vmatpush2.msra.mxu0 0.0
    %5012 = vmatprep.subr.mxu0 0.0
    %5013 = vmatpush2.msra.mxu0 0.0
    %5014 = vmatprep.subr.mxu0 0.0
    %5015 = vmatpush2.msra.mxu0 0.0
    %5016 = vmatprep.subr.mxu0 0.0
    %5017 = vmatpush2.msra.mxu0 0.0
    %5018 = vmatprep.subr.mxu0 0.0
    %5019 = vmatpush2.msra.mxu0 0.0
    %5020 = vmatprep.subr.mxu0 0.0
    %5021 = vmatpush2.msra.mxu0 0.0
    %5022 = vmatprep.subr.mxu0 0.0
    %5023 = vmatpush2.msra.mxu0 0.0
    %5024 = vmatprep.subr.mxu0 0.0
    %5025 = vmatpush2.msra.mxu0 0.0
    %5026 = vmatprep.subr.mxu0 0.0
    %5027 = vmatpush2.msra.mxu0 0.0
    %5028 = vmatprep.mubr.f32.mxu0 0.0
    %5029 = vmatmul.mubr.f32.gmra.mxu0 %v4881
    %v5030 = vpop.f32.mrf.mxu0
    %v5031 = vadd.f32 %v3669, %v5030
    %v5032 = vpop.f32.mrf.mxu0
    %5033 = vdwg.mxu0
    %v5034 = vadd.f32 %v4890, %v4960
    %v5035 = vxor.u32 %v5034, 2147483648
    %v5036 = vmul.f32 %v5035, 1.442695
    %v5037 = vpow.pop %v5036
    %v5038 = vadd.f32 %v5037, 1.0
    %v5039 = vrcp.pop %v5038
    %v5040 = vmul.f32 1.0, %v5039
    %v5041 = vadd.f32 %v4891, %v4962
    %v5042 = vxor.u32 %v5041, 2147483648
    %v5043 = vmul.f32 %v5042, 1.442695
    %v5044 = vpow.pop %v5043
    %v5045 = vadd.f32 %v5044, 1.0
    %v5046 = vrcp.pop %v5045
    %v5047 = vmul.f32 1.0, %v5046
    %v5048 = vmul.f32 %v5040, %v5031
    %v5049 = vadd.f32 %v4892, %v5048
    %v5050 = vtanh.pop %v5049
    %v5051 = vsub.f32 1.0, %v5047
    %v5052 = vmul.f32 %v5051, %v5050
    %v5053 = vmul.f32 %v5047, %v4881
    %v5054 = vadd.f32 %v5052, %v5053
    %5055 = vst [vmem:[#allocation6 + $0x38] sm:$0xff] %v5054
    %5056 = vst [vmem:[#allocation7] sm:$0xff] %v5054
    %v5057 = vld [vmem:[#allocation6] sm:$0xff]
    %v5058 = vld [vmem:[#allocation6 + $0x8] sm:$0xff]
    %v5059 = vld [vmem:[#allocation6 + $0x10] sm:$0xff]
    %v5060 = vld [vmem:[#allocation6 + $0x18] sm:$0xff]
    %v5061 = vld [vmem:[#allocation6 + $0x20] sm:$0xff]
    %v5062 = vld [vmem:[#allocation6 + $0x28] sm:$0xff]
    %v5063 = vld [vmem:[#allocation6 + $0x30] sm:$0xff]
    %v5064 = vld [vmem:[#allocation6 + $0x38] sm:$0xff]
    %v5065 = vld [vmem:[#allocation7] sm:$0xff]
    %v5066 = vld [vmem:[#allocation7 + $0x8] sm:$0xff]
    %v5067 = vld [vmem:[#allocation7 + $0x10] sm:$0xff]
    %v5068 = vld [vmem:[#allocation7 + $0x18] sm:$0xff]
    %v5069 = vld [vmem:[#allocation7 + $0x20] sm:$0xff]
    %v5070 = vld [vmem:[#allocation7 + $0x28] sm:$0xff]
    %v5071 = vld [vmem:[#allocation7 + $0x30] sm:$0xff]
    %v5072 = vld [vmem:[#allocation7 + $0x38] sm:$0xff]
    %5073 = vmatprep.subr.mxu0 0.0
    %5074 = vmatpush1.msra.mxu0 %v381
    %5075 = vmatprep.subr.mxu0 0.0
    %5076 = vmatpush1.msra.mxu0 %v380
    %5077 = vmatprep.subr.mxu0 0.0
    %5078 = vmatpush1.msra.mxu0 %v379
    %5079 = vmatprep.subr.mxu0 0.0
    %5080 = vmatpush1.msra.mxu0 %v378
    %5081 = vmatprep.subr.mxu0 0.0
    %5082 = vmatpush1.msra.mxu0 %v377
    %5083 = vmatprep.subr.mxu0 0.0
    %5084 = vmatpush1.msra.mxu0 %v376
    %5085 = vmatprep.subr.mxu0 0.0
    %5086 = vmatpush1.msra.mxu0 %v375
    %5087 = vmatprep.subr.mxu0 0.0
    %5088 = vmatpush1.msra.mxu0 %v374
    %5089 = vmatprep.subr.mxu0 0.0
    %5090 = vmatpush1.msra.mxu0 %v373
    %5091 = vmatprep.subr.mxu0 0.0
    %5092 = vmatpush1.msra.mxu0 %v372
    %5093 = vmatprep.subr.mxu0 0.0
    %5094 = vmatpush1.msra.mxu0 %v371
    %5095 = vmatprep.subr.mxu0 0.0
    %5096 = vmatpush1.msra.mxu0 %v370
    %5097 = vmatprep.subr.mxu0 0.0
    %5098 = vmatpush1.msra.mxu0 %v369
    %5099 = vmatprep.subr.mxu0 0.0
    %5100 = vmatpush1.msra.mxu0 %v368
    %5101 = vmatprep.subr.mxu0 0.0
    %5102 = vmatpush1.msra.mxu0 %v367
    %5103 = vmatprep.subr.mxu0 0.0
    %5104 = vmatpush1.msra.mxu0 %v366
    %5105 = vmatprep.subr.mxu0 0.0
    %5106 = vmatpush2.msra.mxu0 0.0
    %5107 = vmatprep.subr.mxu0 0.0
    %5108 = vmatpush2.msra.mxu0 0.0
    %5109 = vmatprep.subr.mxu0 0.0
    %5110 = vmatpush2.msra.mxu0 0.0
    %5111 = vmatprep.subr.mxu0 0.0
    %5112 = vmatpush2.msra.mxu0 0.0
    %5113 = vmatprep.subr.mxu0 0.0
    %5114 = vmatpush2.msra.mxu0 0.0
    %5115 = vmatprep.subr.mxu0 0.0
    %5116 = vmatpush2.msra.mxu0 0.0
    %5117 = vmatprep.subr.mxu0 0.0
    %5118 = vmatpush2.msra.mxu0 0.0
    %5119 = vmatprep.subr.mxu0 0.0
    %5120 = vmatpush2.msra.mxu0 0.0
    %5121 = vmatprep.subr.mxu0 0.0
    %5122 = vmatpush2.msra.mxu0 0.0
    %5123 = vmatprep.subr.mxu0 0.0
    %5124 = vmatpush2.msra.mxu0 0.0
    %5125 = vmatprep.subr.mxu0 0.0
    %5126 = vmatpush2.msra.mxu0 0.0
    %5127 = vmatprep.subr.mxu0 0.0
    %5128 = vmatpush2.msra.mxu0 0.0
    %5129 = vmatprep.subr.mxu0 0.0
    %5130 = vmatpush2.msra.mxu0 0.0
    %5131 = vmatprep.subr.mxu0 0.0
    %5132 = vmatpush2.msra.mxu0 0.0
    %5133 = vmatprep.subr.mxu0 0.0
    %5134 = vmatpush2.msra.mxu0 0.0
    %5135 = vmatprep.subr.mxu0 0.0
    %5136 = vmatpush2.msra.mxu0 0.0
    %5137 = vmatprep.mubr.f32.mxu0 0.0
    %5138 = vmatmul.mubr.f32.gmra.mxu0 %v5065
    %v5139 = vpop.f32.mrf.mxu0
    %v5140 = vadd.f32 0.0, %v5139
    %v5141 = vpop.f32.mrf.mxu0
    %5142 = vmatprep.mubr.f32.mxu0 0.0
    %5143 = vmatmul.mubr.f32.gmra.mxu0 %v5066
    %v5144 = vpop.f32.mrf.mxu0
    %v5145 = vadd.f32 0.0, %v5144
    %v5146 = vpop.f32.mrf.mxu0
    %5147 = vmatprep.mubr.f32.mxu0 0.0
    %5148 = vmatmul.mubr.f32.gmra.mxu0 %v5067
    %v5149 = vpop.f32.mrf.mxu0
    %v5150 = vadd.f32 0.0, %v5149
    %v5151 = vpop.f32.mrf.mxu0
    %5152 = vmatprep.mubr.f32.mxu0 0.0
    %5153 = vmatmul.mubr.f32.gmra.mxu0 %v5068
    %v5154 = vpop.f32.mrf.mxu0
    %v5155 = vadd.f32 0.0, %v5154
    %v5156 = vpop.f32.mrf.mxu0
    %5157 = vmatprep.mubr.f32.mxu0 0.0
    %5158 = vmatmul.mubr.f32.gmra.mxu0 %v5069
    %v5159 = vpop.f32.mrf.mxu0
    %v5160 = vadd.f32 0.0, %v5159
    %v5161 = vpop.f32.mrf.mxu0
    %5162 = vmatprep.mubr.f32.mxu0 0.0
    %5163 = vmatmul.mubr.f32.gmra.mxu0 %v5070
    %v5164 = vpop.f32.mrf.mxu0
    %v5165 = vadd.f32 0.0, %v5164
    %v5166 = vpop.f32.mrf.mxu0
    %5167 = vmatprep.mubr.f32.mxu0 0.0
    %5168 = vmatmul.mubr.f32.gmra.mxu0 %v5071
    %v5169 = vpop.f32.mrf.mxu0
    %v5170 = vadd.f32 0.0, %v5169
    %v5171 = vpop.f32.mrf.mxu0
    %5172 = vmatprep.mubr.f32.mxu0 0.0
    %5173 = vmatmul.mubr.f32.gmra.mxu0 %v5072
    %v5174 = vpop.f32.mrf.mxu0
    %v5175 = vadd.f32 0.0, %v5174
    %v5176 = vpop.f32.mrf.mxu0
    %5177 = vdwg.mxu0
    %v5178 = vadd.f32 %v5057, %v5140
    %v5179 = vadd.f32 %v5058, %v5145
    %v5180 = vadd.f32 %v5059, %v5150
    %v5181 = vadd.f32 %v5060, %v5155
    %v5182 = vadd.f32 %v5061, %v5160
    %v5183 = vadd.f32 %v5062, %v5165
    %v5184 = vadd.f32 %v5063, %v5170
    %v5185 = vadd.f32 %v5064, %v5175
    %5186 = vst [vmem:[%s16] sm:$0xff] %v5178
    %s5187 = scalar_lea.vmem %s16, 8
    %5188 = vst [vmem:[%s5187] sm:$0xff] %v5179
    %s5189 = scalar_lea.vmem %s16, 16
    %5190 = vst [vmem:[%s5189] sm:$0xff] %v5180
    %s5191 = scalar_lea.vmem %s16, 24
    %5192 = vst [vmem:[%s5191] sm:$0xff] %v5181
    %s5193 = scalar_lea.vmem %s16, 32
    %5194 = vst [vmem:[%s5193] sm:$0xff] %v5182
    %s5195 = scalar_lea.vmem %s16, 40
    %5196 = vst [vmem:[%s5195] sm:$0xff] %v5183
    %s5197 = scalar_lea.vmem %s16, 48
    %5198 = vst [vmem:[%s5197] sm:$0xff] %v5184
    %s5199 = scalar_lea.vmem %s16, 56
    %5200 = vst [vmem:[%s5199] sm:$0xff] %v5185
    %5201 = vst [vmem:[%s17] sm:$0xff] %v2395
    %5202 = vmatprep.subr.mxu0 0.0
    %5203 = vmatpush1.msra.mxu0 %v381
    %5204 = vmatprep.subr.mxu0 0.0
    %5205 = vmatpush1.msra.mxu0 %v380
    %5206 = vmatprep.subr.mxu0 0.0
    %5207 = vmatpush1.msra.mxu0 %v379
    %5208 = vmatprep.subr.mxu0 0.0
    %5209 = vmatpush1.msra.mxu0 %v378
    %5210 = vmatprep.subr.mxu0 0.0
    %5211 = vmatpush1.msra.mxu0 %v377
    %5212 = vmatprep.subr.mxu0 0.0
    %5213 = vmatpush1.msra.mxu0 %v376
    %5214 = vmatprep.subr.mxu0 0.0
    %5215 = vmatpush1.msra.mxu0 %v375
    %5216 = vmatprep.subr.mxu0 0.0
    %5217 = vmatpush1.msra.mxu0 %v374
    %5218 = vmatprep.subr.mxu0 0.0
    %5219 = vmatpush1.msra.mxu0 %v373
    %5220 = vmatprep.subr.mxu0 0.0
    %5221 = vmatpush1.msra.mxu0 %v372
    %5222 = vmatprep.subr.mxu0 0.0
    %5223 = vmatpush1.msra.mxu0 %v371
    %5224 = vmatprep.subr.mxu0 0.0
    %5225 = vmatpush1.msra.mxu0 %v370
    %5226 = vmatprep.subr.mxu0 0.0
    %5227 = vmatpush1.msra.mxu0 %v369
    %5228 = vmatprep.subr.mxu0 0.0
    %5229 = vmatpush1.msra.mxu0 %v368
    %5230 = vmatprep.subr.mxu0 0.0
    %5231 = vmatpush1.msra.mxu0 %v367
    %5232 = vmatprep.subr.mxu0 0.0
    %5233 = vmatpush1.msra.mxu0 %v366
    %5234 = vmatprep.subr.mxu0 0.0
    %5235 = vmatpush2.msra.mxu0 0.0
    %5236 = vmatprep.subr.mxu0 0.0
    %5237 = vmatpush2.msra.mxu0 0.0
    %5238 = vmatprep.subr.mxu0 0.0
    %5239 = vmatpush2.msra.mxu0 0.0
    %5240 = vmatprep.subr.mxu0 0.0
    %5241 = vmatpush2.msra.mxu0 0.0
    %5242 = vmatprep.subr.mxu0 0.0
    %5243 = vmatpush2.msra.mxu0 0.0
    %5244 = vmatprep.subr.mxu0 0.0
    %5245 = vmatpush2.msra.mxu0 0.0
    %5246 = vmatprep.subr.mxu0 0.0
    %5247 = vmatpush2.msra.mxu0 0.0
    %5248 = vmatprep.subr.mxu0 0.0
    %5249 = vmatpush2.msra.mxu0 0.0
    %5250 = vmatprep.subr.mxu0 0.0
    %5251 = vmatpush2.msra.mxu0 0.0
    %5252 = vmatprep.subr.mxu0 0.0
    %5253 = vmatpush2.msra.mxu0 0.0
    %5254 = vmatprep.subr.mxu0 0.0
    %5255 = vmatpush2.msra.mxu0 0.0
    %5256 = vmatprep.subr.mxu0 0.0
    %5257 = vmatpush2.msra.mxu0 0.0
    %5258 = vmatprep.subr.mxu0 0.0
    %5259 = vmatpush2.msra.mxu0 0.0
    %5260 = vmatprep.subr.mxu0 0.0
    %5261 = vmatpush2.msra.mxu0 0.0
    %5262 = vmatprep.subr.mxu0 0.0
    %5263 = vmatpush2.msra.mxu0 0.0
    %5264 = vmatprep.subr.mxu0 0.0
    %5265 = vmatpush2.msra.mxu0 0.0
    %5266 = vmatprep.mubr.f32.mxu0 0.0
    %5267 = vmatmul.mubr.f32.gmra.mxu0 %v2395
    %v5268 = vpop.f32.mrf.mxu0
    %v5269 = vadd.f32 0.0, %v5268
    %v5270 = vpop.f32.mrf.mxu0
    %5271 = vdwg.mxu0
    %s5272 = scalar_lea.vmem %s17, 8
    %5273 = vst [vmem:[%s5272] sm:$0xff] %v5269
    %s5274 = scalar_lea.vmem %s17, 16
    %5275 = vst [vmem:[%s5274] sm:$0xff] %v5054
    %5276 = vmatprep.subr.mxu0 0.0
    %5277 = vmatpush1.msra.mxu0 %v381
    %5278 = vmatprep.subr.mxu0 0.0
    %5279 = vmatpush1.msra.mxu0 %v380
    %5280 = vmatprep.subr.mxu0 0.0
    %5281 = vmatpush1.msra.mxu0 %v379
    %5282 = vmatprep.subr.mxu0 0.0
    %5283 = vmatpush1.msra.mxu0 %v378
    %5284 = vmatprep.subr.mxu0 0.0
    %5285 = vmatpush1.msra.mxu0 %v377
    %5286 = vmatprep.subr.mxu0 0.0
    %5287 = vmatpush1.msra.mxu0 %v376
    %5288 = vmatprep.subr.mxu0 0.0
    %5289 = vmatpush1.msra.mxu0 %v375
    %5290 = vmatprep.subr.mxu0 0.0
    %5291 = vmatpush1.msra.mxu0 %v374
    %5292 = vmatprep.subr.mxu0 0.0
    %5293 = vmatpush1.msra.mxu0 %v373
    %5294 = vmatprep.subr.mxu0 0.0
    %5295 = vmatpush1.msra.mxu0 %v372
    %5296 = vmatprep.subr.mxu0 0.0
    %5297 = vmatpush1.msra.mxu0 %v371
    %5298 = vmatprep.subr.mxu0 0.0
    %5299 = vmatpush1.msra.mxu0 %v370
    %5300 = vmatprep.subr.mxu0 0.0
    %5301 = vmatpush1.msra.mxu0 %v369
    %5302 = vmatprep.subr.mxu0 0.0
    %5303 = vmatpush1.msra.mxu0 %v368
    %5304 = vmatprep.subr.mxu0 0.0
    %5305 = vmatpush1.msra.mxu0 %v367
    %5306 = vmatprep.subr.mxu0 0.0
    %5307 = vmatpush1.msra.mxu0 %v366
    %5308 = vmatprep.subr.mxu0 0.0
    %5309 = vmatpush2.msra.mxu0 0.0
    %5310 = vmatprep.subr.mxu0 0.0
    %5311 = vmatpush2.msra.mxu0 0.0
    %5312 = vmatprep.subr.mxu0 0.0
    %5313 = vmatpush2.msra.mxu0 0.0
    %5314 = vmatprep.subr.mxu0 0.0
    %5315 = vmatpush2.msra.mxu0 0.0
    %5316 = vmatprep.subr.mxu0 0.0
    %5317 = vmatpush2.msra.mxu0 0.0
    %5318 = vmatprep.subr.mxu0 0.0
    %5319 = vmatpush2.msra.mxu0 0.0
    %5320 = vmatprep.subr.mxu0 0.0
    %5321 = vmatpush2.msra.mxu0 0.0
    %5322 = vmatprep.subr.mxu0 0.0
    %5323 = vmatpush2.msra.mxu0 0.0
    %5324 = vmatprep.subr.mxu0 0.0
    %5325 = vmatpush2.msra.mxu0 0.0
    %5326 = vmatprep.subr.mxu0 0.0
    %5327 = vmatpush2.msra.mxu0 0.0
    %5328 = vmatprep.subr.mxu0 0.0
    %5329 = vmatpush2.msra.mxu0 0.0
    %5330 = vmatprep.subr.mxu0 0.0
    %5331 = vmatpush2.msra.mxu0 0.0
    %5332 = vmatprep.subr.mxu0 0.0
    %5333 = vmatpush2.msra.mxu0 0.0
    %5334 = vmatprep.subr.mxu0 0.0
    %5335 = vmatpush2.msra.mxu0 0.0
    %5336 = vmatprep.subr.mxu0 0.0
    %5337 = vmatpush2.msra.mxu0 0.0
    %5338 = vmatprep.subr.mxu0 0.0
    %5339 = vmatpush2.msra.mxu0 0.0
    %5340 = vmatprep.mubr.f32.mxu0 0.0
    %5341 = vmatmul.mubr.f32.gmra.mxu0 %v5054
    %v5342 = vpop.f32.mrf.mxu0
    %v5343 = vadd.f32 0.0, %v5342
    %v5344 = vpop.f32.mrf.mxu0
    %5345 = vdwg.mxu0
    %s5346 = scalar_lea.vmem %s17, 24
    %5347 = vst [vmem:[%s5346] sm:$0xff] %v5343
    // Predicated region
    $region90: #{teacher_encoder_forward.1} parent=1 // pred_check
      _
    $region91: #{teacher_encoder_forward.1} parent=1 // pred_check_branch
      %5349 = sbr.rel (0) target = $region93
    $region92: #{teacher_encoder_forward.1} parent=1 // pred_region
      _
    $region93: #{teacher_encoder_forward.1} parent=1 // pred_fallthru
      _
    // Predicated region
    $region94: #{teacher_encoder_forward.1} parent=1 // pred_check
      _
    $region95: #{teacher_encoder_forward.1} parent=1 // pred_check_branch
      %5351 = sbr.rel (0) target = $region97
    $region96: #{teacher_encoder_forward.1} parent=1 // pred_region
      _
    $region97: #{teacher_encoder_forward.1} parent=1 // pred_fallthru
      _
    // Predicated region
    $region98: #{teacher_encoder_forward.1} parent=1 // pred_check
      _
    $region99: #{teacher_encoder_forward.1} parent=1 // pred_check_branch
      %5353 = sbr.rel (0) target = $region101
    $region100: #{teacher_encoder_forward.1} parent=1 // pred_region
      _
    $region101: #{teacher_encoder_forward.1} parent=1 // pred_fallthru
      _
    // Predicated region
    $region102: #{teacher_encoder_forward.1} parent=1 // pred_check
      _
    $region103: #{teacher_encoder_forward.1} parent=1 // pred_check_branch
      %5355 = sbr.rel (0) target = $region105
    $region104: #{teacher_encoder_forward.1} parent=1 // pred_region
      _
    $region105: #{teacher_encoder_forward.1} parent=1 // pred_fallthru
      _
    %5356 = vsyncpa [#allocation9], 1
    %5357 = vsyncpa [#allocation11], 1
    %5358 = vsyncpa [#allocation14], 1
    %5359 = vsyncpa [#allocation17], 1

</llo_original>
